<compile_context>
chip_gen: v5e
topology: v5e:2x2
jax: 0.10.0
libtpu: 0.0.40
codegen_flags: <defaults>
</compile_context>

<pallas_src>
import functools

import jax
import jax.numpy as jnp
from jax.experimental import pallas as pl
from jax.experimental.pallas import tpu as pltpu

NUM_PARALLEL = 2
BN_EPS = 1e-5


def _bottleneck_kernel(x_ref, xup_ref, xdn_ref,
                       w1_ref, w2_ref, w3_ref,
                       bn1_s_ref, bn1_b_ref,
                       bn2_s_ref, bn2_b_ref, g2_ref,
                       bn3_s_ref, bn3_b_ref,
                       out_ref,
                       pad_ref,
                       *, TH, W, planes, cin, cout, num_parallel, bn_threshold):
    """One (batch element, row tile) for both parallel branches."""
    P = num_parallel
    THW = TH * W

    h_idx = pl.program_id(1)
    n_h = pl.num_programs(1)

    w1 = w1_ref[...]                       # (cin, planes)       bf16, pre-cast in wrapper
    w3 = w3_ref[...]                       # (planes, cout)      bf16

    # Zero only the left/right column halo ring of the conv2 scratch; everything else
    # (interior + top/bottom halo rows) is fully rewritten every grid step, so this is
    # safe under "parallel"/megacore sharding.
    zcol = jnp.zeros((P, TH + 2, 1, planes), jnp.bfloat16)
    pad_ref[:, :, 0:1, :] = zcol
    pad_ref[:, :, W + 1:W + 2, :] = zcol

    # Halo-row validity (image border => conv2 zero padding on the *feature map*).
    up_valid = (h_idx > 0).astype(jnp.float32)
    dn_valid = (h_idx < n_h - 1).astype(jnp.float32)

    def conv1_bn_relu(xrows, p):
        h = jnp.dot(xrows.astype(jnp.bfloat16), w1,
                    preferred_element_type=jnp.float32)
        h = h * bn1_s_ref[p] + bn1_b_ref[p]
        return jnp.maximum(h, 0.0)

    # ---- conv1 (1x1) + bn1 + relu: core rows + 1-row halos, per branch -------------
    for p in range(P):
        core = conv1_bn_relu(x_ref[0, p].reshape(THW, cin), p)            # (THW, planes)
        pad_ref[p, 1:TH + 1, 1:W + 1, :] = (
            core.reshape(TH, W, planes).astype(jnp.bfloat16))
        up = conv1_bn_relu(xup_ref[0, p, 0], p) * up_valid                # (W, planes)
        pad_ref[p, 0, 1:W + 1, :] = up.astype(jnp.bfloat16)
        dn = conv1_bn_relu(xdn_ref[0, p, 0], p) * dn_valid                # (W, planes)
        pad_ref[p, TH + 1, 1:W + 1, :] = dn.astype(jnp.bfloat16)

    # ---- conv2 (3x3, pad=1) + bn2: dy-split im2col, 3 MXU passes per branch --------
    y2 = []
    for p in range(P):
        acc = jnp.zeros((THW, planes), jnp.float32)
        for dy in range(3):
            col = jnp.concatenate(
                [pad_ref[p, dy:dy + TH, dx:dx + W, :] for dx in range(3)],
                axis=-1).reshape(THW, 3 * planes)                          # bf16
            acc = acc + jnp.dot(col, w2_ref[dy],
                                preferred_element_type=jnp.float32)
        y2.append(acc * bn2_s_ref[p] + bn2_b_ref[p])

    # ---- channel exchange -> relu -> conv3 (1x1) -> bn3 + residual + relu ----------
    # TODO(synk): the swap rule (take the other branch's channel) is only defined for
    #             num_parallel == 2, matching the reference Exchange module.
    for p in range(P):
        keep = jnp.abs(g2_ref[p]) >= bn_threshold                          # (planes,)
        h = jnp.maximum(jnp.where(keep, y2[p], y2[P - 1 - p]), 0.0)
        h3 = jnp.dot(h.astype(jnp.bfloat16), w3,
                     preferred_element_type=jnp.float32)                   # (THW, cout)
        h3 = h3 * bn3_s_ref[p] + bn3_b_ref[p]
        res = x_ref[0, p].reshape(THW, cin)            # re-read (downsample=None)
        o = jnp.maximum(h3 + res, 0.0)
        out_ref[0, p] = o.reshape(TH, W, cout).astype(out_ref.dtype)


def _pick_row_tile(H, max_rows=32):
    """Largest divisor of H not exceeding max_rows (bounds VMEM per grid step)."""
    th = min(H, max_rows)
    while H % th != 0:
        th -= 1
    return th


def _vmem_limit_bytes():
    # Leave headroom for compiler-internal scratch / double-buffering instead of
    # requesting the full physical VMEM (v7x has only 64 MiB per TensorCore).
    try:
        cap = pltpu.get_tpu_info().vmem_capacity_bytes
        return int(cap * 3 // 4)
    except Exception:
        return None


def bottleneck_forward(x, w1, w2, w3, bn1_s, bn1_b, bn2_s, bn2_b, g2,
                       bn3_s, bn3_b, bn_threshold, row_tile=None):
    N, P, H, W, cin = x.shape
    planes = w1.shape[1]
    cout = w3.shape[1]
    assert cin == cout, "downsample=None requires inplanes == planes * expansion"
    assert P == NUM_PARALLEL, "Exchange is defined for exactly two parallel branches"

    TH = _pick_row_tile(H) if row_tile is None else row_tile
    assert H % TH == 0

    # Weight prep hoisted out of the kernel: bf16 cast + (3,3,planes,planes) HWIO
    # -> (dy, dx*in, out) relayout happens once, not per grid step.
    w1_b = w1.astype(jnp.bfloat16)
    w2_b = w2.reshape(3, 3 * planes, planes).astype(jnp.bfloat16)
    w3_b = w3.astype(jnp.bfloat16)

    kernel = functools.partial(
        _bottleneck_kernel, TH=TH, W=W, planes=planes, cin=cin, cout=cout,
        num_parallel=P, bn_threshold=float(bn_threshold))

    grid = (N, H // TH)

    return pl.pallas_call(
        kernel,
        out_shape=jax.ShapeDtypeStruct((N, P, H, W, cout), jnp.float32),
        grid_spec=pltpu.PrefetchScalarGridSpec(
            num_scalar_prefetch=0,
            grid=grid,
            in_specs=[
                # core row tile of x (conv1 input + residual)
                pl.BlockSpec((1, P, TH, W, cin), lambda n, h: (n, 0, h, 0, 0)),
                # one x row above the tile (clamped at the image border, masked in-kernel)
                pl.BlockSpec((1, P, 1, W, cin),
                             lambda n, h: (n, 0, jnp.maximum(h * TH - 1, 0), 0, 0)),
                # one x row below the tile (clamped at the image border, masked in-kernel)
                pl.BlockSpec((1, P, 1, W, cin),
                             lambda n, h: (n, 0, jnp.minimum(h * TH + TH, H - 1), 0, 0)),
                pl.BlockSpec((cin, planes), lambda n, h: (0, 0)),              # w1 (bf16)
                pl.BlockSpec((3, 3 * planes, planes), lambda n, h: (0, 0, 0)), # w2 (bf16)
                pl.BlockSpec((planes, cout), lambda n, h: (0, 0)),             # w3 (bf16)
                pl.BlockSpec((P, planes), lambda n, h: (0, 0)),                # bn1 scale
                pl.BlockSpec((P, planes), lambda n, h: (0, 0)),                # bn1 bias
                pl.BlockSpec((P, planes), lambda n, h: (0, 0)),                # bn2 scale
                pl.BlockSpec((P, planes), lambda n, h: (0, 0)),                # bn2 bias
                pl.BlockSpec((P, planes), lambda n, h: (0, 0)),                # bn2 gamma
                pl.BlockSpec((P, cout), lambda n, h: (0, 0)),                  # bn3 scale
                pl.BlockSpec((P, cout), lambda n, h: (0, 0)),                  # bn3 bias
            ],
            out_specs=pl.BlockSpec((1, P, TH, W, cout), lambda n, h: (n, 0, h, 0, 0)),
            scratch_shapes=[
                # zero-padded conv2 input (conv1+bn1+relu output) for both branches, bf16
                pltpu.VMEM((P, TH + 2, W + 2, planes), jnp.bfloat16),
            ],
        ),
        compiler_params=pltpu.CompilerParams(
            # batch elems and row tiles are independent -> megacore sharding on v7x
            dimension_semantics=("parallel", "parallel"),
            vmem_limit_bytes=_vmem_limit_bytes(),
        ),
    )(x, x, x, w1_b, w2_b, w3_b, bn1_s, bn1_b, bn2_s, bn2_b, g2, bn3_s, bn3_b)


# ----------------------------- pure-JAX reference (f32) -----------------------------
def _reference(x, w1, w2, w3, bn1_s, bn1_b, bn2_s, bn2_b, g2, bn3_s, bn3_b, thr):
    N, P, H, W, cin = x.shape

    def bn(h, s, b):
        return h * s + b   # s, b broadcast on channel (last) axis

    y2 = []
    for p in range(P):
        h = jnp.einsum('nhwc,cd->nhwd', x[:, p], w1)
        h = jax.nn.relu(bn(h, bn1_s[p], bn1_b[p]))
        h = jax.lax.conv_general_dilated(
            h, w2, window_strides=(1, 1), padding='SAME',
            dimension_numbers=('NHWC', 'HWIO', 'NHWC'))
        y2.append(bn(h, bn2_s[p], bn2_b[p]))

    outs = []
    for p in range(P):
        keep = jnp.abs(g2[p]) >= thr
        y = jnp.where(keep[None, None, None, :], y2[p], y2[1 - p])
        h = jax.nn.relu(y)
        h = jnp.einsum('nhwc,cd->nhwd', h, w3)
        h = bn(h, bn3_s[p], bn3_b[p])
        outs.append(jax.nn.relu(h + x[:, p]))
    return jnp.stack(outs, axis=1)


if __name__ == "__main__":
    key = jax.random.PRNGKey(0)
    keys = jax.random.split(key, 16)

    N, P = 2, NUM_PARALLEL
    planes = 8
    inplanes = planes * 4          # 32: residual add valid with downsample=None
    H = W = 16
    bn_threshold = 0.5

    # input: list of P NCHW tensors [N, inplanes, H, W] -> stacked NHWC [N, P, H, W, C]
    x = jax.random.normal(keys[0], (N, P, H, W, inplanes), jnp.float32)

    # shared conv weights (bias=False), already in kernel layout
    w1 = jax.random.normal(keys[1], (inplanes, planes), jnp.float32) * 0.1        # conv1x1
    w2 = jax.random.normal(keys[2], (3, 3, planes, planes), jnp.float32) * 0.1    # conv3x3 (HWIO)
    w3 = jax.random.normal(keys[3], (planes, inplanes), jnp.float32) * 0.1        # conv1x1

    # per-branch BatchNorm parameters, folded to inference-mode scale/bias
    def make_bn(kg, kb, km, kv, c):
        gamma = jax.random.uniform(kg, (P, c), jnp.float32, 0.0, 1.0)
        beta = jax.random.normal(kb, (P, c), jnp.float32) * 0.1
        mean = jax.random.normal(km, (P, c), jnp.float32) * 0.1
        var = jax.random.uniform(kv, (P, c), jnp.float32, 0.5, 1.5)
        scale = gamma / jnp.sqrt(var + BN_EPS)
        bias = beta - mean * scale
        return gamma, scale, bias

    _,  bn1_s, bn1_b = make_bn(keys[4], keys[5], keys[6], keys[7], planes)
    g2, bn2_s, bn2_b = make_bn(keys[8], keys[9], keys[10], keys[11], planes)
    _,  bn3_s, bn3_b = make_bn(keys[12], keys[13], keys[14], keys[15], inplanes)

    # row_tile=8 with H=16 -> two row tiles per image, exercising the halo path.
    out = bottleneck_forward(x, w1, w2, w3, bn1_s, bn1_b, bn2_s, bn2_b, g2,
                             bn3_s, bn3_b, bn_threshold, row_tile=8)
    out = jax.block_until_ready(out)

    ref = _reference(x, w1, w2, w3, bn1_s, bn1_b, bn2_s, bn2_b, g2,
                     bn3_s, bn3_b, bn_threshold)
    assert out.shape == (N, P, H, W, inplanes)
    # Kernel uses bf16 MXU operands (and a bf16 conv2 scratch) with f32 accumulation;
    # compare against the pure-f32 reference with a tolerance covering bf16 rounding.
    max_err = jnp.max(jnp.abs(out - ref))
    assert jnp.allclose(out, ref, atol=2e-2, rtol=2e-2), f"max abs err = {max_err}"

    print("KERNEL_OK")
</pallas_src>

<mosaic_0001>
module attributes {stable_mosaic.version = 11 : i64} {
  func.func @_bottleneck_kernel(%arg0: i32, %arg1: i32, %arg2: memref<1x2x8x16x32xf32, #tpu.memory_space<vmem>>, %arg3: memref<1x2x1x16x32xf32, #tpu.memory_space<vmem>>, %arg4: memref<1x2x1x16x32xf32, #tpu.memory_space<vmem>>, %arg5: memref<32x8xbf16, #tpu.memory_space<vmem>>, %arg6: memref<3x24x8xbf16, #tpu.memory_space<vmem>>, %arg7: memref<8x32xbf16, #tpu.memory_space<vmem>>, %arg8: memref<2x8xf32, #tpu.memory_space<vmem>>, %arg9: memref<2x8xf32, #tpu.memory_space<vmem>>, %arg10: memref<2x8xf32, #tpu.memory_space<vmem>>, %arg11: memref<2x8xf32, #tpu.memory_space<vmem>>, %arg12: memref<2x8xf32, #tpu.memory_space<vmem>>, %arg13: memref<2x32xf32, #tpu.memory_space<vmem>>, %arg14: memref<2x32xf32, #tpu.memory_space<vmem>>, %arg15: memref<1x2x8x16x32xf32, #tpu.memory_space<vmem>>, %arg16: memref<2x10x18x8xbf16, #tpu.memory_space<vmem>>) attributes {dimension_semantics = [#tpu.dimension_semantics<parallel>, #tpu.dimension_semantics<parallel>], iteration_bounds = array<i64: 2, 2>, scalar_prefetch = 0 : i64, scratch_operands = 1 : i64, tpu.core_type = #tpu.core_type<tc>, window_params = [{transform_indices = @transform_0, window_bounds = array<i64: 1, 2, 8, 16, 32>}, {transform_indices = @transform_1, window_bounds = array<i64: 1, 2, 1, 16, 32>}, {transform_indices = @transform_2, window_bounds = array<i64: 1, 2, 1, 16, 32>}, {pipeline_mode = #tpu.pipeline_mode<synchronous>, transform_indices = @transform_3, window_bounds = array<i64: 32, 8>}, {pipeline_mode = #tpu.pipeline_mode<synchronous>, transform_indices = @transform_4, window_bounds = array<i64: 3, 24, 8>}, {pipeline_mode = #tpu.pipeline_mode<synchronous>, transform_indices = @transform_5, window_bounds = array<i64: 8, 32>}, {pipeline_mode = #tpu.pipeline_mode<synchronous>, transform_indices = @transform_6, window_bounds = array<i64: 2, 8>}, {pipeline_mode = #tpu.pipeline_mode<synchronous>, transform_indices = @transform_7, window_bounds = array<i64: 2, 8>}, {pipeline_mode = #tpu.pipeline_mode<synchronous>, transform_indices = @transform_8, window_bounds = array<i64: 2, 8>}, {pipeline_mode = #tpu.pipeline_mode<synchronous>, transform_indices = @transform_9, window_bounds = array<i64: 2, 8>}, {pipeline_mode = #tpu.pipeline_mode<synchronous>, transform_indices = @transform_10, window_bounds = array<i64: 2, 8>}, {pipeline_mode = #tpu.pipeline_mode<synchronous>, transform_indices = @transform_11, window_bounds = array<i64: 2, 32>}, {pipeline_mode = #tpu.pipeline_mode<synchronous>, transform_indices = @transform_12, window_bounds = array<i64: 2, 32>}, {transform_indices = @transform_13, window_bounds = array<i64: 1, 2, 8, 16, 32>}]} {
    %c0 = arith.constant 0 : index
    %c0_0 = arith.constant 0 : index
    %0 = vector.load %arg5[%c0, %c0_0] : memref<32x8xbf16, #tpu.memory_space<vmem>>, vector<32x8xbf16>
    %c0_1 = arith.constant 0 : index
    %c0_2 = arith.constant 0 : index
    %1 = vector.load %arg7[%c0_1, %c0_2] : memref<8x32xbf16, #tpu.memory_space<vmem>>, vector<8x32xbf16>
    %cst = arith.constant 0.000000e+00 : bf16
    %2 = vector.broadcast %cst : bf16 to vector<2x10x1x8xbf16>
    %c0_3 = arith.constant 0 : index
    %c0_4 = arith.constant 0 : index
    %c0_5 = arith.constant 0 : index
    %c0_6 = arith.constant 0 : index
    %3 = vector.load %arg16[%c0_3, %c0_4, %c0_5, %c0_6] : memref<2x10x18x8xbf16, #tpu.memory_space<vmem>>, vector<2x10x1x8xbf16>
    tpu.vector_store %arg16[%c0_3, %c0_4, %c0_5, %c0_6], %2 {strides = array<i32>} : memref<2x10x18x8xbf16, #tpu.memory_space<vmem>>, vector<2x10x1x8xbf16>,
    %c0_7 = arith.constant 0 : index
    %c0_8 = arith.constant 0 : index
    %c17 = arith.constant 17 : index
    %c0_9 = arith.constant 0 : index
    %4 = vector.load %arg16[%c0_7, %c0_8, %c17, %c0_9] : memref<2x10x18x8xbf16, #tpu.memory_space<vmem>>, vector<2x10x1x8xbf16>
    tpu.vector_store %arg16[%c0_7, %c0_8, %c17, %c0_9], %2 {strides = array<i32>} : memref<2x10x18x8xbf16, #tpu.memory_space<vmem>>, vector<2x10x1x8xbf16>,
    %c0_i32 = arith.constant 0 : i32
    %5 = arith.cmpi sgt, %arg1, %c0_i32 : i32
    %6 = arith.extui %5 : i1 to i32
    %7 = arith.sitofp %6 : i32 to f32
    %c1_i32 = arith.constant 1 : i32
    %8 = arith.cmpi slt, %arg1, %c1_i32 : i32
    %9 = arith.extui %8 : i1 to i32
    %10 = arith.sitofp %9 : i32 to f32
    %c0_10 = arith.constant 0 : index
    %c0_11 = arith.constant 0 : index
    %c0_12 = arith.constant 0 : index
    %c0_13 = arith.constant 0 : index
    %c0_14 = arith.constant 0 : index
    %11 = vector.load %arg2[%c0_10, %c0_11, %c0_12, %c0_13, %c0_14] : memref<1x2x8x16x32xf32, #tpu.memory_space<vmem>>, vector<1x1x8x16x32xf32>
    %12 = vector.shape_cast %11 : vector<1x1x8x16x32xf32> to vector<8x16x32xf32>
    %13 = vector.shape_cast %12 : vector<8x16x32xf32> to vector<128x32xf32>
    %14 = arith.truncf %13 : vector<128x32xf32> to vector<128x32xbf16>
    %cst_15 = arith.constant dense<0.000000e+00> : vector<128x8xf32>
    %15 = tpu.matmul %14, %0, %cst_15 {dimension_numbers = #tpu.dot_dimension_numbers<[1], [0], [0], [1], [0, 0, 1, 1], [], []>} : vector<128x32xbf16>, vector<32x8xbf16>, vector<128x8xf32> -> vector<128x8xf32>
    %c0_16 = arith.constant 0 : index
    %c0_17 = arith.constant 0 : index
    %16 = vector.load %arg8[%c0_16, %c0_17] : memref<2x8xf32, #tpu.memory_space<vmem>>, vector<1x8xf32>
    %17 = vector.shape_cast %16 : vector<1x8xf32> to vector<8xf32>
    %18 = vector.shape_cast %17 : vector<8xf32> to vector<1x8xf32>
    %19 = vector.broadcast %18 : vector<1x8xf32> to vector<128x8xf32>
    %20 = arith.mulf %15, %19 : vector<128x8xf32>
    %c0_18 = arith.constant 0 : index
    %c0_19 = arith.constant 0 : index
    %21 = vector.load %arg9[%c0_18, %c0_19] : memref<2x8xf32, #tpu.memory_space<vmem>>, vector<1x8xf32>
    %22 = vector.shape_cast %21 : vector<1x8xf32> to vector<8xf32>
    %23 = vector.shape_cast %22 : vector<8xf32> to vector<1x8xf32>
    %24 = vector.broadcast %23 : vector<1x8xf32> to vector<128x8xf32>
    %25 = arith.addf %20, %24 : vector<128x8xf32>
    %cst_20 = arith.constant 0.000000e+00 : f32
    %26 = vector.broadcast %cst_20 : f32 to vector<128x8xf32>
    %27 = arith.maximumf %25, %26 : vector<128x8xf32>
    %28 = vector.shape_cast %27 : vector<128x8xf32> to vector<8x16x8xf32>
    %29 = arith.truncf %28 : vector<8x16x8xf32> to vector<8x16x8xbf16>
    %c0_21 = arith.constant 0 : index
    %c1 = arith.constant 1 : index
    %c1_22 = arith.constant 1 : index
    %c0_23 = arith.constant 0 : index
    %30 = vector.load %arg16[%c0_21, %c1, %c1_22, %c0_23] : memref<2x10x18x8xbf16, #tpu.memory_space<vmem>>, vector<1x8x16x8xbf16>
    %31 = vector.shape_cast %30 : vector<1x8x16x8xbf16> to vector<8x16x8xbf16>
    %32 = vector.shape_cast %29 : vector<8x16x8xbf16> to vector<1x8x16x8xbf16>
    tpu.vector_store %arg16[%c0_21, %c1, %c1_22, %c0_23], %32 {strides = array<i32>} : memref<2x10x18x8xbf16, #tpu.memory_space<vmem>>, vector<1x8x16x8xbf16>,
    %c0_24 = arith.constant 0 : index
    %c0_25 = arith.constant 0 : index
    %c0_26 = arith.constant 0 : index
    %c0_27 = arith.constant 0 : index
    %c0_28 = arith.constant 0 : index
    %33 = vector.load %arg3[%c0_24, %c0_25, %c0_26, %c0_27, %c0_28] : memref<1x2x1x16x32xf32, #tpu.memory_space<vmem>>, vector<1x1x1x16x32xf32>
    %34 = vector.shape_cast %33 : vector<1x1x1x16x32xf32> to vector<16x32xf32>
    %35 = arith.truncf %34 : vector<16x32xf32> to vector<16x32xbf16>
    %cst_29 = arith.constant dense<0.000000e+00> : vector<16x8xf32>
    %36 = tpu.matmul %35, %0, %cst_29 {dimension_numbers = #tpu.dot_dimension_numbers<[1], [0], [0], [1], [0, 0, 1, 1], [], []>} : vector<16x32xbf16>, vector<32x8xbf16>, vector<16x8xf32> -> vector<16x8xf32>
    %c0_30 = arith.constant 0 : index
    %c0_31 = arith.constant 0 : index
    %37 = vector.load %arg8[%c0_30, %c0_31] : memref<2x8xf32, #tpu.memory_space<vmem>>, vector<1x8xf32>
    %38 = vector.shape_cast %37 : vector<1x8xf32> to vector<8xf32>
    %39 = vector.shape_cast %38 : vector<8xf32> to vector<1x8xf32>
    %40 = vector.broadcast %39 : vector<1x8xf32> to vector<16x8xf32>
    %41 = arith.mulf %36, %40 : vector<16x8xf32>
    %c0_32 = arith.constant 0 : index
    %c0_33 = arith.constant 0 : index
    %42 = vector.load %arg9[%c0_32, %c0_33] : memref<2x8xf32, #tpu.memory_space<vmem>>, vector<1x8xf32>
    %43 = vector.shape_cast %42 : vector<1x8xf32> to vector<8xf32>
    %44 = vector.shape_cast %43 : vector<8xf32> to vector<1x8xf32>
    %45 = vector.broadcast %44 : vector<1x8xf32> to vector<16x8xf32>
    %46 = arith.addf %41, %45 : vector<16x8xf32>
    %cst_34 = arith.constant 0.000000e+00 : f32
    %47 = vector.broadcast %cst_34 : f32 to vector<16x8xf32>
    %48 = arith.maximumf %46, %47 : vector<16x8xf32>
    %49 = vector.broadcast %7 : f32 to vector<16x8xf32>
    %50 = arith.mulf %48, %49 : vector<16x8xf32>
    %51 = arith.truncf %50 : vector<16x8xf32> to vector<16x8xbf16>
    %c0_35 = arith.constant 0 : index
    %c0_36 = arith.constant 0 : index
    %c1_37 = arith.constant 1 : index
    %c0_38 = arith.constant 0 : index
    %52 = vector.load %arg16[%c0_35, %c0_36, %c1_37, %c0_38] : memref<2x10x18x8xbf16, #tpu.memory_space<vmem>>, vector<1x1x16x8xbf16>
    %53 = vector.shape_cast %52 : vector<1x1x16x8xbf16> to vector<16x8xbf16>
    %54 = vector.shape_cast %51 : vector<16x8xbf16> to vector<1x1x16x8xbf16>
    tpu.vector_store %arg16[%c0_35, %c0_36, %c1_37, %c0_38], %54 {strides = array<i32>} : memref<2x10x18x8xbf16, #tpu.memory_space<vmem>>, vector<1x1x16x8xbf16>,
    %c0_39 = arith.constant 0 : index
    %c0_40 = arith.constant 0 : index
    %c0_41 = arith.constant 0 : index
    %c0_42 = arith.constant 0 : index
    %c0_43 = arith.constant 0 : index
    %55 = vector.load %arg4[%c0_39, %c0_40, %c0_41, %c0_42, %c0_43] : memref<1x2x1x16x32xf32, #tpu.memory_space<vmem>>, vector<1x1x1x16x32xf32>
    %56 = vector.shape_cast %55 : vector<1x1x1x16x32xf32> to vector<16x32xf32>
    %57 = arith.truncf %56 : vector<16x32xf32> to vector<16x32xbf16>
    %cst_44 = arith.constant dense<0.000000e+00> : vector<16x8xf32>
    %58 = tpu.matmul %57, %0, %cst_44 {dimension_numbers = #tpu.dot_dimension_numbers<[1], [0], [0], [1], [0, 0, 1, 1], [], []>} : vector<16x32xbf16>, vector<32x8xbf16>, vector<16x8xf32> -> vector<16x8xf32>
    %c0_45 = arith.constant 0 : index
    %c0_46 = arith.constant 0 : index
    %59 = vector.load %arg8[%c0_45, %c0_46] : memref<2x8xf32, #tpu.memory_space<vmem>>, vector<1x8xf32>
    %60 = vector.shape_cast %59 : vector<1x8xf32> to vector<8xf32>
    %61 = vector.shape_cast %60 : vector<8xf32> to vector<1x8xf32>
    %62 = vector.broadcast %61 : vector<1x8xf32> to vector<16x8xf32>
    %63 = arith.mulf %58, %62 : vector<16x8xf32>
    %c0_47 = arith.constant 0 : index
    %c0_48 = arith.constant 0 : index
    %64 = vector.load %arg9[%c0_47, %c0_48] : memref<2x8xf32, #tpu.memory_space<vmem>>, vector<1x8xf32>
    %65 = vector.shape_cast %64 : vector<1x8xf32> to vector<8xf32>
    %66 = vector.shape_cast %65 : vector<8xf32> to vector<1x8xf32>
    %67 = vector.broadcast %66 : vector<1x8xf32> to vector<16x8xf32>
    %68 = arith.addf %63, %67 : vector<16x8xf32>
    %cst_49 = arith.constant 0.000000e+00 : f32
    %69 = vector.broadcast %cst_49 : f32 to vector<16x8xf32>
    %70 = arith.maximumf %68, %69 : vector<16x8xf32>
    %71 = vector.broadcast %10 : f32 to vector<16x8xf32>
    %72 = arith.mulf %70, %71 : vector<16x8xf32>
    %73 = arith.truncf %72 : vector<16x8xf32> to vector<16x8xbf16>
    %c0_50 = arith.constant 0 : index
    %c9 = arith.constant 9 : index
    %c1_51 = arith.constant 1 : index
    %c0_52 = arith.constant 0 : index
    %74 = vector.load %arg16[%c0_50, %c9, %c1_51, %c0_52] : memref<2x10x18x8xbf16, #tpu.memory_space<vmem>>, vector<1x1x16x8xbf16>
    %75 = vector.shape_cast %74 : vector<1x1x16x8xbf16> to vector<16x8xbf16>
    %76 = vector.shape_cast %73 : vector<16x8xbf16> to vector<1x1x16x8xbf16>
    tpu.vector_store %arg16[%c0_50, %c9, %c1_51, %c0_52], %76 {strides = array<i32>} : memref<2x10x18x8xbf16, #tpu.memory_space<vmem>>, vector<1x1x16x8xbf16>,
    %c0_53 = arith.constant 0 : index
    %c1_54 = arith.constant 1 : index
    %c0_55 = arith.constant 0 : index
    %c0_56 = arith.constant 0 : index
    %c0_57 = arith.constant 0 : index
    %77 = vector.load %arg2[%c0_53, %c1_54, %c0_55, %c0_56, %c0_57] : memref<1x2x8x16x32xf32, #tpu.memory_space<vmem>>, vector<1x1x8x16x32xf32>
    %78 = vector.shape_cast %77 : vector<1x1x8x16x32xf32> to vector<8x16x32xf32>
    %79 = vector.shape_cast %78 : vector<8x16x32xf32> to vector<128x32xf32>
    %80 = arith.truncf %79 : vector<128x32xf32> to vector<128x32xbf16>
    %cst_58 = arith.constant dense<0.000000e+00> : vector<128x8xf32>
    %81 = tpu.matmul %80, %0, %cst_58 {dimension_numbers = #tpu.dot_dimension_numbers<[1], [0], [0], [1], [0, 0, 1, 1], [], []>} : vector<128x32xbf16>, vector<32x8xbf16>, vector<128x8xf32> -> vector<128x8xf32>
    %c1_59 = arith.constant 1 : index
    %c0_60 = arith.constant 0 : index
    %82 = vector.load %arg8[%c1_59, %c0_60] : memref<2x8xf32, #tpu.memory_space<vmem>>, vector<1x8xf32>
    %83 = vector.shape_cast %82 : vector<1x8xf32> to vector<8xf32>
    %84 = vector.shape_cast %83 : vector<8xf32> to vector<1x8xf32>
    %85 = vector.broadcast %84 : vector<1x8xf32> to vector<128x8xf32>
    %86 = arith.mulf %81, %85 : vector<128x8xf32>
    %c1_61 = arith.constant 1 : index
    %c0_62 = arith.constant 0 : index
    %87 = vector.load %arg9[%c1_61, %c0_62] : memref<2x8xf32, #tpu.memory_space<vmem>>, vector<1x8xf32>
    %88 = vector.shape_cast %87 : vector<1x8xf32> to vector<8xf32>
    %89 = vector.shape_cast %88 : vector<8xf32> to vector<1x8xf32>
    %90 = vector.broadcast %89 : vector<1x8xf32> to vector<128x8xf32>
    %91 = arith.addf %86, %90 : vector<128x8xf32>
    %cst_63 = arith.constant 0.000000e+00 : f32
    %92 = vector.broadcast %cst_63 : f32 to vector<128x8xf32>
    %93 = arith.maximumf %91, %92 : vector<128x8xf32>
    %94 = vector.shape_cast %93 : vector<128x8xf32> to vector<8x16x8xf32>
    %95 = arith.truncf %94 : vector<8x16x8xf32> to vector<8x16x8xbf16>
    %c1_64 = arith.constant 1 : index
    %c1_65 = arith.constant 1 : index
    %c1_66 = arith.constant 1 : index
    %c0_67 = arith.constant 0 : index
    %96 = vector.load %arg16[%c1_64, %c1_65, %c1_66, %c0_67] : memref<2x10x18x8xbf16, #tpu.memory_space<vmem>>, vector<1x8x16x8xbf16>
    %97 = vector.shape_cast %96 : vector<1x8x16x8xbf16> to vector<8x16x8xbf16>
    %98 = vector.shape_cast %95 : vector<8x16x8xbf16> to vector<1x8x16x8xbf16>
    tpu.vector_store %arg16[%c1_64, %c1_65, %c1_66, %c0_67], %98 {strides = array<i32>} : memref<2x10x18x8xbf16, #tpu.memory_space<vmem>>, vector<1x8x16x8xbf16>,
    %c0_68 = arith.constant 0 : index
    %c1_69 = arith.constant 1 : index
    %c0_70 = arith.constant 0 : index
    %c0_71 = arith.constant 0 : index
    %c0_72 = arith.constant 0 : index
    %99 = vector.load %arg3[%c0_68, %c1_69, %c0_70, %c0_71, %c0_72] : memref<1x2x1x16x32xf32, #tpu.memory_space<vmem>>, vector<1x1x1x16x32xf32>
    %100 = vector.shape_cast %99 : vector<1x1x1x16x32xf32> to vector<16x32xf32>
    %101 = arith.truncf %100 : vector<16x32xf32> to vector<16x32xbf16>
    %cst_73 = arith.constant dense<0.000000e+00> : vector<16x8xf32>
    %102 = tpu.matmul %101, %0, %cst_73 {dimension_numbers = #tpu.dot_dimension_numbers<[1], [0], [0], [1], [0, 0, 1, 1], [], []>} : vector<16x32xbf16>, vector<32x8xbf16>, vector<16x8xf32> -> vector<16x8xf32>
    %c1_74 = arith.constant 1 : index
    %c0_75 = arith.constant 0 : index
    %103 = vector.load %arg8[%c1_74, %c0_75] : memref<2x8xf32, #tpu.memory_space<vmem>>, vector<1x8xf32>
    %104 = vector.shape_cast %103 : vector<1x8xf32> to vector<8xf32>
    %105 = vector.shape_cast %104 : vector<8xf32> to vector<1x8xf32>
    %106 = vector.broadcast %105 : vector<1x8xf32> to vector<16x8xf32>
    %107 = arith.mulf %102, %106 : vector<16x8xf32>
    %c1_76 = arith.constant 1 : index
    %c0_77 = arith.constant 0 : index
    %108 = vector.load %arg9[%c1_76, %c0_77] : memref<2x8xf32, #tpu.memory_space<vmem>>, vector<1x8xf32>
    %109 = vector.shape_cast %108 : vector<1x8xf32> to vector<8xf32>
    %110 = vector.shape_cast %109 : vector<8xf32> to vector<1x8xf32>
    %111 = vector.broadcast %110 : vector<1x8xf32> to vector<16x8xf32>
    %112 = arith.addf %107, %111 : vector<16x8xf32>
    %cst_78 = arith.constant 0.000000e+00 : f32
    %113 = vector.broadcast %cst_78 : f32 to vector<16x8xf32>
    %114 = arith.maximumf %112, %113 : vector<16x8xf32>
    %115 = vector.broadcast %7 : f32 to vector<16x8xf32>
    %116 = arith.mulf %114, %115 : vector<16x8xf32>
    %117 = arith.truncf %116 : vector<16x8xf32> to vector<16x8xbf16>
    %c1_79 = arith.constant 1 : index
    %c0_80 = arith.constant 0 : index
    %c1_81 = arith.constant 1 : index
    %c0_82 = arith.constant 0 : index
    %118 = vector.load %arg16[%c1_79, %c0_80, %c1_81, %c0_82] : memref<2x10x18x8xbf16, #tpu.memory_space<vmem>>, vector<1x1x16x8xbf16>
    %119 = vector.shape_cast %118 : vector<1x1x16x8xbf16> to vector<16x8xbf16>
    %120 = vector.shape_cast %117 : vector<16x8xbf16> to vector<1x1x16x8xbf16>
    tpu.vector_store %arg16[%c1_79, %c0_80, %c1_81, %c0_82], %120 {strides = array<i32>} : memref<2x10x18x8xbf16, #tpu.memory_space<vmem>>, vector<1x1x16x8xbf16>,
    %c0_83 = arith.constant 0 : index
    %c1_84 = arith.constant 1 : index
    %c0_85 = arith.constant 0 : index
    %c0_86 = arith.constant 0 : index
    %c0_87 = arith.constant 0 : index
    %121 = vector.load %arg4[%c0_83, %c1_84, %c0_85, %c0_86, %c0_87] : memref<1x2x1x16x32xf32, #tpu.memory_space<vmem>>, vector<1x1x1x16x32xf32>
    %122 = vector.shape_cast %121 : vector<1x1x1x16x32xf32> to vector<16x32xf32>
    %123 = arith.truncf %122 : vector<16x32xf32> to vector<16x32xbf16>
    %cst_88 = arith.constant dense<0.000000e+00> : vector<16x8xf32>
    %124 = tpu.matmul %123, %0, %cst_88 {dimension_numbers = #tpu.dot_dimension_numbers<[1], [0], [0], [1], [0, 0, 1, 1], [], []>} : vector<16x32xbf16>, vector<32x8xbf16>, vector<16x8xf32> -> vector<16x8xf32>
    %c1_89 = arith.constant 1 : index
    %c0_90 = arith.constant 0 : index
    %125 = vector.load %arg8[%c1_89, %c0_90] : memref<2x8xf32, #tpu.memory_space<vmem>>, vector<1x8xf32>
    %126 = vector.shape_cast %125 : vector<1x8xf32> to vector<8xf32>
    %127 = vector.shape_cast %126 : vector<8xf32> to vector<1x8xf32>
    %128 = vector.broadcast %127 : vector<1x8xf32> to vector<16x8xf32>
    %129 = arith.mulf %124, %128 : vector<16x8xf32>
    %c1_91 = arith.constant 1 : index
    %c0_92 = arith.constant 0 : index
    %130 = vector.load %arg9[%c1_91, %c0_92] : memref<2x8xf32, #tpu.memory_space<vmem>>, vector<1x8xf32>
    %131 = vector.shape_cast %130 : vector<1x8xf32> to vector<8xf32>
    %132 = vector.shape_cast %131 : vector<8xf32> to vector<1x8xf32>
    %133 = vector.broadcast %132 : vector<1x8xf32> to vector<16x8xf32>
    %134 = arith.addf %129, %133 : vector<16x8xf32>
    %cst_93 = arith.constant 0.000000e+00 : f32
    %135 = vector.broadcast %cst_93 : f32 to vector<16x8xf32>
    %136 = arith.maximumf %134, %135 : vector<16x8xf32>
    %137 = vector.broadcast %10 : f32 to vector<16x8xf32>
    %138 = arith.mulf %136, %137 : vector<16x8xf32>
    %139 = arith.truncf %138 : vector<16x8xf32> to vector<16x8xbf16>
    %c1_94 = arith.constant 1 : index
    %c9_95 = arith.constant 9 : index
    %c1_96 = arith.constant 1 : index
    %c0_97 = arith.constant 0 : index
    %140 = vector.load %arg16[%c1_94, %c9_95, %c1_96, %c0_97] : memref<2x10x18x8xbf16, #tpu.memory_space<vmem>>, vector<1x1x16x8xbf16>
    %141 = vector.shape_cast %140 : vector<1x1x16x8xbf16> to vector<16x8xbf16>
    %142 = vector.shape_cast %139 : vector<16x8xbf16> to vector<1x1x16x8xbf16>
    tpu.vector_store %arg16[%c1_94, %c9_95, %c1_96, %c0_97], %142 {strides = array<i32>} : memref<2x10x18x8xbf16, #tpu.memory_space<vmem>>, vector<1x1x16x8xbf16>,
    %cst_98 = arith.constant 0.000000e+00 : f32
    %143 = vector.broadcast %cst_98 : f32 to vector<128x8xf32>
    %c0_99 = arith.constant 0 : index
    %c0_100 = arith.constant 0 : index
    %c0_101 = arith.constant 0 : index
    %c0_102 = arith.constant 0 : index
    %144 = vector.load %arg16[%c0_99, %c0_100, %c0_101, %c0_102] : memref<2x10x18x8xbf16, #tpu.memory_space<vmem>>, vector<1x8x16x8xbf16>
    %145 = vector.shape_cast %144 : vector<1x8x16x8xbf16> to vector<8x16x8xbf16>
    %c0_103 = arith.constant 0 : index
    %c0_104 = arith.constant 0 : index
    %c1_105 = arith.constant 1 : index
    %c0_106 = arith.constant 0 : index
    %146 = vector.load %arg16[%c0_103, %c0_104, %c1_105, %c0_106] : memref<2x10x18x8xbf16, #tpu.memory_space<vmem>>, vector<1x8x16x8xbf16>
    %147 = vector.shape_cast %146 : vector<1x8x16x8xbf16> to vector<8x16x8xbf16>
    %c0_107 = arith.constant 0 : index
    %c0_108 = arith.constant 0 : index
    %c2 = arith.constant 2 : index
    %c0_109 = arith.constant 0 : index
    %148 = vector.load %arg16[%c0_107, %c0_108, %c2, %c0_109] : memref<2x10x18x8xbf16, #tpu.memory_space<vmem>>, vector<1x8x16x8xbf16>
    %149 = vector.shape_cast %148 : vector<1x8x16x8xbf16> to vector<8x16x8xbf16>
    %150 = tpu.concatenate %145, %147, %149 in 2 : vector<8x16x8xbf16>, vector<8x16x8xbf16>, vector<8x16x8xbf16> -> vector<8x16x24xbf16>
    %151 = vector.shape_cast %150 : vector<8x16x24xbf16> to vector<128x24xbf16>
    %c0_110 = arith.constant 0 : index
    %c0_111 = arith.constant 0 : index
    %c0_112 = arith.constant 0 : index
    %152 = vector.load %arg6[%c0_110, %c0_111, %c0_112] : memref<3x24x8xbf16, #tpu.memory_space<vmem>>, vector<1x24x8xbf16>
    %153 = vector.shape_cast %152 : vector<1x24x8xbf16> to vector<24x8xbf16>
    %cst_113 = arith.constant dense<0.000000e+00> : vector<128x8xf32>
    %154 = tpu.matmul %151, %153, %cst_113 {dimension_numbers = #tpu.dot_dimension_numbers<[1], [0], [0], [1], [0, 0, 1, 1], [], []>} : vector<128x24xbf16>, vector<24x8xbf16>, vector<128x8xf32> -> vector<128x8xf32>
    %155 = arith.addf %143, %154 : vector<128x8xf32>
    %c0_114 = arith.constant 0 : index
    %c1_115 = arith.constant 1 : index
    %c0_116 = arith.constant 0 : index
    %c0_117 = arith.constant 0 : index
    %156 = vector.load %arg16[%c0_114, %c1_115, %c0_116, %c0_117] : memref<2x10x18x8xbf16, #tpu.memory_space<vmem>>, vector<1x8x16x8xbf16>
    %157 = vector.shape_cast %156 : vector<1x8x16x8xbf16> to vector<8x16x8xbf16>
    %c0_118 = arith.constant 0 : index
    %c1_119 = arith.constant 1 : index
    %c1_120 = arith.constant 1 : index
    %c0_121 = arith.constant 0 : index
    %158 = vector.load %arg16[%c0_118, %c1_119, %c1_120, %c0_121] : memref<2x10x18x8xbf16, #tpu.memory_space<vmem>>, vector<1x8x16x8xbf16>
    %159 = vector.shape_cast %158 : vector<1x8x16x8xbf16> to vector<8x16x8xbf16>
    %c0_122 = arith.constant 0 : index
    %c1_123 = arith.constant 1 : index
    %c2_124 = arith.constant 2 : index
    %c0_125 = arith.constant 0 : index
    %160 = vector.load %arg16[%c0_122, %c1_123, %c2_124, %c0_125] : memref<2x10x18x8xbf16, #tpu.memory_space<vmem>>, vector<1x8x16x8xbf16>
    %161 = vector.shape_cast %160 : vector<1x8x16x8xbf16> to vector<8x16x8xbf16>
    %162 = tpu.concatenate %157, %159, %161 in 2 : vector<8x16x8xbf16>, vector<8x16x8xbf16>, vector<8x16x8xbf16> -> vector<8x16x24xbf16>
    %163 = vector.shape_cast %162 : vector<8x16x24xbf16> to vector<128x24xbf16>
    %c1_126 = arith.constant 1 : index
    %c0_127 = arith.constant 0 : index
    %c0_128 = arith.constant 0 : index
    %164 = vector.load %arg6[%c1_126, %c0_127, %c0_128] : memref<3x24x8xbf16, #tpu.memory_space<vmem>>, vector<1x24x8xbf16>
    %165 = vector.shape_cast %164 : vector<1x24x8xbf16> to vector<24x8xbf16>
    %cst_129 = arith.constant dense<0.000000e+00> : vector<128x8xf32>
    %166 = tpu.matmul %163, %165, %cst_129 {dimension_numbers = #tpu.dot_dimension_numbers<[1], [0], [0], [1], [0, 0, 1, 1], [], []>} : vector<128x24xbf16>, vector<24x8xbf16>, vector<128x8xf32> -> vector<128x8xf32>
    %167 = arith.addf %155, %166 : vector<128x8xf32>
    %c0_130 = arith.constant 0 : index
    %c2_131 = arith.constant 2 : index
    %c0_132 = arith.constant 0 : index
    %c0_133 = arith.constant 0 : index
    %168 = vector.load %arg16[%c0_130, %c2_131, %c0_132, %c0_133] : memref<2x10x18x8xbf16, #tpu.memory_space<vmem>>, vector<1x8x16x8xbf16>
    %169 = vector.shape_cast %168 : vector<1x8x16x8xbf16> to vector<8x16x8xbf16>
    %c0_134 = arith.constant 0 : index
    %c2_135 = arith.constant 2 : index
    %c1_136 = arith.constant 1 : index
    %c0_137 = arith.constant 0 : index
    %170 = vector.load %arg16[%c0_134, %c2_135, %c1_136, %c0_137] : memref<2x10x18x8xbf16, #tpu.memory_space<vmem>>, vector<1x8x16x8xbf16>
    %171 = vector.shape_cast %170 : vector<1x8x16x8xbf16> to vector<8x16x8xbf16>
    %c0_138 = arith.constant 0 : index
    %c2_139 = arith.constant 2 : index
    %c2_140 = arith.constant 2 : index
    %c0_141 = arith.constant 0 : index
    %172 = vector.load %arg16[%c0_138, %c2_139, %c2_140, %c0_141] : memref<2x10x18x8xbf16, #tpu.memory_space<vmem>>, vector<1x8x16x8xbf16>
    %173 = vector.shape_cast %172 : vector<1x8x16x8xbf16> to vector<8x16x8xbf16>
    %174 = tpu.concatenate %169, %171, %173 in 2 : vector<8x16x8xbf16>, vector<8x16x8xbf16>, vector<8x16x8xbf16> -> vector<8x16x24xbf16>
    %175 = vector.shape_cast %174 : vector<8x16x24xbf16> to vector<128x24xbf16>
    %c2_142 = arith.constant 2 : index
    %c0_143 = arith.constant 0 : index
    %c0_144 = arith.constant 0 : index
    %176 = vector.load %arg6[%c2_142, %c0_143, %c0_144] : memref<3x24x8xbf16, #tpu.memory_space<vmem>>, vector<1x24x8xbf16>
    %177 = vector.shape_cast %176 : vector<1x24x8xbf16> to vector<24x8xbf16>
    %cst_145 = arith.constant dense<0.000000e+00> : vector<128x8xf32>
    %178 = tpu.matmul %175, %177, %cst_145 {dimension_numbers = #tpu.dot_dimension_numbers<[1], [0], [0], [1], [0, 0, 1, 1], [], []>} : vector<128x24xbf16>, vector<24x8xbf16>, vector<128x8xf32> -> vector<128x8xf32>
    %179 = arith.addf %167, %178 : vector<128x8xf32>
    %c0_146 = arith.constant 0 : index
    %c0_147 = arith.constant 0 : index
    %180 = vector.load %arg10[%c0_146, %c0_147] : memref<2x8xf32, #tpu.memory_space<vmem>>, vector<1x8xf32>
    %181 = vector.shape_cast %180 : vector<1x8xf32> to vector<8xf32>
    %182 = vector.shape_cast %181 : vector<8xf32> to vector<1x8xf32>
    %183 = vector.broadcast %182 : vector<1x8xf32> to vector<128x8xf32>
    %184 = arith.mulf %179, %183 : vector<128x8xf32>
    %c0_148 = arith.constant 0 : index
    %c0_149 = arith.constant 0 : index
    %185 = vector.load %arg11[%c0_148, %c0_149] : memref<2x8xf32, #tpu.memory_space<vmem>>, vector<1x8xf32>
    %186 = vector.shape_cast %185 : vector<1x8xf32> to vector<8xf32>
    %187 = vector.shape_cast %186 : vector<8xf32> to vector<1x8xf32>
    %188 = vector.broadcast %187 : vector<1x8xf32> to vector<128x8xf32>
    %189 = arith.addf %184, %188 : vector<128x8xf32>
    %cst_150 = arith.constant 0.000000e+00 : f32
    %190 = vector.broadcast %cst_150 : f32 to vector<128x8xf32>
    %c1_151 = arith.constant 1 : index
    %c0_152 = arith.constant 0 : index
    %c0_153 = arith.constant 0 : index
    %c0_154 = arith.constant 0 : index
    %191 = vector.load %arg16[%c1_151, %c0_152, %c0_153, %c0_154] : memref<2x10x18x8xbf16, #tpu.memory_space<vmem>>, vector<1x8x16x8xbf16>
    %192 = vector.shape_cast %191 : vector<1x8x16x8xbf16> to vector<8x16x8xbf16>
    %c1_155 = arith.constant 1 : index
    %c0_156 = arith.constant 0 : index
    %c1_157 = arith.constant 1 : index
    %c0_158 = arith.constant 0 : index
    %193 = vector.load %arg16[%c1_155, %c0_156, %c1_157, %c0_158] : memref<2x10x18x8xbf16, #tpu.memory_space<vmem>>, vector<1x8x16x8xbf16>
    %194 = vector.shape_cast %193 : vector<1x8x16x8xbf16> to vector<8x16x8xbf16>
    %c1_159 = arith.constant 1 : index
    %c0_160 = arith.constant 0 : index
    %c2_161 = arith.constant 2 : index
    %c0_162 = arith.constant 0 : index
    %195 = vector.load %arg16[%c1_159, %c0_160, %c2_161, %c0_162] : memref<2x10x18x8xbf16, #tpu.memory_space<vmem>>, vector<1x8x16x8xbf16>
    %196 = vector.shape_cast %195 : vector<1x8x16x8xbf16> to vector<8x16x8xbf16>
    %197 = tpu.concatenate %192, %194, %196 in 2 : vector<8x16x8xbf16>, vector<8x16x8xbf16>, vector<8x16x8xbf16> -> vector<8x16x24xbf16>
    %198 = vector.shape_cast %197 : vector<8x16x24xbf16> to vector<128x24xbf16>
    %c0_163 = arith.constant 0 : index
    %c0_164 = arith.constant 0 : index
    %c0_165 = arith.constant 0 : index
    %199 = vector.load %arg6[%c0_163, %c0_164, %c0_165] : memref<3x24x8xbf16, #tpu.memory_space<vmem>>, vector<1x24x8xbf16>
    %200 = vector.shape_cast %199 : vector<1x24x8xbf16> to vector<24x8xbf16>
    %cst_166 = arith.constant dense<0.000000e+00> : vector<128x8xf32>
    %201 = tpu.matmul %198, %200, %cst_166 {dimension_numbers = #tpu.dot_dimension_numbers<[1], [0], [0], [1], [0, 0, 1, 1], [], []>} : vector<128x24xbf16>, vector<24x8xbf16>, vector<128x8xf32> -> vector<128x8xf32>
    %202 = arith.addf %190, %201 : vector<128x8xf32>
    %c1_167 = arith.constant 1 : index
    %c1_168 = arith.constant 1 : index
    %c0_169 = arith.constant 0 : index
    %c0_170 = arith.constant 0 : index
    %203 = vector.load %arg16[%c1_167, %c1_168, %c0_169, %c0_170] : memref<2x10x18x8xbf16, #tpu.memory_space<vmem>>, vector<1x8x16x8xbf16>
    %204 = vector.shape_cast %203 : vector<1x8x16x8xbf16> to vector<8x16x8xbf16>
    %c1_171 = arith.constant 1 : index
    %c1_172 = arith.constant 1 : index
    %c1_173 = arith.constant 1 : index
    %c0_174 = arith.constant 0 : index
    %205 = vector.load %arg16[%c1_171, %c1_172, %c1_173, %c0_174] : memref<2x10x18x8xbf16, #tpu.memory_space<vmem>>, vector<1x8x16x8xbf16>
    %206 = vector.shape_cast %205 : vector<1x8x16x8xbf16> to vector<8x16x8xbf16>
    %c1_175 = arith.constant 1 : index
    %c1_176 = arith.constant 1 : index
    %c2_177 = arith.constant 2 : index
    %c0_178 = arith.constant 0 : index
    %207 = vector.load %arg16[%c1_175, %c1_176, %c2_177, %c0_178] : memref<2x10x18x8xbf16, #tpu.memory_space<vmem>>, vector<1x8x16x8xbf16>
    %208 = vector.shape_cast %207 : vector<1x8x16x8xbf16> to vector<8x16x8xbf16>
    %209 = tpu.concatenate %204, %206, %208 in 2 : vector<8x16x8xbf16>, vector<8x16x8xbf16>, vector<8x16x8xbf16> -> vector<8x16x24xbf16>
    %210 = vector.shape_cast %209 : vector<8x16x24xbf16> to vector<128x24xbf16>
    %c1_179 = arith.constant 1 : index
    %c0_180 = arith.constant 0 : index
    %c0_181 = arith.constant 0 : index
    %211 = vector.load %arg6[%c1_179, %c0_180, %c0_181] : memref<3x24x8xbf16, #tpu.memory_space<vmem>>, vector<1x24x8xbf16>
    %212 = vector.shape_cast %211 : vector<1x24x8xbf16> to vector<24x8xbf16>
    %cst_182 = arith.constant dense<0.000000e+00> : vector<128x8xf32>
    %213 = tpu.matmul %210, %212, %cst_182 {dimension_numbers = #tpu.dot_dimension_numbers<[1], [0], [0], [1], [0, 0, 1, 1], [], []>} : vector<128x24xbf16>, vector<24x8xbf16>, vector<128x8xf32> -> vector<128x8xf32>
    %214 = arith.addf %202, %213 : vector<128x8xf32>
    %c1_183 = arith.constant 1 : index
    %c2_184 = arith.constant 2 : index
    %c0_185 = arith.constant 0 : index
    %c0_186 = arith.constant 0 : index
    %215 = vector.load %arg16[%c1_183, %c2_184, %c0_185, %c0_186] : memref<2x10x18x8xbf16, #tpu.memory_space<vmem>>, vector<1x8x16x8xbf16>
    %216 = vector.shape_cast %215 : vector<1x8x16x8xbf16> to vector<8x16x8xbf16>
    %c1_187 = arith.constant 1 : index
    %c2_188 = arith.constant 2 : index
    %c1_189 = arith.constant 1 : index
    %c0_190 = arith.constant 0 : index
    %217 = vector.load %arg16[%c1_187, %c2_188, %c1_189, %c0_190] : memref<2x10x18x8xbf16, #tpu.memory_space<vmem>>, vector<1x8x16x8xbf16>
    %218 = vector.shape_cast %217 : vector<1x8x16x8xbf16> to vector<8x16x8xbf16>
    %c1_191 = arith.constant 1 : index
    %c2_192 = arith.constant 2 : index
    %c2_193 = arith.constant 2 : index
    %c0_194 = arith.constant 0 : index
    %219 = vector.load %arg16[%c1_191, %c2_192, %c2_193, %c0_194] : memref<2x10x18x8xbf16, #tpu.memory_space<vmem>>, vector<1x8x16x8xbf16>
    %220 = vector.shape_cast %219 : vector<1x8x16x8xbf16> to vector<8x16x8xbf16>
    %221 = tpu.concatenate %216, %218, %220 in 2 : vector<8x16x8xbf16>, vector<8x16x8xbf16>, vector<8x16x8xbf16> -> vector<8x16x24xbf16>
    %222 = vector.shape_cast %221 : vector<8x16x24xbf16> to vector<128x24xbf16>
    %c2_195 = arith.constant 2 : index
    %c0_196 = arith.constant 0 : index
    %c0_197 = arith.constant 0 : index
    %223 = vector.load %arg6[%c2_195, %c0_196, %c0_197] : memref<3x24x8xbf16, #tpu.memory_space<vmem>>, vector<1x24x8xbf16>
    %224 = vector.shape_cast %223 : vector<1x24x8xbf16> to vector<24x8xbf16>
    %cst_198 = arith.constant dense<0.000000e+00> : vector<128x8xf32>
    %225 = tpu.matmul %222, %224, %cst_198 {dimension_numbers = #tpu.dot_dimension_numbers<[1], [0], [0], [1], [0, 0, 1, 1], [], []>} : vector<128x24xbf16>, vector<24x8xbf16>, vector<128x8xf32> -> vector<128x8xf32>
    %226 = arith.addf %214, %225 : vector<128x8xf32>
    %c1_199 = arith.constant 1 : index
    %c0_200 = arith.constant 0 : index
    %227 = vector.load %arg10[%c1_199, %c0_200] : memref<2x8xf32, #tpu.memory_space<vmem>>, vector<1x8xf32>
    %228 = vector.shape_cast %227 : vector<1x8xf32> to vector<8xf32>
    %229 = vector.shape_cast %228 : vector<8xf32> to vector<1x8xf32>
    %230 = vector.broadcast %229 : vector<1x8xf32> to vector<128x8xf32>
    %231 = arith.mulf %226, %230 : vector<128x8xf32>
    %c1_201 = arith.constant 1 : index
    %c0_202 = arith.constant 0 : index
    %232 = vector.load %arg11[%c1_201, %c0_202] : memref<2x8xf32, #tpu.memory_space<vmem>>, vector<1x8xf32>
    %233 = vector.shape_cast %232 : vector<1x8xf32> to vector<8xf32>
    %234 = vector.shape_cast %233 : vector<8xf32> to vector<1x8xf32>
    %235 = vector.broadcast %234 : vector<1x8xf32> to vector<128x8xf32>
    %236 = arith.addf %231, %235 : vector<128x8xf32>
    %c0_203 = arith.constant 0 : index
    %c0_204 = arith.constant 0 : index
    %237 = vector.load %arg12[%c0_203, %c0_204] : memref<2x8xf32, #tpu.memory_space<vmem>>, vector<1x8xf32>
    %238 = vector.shape_cast %237 : vector<1x8xf32> to vector<8xf32>
    %239 = math.absf %238 : vector<8xf32>
    %cst_205 = arith.constant 5.000000e-01 : f32
    %240 = vector.broadcast %cst_205 : f32 to vector<8xf32>
    %241 = arith.cmpf oge, %239, %240 : vector<8xf32>
    %242 = vector.shape_cast %241 : vector<8xi1> to vector<1x8xi1>
    %243 = vector.broadcast %242 : vector<1x8xi1> to vector<128x8xi1>
    %244 = arith.select %243, %189, %236 : vector<128x8xi1>, vector<128x8xf32>
    %cst_206 = arith.constant 0.000000e+00 : f32
    %245 = vector.broadcast %cst_206 : f32 to vector<128x8xf32>
    %246 = arith.maximumf %244, %245 : vector<128x8xf32>
    %247 = arith.truncf %246 : vector<128x8xf32> to vector<128x8xbf16>
    %cst_207 = arith.constant dense<0.000000e+00> : vector<128x32xf32>
    %248 = tpu.matmul %247, %1, %cst_207 {dimension_numbers = #tpu.dot_dimension_numbers<[1], [0], [0], [1], [0, 0, 1, 1], [], []>} : vector<128x8xbf16>, vector<8x32xbf16>, vector<128x32xf32> -> vector<128x32xf32>
    %c0_208 = arith.constant 0 : index
    %c0_209 = arith.constant 0 : index
    %249 = vector.load %arg13[%c0_208, %c0_209] : memref<2x32xf32, #tpu.memory_space<vmem>>, vector<1x32xf32>
    %250 = vector.shape_cast %249 : vector<1x32xf32> to vector<32xf32>
    %251 = vector.shape_cast %250 : vector<32xf32> to vector<1x32xf32>
    %252 = vector.broadcast %251 : vector<1x32xf32> to vector<128x32xf32>
    %253 = arith.mulf %248, %252 : vector<128x32xf32>
    %c0_210 = arith.constant 0 : index
    %c0_211 = arith.constant 0 : index
    %254 = vector.load %arg14[%c0_210, %c0_211] : memref<2x32xf32, #tpu.memory_space<vmem>>, vector<1x32xf32>
    %255 = vector.shape_cast %254 : vector<1x32xf32> to vector<32xf32>
    %256 = vector.shape_cast %255 : vector<32xf32> to vector<1x32xf32>
    %257 = vector.broadcast %256 : vector<1x32xf32> to vector<128x32xf32>
    %258 = arith.addf %253, %257 : vector<128x32xf32>
    %c0_212 = arith.constant 0 : index
    %c0_213 = arith.constant 0 : index
    %c0_214 = arith.constant 0 : index
    %c0_215 = arith.constant 0 : index
    %c0_216 = arith.constant 0 : index
    %259 = vector.load %arg2[%c0_212, %c0_213, %c0_214, %c0_215, %c0_216] : memref<1x2x8x16x32xf32, #tpu.memory_space<vmem>>, vector<1x1x8x16x32xf32>
    %260 = vector.shape_cast %259 : vector<1x1x8x16x32xf32> to vector<8x16x32xf32>
    %261 = vector.shape_cast %260 : vector<8x16x32xf32> to vector<128x32xf32>
    %262 = arith.addf %258, %261 : vector<128x32xf32>
    %cst_217 = arith.constant 0.000000e+00 : f32
    %263 = vector.broadcast %cst_217 : f32 to vector<128x32xf32>
    %264 = arith.maximumf %262, %263 : vector<128x32xf32>
    %265 = vector.shape_cast %264 : vector<128x32xf32> to vector<8x16x32xf32>
    %c0_218 = arith.constant 0 : index
    %c0_219 = arith.constant 0 : index
    %c0_220 = arith.constant 0 : index
    %c0_221 = arith.constant 0 : index
    %c0_222 = arith.constant 0 : index
    %266 = vector.load %arg15[%c0_218, %c0_219, %c0_220, %c0_221, %c0_222] : memref<1x2x8x16x32xf32, #tpu.memory_space<vmem>>, vector<1x1x8x16x32xf32>
    %267 = vector.shape_cast %266 : vector<1x1x8x16x32xf32> to vector<8x16x32xf32>
    %268 = vector.shape_cast %265 : vector<8x16x32xf32> to vector<1x1x8x16x32xf32>
    tpu.vector_store %arg15[%c0_218, %c0_219, %c0_220, %c0_221, %c0_222], %268 {strides = array<i32>} : memref<1x2x8x16x32xf32, #tpu.memory_space<vmem>>, vector<1x1x8x16x32xf32>,
    %c1_223 = arith.constant 1 : index
    %c0_224 = arith.constant 0 : index
    %269 = vector.load %arg12[%c1_223, %c0_224] : memref<2x8xf32, #tpu.memory_space<vmem>>, vector<1x8xf32>
    %270 = vector.shape_cast %269 : vector<1x8xf32> to vector<8xf32>
    %271 = math.absf %270 : vector<8xf32>
    %cst_225 = arith.constant 5.000000e-01 : f32
    %272 = vector.broadcast %cst_225 : f32 to vector<8xf32>
    %273 = arith.cmpf oge, %271, %272 : vector<8xf32>
    %274 = vector.shape_cast %273 : vector<8xi1> to vector<1x8xi1>
    %275 = vector.broadcast %274 : vector<1x8xi1> to vector<128x8xi1>
    %276 = arith.select %275, %236, %189 : vector<128x8xi1>, vector<128x8xf32>
    %cst_226 = arith.constant 0.000000e+00 : f32
    %277 = vector.broadcast %cst_226 : f32 to vector<128x8xf32>
    %278 = arith.maximumf %276, %277 : vector<128x8xf32>
    %279 = arith.truncf %278 : vector<128x8xf32> to vector<128x8xbf16>
    %cst_227 = arith.constant dense<0.000000e+00> : vector<128x32xf32>
    %280 = tpu.matmul %279, %1, %cst_227 {dimension_numbers = #tpu.dot_dimension_numbers<[1], [0], [0], [1], [0, 0, 1, 1], [], []>} : vector<128x8xbf16>, vector<8x32xbf16>, vector<128x32xf32> -> vector<128x32xf32>
    %c1_228 = arith.constant 1 : index
    %c0_229 = arith.constant 0 : index
    %281 = vector.load %arg13[%c1_228, %c0_229] : memref<2x32xf32, #tpu.memory_space<vmem>>, vector<1x32xf32>
    %282 = vector.shape_cast %281 : vector<1x32xf32> to vector<32xf32>
    %283 = vector.shape_cast %282 : vector<32xf32> to vector<1x32xf32>
    %284 = vector.broadcast %283 : vector<1x32xf32> to vector<128x32xf32>
    %285 = arith.mulf %280, %284 : vector<128x32xf32>
    %c1_230 = arith.constant 1 : index
    %c0_231 = arith.constant 0 : index
    %286 = vector.load %arg14[%c1_230, %c0_231] : memref<2x32xf32, #tpu.memory_space<vmem>>, vector<1x32xf32>
    %287 = vector.shape_cast %286 : vector<1x32xf32> to vector<32xf32>
    %288 = vector.shape_cast %287 : vector<32xf32> to vector<1x32xf32>
    %289 = vector.broadcast %288 : vector<1x32xf32> to vector<128x32xf32>
    %290 = arith.addf %285, %289 : vector<128x32xf32>
    %c0_232 = arith.constant 0 : index
    %c1_233 = arith.constant 1 : index
    %c0_234 = arith.constant 0 : index
    %c0_235 = arith.constant 0 : index
    %c0_236 = arith.constant 0 : index
    %291 = vector.load %arg2[%c0_232, %c1_233, %c0_234, %c0_235, %c0_236] : memref<1x2x8x16x32xf32, #tpu.memory_space<vmem>>, vector<1x1x8x16x32xf32>
    %292 = vector.shape_cast %291 : vector<1x1x8x16x32xf32> to vector<8x16x32xf32>
    %293 = vector.shape_cast %292 : vector<8x16x32xf32> to vector<128x32xf32>
    %294 = arith.addf %290, %293 : vector<128x32xf32>
    %cst_237 = arith.constant 0.000000e+00 : f32
    %295 = vector.broadcast %cst_237 : f32 to vector<128x32xf32>
    %296 = arith.maximumf %294, %295 : vector<128x32xf32>
    %297 = vector.shape_cast %296 : vector<128x32xf32> to vector<8x16x32xf32>
    %c0_238 = arith.constant 0 : index
    %c1_239 = arith.constant 1 : index
    %c0_240 = arith.constant 0 : index
    %c0_241 = arith.constant 0 : index
    %c0_242 = arith.constant 0 : index
    %298 = vector.load %arg15[%c0_238, %c1_239, %c0_240, %c0_241, %c0_242] : memref<1x2x8x16x32xf32, #tpu.memory_space<vmem>>, vector<1x1x8x16x32xf32>
    %299 = vector.shape_cast %298 : vector<1x1x8x16x32xf32> to vector<8x16x32xf32>
    %300 = vector.shape_cast %297 : vector<8x16x32xf32> to vector<1x1x8x16x32xf32>
    tpu.vector_store %arg15[%c0_238, %c1_239, %c0_240, %c0_241, %c0_242], %300 {strides = array<i32>} : memref<1x2x8x16x32xf32, #tpu.memory_space<vmem>>, vector<1x1x8x16x32xf32>,
    return
  }
  func.func @transform_0(%arg0: i32, %arg1: i32) -> (i32, i32, i32, i32, i32) {
    %c0_i32 = arith.constant 0 : i32
    %c0_i32_0 = arith.constant 0 : i32
    %c0_i32_1 = arith.constant 0 : i32
    %c0_i32_2 = arith.constant 0 : i32
    return %arg0, %c0_i32, %arg1, %c0_i32_0, %c0_i32_1 : i32, i32, i32, i32, i32
  }
  func.func @transform_1(%arg0: i32, %arg1: i32) -> (i32, i32, i32, i32, i32) {
    %c8_i32 = arith.constant 8 : i32
    %0 = arith.muli %arg1, %c8_i32 : i32
    %c1_i32 = arith.constant 1 : i32
    %1 = arith.subi %0, %c1_i32 : i32
    %c0_i32 = arith.constant 0 : i32
    %2 = arith.maxsi %1, %c0_i32 : i32
    %c0_i32_0 = arith.constant 0 : i32
    %c0_i32_1 = arith.constant 0 : i32
    %c0_i32_2 = arith.constant 0 : i32
    %c0_i32_3 = arith.constant 0 : i32
    return %arg0, %c0_i32_0, %2, %c0_i32_1, %c0_i32_2 : i32, i32, i32, i32, i32
  }
  func.func @transform_2(%arg0: i32, %arg1: i32) -> (i32, i32, i32, i32, i32) {
    %c8_i32 = arith.constant 8 : i32
    %0 = arith.muli %arg1, %c8_i32 : i32
    %c8_i32_0 = arith.constant 8 : i32
    %1 = arith.addi %0, %c8_i32_0 : i32
    %c15_i32 = arith.constant 15 : i32
    %2 = arith.minsi %1, %c15_i32 : i32
    %c0_i32 = arith.constant 0 : i32
    %c0_i32_1 = arith.constant 0 : i32
    %c0_i32_2 = arith.constant 0 : i32
    %c0_i32_3 = arith.constant 0 : i32
    return %arg0, %c0_i32, %2, %c0_i32_1, %c0_i32_2 : i32, i32, i32, i32, i32
  }
  func.func @transform_3(%arg0: i32, %arg1: i32) -> (i32, i32) {
    %c0_i32 = arith.constant 0 : i32
    %c0_i32_0 = arith.constant 0 : i32
    %c0_i32_1 = arith.constant 0 : i32
    return %c0_i32, %c0_i32_0 : i32, i32
  }
  func.func @transform_4(%arg0: i32, %arg1: i32) -> (i32, i32, i32) {
    %c0_i32 = arith.constant 0 : i32
    %c0_i32_0 = arith.constant 0 : i32
    %c0_i32_1 = arith.constant 0 : i32
    %c0_i32_2 = arith.constant 0 : i32
    return %c0_i32, %c0_i32_0, %c0_i32_1 : i32, i32, i32
  }
  func.func @transform_5(%arg0: i32, %arg1: i32) -> (i32, i32) {
    %c0_i32 = arith.constant 0 : i32
    %c0_i32_0 = arith.constant 0 : i32
    %c0_i32_1 = arith.constant 0 : i32
    return %c0_i32, %c0_i32_0 : i32, i32
  }
  func.func @transform_6(%arg0: i32, %arg1: i32) -> (i32, i32) {
    %c0_i32 = arith.constant 0 : i32
    %c0_i32_0 = arith.constant 0 : i32
    %c0_i32_1 = arith.constant 0 : i32
    return %c0_i32, %c0_i32_0 : i32, i32
  }
  func.func @transform_7(%arg0: i32, %arg1: i32) -> (i32, i32) {
    %c0_i32 = arith.constant 0 : i32
    %c0_i32_0 = arith.constant 0 : i32
    %c0_i32_1 = arith.constant 0 : i32
    return %c0_i32, %c0_i32_0 : i32, i32
  }
  func.func @transform_8(%arg0: i32, %arg1: i32) -> (i32, i32) {
    %c0_i32 = arith.constant 0 : i32
    %c0_i32_0 = arith.constant 0 : i32
    %c0_i32_1 = arith.constant 0 : i32
    return %c0_i32, %c0_i32_0 : i32, i32
  }
  func.func @transform_9(%arg0: i32, %arg1: i32) -> (i32, i32) {
    %c0_i32 = arith.constant 0 : i32
    %c0_i32_0 = arith.constant 0 : i32
    %c0_i32_1 = arith.constant 0 : i32
    return %c0_i32, %c0_i32_0 : i32, i32
  }
  func.func @transform_10(%arg0: i32, %arg1: i32) -> (i32, i32) {
    %c0_i32 = arith.constant 0 : i32
    %c0_i32_0 = arith.constant 0 : i32
    %c0_i32_1 = arith.constant 0 : i32
    return %c0_i32, %c0_i32_0 : i32, i32
  }
  func.func @transform_11(%arg0: i32, %arg1: i32) -> (i32, i32) {
    %c0_i32 = arith.constant 0 : i32
    %c0_i32_0 = arith.constant 0 : i32
    %c0_i32_1 = arith.constant 0 : i32
    return %c0_i32, %c0_i32_0 : i32, i32
  }
  func.func @transform_12(%arg0: i32, %arg1: i32) -> (i32, i32) {
    %c0_i32 = arith.constant 0 : i32
    %c0_i32_0 = arith.constant 0 : i32
    %c0_i32_1 = arith.constant 0 : i32
    return %c0_i32, %c0_i32_0 : i32, i32
  }
  func.func @transform_13(%arg0: i32, %arg1: i32) -> (i32, i32, i32, i32, i32) {
    %c0_i32 = arith.constant 0 : i32
    %c0_i32_0 = arith.constant 0 : i32
    %c0_i32_1 = arith.constant 0 : i32
    %c0_i32_2 = arith.constant 0 : i32
    return %arg0, %c0_i32, %arg1, %c0_i32_0, %c0_i32_1 : i32, i32, i32, i32, i32
  }
}

</mosaic_0001>

<llo_original>
// kernel: tpu_custom_call.1
$region0: #{tpu_custom_call.1}
  #allocation0 [shape = 'u32[]', space=smem, size = 0x4, offset = 0x4, fixed_abs, tag = 'smem constant byte address 0x4 - core index']
  #allocation1 [shape = 'u32[72,128]{1,0:T(1,128)}', space=vmem, size = 0x9000, scoped, tag = 'internal scratch']
  #allocation2 [shape = 'bf16[2,10,18,8]{3,2,1,0:T(8,128)(2,1)}', space=vmem, size = 0x1e000, scoped, tag = 'scratch operand']
  #allocation10 [shape = 's32[]', space=sflag, size = 0x4, offset = 0, fixed_abs, tag = 'sflag constant byte address 0x0 - dummy sync flag']
  #allocation12 [shape = 's32[]', space=sflag, size = 0x4, offset = 0, fixed_abs, tag = 'sflag constant byte address 0x0 - dummy sync flag']
  #allocation14 [shape = 's32[]', space=sflag, size = 0x4, offset = 0, fixed_abs, tag = 'sflag constant byte address 0x0 - dummy sync flag']
  #allocation16 [shape = 's32[]', space=sflag, size = 0x4, offset = 0, fixed_abs, tag = 'sflag constant byte address 0x0 - dummy sync flag']
  %s0 = inlined_call_operand.hbm [shape: f32[2,2,16,16,32], index: 0, kind: input, shape index: {}]
  %s1 = inlined_call_operand.hbm [shape: f32[2,2,16,16,32], index: 1, kind: input, shape index: {}]
  %s2 = inlined_call_operand.hbm [shape: f32[2,2,16,16,32], index: 2, kind: input, shape index: {}]
  %s3 = inlined_call_operand.vmem [shape: bf16[32,8], index: 3, kind: input, shape index: {}]
  %s4 = inlined_call_operand.vmem [shape: bf16[3,24,8], index: 4, kind: input, shape index: {}]
  %s5 = inlined_call_operand.vmem [shape: bf16[8,32], index: 5, kind: input, shape index: {}]
  %s6 = inlined_call_operand.vmem [shape: f32[2,8], index: 6, kind: input, shape index: {}]
  %s7 = inlined_call_operand.vmem [shape: f32[2,8], index: 7, kind: input, shape index: {}]
  %s8 = inlined_call_operand.vmem [shape: f32[2,8], index: 8, kind: input, shape index: {}]
  %s9 = inlined_call_operand.vmem [shape: f32[2,8], index: 9, kind: input, shape index: {}]
  %s10 = inlined_call_operand.vmem [shape: f32[2,8], index: 10, kind: input, shape index: {}]
  %s11 = inlined_call_operand.vmem [shape: f32[2,32], index: 11, kind: input, shape index: {}]
  %s12 = inlined_call_operand.vmem [shape: f32[2,32], index: 12, kind: input, shape index: {}]
  %s13 = inlined_call_operand.hbm [shape: f32[2,2,16,16,32], index: 13, kind: output, shape index: {}]
  %s14 = sld [smem:[#allocation0]]
  $region97: #{tpu_custom_call.1} parent=0
    _
  %s16 = ssub.s32 1, %s14
  %s17 = scalar_select 0, %s16, %s14
  $region1: #{tpu_custom_call.1} parent=0
    #allocation3 [shape = 'u8[262144]{0}', space=vmem, size = 0x40000, scoped, tag = 'input window, operand 0']
    #allocation4 [shape = 's32[2]{0}', space=sflag, size = 0x8, scoped, tag = 'scoped memory for tpu_custom_call.1']
    #allocation5 [shape = 's32[2]{0}', space=sflag, size = 0x8, scoped, tag = 'scoped memory for tpu_custom_call.1']
    #allocation6 [shape = 'u8[32768]{0}', space=vmem, size = 0x8000, scoped, tag = 'input window, operand 1']
    #allocation7 [shape = 's32[2]{0}', space=sflag, size = 0x8, scoped, tag = 'scoped memory for tpu_custom_call.1']
    #allocation8 [shape = 'u8[32768]{0}', space=vmem, size = 0x8000, scoped, tag = 'input window, operand 2']
    #allocation9 [shape = 'u8[262144]{0}', space=vmem, size = 0x40000, scoped, tag = 'output window, operand 0']
    %18 = vsyncpa [#allocation4], 0
    %s19 = scalar_lea.sflag [#allocation4], 1
    %20 = vsyncpa %s19, 0
    %21 = vsyncpa [#allocation7], 0
    %s22 = scalar_lea.sflag [#allocation7], 1
    %23 = vsyncpa %s22, 0
    %24 = vsyncpa [#allocation5], 0
    %s25 = scalar_lea.sflag [#allocation5], 1
    %26 = vsyncpa %s25, 0
    loop: start=0, step=1, limit=6
    $region2: #{tpu_custom_call.1} parent=1 // loop_pre_header
      _
    $region3: #{tpu_custom_call.1} parent=1 // loop_header
      %s28 = sphi 0, %s32
      %p29 = scmp.ge.s32.totalorder %s28, 6
      %s35 = sphi 0, %s47
      %s36 = sphi 0, %s43
      %s37 = sphi 0, %s35
      %s38 = sphi 0, %s36
      %s39 = sphi 0, %s37
      %s40 = sphi 0, %s38
      %s52 = sphi 0, %s54
      %s55 = sphi 0, %s52
      %s56 = sphi 0, %s55
      %s72 = sphi 0, %s56
      %s88 = sphi 0, %s90
      %s91 = sphi 0, %s88
      %s92 = sphi 0, %s91
      %s108 = sphi 0, %s92
      %s124 = sphi 0, %s126
      %s127 = sphi 0, %s124
      %s128 = sphi 0, %s127
      %s144 = sphi 0, %s128
      %s148 = sphi 0, %s148
      %s150 = sphi 0, %s148
      %s151 = sphi 0, %s150
      %s165 = sphi 0, %s151
      %s169 = sphi 0, %s169
      %s171 = sphi 0, %s169
      %s172 = sphi 0, %s171
      %s186 = sphi 0, %s172
      %s190 = sphi 0, %s190
      %s192 = sphi 0, %s190
      %s193 = sphi 0, %s192
      %s207 = sphi 0, %s193
      %s211 = sphi 0, %s211
      %s213 = sphi 0, %s211
      %s214 = sphi 0, %s213
      %s228 = sphi 0, %s214
      %s232 = sphi 0, %s232
      %s234 = sphi 0, %s232
      %s235 = sphi 0, %s234
      %s249 = sphi 0, %s235
      %s253 = sphi 0, %s253
      %s255 = sphi 0, %s253
      %s256 = sphi 0, %s255
      %s270 = sphi 0, %s256
      %s274 = sphi 0, %s274
      %s276 = sphi 0, %s274
      %s277 = sphi 0, %s276
      %s291 = sphi 0, %s277
      %s295 = sphi 0, %s295
      %s297 = sphi 0, %s295
      %s298 = sphi 0, %s297
      %s312 = sphi 0, %s298
      %s316 = sphi 0, %s316
      %s318 = sphi 0, %s316
      %s319 = sphi 0, %s318
      %s333 = sphi 0, %s319
      %s337 = sphi 0, %s337
      %s339 = sphi 0, %s337
      %s340 = sphi 0, %s339
      %s354 = sphi 0, %s340
      %s362 = sphi 0, %s364
      %s365 = sphi 0, %s362
      %s366 = sphi 0, %s365
      %s382 = sphi 0, %s366
    $region4: #{tpu_custom_call.1} parent=1 // loop_header_branch
      %31 = sbr.rel (%p29) target = $region8
    $region5: #{tpu_custom_call.1} parent=1 // loop_body
      %s33 = ssub.s32 %s28, 1
      %s34 = ssub.s32 %s28, 2
      %s41 = sadd.s32 1, %s36
      %p42 = scmp.ge.s32.totalorder %s41, 2
      %s43 = scalar_select %p42, 0, %s41
      %s44 = sadd.s32 1, %s35
      %s45 = scalar_select %p42, %s44, %s35
      %p46 = scmp.ge.s32.totalorder %s45, 2
      %s47 = scalar_select %p46, 0, %s45
      %s48 = ssub.s32 %s35, %s47
      %s49 = ssub.s32 %s36, %s43
      %s50 = sor.u32 %s48, %s49
      %p51 = scmp.eq.s32.totalorder %s50, 0
      %s53 = sadd.s32 %s52, 1
      %s54 = scalar_select %p51, %s52, %s53
      %p57 = pneg %p51
      %p58 = scmp.eq.s32.totalorder %s28, 3
      %p59 = por %p57, %p58
      %p60 = scmp.ne.s32.totalorder %s52, %s55
      %p61 = scmp.eq.s32.totalorder %s28, 0
      %p62 = por %p60, %p61
      %p63 = scmp.ne.s32.totalorder %s52, %s55
      %p64 = scmp.eq.s32.totalorder %s33, 3
      %p65 = por %p63, %p64
      %p66 = scmp.ne.s32.totalorder %s55, %s56
      %p67 = scmp.eq.s32.totalorder %s33, 0
      %p68 = por %p66, %p67
      %p69 = scmp.ne.s32.totalorder %s55, %s56
      %p70 = scmp.eq.s32.totalorder %s34, 3
      %p71 = por %p69, %p70
      %p73 = scmp.ne.s32.totalorder %s56, %s72
      %p74 = scmp.eq.s32.totalorder %s34, 0
      %p75 = por %p73, %p74
      %s76 = smul.u32 %s36, 8
      %s77 = ssub.s32 %s76, 1
      %p78 = scmp.gt.s32.totalorder %s77, 0
      %s79 = scalar_select %p78, %s77, 0
      %s80 = smul.u32 %s43, 8
      %s81 = ssub.s32 %s80, 1
      %p82 = scmp.gt.s32.totalorder %s81, 0
      %s83 = scalar_select %p82, %s81, 0
      %s84 = ssub.s32 %s35, %s47
      %s85 = ssub.s32 %s79, %s83
      %s86 = sor.u32 %s84, %s85
      %p87 = scmp.eq.s32.totalorder %s86, 0
      %s89 = sadd.s32 %s88, 1
      %s90 = scalar_select %p87, %s88, %s89
      %p93 = pneg %p87
      %p94 = scmp.eq.s32.totalorder %s28, 3
      %p95 = por %p93, %p94
      %p96 = scmp.ne.s32.totalorder %s88, %s91
      %p97 = scmp.eq.s32.totalorder %s28, 0
      %p98 = por %p96, %p97
      %p99 = scmp.ne.s32.totalorder %s88, %s91
      %p100 = scmp.eq.s32.totalorder %s33, 3
      %p101 = por %p99, %p100
      %p102 = scmp.ne.s32.totalorder %s91, %s92
      %p103 = scmp.eq.s32.totalorder %s33, 0
      %p104 = por %p102, %p103
      %p105 = scmp.ne.s32.totalorder %s91, %s92
      %p106 = scmp.eq.s32.totalorder %s34, 3
      %p107 = por %p105, %p106
      %p109 = scmp.ne.s32.totalorder %s92, %s108
      %p110 = scmp.eq.s32.totalorder %s34, 0
      %p111 = por %p109, %p110
      %s112 = smul.u32 %s36, 8
      %s113 = sadd.s32 %s112, 8
      %p114 = scmp.lt.s32.totalorder %s113, 15
      %s115 = scalar_select %p114, %s113, 15
      %s116 = smul.u32 %s43, 8
      %s117 = sadd.s32 %s116, 8
      %p118 = scmp.lt.s32.totalorder %s117, 15
      %s119 = scalar_select %p118, %s117, 15
      %s120 = ssub.s32 %s35, %s47
      %s121 = ssub.s32 %s115, %s119
      %s122 = sor.u32 %s120, %s121
      %p123 = scmp.eq.s32.totalorder %s122, 0
      %s125 = sadd.s32 %s124, 1
      %s126 = scalar_select %p123, %s124, %s125
      %p129 = pneg %p123
      %p130 = scmp.eq.s32.totalorder %s28, 3
      %p131 = por %p129, %p130
      %p132 = scmp.ne.s32.totalorder %s124, %s127
      %p133 = scmp.eq.s32.totalorder %s28, 0
      %p134 = por %p132, %p133
      %p135 = scmp.ne.s32.totalorder %s124, %s127
      %p136 = scmp.eq.s32.totalorder %s33, 3
      %p137 = por %p135, %p136
      %p138 = scmp.ne.s32.totalorder %s127, %s128
      %p139 = scmp.eq.s32.totalorder %s33, 0
      %p140 = por %p138, %p139
      %p141 = scmp.ne.s32.totalorder %s127, %s128
      %p142 = scmp.eq.s32.totalorder %s34, 3
      %p143 = por %p141, %p142
      %p145 = scmp.ne.s32.totalorder %s128, %s144
      %p146 = scmp.eq.s32.totalorder %s34, 0
      %p147 = por %p145, %p146
      %s149 = sadd.s32 %s148, 1
      %p152 = scmp.eq.s32.totalorder %s28, 3
      %p153 = scmp.ne.s32.totalorder %s148, %s150
      %p154 = scmp.eq.s32.totalorder %s28, 0
      %p155 = por %p153, %p154
      %p156 = scmp.ne.s32.totalorder %s148, %s150
      %p157 = scmp.eq.s32.totalorder %s33, 3
      %p158 = por %p156, %p157
      %p159 = scmp.ne.s32.totalorder %s150, %s151
      %p160 = scmp.eq.s32.totalorder %s33, 0
      %p161 = por %p159, %p160
      %p162 = scmp.ne.s32.totalorder %s150, %s151
      %p163 = scmp.eq.s32.totalorder %s34, 3
      %p164 = por %p162, %p163
      %p166 = scmp.ne.s32.totalorder %s151, %s165
      %p167 = scmp.eq.s32.totalorder %s34, 0
      %p168 = por %p166, %p167
      %s170 = sadd.s32 %s169, 1
      %p173 = scmp.eq.s32.totalorder %s28, 3
      %p174 = scmp.ne.s32.totalorder %s169, %s171
      %p175 = scmp.eq.s32.totalorder %s28, 0
      %p176 = por %p174, %p175
      %p177 = scmp.ne.s32.totalorder %s169, %s171
      %p178 = scmp.eq.s32.totalorder %s33, 3
      %p179 = por %p177, %p178
      %p180 = scmp.ne.s32.totalorder %s171, %s172
      %p181 = scmp.eq.s32.totalorder %s33, 0
      %p182 = por %p180, %p181
      %p183 = scmp.ne.s32.totalorder %s171, %s172
      %p184 = scmp.eq.s32.totalorder %s34, 3
      %p185 = por %p183, %p184
      %p187 = scmp.ne.s32.totalorder %s172, %s186
      %p188 = scmp.eq.s32.totalorder %s34, 0
      %p189 = por %p187, %p188
      %s191 = sadd.s32 %s190, 1
      %p194 = scmp.eq.s32.totalorder %s28, 3
      %p195 = scmp.ne.s32.totalorder %s190, %s192
      %p196 = scmp.eq.s32.totalorder %s28, 0
      %p197 = por %p195, %p196
      %p198 = scmp.ne.s32.totalorder %s190, %s192
      %p199 = scmp.eq.s32.totalorder %s33, 3
      %p200 = por %p198, %p199
      %p201 = scmp.ne.s32.totalorder %s192, %s193
      %p202 = scmp.eq.s32.totalorder %s33, 0
      %p203 = por %p201, %p202
      %p204 = scmp.ne.s32.totalorder %s192, %s193
      %p205 = scmp.eq.s32.totalorder %s34, 3
      %p206 = por %p204, %p205
      %p208 = scmp.ne.s32.totalorder %s193, %s207
      %p209 = scmp.eq.s32.totalorder %s34, 0
      %p210 = por %p208, %p209
      %s212 = sadd.s32 %s211, 1
      %p215 = scmp.eq.s32.totalorder %s28, 3
      %p216 = scmp.ne.s32.totalorder %s211, %s213
      %p217 = scmp.eq.s32.totalorder %s28, 0
      %p218 = por %p216, %p217
      %p219 = scmp.ne.s32.totalorder %s211, %s213
      %p220 = scmp.eq.s32.totalorder %s33, 3
      %p221 = por %p219, %p220
      %p222 = scmp.ne.s32.totalorder %s213, %s214
      %p223 = scmp.eq.s32.totalorder %s33, 0
      %p224 = por %p222, %p223
      %p225 = scmp.ne.s32.totalorder %s213, %s214
      %p226 = scmp.eq.s32.totalorder %s34, 3
      %p227 = por %p225, %p226
      %p229 = scmp.ne.s32.totalorder %s214, %s228
      %p230 = scmp.eq.s32.totalorder %s34, 0
      %p231 = por %p229, %p230
      %s233 = sadd.s32 %s232, 1
      %p236 = scmp.eq.s32.totalorder %s28, 3
      %p237 = scmp.ne.s32.totalorder %s232, %s234
      %p238 = scmp.eq.s32.totalorder %s28, 0
      %p239 = por %p237, %p238
      %p240 = scmp.ne.s32.totalorder %s232, %s234
      %p241 = scmp.eq.s32.totalorder %s33, 3
      %p242 = por %p240, %p241
      %p243 = scmp.ne.s32.totalorder %s234, %s235
      %p244 = scmp.eq.s32.totalorder %s33, 0
      %p245 = por %p243, %p244
      %p246 = scmp.ne.s32.totalorder %s234, %s235
      %p247 = scmp.eq.s32.totalorder %s34, 3
      %p248 = por %p246, %p247
      %p250 = scmp.ne.s32.totalorder %s235, %s249
      %p251 = scmp.eq.s32.totalorder %s34, 0
      %p252 = por %p250, %p251
      %s254 = sadd.s32 %s253, 1
      %p257 = scmp.eq.s32.totalorder %s28, 3
      %p258 = scmp.ne.s32.totalorder %s253, %s255
      %p259 = scmp.eq.s32.totalorder %s28, 0
      %p260 = por %p258, %p259
      %p261 = scmp.ne.s32.totalorder %s253, %s255
      %p262 = scmp.eq.s32.totalorder %s33, 3
      %p263 = por %p261, %p262
      %p264 = scmp.ne.s32.totalorder %s255, %s256
      %p265 = scmp.eq.s32.totalorder %s33, 0
      %p266 = por %p264, %p265
      %p267 = scmp.ne.s32.totalorder %s255, %s256
      %p268 = scmp.eq.s32.totalorder %s34, 3
      %p269 = por %p267, %p268
      %p271 = scmp.ne.s32.totalorder %s256, %s270
      %p272 = scmp.eq.s32.totalorder %s34, 0
      %p273 = por %p271, %p272
      %s275 = sadd.s32 %s274, 1
      %p278 = scmp.eq.s32.totalorder %s28, 3
      %p279 = scmp.ne.s32.totalorder %s274, %s276
      %p280 = scmp.eq.s32.totalorder %s28, 0
      %p281 = por %p279, %p280
      %p282 = scmp.ne.s32.totalorder %s274, %s276
      %p283 = scmp.eq.s32.totalorder %s33, 3
      %p284 = por %p282, %p283
      %p285 = scmp.ne.s32.totalorder %s276, %s277
      %p286 = scmp.eq.s32.totalorder %s33, 0
      %p287 = por %p285, %p286
      %p288 = scmp.ne.s32.totalorder %s276, %s277
      %p289 = scmp.eq.s32.totalorder %s34, 3
      %p290 = por %p288, %p289
      %p292 = scmp.ne.s32.totalorder %s277, %s291
      %p293 = scmp.eq.s32.totalorder %s34, 0
      %p294 = por %p292, %p293
      %s296 = sadd.s32 %s295, 1
      %p299 = scmp.eq.s32.totalorder %s28, 3
      %p300 = scmp.ne.s32.totalorder %s295, %s297
      %p301 = scmp.eq.s32.totalorder %s28, 0
      %p302 = por %p300, %p301
      %p303 = scmp.ne.s32.totalorder %s295, %s297
      %p304 = scmp.eq.s32.totalorder %s33, 3
      %p305 = por %p303, %p304
      %p306 = scmp.ne.s32.totalorder %s297, %s298
      %p307 = scmp.eq.s32.totalorder %s33, 0
      %p308 = por %p306, %p307
      %p309 = scmp.ne.s32.totalorder %s297, %s298
      %p310 = scmp.eq.s32.totalorder %s34, 3
      %p311 = por %p309, %p310
      %p313 = scmp.ne.s32.totalorder %s298, %s312
      %p314 = scmp.eq.s32.totalorder %s34, 0
      %p315 = por %p313, %p314
      %s317 = sadd.s32 %s316, 1
      %p320 = scmp.eq.s32.totalorder %s28, 3
      %p321 = scmp.ne.s32.totalorder %s316, %s318
      %p322 = scmp.eq.s32.totalorder %s28, 0
      %p323 = por %p321, %p322
      %p324 = scmp.ne.s32.totalorder %s316, %s318
      %p325 = scmp.eq.s32.totalorder %s33, 3
      %p326 = por %p324, %p325
      %p327 = scmp.ne.s32.totalorder %s318, %s319
      %p328 = scmp.eq.s32.totalorder %s33, 0
      %p329 = por %p327, %p328
      %p330 = scmp.ne.s32.totalorder %s318, %s319
      %p331 = scmp.eq.s32.totalorder %s34, 3
      %p332 = por %p330, %p331
      %p334 = scmp.ne.s32.totalorder %s319, %s333
      %p335 = scmp.eq.s32.totalorder %s34, 0
      %p336 = por %p334, %p335
      %s338 = sadd.s32 %s337, 1
      %p341 = scmp.eq.s32.totalorder %s28, 3
      %p342 = scmp.ne.s32.totalorder %s337, %s339
      %p343 = scmp.eq.s32.totalorder %s28, 0
      %p344 = por %p342, %p343
      %p345 = scmp.ne.s32.totalorder %s337, %s339
      %p346 = scmp.eq.s32.totalorder %s33, 3
      %p347 = por %p345, %p346
      %p348 = scmp.ne.s32.totalorder %s339, %s340
      %p349 = scmp.eq.s32.totalorder %s33, 0
      %p350 = por %p348, %p349
      %p351 = scmp.ne.s32.totalorder %s339, %s340
      %p352 = scmp.eq.s32.totalorder %s34, 3
      %p353 = por %p351, %p352
      %p355 = scmp.ne.s32.totalorder %s340, %s354
      %p356 = scmp.eq.s32.totalorder %s34, 0
      %p357 = por %p355, %p356
      %s358 = ssub.s32 %s35, %s47
      %s359 = ssub.s32 %s36, %s43
      %s360 = sor.u32 %s358, %s359
      %p361 = scmp.eq.s32.totalorder %s360, 0
      %s363 = sadd.s32 %s362, 1
      %s364 = scalar_select %p361, %s362, %s363
      %p367 = pneg %p361
      %p368 = scmp.eq.s32.totalorder %s28, 3
      %p369 = por %p367, %p368
      %p370 = scmp.ne.s32.totalorder %s362, %s365
      %p371 = scmp.eq.s32.totalorder %s28, 0
      %p372 = por %p370, %p371
      %p373 = scmp.ne.s32.totalorder %s362, %s365
      %p374 = scmp.eq.s32.totalorder %s33, 3
      %p375 = por %p373, %p374
      %p376 = scmp.ne.s32.totalorder %s365, %s366
      %p377 = scmp.eq.s32.totalorder %s33, 0
      %p378 = por %p376, %p377
      %p379 = scmp.ne.s32.totalorder %s365, %s366
      %p380 = scmp.eq.s32.totalorder %s34, 3
      %p381 = por %p379, %p380
      %p383 = scmp.ne.s32.totalorder %s366, %s382
      %p384 = scmp.eq.s32.totalorder %s34, 0
      %p385 = por %p383, %p384
      %p386 = scmp.le.s32.totalorder 1, %s28
      %p387 = scmp.lt.s32.totalorder %s28, 5
      %p388 = pnand %p386, %p387
      %p389 = pneg %p388
      // Predicated region
      $region9: #{tpu_custom_call.1} parent=5 // pred_check
        _
      $region10: #{tpu_custom_call.1} parent=5 // pred_check_branch
        %391 = sbr.rel (%p388) target = $region12
      $region11: #{tpu_custom_call.1} parent=5 // pred_region
        %s392 = ssub.s32 %s28, 1
        // Predicated region
        $region13: #{tpu_custom_call.1} parent=11 // pred_check
          %p393 = pneg %p161
        $region14: #{tpu_custom_call.1} parent=11 // pred_check_branch
          %395 = sbr.rel (%p393) target = $region16
        $region15: #{tpu_custom_call.1} parent=11 // pred_region
          _
        $region16: #{tpu_custom_call.1} parent=11 // pred_fallthru
          _
        // Predicated region
        $region17: #{tpu_custom_call.1} parent=11 // pred_check
          %p396 = pneg %p182
        $region18: #{tpu_custom_call.1} parent=11 // pred_check_branch
          %398 = sbr.rel (%p396) target = $region20
        $region19: #{tpu_custom_call.1} parent=11 // pred_region
          _
        $region20: #{tpu_custom_call.1} parent=11 // pred_fallthru
          _
        // Predicated region
        $region21: #{tpu_custom_call.1} parent=11 // pred_check
          %p399 = pneg %p203
        $region22: #{tpu_custom_call.1} parent=11 // pred_check_branch
          %401 = sbr.rel (%p399) target = $region24
        $region23: #{tpu_custom_call.1} parent=11 // pred_region
          _
        $region24: #{tpu_custom_call.1} parent=11 // pred_fallthru
          _
        // Predicated region
        $region25: #{tpu_custom_call.1} parent=11 // pred_check
          %p402 = pneg %p224
        $region26: #{tpu_custom_call.1} parent=11 // pred_check_branch
          %404 = sbr.rel (%p402) target = $region28
        $region27: #{tpu_custom_call.1} parent=11 // pred_region
          _
        $region28: #{tpu_custom_call.1} parent=11 // pred_fallthru
          _
        // Predicated region
        $region29: #{tpu_custom_call.1} parent=11 // pred_check
          %p405 = pneg %p245
        $region30: #{tpu_custom_call.1} parent=11 // pred_check_branch
          %407 = sbr.rel (%p405) target = $region32
        $region31: #{tpu_custom_call.1} parent=11 // pred_region
          _
        $region32: #{tpu_custom_call.1} parent=11 // pred_fallthru
          _
        // Predicated region
        $region33: #{tpu_custom_call.1} parent=11 // pred_check
          %p408 = pneg %p266
        $region34: #{tpu_custom_call.1} parent=11 // pred_check_branch
          %410 = sbr.rel (%p408) target = $region36
        $region35: #{tpu_custom_call.1} parent=11 // pred_region
          _
        $region36: #{tpu_custom_call.1} parent=11 // pred_fallthru
          _
        // Predicated region
        $region37: #{tpu_custom_call.1} parent=11 // pred_check
          %p411 = pneg %p287
        $region38: #{tpu_custom_call.1} parent=11 // pred_check_branch
          %413 = sbr.rel (%p411) target = $region40
        $region39: #{tpu_custom_call.1} parent=11 // pred_region
          _
        $region40: #{tpu_custom_call.1} parent=11 // pred_fallthru
          _
        // Predicated region
        $region41: #{tpu_custom_call.1} parent=11 // pred_check
          %p414 = pneg %p308
        $region42: #{tpu_custom_call.1} parent=11 // pred_check_branch
          %416 = sbr.rel (%p414) target = $region44
        $region43: #{tpu_custom_call.1} parent=11 // pred_region
          _
        $region44: #{tpu_custom_call.1} parent=11 // pred_fallthru
          _
        // Predicated region
        $region45: #{tpu_custom_call.1} parent=11 // pred_check
          %p417 = pneg %p329
        $region46: #{tpu_custom_call.1} parent=11 // pred_check_branch
          %419 = sbr.rel (%p417) target = $region48
        $region47: #{tpu_custom_call.1} parent=11 // pred_region
          _
        $region48: #{tpu_custom_call.1} parent=11 // pred_fallthru
          _
        // Predicated region
        $region49: #{tpu_custom_call.1} parent=11 // pred_check
          %p420 = pneg %p350
        $region50: #{tpu_custom_call.1} parent=11 // pred_check_branch
          %422 = sbr.rel (%p420) target = $region52
        $region51: #{tpu_custom_call.1} parent=11 // pred_region
          _
        $region52: #{tpu_custom_call.1} parent=11 // pred_fallthru
          _
      $region12: #{tpu_custom_call.1} parent=5 // pred_fallthru
        _
      %p423 = scmp.lt.s32.totalorder %s28, 4
      // Predicated region
      $region53: #{tpu_custom_call.1} parent=5 // pred_check
        %p424 = pneg %p423
      $region54: #{tpu_custom_call.1} parent=5 // pred_check_branch
        %426 = sbr.rel (%p424) target = $region56
      $region55: #{tpu_custom_call.1} parent=5 // pred_region
        // Predicated region
        $region57: #{tpu_custom_call.1} parent=55 // pred_check
          %p427 = pneg %p62
        $region58: #{tpu_custom_call.1} parent=55 // pred_check_branch
          %429 = sbr.rel (%p427) target = $region60
        $region59: #{tpu_custom_call.1} parent=55 // pred_region
          #allocation11 [shape = 'u32[6]{0}', space=smem, size = 0x18, scoped, tag = 'DMA stride descriptor']
          %s430 = sand.u32 %s52, 1
          %s431 = scalar_lea.sflag [#allocation4], %s430
          %s432 = sand.u32 %s52, 1
          %s433 = smul.addr %s432, 256
          %s434 = scalar_lea.vmem [#allocation3], %s433
          %s435 = smul.u32 8, %s36
          %437 = vsyncadd %s431, 0
          %s438 = smul.addr %s435, 2
          %s439 = smul.addr %s35, 64
          %s440 = sadd.s32 %s438, %s439
          %s441 = smul.addr %s440, 8
          %s442 = scalar_lea.hbm %s0, %s441
          %s444 = sshll.u32 1, 14
          %s445 = sxor.u32 4294967295, %s444
          %s447 = sld [smem:[#allocation0]]
          %s448 = sadd.s32 2, %s447
          %s450 = sshll.u32 7, 26
          %s451 = sxor.u32 4294967295, %s450
          %s452 = sand.u32 0, %s451
          %s453 = sshll.u32 %s448, 26
          %s454 = sor.u32 %s452, %s453
          %s455 = sshll.u32 %s442, 4
          %s456 = int_to_ptr.hbm [resolvable:$true] %s455
          %s457 = sshll.u32 %s434, 4
          %s458 = int_to_ptr.vmem [resolvable:$true] %s457
          %464 = sst [smem:[#allocation11]] 4096
          %s465 = scalar_lea.smem [#allocation11], 1
          %466 = sst [smem:[%s465]] 2048
          %s467 = scalar_lea.smem [#allocation11], 2
          %468 = sst [smem:[%s467]] 16
          %s469 = scalar_lea.smem [#allocation11], 3
          %470 = sst [smem:[%s469]] 128
          %s471 = scalar_lea.smem [#allocation11], 4
          %472 = sst [smem:[%s471]] 128
          %s473 = scalar_lea.smem [#allocation11], 5
          %474 = sst [smem:[%s473]] 8
          %476 = dma.general %s456, 4096, %s458, %s431, [#allocation10], [#allocation11], %s454, 0
        $region60: #{tpu_custom_call.1} parent=55 // pred_fallthru
          _
        // Predicated region
        $region61: #{tpu_custom_call.1} parent=55 // pred_check
          %p477 = pneg %p98
        $region62: #{tpu_custom_call.1} parent=55 // pred_check_branch
          %479 = sbr.rel (%p477) target = $region64
        $region63: #{tpu_custom_call.1} parent=55 // pred_region
          #allocation13 [shape = 'u32[6]{0}', space=smem, size = 0x18, scoped, tag = 'DMA stride descriptor']
          %s480 = sand.u32 %s28, 1
          %s481 = scalar_lea.sflag [#allocation7], %s480
          %s482 = sand.u32 %s88, 1
          %s483 = smul.addr %s482, 32
          %s484 = scalar_lea.vmem [#allocation6], %s483
          %s485 = smul.u32 %s36, 8
          %s486 = ssub.s32 %s485, 1
          %p487 = scmp.gt.s32.totalorder %s486, 0
          %s488 = scalar_select %p487, %s486, 0
          %490 = vsyncadd %s481, 0
          %s491 = smul.addr %s488, 2
          %s492 = smul.addr %s35, 64
          %s493 = sadd.s32 %s491, %s492
          %s494 = smul.addr %s493, 8
          %s495 = scalar_lea.hbm %s1, %s494
          %s497 = sshll.u32 1, 14
          %s498 = sxor.u32 4294967295, %s497
          %s500 = sld [smem:[#allocation0]]
          %s501 = sadd.s32 2, %s500
          %s503 = sshll.u32 7, 26
          %s504 = sxor.u32 4294967295, %s503
          %s505 = sand.u32 0, %s504
          %s506 = sshll.u32 %s501, 26
          %s507 = sor.u32 %s505, %s506
          %s508 = sshll.u32 %s495, 4
          %s509 = int_to_ptr.hbm [resolvable:$true] %s508
          %s510 = sshll.u32 %s484, 4
          %s511 = int_to_ptr.vmem [resolvable:$true] %s510
          %517 = sst [smem:[#allocation13]] 4096
          %s518 = scalar_lea.smem [#allocation13], 1
          %519 = sst [smem:[%s518]] 256
          %s520 = scalar_lea.smem [#allocation13], 2
          %521 = sst [smem:[%s520]] 2
          %s522 = scalar_lea.smem [#allocation13], 3
          %523 = sst [smem:[%s522]] 128
          %s524 = scalar_lea.smem [#allocation13], 4
          %525 = sst [smem:[%s524]] 128
          %s526 = scalar_lea.smem [#allocation13], 5
          %527 = sst [smem:[%s526]] 8
          %529 = dma.general %s509, 512, %s511, %s481, [#allocation12], [#allocation13], %s507, 0
        $region64: #{tpu_custom_call.1} parent=55 // pred_fallthru
          _
        // Predicated region
        $region65: #{tpu_custom_call.1} parent=55 // pred_check
          %p530 = pneg %p134
        $region66: #{tpu_custom_call.1} parent=55 // pred_check_branch
          %532 = sbr.rel (%p530) target = $region68
        $region67: #{tpu_custom_call.1} parent=55 // pred_region
          #allocation15 [shape = 'u32[6]{0}', space=smem, size = 0x18, scoped, tag = 'DMA stride descriptor']
          %s533 = sand.u32 %s28, 1
          %s534 = scalar_lea.sflag [#allocation7], %s533
          %s535 = sand.u32 %s124, 1
          %s536 = smul.addr %s535, 32
          %s537 = scalar_lea.vmem [#allocation8], %s536
          %s538 = smul.u32 %s36, 8
          %s539 = sadd.s32 %s538, 8
          %p540 = scmp.lt.s32.totalorder %s539, 15
          %s541 = scalar_select %p540, %s539, 15
          %543 = vsyncadd %s534, 0
          %s544 = smul.addr %s541, 2
          %s545 = smul.addr %s35, 64
          %s546 = sadd.s32 %s544, %s545
          %s547 = smul.addr %s546, 8
          %s548 = scalar_lea.hbm %s2, %s547
          %s550 = sshll.u32 1, 14
          %s551 = sxor.u32 4294967295, %s550
          %s553 = sld [smem:[#allocation0]]
          %s554 = sadd.s32 2, %s553
          %s556 = sshll.u32 7, 26
          %s557 = sxor.u32 4294967295, %s556
          %s558 = sand.u32 0, %s557
          %s559 = sshll.u32 %s554, 26
          %s560 = sor.u32 %s558, %s559
          %s561 = sshll.u32 %s548, 4
          %s562 = int_to_ptr.hbm [resolvable:$true] %s561
          %s563 = sshll.u32 %s537, 4
          %s564 = int_to_ptr.vmem [resolvable:$true] %s563
          %570 = sst [smem:[#allocation15]] 4096
          %s571 = scalar_lea.smem [#allocation15], 1
          %572 = sst [smem:[%s571]] 256
          %s573 = scalar_lea.smem [#allocation15], 2
          %574 = sst [smem:[%s573]] 2
          %s575 = scalar_lea.smem [#allocation15], 3
          %576 = sst [smem:[%s575]] 128
          %s577 = scalar_lea.smem [#allocation15], 4
          %578 = sst [smem:[%s577]] 128
          %s579 = scalar_lea.smem [#allocation15], 5
          %580 = sst [smem:[%s579]] 8
          %582 = dma.general %s562, 512, %s564, %s534, [#allocation14], [#allocation15], %s560, 0
        $region68: #{tpu_custom_call.1} parent=55 // pred_fallthru
          _
      $region56: #{tpu_custom_call.1} parent=5 // pred_fallthru
        _
      %p583 = scmp.le.s32.totalorder 1, %s28
      %p584 = scmp.lt.s32.totalorder %s28, 5
      %p585 = pnand %p583, %p584
      %p586 = pneg %p585
      // Predicated region
      $region69: #{tpu_custom_call.1} parent=5 // pred_check
        _
      $region70: #{tpu_custom_call.1} parent=5 // pred_check_branch
        %588 = sbr.rel (%p585) target = $region72
      $region71: #{tpu_custom_call.1} parent=5 // pred_region
        %s589 = ssub.s32 %s28, 1
        %s590 = sand.u32 %s55, 1
        %s591 = scalar_lea.sflag [#allocation4], %s590
        %s592 = sand.u32 %s55, 1
        %s593 = smul.addr %s592, 256
        %s594 = scalar_lea.vmem [#allocation3], %s593
        // Predicated region
        $region73: #{tpu_custom_call.1} parent=71 // pred_check
          %p595 = pneg %p68
        $region74: #{tpu_custom_call.1} parent=71 // pred_check_branch
          %597 = sbr.rel (%p595) target = $region76
        $region75: #{tpu_custom_call.1} parent=71 // pred_region
          %599 = dma.done %s591, 4096
        $region76: #{tpu_custom_call.1} parent=71 // pred_fallthru
          _
        %s600 = sand.u32 %s33, 1
        %s601 = scalar_lea.sflag [#allocation7], %s600
        %s602 = sand.u32 %s91, 1
        %s603 = smul.addr %s602, 32
        %s604 = scalar_lea.vmem [#allocation6], %s603
        // Predicated region
        $region77: #{tpu_custom_call.1} parent=71 // pred_check
          %p605 = pneg %p104
        $region78: #{tpu_custom_call.1} parent=71 // pred_check_branch
          %607 = sbr.rel (%p605) target = $region80
        $region79: #{tpu_custom_call.1} parent=71 // pred_region
          %609 = dma.done %s601, 512
        $region80: #{tpu_custom_call.1} parent=71 // pred_fallthru
          _
        %s610 = sand.u32 %s33, 1
        %s611 = scalar_lea.sflag [#allocation7], %s610
        %s612 = sand.u32 %s127, 1
        %s613 = smul.addr %s612, 32
        %s614 = scalar_lea.vmem [#allocation8], %s613
        // Predicated region
        $region81: #{tpu_custom_call.1} parent=71 // pred_check
          %p615 = pneg %p140
        $region82: #{tpu_custom_call.1} parent=71 // pred_check_branch
          %617 = sbr.rel (%p615) target = $region84
        $region83: #{tpu_custom_call.1} parent=71 // pred_region
          %619 = dma.done %s611, 512
        $region84: #{tpu_custom_call.1} parent=71 // pred_fallthru
          _
        %s620 = sand.u32 %s55, 1
        %s621 = scalar_lea.sflag [#allocation4], %s620
        %s622 = sand.u32 %s55, 1
        %s623 = smul.addr %s622, 256
        %s624 = scalar_lea.vmem [#allocation3], %s623
        %p625 = pneg %p68
        %p626 = pneg %p65
        %s627 = sand.u32 %s33, 1
        %s628 = scalar_lea.sflag [#allocation7], %s627
        %s629 = sand.u32 %s91, 1
        %s630 = smul.addr %s629, 32
        %s631 = scalar_lea.vmem [#allocation6], %s630
        %p632 = pneg %p104
        %p633 = pneg %p101
        %s634 = sand.u32 %s33, 1
        %s635 = scalar_lea.sflag [#allocation7], %s634
        %s636 = sand.u32 %s127, 1
        %s637 = smul.addr %s636, 32
        %s638 = scalar_lea.vmem [#allocation8], %s637
        %p639 = pneg %p140
        %p640 = pneg %p137
        %p641 = pneg %p161
        %p642 = pneg %p158
        %p643 = pneg %p182
        %p644 = pneg %p179
        %p645 = pneg %p203
        %p646 = pneg %p200
        %p647 = pneg %p224
        %p648 = pneg %p221
        %p649 = pneg %p245
        %p650 = pneg %p242
        %p651 = pneg %p266
        %p652 = pneg %p263
        %p653 = pneg %p287
        %p654 = pneg %p284
        %p655 = pneg %p308
        %p656 = pneg %p305
        %p657 = pneg %p329
        %p658 = pneg %p326
        %p659 = pneg %p350
        %p660 = pneg %p347
        %p661 = pneg %p378
        %p662 = pneg %p375
        %s663 = sand.u32 %s365, 1
        %s664 = scalar_lea.sflag [#allocation5], %s663
        %s665 = sand.u32 %s365, 1
        %s666 = smul.addr %s665, 256
        %s667 = scalar_lea.vmem [#allocation9], %s666
        %s668 = smul.u32 8, %s38
        %s669 = smul.u32 %s38, 8
        %s670 = ssub.s32 %s669, 1
        %p671 = scmp.gt.s32.totalorder %s670, 0
        %s672 = scalar_select %p671, %s670, 0
        %s673 = smul.u32 %s38, 8
        %s674 = sadd.s32 %s673, 8
        %p675 = scmp.lt.s32.totalorder %s674, 15
        %s676 = scalar_select %p675, %s674, 15
        %s677 = smul.u32 8, %s38
        %v679 = vld [vmem:[%s3] sm:$0xf]
        %v680 = vld [vmem:[%s3 + $0x4] sm:$0xf]
        %v681 = vld [vmem:[%s3 + $0x8] sm:$0xf]
        %v682 = vld [vmem:[%s3 + $0xc] sm:$0xf]
        %v683 = vld [vmem:[%s5] sm:$0xf]
        %vm684 = vcmask 57344
        %vm685 = vsmask.f32 256
        %vm686 = vmand %vm684, %vm685
        %v687 = vld [vmem:[#allocation2] sm:$0x1]
        %v688 = vsel %vm686, 0, %v687
        %689 = vst [vmem:[#allocation2] sm:$0x1] %v688
        %v690 = vld [vmem:[#allocation2 + $0xc] sm:$0x1]
        %v691 = vsel %vm686, 0, %v690
        %692 = vst [vmem:[#allocation2 + $0xc] sm:$0x1] %v691
        %v693 = vld [vmem:[#allocation2 + $0x18] sm:$0x1]
        %v694 = vsel %vm686, 0, %v693
        %695 = vst [vmem:[#allocation2 + $0x18] sm:$0x1] %v694
        %v696 = vld [vmem:[#allocation2 + $0x24] sm:$0x1]
        %v697 = vsel %vm686, 0, %v696
        %698 = vst [vmem:[#allocation2 + $0x24] sm:$0x1] %v697
        %v699 = vld [vmem:[#allocation2 + $0x30] sm:$0x1]
        %v700 = vsel %vm686, 0, %v699
        %701 = vst [vmem:[#allocation2 + $0x30] sm:$0x1] %v700
        %v702 = vld [vmem:[#allocation2 + $0x3c] sm:$0x1]
        %v703 = vsel %vm686, 0, %v702
        %704 = vst [vmem:[#allocation2 + $0x3c] sm:$0x1] %v703
        %v705 = vld [vmem:[#allocation2 + $0x48] sm:$0x1]
        %v706 = vsel %vm686, 0, %v705
        %707 = vst [vmem:[#allocation2 + $0x48] sm:$0x1] %v706
        %v708 = vld [vmem:[#allocation2 + $0x54] sm:$0x1]
        %v709 = vsel %vm686, 0, %v708
        %710 = vst [vmem:[#allocation2 + $0x54] sm:$0x1] %v709
        %v711 = vld [vmem:[#allocation2 + $0x60] sm:$0x1]
        %v712 = vsel %vm686, 0, %v711
        %713 = vst [vmem:[#allocation2 + $0x60] sm:$0x1] %v712
        %v714 = vld [vmem:[#allocation2 + $0x6c] sm:$0x1]
        %v715 = vsel %vm686, 0, %v714
        %716 = vst [vmem:[#allocation2 + $0x6c] sm:$0x1] %v715
        %v717 = vld [vmem:[#allocation2 + $0x78] sm:$0x1]
        %v718 = vsel %vm686, 0, %v717
        %719 = vst [vmem:[#allocation2 + $0x78] sm:$0x1] %v718
        %v720 = vld [vmem:[#allocation2 + $0x84] sm:$0x1]
        %v721 = vsel %vm686, 0, %v720
        %722 = vst [vmem:[#allocation2 + $0x84] sm:$0x1] %v721
        %v723 = vld [vmem:[#allocation2 + $0x90] sm:$0x1]
        %v724 = vsel %vm686, 0, %v723
        %725 = vst [vmem:[#allocation2 + $0x90] sm:$0x1] %v724
        %v726 = vld [vmem:[#allocation2 + $0x9c] sm:$0x1]
        %v727 = vsel %vm686, 0, %v726
        %728 = vst [vmem:[#allocation2 + $0x9c] sm:$0x1] %v727
        %v729 = vld [vmem:[#allocation2 + $0xa8] sm:$0x1]
        %v730 = vsel %vm686, 0, %v729
        %731 = vst [vmem:[#allocation2 + $0xa8] sm:$0x1] %v730
        %v732 = vld [vmem:[#allocation2 + $0xb4] sm:$0x1]
        %v733 = vsel %vm686, 0, %v732
        %734 = vst [vmem:[#allocation2 + $0xb4] sm:$0x1] %v733
        %v735 = vld [vmem:[#allocation2 + $0xc0] sm:$0x1]
        %v736 = vsel %vm686, 0, %v735
        %737 = vst [vmem:[#allocation2 + $0xc0] sm:$0x1] %v736
        %v738 = vld [vmem:[#allocation2 + $0xcc] sm:$0x1]
        %v739 = vsel %vm686, 0, %v738
        %740 = vst [vmem:[#allocation2 + $0xcc] sm:$0x1] %v739
        %v741 = vld [vmem:[#allocation2 + $0xd8] sm:$0x1]
        %v742 = vsel %vm686, 0, %v741
        %743 = vst [vmem:[#allocation2 + $0xd8] sm:$0x1] %v742
        %v744 = vld [vmem:[#allocation2 + $0xe4] sm:$0x1]
        %v745 = vsel %vm686, 0, %v744
        %746 = vst [vmem:[#allocation2 + $0xe4] sm:$0x1] %v745
        %vm747 = vsmask.f32 7938
        %vm748 = vmand %vm684, %vm747
        %v749 = vld [vmem:[#allocation2 + $0x8] sm:$0x1]
        %v750 = vsel %vm748, 0, %v749
        %751 = vst [vmem:[#allocation2 + $0x8] sm:$0x1] %v750
        %v752 = vld [vmem:[#allocation2 + $0x14] sm:$0x1]
        %v753 = vsel %vm748, 0, %v752
        %754 = vst [vmem:[#allocation2 + $0x14] sm:$0x1] %v753
        %v755 = vld [vmem:[#allocation2 + $0x20] sm:$0x1]
        %v756 = vsel %vm748, 0, %v755
        %757 = vst [vmem:[#allocation2 + $0x20] sm:$0x1] %v756
        %v758 = vld [vmem:[#allocation2 + $0x2c] sm:$0x1]
        %v759 = vsel %vm748, 0, %v758
        %760 = vst [vmem:[#allocation2 + $0x2c] sm:$0x1] %v759
        %v761 = vld [vmem:[#allocation2 + $0x38] sm:$0x1]
        %v762 = vsel %vm748, 0, %v761
        %763 = vst [vmem:[#allocation2 + $0x38] sm:$0x1] %v762
        %v764 = vld [vmem:[#allocation2 + $0x44] sm:$0x1]
        %v765 = vsel %vm748, 0, %v764
        %766 = vst [vmem:[#allocation2 + $0x44] sm:$0x1] %v765
        %v767 = vld [vmem:[#allocation2 + $0x50] sm:$0x1]
        %v768 = vsel %vm748, 0, %v767
        %769 = vst [vmem:[#allocation2 + $0x50] sm:$0x1] %v768
        %v770 = vld [vmem:[#allocation2 + $0x5c] sm:$0x1]
        %v771 = vsel %vm748, 0, %v770
        %772 = vst [vmem:[#allocation2 + $0x5c] sm:$0x1] %v771
        %v773 = vld [vmem:[#allocation2 + $0x68] sm:$0x1]
        %v774 = vsel %vm748, 0, %v773
        %775 = vst [vmem:[#allocation2 + $0x68] sm:$0x1] %v774
        %v776 = vld [vmem:[#allocation2 + $0x74] sm:$0x1]
        %v777 = vsel %vm748, 0, %v776
        %778 = vst [vmem:[#allocation2 + $0x74] sm:$0x1] %v777
        %v779 = vld [vmem:[#allocation2 + $0x80] sm:$0x1]
        %v780 = vsel %vm748, 0, %v779
        %781 = vst [vmem:[#allocation2 + $0x80] sm:$0x1] %v780
        %v782 = vld [vmem:[#allocation2 + $0x8c] sm:$0x1]
        %v783 = vsel %vm748, 0, %v782
        %784 = vst [vmem:[#allocation2 + $0x8c] sm:$0x1] %v783
        %v785 = vld [vmem:[#allocation2 + $0x98] sm:$0x1]
        %v786 = vsel %vm748, 0, %v785
        %787 = vst [vmem:[#allocation2 + $0x98] sm:$0x1] %v786
        %v788 = vld [vmem:[#allocation2 + $0xa4] sm:$0x1]
        %v789 = vsel %vm748, 0, %v788
        %790 = vst [vmem:[#allocation2 + $0xa4] sm:$0x1] %v789
        %v791 = vld [vmem:[#allocation2 + $0xb0] sm:$0x1]
        %v792 = vsel %vm748, 0, %v791
        %793 = vst [vmem:[#allocation2 + $0xb0] sm:$0x1] %v792
        %v794 = vld [vmem:[#allocation2 + $0xbc] sm:$0x1]
        %v795 = vsel %vm748, 0, %v794
        %796 = vst [vmem:[#allocation2 + $0xbc] sm:$0x1] %v795
        %v797 = vld [vmem:[#allocation2 + $0xc8] sm:$0x1]
        %v798 = vsel %vm748, 0, %v797
        %799 = vst [vmem:[#allocation2 + $0xc8] sm:$0x1] %v798
        %v800 = vld [vmem:[#allocation2 + $0xd4] sm:$0x1]
        %v801 = vsel %vm748, 0, %v800
        %802 = vst [vmem:[#allocation2 + $0xd4] sm:$0x1] %v801
        %v803 = vld [vmem:[#allocation2 + $0xe0] sm:$0x1]
        %v804 = vsel %vm748, 0, %v803
        %805 = vst [vmem:[#allocation2 + $0xe0] sm:$0x1] %v804
        %v806 = vld [vmem:[#allocation2 + $0xec] sm:$0x1]
        %v807 = vsel %vm748, 0, %v806
        %808 = vst [vmem:[#allocation2 + $0xec] sm:$0x1] %v807
        %p809 = scmp.gt.s32.totalorder %s38, 0
        %s810 = scalar_select %p809, 1, 0
        %s811 = scvt.s32.f32 %s810
        %p812 = scmp.lt.s32.totalorder %s38, 1
        %s813 = scalar_select %p812, 1, 0
        %s814 = scvt.s32.f32 %s813
        %v815 = vld [vmem:[%s594] sm:$0xff]
        %v816 = vld [vmem:[%s594 + $0x8] sm:$0xff]
        %v817 = vld [vmem:[%s594 + $0x10] sm:$0xff]
        %v818 = vld [vmem:[%s594 + $0x18] sm:$0xff]
        %v819 = vld [vmem:[%s594 + $0x20] sm:$0xff]
        %v820 = vld [vmem:[%s594 + $0x28] sm:$0xff]
        %v821 = vld [vmem:[%s594 + $0x30] sm:$0xff]
        %v822 = vld [vmem:[%s594 + $0x38] sm:$0xff]
        %v823 = vld [vmem:[%s594 + $0x40] sm:$0xff]
        %v824 = vld [vmem:[%s594 + $0x48] sm:$0xff]
        %v825 = vld [vmem:[%s594 + $0x50] sm:$0xff]
        %v826 = vld [vmem:[%s594 + $0x58] sm:$0xff]
        %v827 = vld [vmem:[%s594 + $0x60] sm:$0xff]
        %v828 = vld [vmem:[%s594 + $0x68] sm:$0xff]
        %v829 = vld [vmem:[%s594 + $0x70] sm:$0xff]
        %v830 = vld [vmem:[%s594 + $0x78] sm:$0xff]
        %v831 = vpack.c.bf16 %v816, %v815
        %v832 = vpack.c.bf16 %v818, %v817
        %v833 = vpack.c.bf16 %v820, %v819
        %v834 = vpack.c.bf16 %v822, %v821
        %v835 = vpack.c.bf16 %v824, %v823
        %v836 = vpack.c.bf16 %v826, %v825
        %v837 = vpack.c.bf16 %v828, %v827
        %v838 = vpack.c.bf16 %v830, %v829
        %v843 = vunpack.c.l.b16 %v679
        %v844 = vunpack.c.l.b16 %v680
        %v845 = vunpack.c.l.b16 %v681
        %v846 = vunpack.c.l.b16 %v682
        %v847 = vpack.c.b16 %v844, %v843
        %v848 = vpack.c.b16 %v846, %v845
        %vm851 = vcmask 261120
        %v853 = vsel %vm851, %v831, 0
        %v856 = vsel %vm851, %v832, 0
        %v859 = vsel %vm851, %v833, 0
        %v862 = vsel %vm851, %v834, 0
        %v865 = vsel %vm851, %v835, 0
        %v868 = vsel %vm851, %v836, 0
        %v871 = vsel %vm851, %v837, 0
        %v874 = vsel %vm851, %v838, 0
        %876 = vmatpush.bf16.msra.mxu0 0
        %877 = vmatpush.bf16.msra.mxu0 0
        %878 = vmatpush.bf16.msra.mxu0 0
        %879 = vmatpush.bf16.msra.mxu0 0
        %880 = vmatpush.bf16.msra.mxu0 0
        %881 = vmatpush.bf16.msra.mxu0 0
        %882 = vmatpush.bf16.msra.mxu0 %v848
        %883 = vmatpush.bf16.msra.mxu0 %v847
        %884 = vmatmul.bf16.gmra.mxu0 %v853
        %v885 = vpop.f32.mrf.mxu0
        %v886 = vadd.f32 0.0, %v885
        %v887 = vpop.f32.mrf.mxu0
        %v888 = vadd.f32 0.0, %v887
        %889 = vmatmul.bf16.gmra.mxu0 %v856
        %v890 = vpop.f32.mrf.mxu0
        %v891 = vadd.f32 0.0, %v890
        %v892 = vpop.f32.mrf.mxu0
        %v893 = vadd.f32 0.0, %v892
        %894 = vmatmul.bf16.gmra.mxu0 %v859
        %v895 = vpop.f32.mrf.mxu0
        %v896 = vadd.f32 0.0, %v895
        %v897 = vpop.f32.mrf.mxu0
        %v898 = vadd.f32 0.0, %v897
        %899 = vmatmul.bf16.gmra.mxu0 %v862
        %v900 = vpop.f32.mrf.mxu0
        %v901 = vadd.f32 0.0, %v900
        %v902 = vpop.f32.mrf.mxu0
        %v903 = vadd.f32 0.0, %v902
        %904 = vmatmul.bf16.gmra.mxu0 %v865
        %v905 = vpop.f32.mrf.mxu0
        %v906 = vadd.f32 0.0, %v905
        %v907 = vpop.f32.mrf.mxu0
        %v908 = vadd.f32 0.0, %v907
        %909 = vmatmul.bf16.gmra.mxu0 %v868
        %v910 = vpop.f32.mrf.mxu0
        %v911 = vadd.f32 0.0, %v910
        %v912 = vpop.f32.mrf.mxu0
        %v913 = vadd.f32 0.0, %v912
        %914 = vmatmul.bf16.gmra.mxu0 %v871
        %v915 = vpop.f32.mrf.mxu0
        %v916 = vadd.f32 0.0, %v915
        %v917 = vpop.f32.mrf.mxu0
        %v918 = vadd.f32 0.0, %v917
        %919 = vmatmul.bf16.gmra.mxu0 %v874
        %v920 = vpop.f32.mrf.mxu0
        %v921 = vadd.f32 0.0, %v920
        %v922 = vpop.f32.mrf.mxu0
        %v923 = vadd.f32 0.0, %v922
        %924 = vdwg.mxu0
        %v925 = vld [vmem:[%s6] sm:$0x1]
        %v926 = vperm.slane %v925, 0
        %v927 = vmul.f32 %v886, %v926
        %v928 = vmul.f32 %v888, %v926
        %v929 = vmul.f32 %v891, %v926
        %v930 = vmul.f32 %v893, %v926
        %v931 = vmul.f32 %v896, %v926
        %v932 = vmul.f32 %v898, %v926
        %v933 = vmul.f32 %v901, %v926
        %v934 = vmul.f32 %v903, %v926
        %v935 = vmul.f32 %v906, %v926
        %v936 = vmul.f32 %v908, %v926
        %v937 = vmul.f32 %v911, %v926
        %v938 = vmul.f32 %v913, %v926
        %v939 = vmul.f32 %v916, %v926
        %v940 = vmul.f32 %v918, %v926
        %v941 = vmul.f32 %v921, %v926
        %v942 = vmul.f32 %v923, %v926
        %v943 = vld [vmem:[%s7] sm:$0x1]
        %v944 = vperm.slane %v943, 0
        %v945 = vadd.f32 %v927, %v944
        %v946 = vadd.f32 %v928, %v944
        %v947 = vadd.f32 %v929, %v944
        %v948 = vadd.f32 %v930, %v944
        %v949 = vadd.f32 %v931, %v944
        %v950 = vadd.f32 %v932, %v944
        %v951 = vadd.f32 %v933, %v944
        %v952 = vadd.f32 %v934, %v944
        %v953 = vadd.f32 %v935, %v944
        %v954 = vadd.f32 %v936, %v944
        %v955 = vadd.f32 %v937, %v944
        %v956 = vadd.f32 %v938, %v944
        %v957 = vadd.f32 %v939, %v944
        %v958 = vadd.f32 %v940, %v944
        %v959 = vadd.f32 %v941, %v944
        %v960 = vadd.f32 %v942, %v944
        %v961 = vmax.f32 %v945, 0.0
        %v962 = vmax.f32 %v946, 0.0
        %v963 = vmax.f32 %v947, 0.0
        %v964 = vmax.f32 %v948, 0.0
        %v965 = vmax.f32 %v949, 0.0
        %v966 = vmax.f32 %v950, 0.0
        %v967 = vmax.f32 %v951, 0.0
        %v968 = vmax.f32 %v952, 0.0
        %v969 = vmax.f32 %v953, 0.0
        %v970 = vmax.f32 %v954, 0.0
        %v971 = vmax.f32 %v955, 0.0
        %v972 = vmax.f32 %v956, 0.0
        %v973 = vmax.f32 %v957, 0.0
        %v974 = vmax.f32 %v958, 0.0
        %v975 = vmax.f32 %v959, 0.0
        %v976 = vmax.f32 %v960, 0.0
        %v977 = vpack.c.bf16 %v961, %v961
        %v978 = vpack.c.bf16 %v962, %v962
        %v979 = vpack.c.bf16 %v963, %v963
        %v980 = vpack.c.bf16 %v964, %v964
        %v981 = vpack.c.bf16 %v965, %v965
        %v982 = vpack.c.bf16 %v966, %v966
        %v983 = vpack.c.bf16 %v967, %v967
        %v984 = vpack.c.bf16 %v968, %v968
        %v985 = vpack.c.bf16 %v969, %v969
        %v986 = vpack.c.bf16 %v970, %v970
        %v987 = vpack.c.bf16 %v971, %v971
        %v988 = vpack.c.bf16 %v972, %v972
        %v989 = vpack.c.bf16 %v973, %v973
        %v990 = vpack.c.bf16 %v974, %v974
        %v991 = vpack.c.bf16 %v975, %v975
        %v992 = vpack.c.bf16 %v976, %v976
        %vm993 = vsmask.f32 4368
        %vm994 = vmor %vm685, %vm993
        %v996 = vshrl.u32 %v977, 16
        %v998 = vrot.slane %v996, 7
        %v999 = vshll.u32 %v977, 16
        %v1001 = vor.u32 %v998, %v999
        %v1002 = vrot.slane %v998, 4
        %v1004 = vshrl.u32 %v978, 16
        %v1006 = vrot.slane %v1004, 7
        %v1007 = vshll.u32 %v978, 16
        %v1009 = vor.u32 %v1006, %v1007
        %v1010 = vsel %vm994, %v1002, %v1009
        %v1011 = vrot.slane %v1006, 4
        %v1013 = vshrl.u32 %v979, 16
        %v1015 = vrot.slane %v1013, 7
        %v1016 = vshll.u32 %v979, 16
        %v1018 = vor.u32 %v1015, %v1016
        %v1019 = vrot.slane %v1015, 4
        %v1021 = vshrl.u32 %v980, 16
        %v1023 = vrot.slane %v1021, 7
        %v1024 = vshll.u32 %v980, 16
        %v1026 = vor.u32 %v1023, %v1024
        %v1027 = vsel %vm994, %v1019, %v1026
        %v1028 = vrot.slane %v1023, 4
        %v1030 = vshrl.u32 %v981, 16
        %v1032 = vrot.slane %v1030, 7
        %v1033 = vshll.u32 %v981, 16
        %v1035 = vor.u32 %v1032, %v1033
        %v1036 = vrot.slane %v1032, 4
        %v1038 = vshrl.u32 %v982, 16
        %v1040 = vrot.slane %v1038, 7
        %v1041 = vshll.u32 %v982, 16
        %v1043 = vor.u32 %v1040, %v1041
        %v1044 = vsel %vm994, %v1036, %v1043
        %v1045 = vrot.slane %v1040, 4
        %v1047 = vshrl.u32 %v983, 16
        %v1049 = vrot.slane %v1047, 7
        %v1050 = vshll.u32 %v983, 16
        %v1052 = vor.u32 %v1049, %v1050
        %v1053 = vrot.slane %v1049, 4
        %v1055 = vshrl.u32 %v984, 16
        %v1057 = vrot.slane %v1055, 7
        %v1058 = vshll.u32 %v984, 16
        %v1060 = vor.u32 %v1057, %v1058
        %v1061 = vsel %vm994, %v1053, %v1060
        %v1062 = vrot.slane %v1057, 4
        %v1064 = vshrl.u32 %v985, 16
        %v1066 = vrot.slane %v1064, 7
        %v1067 = vshll.u32 %v985, 16
        %v1069 = vor.u32 %v1066, %v1067
        %v1070 = vrot.slane %v1066, 4
        %v1072 = vshrl.u32 %v986, 16
        %v1074 = vrot.slane %v1072, 7
        %v1075 = vshll.u32 %v986, 16
        %v1077 = vor.u32 %v1074, %v1075
        %v1078 = vsel %vm994, %v1070, %v1077
        %v1079 = vrot.slane %v1074, 4
        %v1081 = vshrl.u32 %v987, 16
        %v1083 = vrot.slane %v1081, 7
        %v1084 = vshll.u32 %v987, 16
        %v1086 = vor.u32 %v1083, %v1084
        %v1087 = vrot.slane %v1083, 4
        %v1089 = vshrl.u32 %v988, 16
        %v1091 = vrot.slane %v1089, 7
        %v1092 = vshll.u32 %v988, 16
        %v1094 = vor.u32 %v1091, %v1092
        %v1095 = vsel %vm994, %v1087, %v1094
        %v1096 = vrot.slane %v1091, 4
        %v1098 = vshrl.u32 %v989, 16
        %v1100 = vrot.slane %v1098, 7
        %v1101 = vshll.u32 %v989, 16
        %v1103 = vor.u32 %v1100, %v1101
        %v1104 = vrot.slane %v1100, 4
        %v1106 = vshrl.u32 %v990, 16
        %v1108 = vrot.slane %v1106, 7
        %v1109 = vshll.u32 %v990, 16
        %v1111 = vor.u32 %v1108, %v1109
        %v1112 = vsel %vm994, %v1104, %v1111
        %v1113 = vrot.slane %v1108, 4
        %v1115 = vshrl.u32 %v991, 16
        %v1117 = vrot.slane %v1115, 7
        %v1118 = vshll.u32 %v991, 16
        %v1120 = vor.u32 %v1117, %v1118
        %v1121 = vrot.slane %v1117, 4
        %v1123 = vshrl.u32 %v992, 16
        %v1125 = vrot.slane %v1123, 7
        %v1126 = vshll.u32 %v992, 16
        %v1128 = vor.u32 %v1125, %v1126
        %v1129 = vsel %vm994, %v1121, %v1128
        %v1130 = vrot.slane %v1125, 4
        %s1155 = scalar_lea.vmem [#allocation2], 12
        %vm1156 = vcmask 60416
        %vm1157 = vmand %vm1156, %vm747
        %v1158 = vld [vmem:[%s1155] sm:$0xf]
        %v1159 = vsel %vm1157, %v1001, %v1158
        %1160 = vst [vmem:[%s1155] sm:$0xf] %v1159
        %vm1161 = vcmask 60416
        %1162 = vst.msk [vmem:[%s1155 + $0x4] sm:$0xf] %vm1161, %v1010
        %v1163 = vld [vmem:[%s1155 + $0x8] sm:$0x1]
        %v1164 = vsel %vm686, %v1011, %v1163
        %1165 = vst [vmem:[%s1155 + $0x8] sm:$0x1] %v1164
        %v1166 = vld [vmem:[%s1155 + $0xc] sm:$0xf]
        %v1167 = vsel %vm1157, %v1018, %v1166
        %1168 = vst [vmem:[%s1155 + $0xc] sm:$0xf] %v1167
        %1169 = vst.msk [vmem:[%s1155 + $0x10] sm:$0xf] %vm1161, %v1027
        %v1170 = vld [vmem:[%s1155 + $0x14] sm:$0x1]
        %v1171 = vsel %vm686, %v1028, %v1170
        %1172 = vst [vmem:[%s1155 + $0x14] sm:$0x1] %v1171
        %v1173 = vld [vmem:[%s1155 + $0x18] sm:$0xf]
        %v1174 = vsel %vm1157, %v1035, %v1173
        %1175 = vst [vmem:[%s1155 + $0x18] sm:$0xf] %v1174
        %1176 = vst.msk [vmem:[%s1155 + $0x1c] sm:$0xf] %vm1161, %v1044
        %v1177 = vld [vmem:[%s1155 + $0x20] sm:$0x1]
        %v1178 = vsel %vm686, %v1045, %v1177
        %1179 = vst [vmem:[%s1155 + $0x20] sm:$0x1] %v1178
        %v1180 = vld [vmem:[%s1155 + $0x24] sm:$0xf]
        %v1181 = vsel %vm1157, %v1052, %v1180
        %1182 = vst [vmem:[%s1155 + $0x24] sm:$0xf] %v1181
        %1183 = vst.msk [vmem:[%s1155 + $0x28] sm:$0xf] %vm1161, %v1061
        %v1184 = vld [vmem:[%s1155 + $0x2c] sm:$0x1]
        %v1185 = vsel %vm686, %v1062, %v1184
        %1186 = vst [vmem:[%s1155 + $0x2c] sm:$0x1] %v1185
        %v1187 = vld [vmem:[%s1155 + $0x30] sm:$0xf]
        %v1188 = vsel %vm1157, %v1069, %v1187
        %1189 = vst [vmem:[%s1155 + $0x30] sm:$0xf] %v1188
        %1190 = vst.msk [vmem:[%s1155 + $0x34] sm:$0xf] %vm1161, %v1078
        %v1191 = vld [vmem:[%s1155 + $0x38] sm:$0x1]
        %v1192 = vsel %vm686, %v1079, %v1191
        %1193 = vst [vmem:[%s1155 + $0x38] sm:$0x1] %v1192
        %v1194 = vld [vmem:[%s1155 + $0x3c] sm:$0xf]
        %v1195 = vsel %vm1157, %v1086, %v1194
        %1196 = vst [vmem:[%s1155 + $0x3c] sm:$0xf] %v1195
        %1197 = vst.msk [vmem:[%s1155 + $0x40] sm:$0xf] %vm1161, %v1095
        %v1198 = vld [vmem:[%s1155 + $0x44] sm:$0x1]
        %v1199 = vsel %vm686, %v1096, %v1198
        %1200 = vst [vmem:[%s1155 + $0x44] sm:$0x1] %v1199
        %v1201 = vld [vmem:[%s1155 + $0x48] sm:$0xf]
        %v1202 = vsel %vm1157, %v1103, %v1201
        %1203 = vst [vmem:[%s1155 + $0x48] sm:$0xf] %v1202
        %1204 = vst.msk [vmem:[%s1155 + $0x4c] sm:$0xf] %vm1161, %v1112
        %v1205 = vld [vmem:[%s1155 + $0x50] sm:$0x1]
        %v1206 = vsel %vm686, %v1113, %v1205
        %1207 = vst [vmem:[%s1155 + $0x50] sm:$0x1] %v1206
        %v1208 = vld [vmem:[%s1155 + $0x54] sm:$0xf]
        %v1209 = vsel %vm1157, %v1120, %v1208
        %1210 = vst [vmem:[%s1155 + $0x54] sm:$0xf] %v1209
        %1211 = vst.msk [vmem:[%s1155 + $0x58] sm:$0xf] %vm1161, %v1129
        %v1212 = vld [vmem:[%s1155 + $0x5c] sm:$0x1]
        %v1213 = vsel %vm686, %v1130, %v1212
        %1214 = vst [vmem:[%s1155 + $0x5c] sm:$0x1] %v1213
        %v1215 = vld [vmem:[%s604] sm:$0xff]
        %v1216 = vld [vmem:[%s604 + $0x8] sm:$0xff]
        %v1217 = vpack.c.bf16 %v1216, %v1215
        %v1219 = vsel %vm851, %v1217, 0
        %1221 = vmatpush.bf16.msra.mxu0 0
        %1222 = vmatpush.bf16.msra.mxu0 0
        %1223 = vmatpush.bf16.msra.mxu0 0
        %1224 = vmatpush.bf16.msra.mxu0 0
        %1225 = vmatpush.bf16.msra.mxu0 0
        %1226 = vmatpush.bf16.msra.mxu0 0
        %1227 = vmatpush.bf16.msra.mxu0 %v848
        %1228 = vmatpush.bf16.msra.mxu0 %v847
        %1229 = vmatmul.bf16.gmra.mxu0 %v1219
        %v1230 = vpop.f32.mrf.mxu0
        %v1231 = vadd.f32 0.0, %v1230
        %v1232 = vpop.f32.mrf.mxu0
        %v1233 = vadd.f32 0.0, %v1232
        %1234 = vdwg.mxu0
        %v1235 = vld [vmem:[%s6] sm:$0x1]
        %v1236 = vperm.slane %v1235, 0
        %v1237 = vmul.f32 %v1231, %v1236
        %v1238 = vmul.f32 %v1233, %v1236
        %v1239 = vld [vmem:[%s7] sm:$0x1]
        %v1240 = vperm.slane %v1239, 0
        %v1241 = vadd.f32 %v1237, %v1240
        %v1242 = vadd.f32 %v1238, %v1240
        %v1243 = vmax.f32 %v1241, 0.0
        %v1244 = vmax.f32 %v1242, 0.0
        %v1245 = vstv %s811
        %v1246 = vmul.f32 %v1243, %v1245
        %v1247 = vmul.f32 %v1244, %v1245
        %v1248 = vpack.c.bf16 %v1246, %v1246
        %v1249 = vpack.c.bf16 %v1247, %v1247
        %v1251 = vshrl.u32 %v1248, 16
        %v1253 = vrot.slane %v1251, 7
        %v1254 = vshll.u32 %v1248, 16
        %v1256 = vor.u32 %v1253, %v1254
        %v1257 = vrot.slane %v1253, 4
        %v1259 = vshrl.u32 %v1249, 16
        %v1261 = vrot.slane %v1259, 7
        %v1262 = vshll.u32 %v1249, 16
        %v1264 = vor.u32 %v1261, %v1262
        %v1265 = vsel %vm994, %v1257, %v1264
        %v1266 = vrot.slane %v1261, 4
        %v1270 = vld [vmem:[#allocation2] sm:$0xf]
        %v1271 = vsel %vm1157, %v1256, %v1270
        %1272 = vst [vmem:[#allocation2] sm:$0xf] %v1271
        %1273 = vst.msk [vmem:[#allocation2 + $0x4] sm:$0xf] %vm1161, %v1265
        %v1274 = vld [vmem:[#allocation2 + $0x8] sm:$0x1]
        %v1275 = vsel %vm686, %v1266, %v1274
        %1276 = vst [vmem:[#allocation2 + $0x8] sm:$0x1] %v1275
        %v1277 = vld [vmem:[%s614] sm:$0xff]
        %v1278 = vld [vmem:[%s614 + $0x8] sm:$0xff]
        %v1279 = vpack.c.bf16 %v1278, %v1277
        %v1281 = vsel %vm851, %v1279, 0
        %1283 = vmatpush.bf16.msra.mxu0 0
        %1284 = vmatpush.bf16.msra.mxu0 0
        %1285 = vmatpush.bf16.msra.mxu0 0
        %1286 = vmatpush.bf16.msra.mxu0 0
        %1287 = vmatpush.bf16.msra.mxu0 0
        %1288 = vmatpush.bf16.msra.mxu0 0
        %1289 = vmatpush.bf16.msra.mxu0 %v848
        %1290 = vmatpush.bf16.msra.mxu0 %v847
        %1291 = vmatmul.bf16.gmra.mxu0 %v1281
        %v1292 = vpop.f32.mrf.mxu0
        %v1293 = vadd.f32 0.0, %v1292
        %v1294 = vpop.f32.mrf.mxu0
        %v1295 = vadd.f32 0.0, %v1294
        %1296 = vdwg.mxu0
        %v1297 = vld [vmem:[%s6] sm:$0x1]
        %v1298 = vperm.slane %v1297, 0
        %v1299 = vmul.f32 %v1293, %v1298
        %v1300 = vmul.f32 %v1295, %v1298
        %v1301 = vld [vmem:[%s7] sm:$0x1]
        %v1302 = vperm.slane %v1301, 0
        %v1303 = vadd.f32 %v1299, %v1302
        %v1304 = vadd.f32 %v1300, %v1302
        %v1305 = vmax.f32 %v1303, 0.0
        %v1306 = vmax.f32 %v1304, 0.0
        %v1307 = vstv %s814
        %v1308 = vmul.f32 %v1305, %v1307
        %v1309 = vmul.f32 %v1306, %v1307
        %v1310 = vpack.c.bf16 %v1308, %v1308
        %v1311 = vpack.c.bf16 %v1309, %v1309
        %v1313 = vshrl.u32 %v1310, 16
        %v1315 = vrot.slane %v1313, 7
        %v1316 = vshll.u32 %v1310, 16
        %v1318 = vor.u32 %v1315, %v1316
        %v1319 = vrot.slane %v1315, 4
        %v1321 = vshrl.u32 %v1311, 16
        %v1323 = vrot.slane %v1321, 7
        %v1324 = vshll.u32 %v1311, 16
        %v1326 = vor.u32 %v1323, %v1324
        %v1327 = vsel %vm994, %v1319, %v1326
        %v1328 = vrot.slane %v1323, 4
        %s1332 = scalar_lea.vmem [#allocation2], 108
        %v1333 = vld [vmem:[%s1332] sm:$0xf]
        %v1334 = vsel %vm1157, %v1318, %v1333
        %1335 = vst [vmem:[%s1332] sm:$0xf] %v1334
        %1336 = vst.msk [vmem:[%s1332 + $0x4] sm:$0xf] %vm1161, %v1327
        %v1337 = vld [vmem:[%s1332 + $0x8] sm:$0x1]
        %v1338 = vsel %vm686, %v1328, %v1337
        %1339 = vst [vmem:[%s1332 + $0x8] sm:$0x1] %v1338
        %s1340 = scalar_lea.vmem %s594, 128 [#allocation3]
        %v1341 = vld [vmem:[%s1340] sm:$0xff]
        %v1342 = vld [vmem:[%s1340 + $0x8] sm:$0xff]
        %v1343 = vld [vmem:[%s1340 + $0x10] sm:$0xff]
        %v1344 = vld [vmem:[%s1340 + $0x18] sm:$0xff]
        %v1345 = vld [vmem:[%s1340 + $0x20] sm:$0xff]
        %v1346 = vld [vmem:[%s1340 + $0x28] sm:$0xff]
        %v1347 = vld [vmem:[%s1340 + $0x30] sm:$0xff]
        %v1348 = vld [vmem:[%s1340 + $0x38] sm:$0xff]
        %v1349 = vld [vmem:[%s1340 + $0x40] sm:$0xff]
        %v1350 = vld [vmem:[%s1340 + $0x48] sm:$0xff]
        %v1351 = vld [vmem:[%s1340 + $0x50] sm:$0xff]
        %v1352 = vld [vmem:[%s1340 + $0x58] sm:$0xff]
        %v1353 = vld [vmem:[%s1340 + $0x60] sm:$0xff]
        %v1354 = vld [vmem:[%s1340 + $0x68] sm:$0xff]
        %v1355 = vld [vmem:[%s1340 + $0x70] sm:$0xff]
        %v1356 = vld [vmem:[%s1340 + $0x78] sm:$0xff]
        %v1357 = vpack.c.bf16 %v1342, %v1341
        %v1358 = vpack.c.bf16 %v1344, %v1343
        %v1359 = vpack.c.bf16 %v1346, %v1345
        %v1360 = vpack.c.bf16 %v1348, %v1347
        %v1361 = vpack.c.bf16 %v1350, %v1349
        %v1362 = vpack.c.bf16 %v1352, %v1351
        %v1363 = vpack.c.bf16 %v1354, %v1353
        %v1364 = vpack.c.bf16 %v1356, %v1355
        %v1366 = vsel %vm851, %v1357, 0
        %v1369 = vsel %vm851, %v1358, 0
        %v1372 = vsel %vm851, %v1359, 0
        %v1375 = vsel %vm851, %v1360, 0
        %v1378 = vsel %vm851, %v1361, 0
        %v1381 = vsel %vm851, %v1362, 0
        %v1384 = vsel %vm851, %v1363, 0
        %v1387 = vsel %vm851, %v1364, 0
        %1389 = vmatpush.bf16.msra.mxu0 0
        %1390 = vmatpush.bf16.msra.mxu0 0
        %1391 = vmatpush.bf16.msra.mxu0 0
        %1392 = vmatpush.bf16.msra.mxu0 0
        %1393 = vmatpush.bf16.msra.mxu0 0
        %1394 = vmatpush.bf16.msra.mxu0 0
        %1395 = vmatpush.bf16.msra.mxu0 %v848
        %1396 = vmatpush.bf16.msra.mxu0 %v847
        %1397 = vmatmul.bf16.gmra.mxu0 %v1366
        %v1398 = vpop.f32.mrf.mxu0
        %v1399 = vadd.f32 0.0, %v1398
        %v1400 = vpop.f32.mrf.mxu0
        %v1401 = vadd.f32 0.0, %v1400
        %1402 = vmatmul.bf16.gmra.mxu0 %v1369
        %v1403 = vpop.f32.mrf.mxu0
        %v1404 = vadd.f32 0.0, %v1403
        %v1405 = vpop.f32.mrf.mxu0
        %v1406 = vadd.f32 0.0, %v1405
        %1407 = vmatmul.bf16.gmra.mxu0 %v1372
        %v1408 = vpop.f32.mrf.mxu0
        %v1409 = vadd.f32 0.0, %v1408
        %v1410 = vpop.f32.mrf.mxu0
        %v1411 = vadd.f32 0.0, %v1410
        %1412 = vmatmul.bf16.gmra.mxu0 %v1375
        %v1413 = vpop.f32.mrf.mxu0
        %v1414 = vadd.f32 0.0, %v1413
        %v1415 = vpop.f32.mrf.mxu0
        %v1416 = vadd.f32 0.0, %v1415
        %1417 = vmatmul.bf16.gmra.mxu0 %v1378
        %v1418 = vpop.f32.mrf.mxu0
        %v1419 = vadd.f32 0.0, %v1418
        %v1420 = vpop.f32.mrf.mxu0
        %v1421 = vadd.f32 0.0, %v1420
        %1422 = vmatmul.bf16.gmra.mxu0 %v1381
        %v1423 = vpop.f32.mrf.mxu0
        %v1424 = vadd.f32 0.0, %v1423
        %v1425 = vpop.f32.mrf.mxu0
        %v1426 = vadd.f32 0.0, %v1425
        %1427 = vmatmul.bf16.gmra.mxu0 %v1384
        %v1428 = vpop.f32.mrf.mxu0
        %v1429 = vadd.f32 0.0, %v1428
        %v1430 = vpop.f32.mrf.mxu0
        %v1431 = vadd.f32 0.0, %v1430
        %1432 = vmatmul.bf16.gmra.mxu0 %v1387
        %v1433 = vpop.f32.mrf.mxu0
        %v1434 = vadd.f32 0.0, %v1433
        %v1435 = vpop.f32.mrf.mxu0
        %v1436 = vadd.f32 0.0, %v1435
        %1437 = vdwg.mxu0
        %v1438 = vld [vmem:[%s6 + $0x1] sm:$0x1]
        %v1439 = vperm.slane %v1438, 0
        %v1440 = vmul.f32 %v1399, %v1439
        %v1441 = vmul.f32 %v1401, %v1439
        %v1442 = vmul.f32 %v1404, %v1439
        %v1443 = vmul.f32 %v1406, %v1439
        %v1444 = vmul.f32 %v1409, %v1439
        %v1445 = vmul.f32 %v1411, %v1439
        %v1446 = vmul.f32 %v1414, %v1439
        %v1447 = vmul.f32 %v1416, %v1439
        %v1448 = vmul.f32 %v1419, %v1439
        %v1449 = vmul.f32 %v1421, %v1439
        %v1450 = vmul.f32 %v1424, %v1439
        %v1451 = vmul.f32 %v1426, %v1439
        %v1452 = vmul.f32 %v1429, %v1439
        %v1453 = vmul.f32 %v1431, %v1439
        %v1454 = vmul.f32 %v1434, %v1439
        %v1455 = vmul.f32 %v1436, %v1439
        %v1456 = vld [vmem:[%s7 + $0x1] sm:$0x1]
        %v1457 = vperm.slane %v1456, 0
        %v1458 = vadd.f32 %v1440, %v1457
        %v1459 = vadd.f32 %v1441, %v1457
        %v1460 = vadd.f32 %v1442, %v1457
        %v1461 = vadd.f32 %v1443, %v1457
        %v1462 = vadd.f32 %v1444, %v1457
        %v1463 = vadd.f32 %v1445, %v1457
        %v1464 = vadd.f32 %v1446, %v1457
        %v1465 = vadd.f32 %v1447, %v1457
        %v1466 = vadd.f32 %v1448, %v1457
        %v1467 = vadd.f32 %v1449, %v1457
        %v1468 = vadd.f32 %v1450, %v1457
        %v1469 = vadd.f32 %v1451, %v1457
        %v1470 = vadd.f32 %v1452, %v1457
        %v1471 = vadd.f32 %v1453, %v1457
        %v1472 = vadd.f32 %v1454, %v1457
        %v1473 = vadd.f32 %v1455, %v1457
        %v1474 = vmax.f32 %v1458, 0.0
        %v1475 = vmax.f32 %v1459, 0.0
        %v1476 = vmax.f32 %v1460, 0.0
        %v1477 = vmax.f32 %v1461, 0.0
        %v1478 = vmax.f32 %v1462, 0.0
        %v1479 = vmax.f32 %v1463, 0.0
        %v1480 = vmax.f32 %v1464, 0.0
        %v1481 = vmax.f32 %v1465, 0.0
        %v1482 = vmax.f32 %v1466, 0.0
        %v1483 = vmax.f32 %v1467, 0.0
        %v1484 = vmax.f32 %v1468, 0.0
        %v1485 = vmax.f32 %v1469, 0.0
        %v1486 = vmax.f32 %v1470, 0.0
        %v1487 = vmax.f32 %v1471, 0.0
        %v1488 = vmax.f32 %v1472, 0.0
        %v1489 = vmax.f32 %v1473, 0.0
        %v1490 = vpack.c.bf16 %v1474, %v1474
        %v1491 = vpack.c.bf16 %v1475, %v1475
        %v1492 = vpack.c.bf16 %v1476, %v1476
        %v1493 = vpack.c.bf16 %v1477, %v1477
        %v1494 = vpack.c.bf16 %v1478, %v1478
        %v1495 = vpack.c.bf16 %v1479, %v1479
        %v1496 = vpack.c.bf16 %v1480, %v1480
        %v1497 = vpack.c.bf16 %v1481, %v1481
        %v1498 = vpack.c.bf16 %v1482, %v1482
        %v1499 = vpack.c.bf16 %v1483, %v1483
        %v1500 = vpack.c.bf16 %v1484, %v1484
        %v1501 = vpack.c.bf16 %v1485, %v1485
        %v1502 = vpack.c.bf16 %v1486, %v1486
        %v1503 = vpack.c.bf16 %v1487, %v1487
        %v1504 = vpack.c.bf16 %v1488, %v1488
        %v1505 = vpack.c.bf16 %v1489, %v1489
        %v1507 = vshrl.u32 %v1490, 16
        %v1509 = vrot.slane %v1507, 7
        %v1510 = vshll.u32 %v1490, 16
        %v1512 = vor.u32 %v1509, %v1510
        %v1513 = vrot.slane %v1509, 4
        %v1515 = vshrl.u32 %v1491, 16
        %v1517 = vrot.slane %v1515, 7
        %v1518 = vshll.u32 %v1491, 16
        %v1520 = vor.u32 %v1517, %v1518
        %v1521 = vsel %vm994, %v1513, %v1520
        %v1522 = vrot.slane %v1517, 4
        %v1524 = vshrl.u32 %v1492, 16
        %v1526 = vrot.slane %v1524, 7
        %v1527 = vshll.u32 %v1492, 16
        %v1529 = vor.u32 %v1526, %v1527
        %v1530 = vrot.slane %v1526, 4
        %v1532 = vshrl.u32 %v1493, 16
        %v1534 = vrot.slane %v1532, 7
        %v1535 = vshll.u32 %v1493, 16
        %v1537 = vor.u32 %v1534, %v1535
        %v1538 = vsel %vm994, %v1530, %v1537
        %v1539 = vrot.slane %v1534, 4
        %v1541 = vshrl.u32 %v1494, 16
        %v1543 = vrot.slane %v1541, 7
        %v1544 = vshll.u32 %v1494, 16
        %v1546 = vor.u32 %v1543, %v1544
        %v1547 = vrot.slane %v1543, 4
        %v1549 = vshrl.u32 %v1495, 16
        %v1551 = vrot.slane %v1549, 7
        %v1552 = vshll.u32 %v1495, 16
        %v1554 = vor.u32 %v1551, %v1552
        %v1555 = vsel %vm994, %v1547, %v1554
        %v1556 = vrot.slane %v1551, 4
        %v1558 = vshrl.u32 %v1496, 16
        %v1560 = vrot.slane %v1558, 7
        %v1561 = vshll.u32 %v1496, 16
        %v1563 = vor.u32 %v1560, %v1561
        %v1564 = vrot.slane %v1560, 4
        %v1566 = vshrl.u32 %v1497, 16
        %v1568 = vrot.slane %v1566, 7
        %v1569 = vshll.u32 %v1497, 16
        %v1571 = vor.u32 %v1568, %v1569
        %v1572 = vsel %vm994, %v1564, %v1571
        %v1573 = vrot.slane %v1568, 4
        %v1575 = vshrl.u32 %v1498, 16
        %v1577 = vrot.slane %v1575, 7
        %v1578 = vshll.u32 %v1498, 16
        %v1580 = vor.u32 %v1577, %v1578
        %v1581 = vrot.slane %v1577, 4
        %v1583 = vshrl.u32 %v1499, 16
        %v1585 = vrot.slane %v1583, 7
        %v1586 = vshll.u32 %v1499, 16
        %v1588 = vor.u32 %v1585, %v1586
        %v1589 = vsel %vm994, %v1581, %v1588
        %v1590 = vrot.slane %v1585, 4
        %v1592 = vshrl.u32 %v1500, 16
        %v1594 = vrot.slane %v1592, 7
        %v1595 = vshll.u32 %v1500, 16
        %v1597 = vor.u32 %v1594, %v1595
        %v1598 = vrot.slane %v1594, 4
        %v1600 = vshrl.u32 %v1501, 16
        %v1602 = vrot.slane %v1600, 7
        %v1603 = vshll.u32 %v1501, 16
        %v1605 = vor.u32 %v1602, %v1603
        %v1606 = vsel %vm994, %v1598, %v1605
        %v1607 = vrot.slane %v1602, 4
        %v1609 = vshrl.u32 %v1502, 16
        %v1611 = vrot.slane %v1609, 7
        %v1612 = vshll.u32 %v1502, 16
        %v1614 = vor.u32 %v1611, %v1612
        %v1615 = vrot.slane %v1611, 4
        %v1617 = vshrl.u32 %v1503, 16
        %v1619 = vrot.slane %v1617, 7
        %v1620 = vshll.u32 %v1503, 16
        %v1622 = vor.u32 %v1619, %v1620
        %v1623 = vsel %vm994, %v1615, %v1622
        %v1624 = vrot.slane %v1619, 4
        %v1626 = vshrl.u32 %v1504, 16
        %v1628 = vrot.slane %v1626, 7
        %v1629 = vshll.u32 %v1504, 16
        %v1631 = vor.u32 %v1628, %v1629
        %v1632 = vrot.slane %v1628, 4
        %v1634 = vshrl.u32 %v1505, 16
        %v1636 = vrot.slane %v1634, 7
        %v1637 = vshll.u32 %v1505, 16
        %v1639 = vor.u32 %v1636, %v1637
        %v1640 = vsel %vm994, %v1632, %v1639
        %v1641 = vrot.slane %v1636, 4
        %s1666 = scalar_lea.vmem [#allocation2], 132
        %v1667 = vld [vmem:[%s1666] sm:$0xf]
        %v1668 = vsel %vm1157, %v1512, %v1667
        %1669 = vst [vmem:[%s1666] sm:$0xf] %v1668
        %1670 = vst.msk [vmem:[%s1666 + $0x4] sm:$0xf] %vm1161, %v1521
        %v1671 = vld [vmem:[%s1666 + $0x8] sm:$0x1]
        %v1672 = vsel %vm686, %v1522, %v1671
        %1673 = vst [vmem:[%s1666 + $0x8] sm:$0x1] %v1672
        %v1674 = vld [vmem:[%s1666 + $0xc] sm:$0xf]
        %v1675 = vsel %vm1157, %v1529, %v1674
        %1676 = vst [vmem:[%s1666 + $0xc] sm:$0xf] %v1675
        %1677 = vst.msk [vmem:[%s1666 + $0x10] sm:$0xf] %vm1161, %v1538
        %v1678 = vld [vmem:[%s1666 + $0x14] sm:$0x1]
        %v1679 = vsel %vm686, %v1539, %v1678
        %1680 = vst [vmem:[%s1666 + $0x14] sm:$0x1] %v1679
        %v1681 = vld [vmem:[%s1666 + $0x18] sm:$0xf]
        %v1682 = vsel %vm1157, %v1546, %v1681
        %1683 = vst [vmem:[%s1666 + $0x18] sm:$0xf] %v1682
        %1684 = vst.msk [vmem:[%s1666 + $0x1c] sm:$0xf] %vm1161, %v1555
        %v1685 = vld [vmem:[%s1666 + $0x20] sm:$0x1]
        %v1686 = vsel %vm686, %v1556, %v1685
        %1687 = vst [vmem:[%s1666 + $0x20] sm:$0x1] %v1686
        %v1688 = vld [vmem:[%s1666 + $0x24] sm:$0xf]
        %v1689 = vsel %vm1157, %v1563, %v1688
        %1690 = vst [vmem:[%s1666 + $0x24] sm:$0xf] %v1689
        %1691 = vst.msk [vmem:[%s1666 + $0x28] sm:$0xf] %vm1161, %v1572
        %v1692 = vld [vmem:[%s1666 + $0x2c] sm:$0x1]
        %v1693 = vsel %vm686, %v1573, %v1692
        %1694 = vst [vmem:[%s1666 + $0x2c] sm:$0x1] %v1693
        %v1695 = vld [vmem:[%s1666 + $0x30] sm:$0xf]
        %v1696 = vsel %vm1157, %v1580, %v1695
        %1697 = vst [vmem:[%s1666 + $0x30] sm:$0xf] %v1696
        %1698 = vst.msk [vmem:[%s1666 + $0x34] sm:$0xf] %vm1161, %v1589
        %v1699 = vld [vmem:[%s1666 + $0x38] sm:$0x1]
        %v1700 = vsel %vm686, %v1590, %v1699
        %1701 = vst [vmem:[%s1666 + $0x38] sm:$0x1] %v1700
        %v1702 = vld [vmem:[%s1666 + $0x3c] sm:$0xf]
        %v1703 = vsel %vm1157, %v1597, %v1702
        %1704 = vst [vmem:[%s1666 + $0x3c] sm:$0xf] %v1703
        %1705 = vst.msk [vmem:[%s1666 + $0x40] sm:$0xf] %vm1161, %v1606
        %v1706 = vld [vmem:[%s1666 + $0x44] sm:$0x1]
        %v1707 = vsel %vm686, %v1607, %v1706
        %1708 = vst [vmem:[%s1666 + $0x44] sm:$0x1] %v1707
        %v1709 = vld [vmem:[%s1666 + $0x48] sm:$0xf]
        %v1710 = vsel %vm1157, %v1614, %v1709
        %1711 = vst [vmem:[%s1666 + $0x48] sm:$0xf] %v1710
        %1712 = vst.msk [vmem:[%s1666 + $0x4c] sm:$0xf] %vm1161, %v1623
        %v1713 = vld [vmem:[%s1666 + $0x50] sm:$0x1]
        %v1714 = vsel %vm686, %v1624, %v1713
        %1715 = vst [vmem:[%s1666 + $0x50] sm:$0x1] %v1714
        %v1716 = vld [vmem:[%s1666 + $0x54] sm:$0xf]
        %v1717 = vsel %vm1157, %v1631, %v1716
        %1718 = vst [vmem:[%s1666 + $0x54] sm:$0xf] %v1717
        %1719 = vst.msk [vmem:[%s1666 + $0x58] sm:$0xf] %vm1161, %v1640
        %v1720 = vld [vmem:[%s1666 + $0x5c] sm:$0x1]
        %v1721 = vsel %vm686, %v1641, %v1720
        %1722 = vst [vmem:[%s1666 + $0x5c] sm:$0x1] %v1721
        %s1723 = scalar_lea.vmem %s604, 16 [#allocation6]
        %v1724 = vld [vmem:[%s1723] sm:$0xff]
        %v1725 = vld [vmem:[%s1723 + $0x8] sm:$0xff]
        %v1726 = vpack.c.bf16 %v1725, %v1724
        %v1728 = vsel %vm851, %v1726, 0
        %1730 = vmatpush.bf16.msra.mxu0 0
        %1731 = vmatpush.bf16.msra.mxu0 0
        %1732 = vmatpush.bf16.msra.mxu0 0
        %1733 = vmatpush.bf16.msra.mxu0 0
        %1734 = vmatpush.bf16.msra.mxu0 0
        %1735 = vmatpush.bf16.msra.mxu0 0
        %1736 = vmatpush.bf16.msra.mxu0 %v848
        %1737 = vmatpush.bf16.msra.mxu0 %v847
        %1738 = vmatmul.bf16.gmra.mxu0 %v1728
        %v1739 = vpop.f32.mrf.mxu0
        %v1740 = vadd.f32 0.0, %v1739
        %v1741 = vpop.f32.mrf.mxu0
        %v1742 = vadd.f32 0.0, %v1741
        %1743 = vdwg.mxu0
        %v1744 = vld [vmem:[%s6 + $0x1] sm:$0x1]
        %v1745 = vperm.slane %v1744, 0
        %v1746 = vmul.f32 %v1740, %v1745
        %v1747 = vmul.f32 %v1742, %v1745
        %v1748 = vld [vmem:[%s7 + $0x1] sm:$0x1]
        %v1749 = vperm.slane %v1748, 0
        %v1750 = vadd.f32 %v1746, %v1749
        %v1751 = vadd.f32 %v1747, %v1749
        %v1752 = vmax.f32 %v1750, 0.0
        %v1753 = vmax.f32 %v1751, 0.0
        %v1754 = vmul.f32 %v1752, %v1245
        %v1755 = vmul.f32 %v1753, %v1245
        %v1756 = vpack.c.bf16 %v1754, %v1754
        %v1757 = vpack.c.bf16 %v1755, %v1755
        %v1759 = vshrl.u32 %v1756, 16
        %v1761 = vrot.slane %v1759, 7
        %v1762 = vshll.u32 %v1756, 16
        %v1764 = vor.u32 %v1761, %v1762
        %v1765 = vrot.slane %v1761, 4
        %v1767 = vshrl.u32 %v1757, 16
        %v1769 = vrot.slane %v1767, 7
        %v1770 = vshll.u32 %v1757, 16
        %v1772 = vor.u32 %v1769, %v1770
        %v1773 = vsel %vm994, %v1765, %v1772
        %v1774 = vrot.slane %v1769, 4
        %s1778 = scalar_lea.vmem [#allocation2], 120
        %v1779 = vld [vmem:[%s1778] sm:$0xf]
        %v1780 = vsel %vm1157, %v1764, %v1779
        %1781 = vst [vmem:[%s1778] sm:$0xf] %v1780
        %1782 = vst.msk [vmem:[%s1778 + $0x4] sm:$0xf] %vm1161, %v1773
        %v1783 = vld [vmem:[%s1778 + $0x8] sm:$0x1]
        %v1784 = vsel %vm686, %v1774, %v1783
        %1785 = vst [vmem:[%s1778 + $0x8] sm:$0x1] %v1784
        %s1786 = scalar_lea.vmem %s614, 16 [#allocation8]
        %v1787 = vld [vmem:[%s1786] sm:$0xff]
        %v1788 = vld [vmem:[%s1786 + $0x8] sm:$0xff]
        %v1789 = vpack.c.bf16 %v1788, %v1787
        %v1791 = vsel %vm851, %v1789, 0
        %1793 = vmatpush.bf16.msra.mxu0 0
        %1794 = vmatpush.bf16.msra.mxu0 0
        %1795 = vmatpush.bf16.msra.mxu0 0
        %1796 = vmatpush.bf16.msra.mxu0 0
        %1797 = vmatpush.bf16.msra.mxu0 0
        %1798 = vmatpush.bf16.msra.mxu0 0
        %1799 = vmatpush.bf16.msra.mxu0 %v848
        %1800 = vmatpush.bf16.msra.mxu0 %v847
        %1801 = vmatmul.bf16.gmra.mxu0 %v1791
        %v1802 = vpop.f32.mrf.mxu0
        %v1803 = vadd.f32 0.0, %v1802
        %v1804 = vpop.f32.mrf.mxu0
        %v1805 = vadd.f32 0.0, %v1804
        %1806 = vdwg.mxu0
        %v1807 = vld [vmem:[%s6 + $0x1] sm:$0x1]
        %v1808 = vperm.slane %v1807, 0
        %v1809 = vmul.f32 %v1803, %v1808
        %v1810 = vmul.f32 %v1805, %v1808
        %v1811 = vld [vmem:[%s7 + $0x1] sm:$0x1]
        %v1812 = vperm.slane %v1811, 0
        %v1813 = vadd.f32 %v1809, %v1812
        %v1814 = vadd.f32 %v1810, %v1812
        %v1815 = vmax.f32 %v1813, 0.0
        %v1816 = vmax.f32 %v1814, 0.0
        %v1817 = vmul.f32 %v1815, %v1307
        %v1818 = vmul.f32 %v1816, %v1307
        %v1819 = vpack.c.bf16 %v1817, %v1817
        %v1820 = vpack.c.bf16 %v1818, %v1818
        %v1822 = vshrl.u32 %v1819, 16
        %v1824 = vrot.slane %v1822, 7
        %v1825 = vshll.u32 %v1819, 16
        %v1827 = vor.u32 %v1824, %v1825
        %v1828 = vrot.slane %v1824, 4
        %v1830 = vshrl.u32 %v1820, 16
        %v1832 = vrot.slane %v1830, 7
        %v1833 = vshll.u32 %v1820, 16
        %v1835 = vor.u32 %v1832, %v1833
        %v1836 = vsel %vm994, %v1828, %v1835
        %v1837 = vrot.slane %v1832, 4
        %s1841 = scalar_lea.vmem [#allocation2], 228
        %v1842 = vld [vmem:[%s1841] sm:$0xf]
        %v1843 = vsel %vm1157, %v1827, %v1842
        %1844 = vst [vmem:[%s1841] sm:$0xf] %v1843
        %1845 = vst.msk [vmem:[%s1841 + $0x4] sm:$0xf] %vm1161, %v1836
        %v1846 = vld [vmem:[%s1841 + $0x8] sm:$0x1]
        %v1847 = vsel %vm686, %v1837, %v1846
        %1848 = vst [vmem:[%s1841 + $0x8] sm:$0x1] %v1847
        %v1849 = vld [vmem:[#allocation2] sm:$0xf]
        %v1850 = vld [vmem:[#allocation2 + $0x4] sm:$0xf]
        %v1851 = vld [vmem:[#allocation2 + $0xc] sm:$0xf]
        %v1852 = vld [vmem:[#allocation2 + $0x10] sm:$0xf]
        %v1853 = vld [vmem:[#allocation2 + $0x18] sm:$0xf]
        %v1854 = vld [vmem:[#allocation2 + $0x1c] sm:$0xf]
        %v1855 = vld [vmem:[#allocation2 + $0x24] sm:$0xf]
        %v1856 = vld [vmem:[#allocation2 + $0x28] sm:$0xf]
        %v1857 = vld [vmem:[#allocation2 + $0x30] sm:$0xf]
        %v1858 = vld [vmem:[#allocation2 + $0x34] sm:$0xf]
        %v1859 = vld [vmem:[#allocation2 + $0x3c] sm:$0xf]
        %v1860 = vld [vmem:[#allocation2 + $0x40] sm:$0xf]
        %v1861 = vld [vmem:[#allocation2 + $0x48] sm:$0xf]
        %v1862 = vld [vmem:[#allocation2 + $0x4c] sm:$0xf]
        %v1863 = vld [vmem:[#allocation2 + $0x54] sm:$0xf]
        %v1864 = vld [vmem:[#allocation2 + $0x58] sm:$0xf]
        %v1865 = vld [vmem:[#allocation2 + $0x8] sm:$0x1]
        %v1866 = vld [vmem:[#allocation2 + $0x14] sm:$0x1]
        %v1867 = vld [vmem:[#allocation2 + $0x20] sm:$0x1]
        %v1868 = vld [vmem:[#allocation2 + $0x2c] sm:$0x1]
        %v1869 = vld [vmem:[#allocation2 + $0x38] sm:$0x1]
        %v1870 = vld [vmem:[#allocation2 + $0x44] sm:$0x1]
        %v1871 = vld [vmem:[#allocation2 + $0x50] sm:$0x1]
        %v1872 = vld [vmem:[#allocation2 + $0x5c] sm:$0x1]
        %v1873 = vld [vmem:[#allocation2] sm:$0xe]
        %v1874 = vld [vmem:[#allocation2 + $0xc] sm:$0xe]
        %v1875 = vld [vmem:[#allocation2 + $0x18] sm:$0xe]
        %v1876 = vld [vmem:[#allocation2 + $0x24] sm:$0xe]
        %v1877 = vld [vmem:[#allocation2 + $0x30] sm:$0xe]
        %v1878 = vld [vmem:[#allocation2 + $0x3c] sm:$0xe]
        %v1879 = vld [vmem:[#allocation2 + $0x48] sm:$0xe]
        %v1880 = vld [vmem:[#allocation2 + $0x54] sm:$0xe]
        %v1897 = vunpack.c.l.b16 %v1849
        %v1898 = vunpack.c.l.b16 %v1850
        %v1899 = vunpack.c.l.b16 %v1851
        %v1900 = vunpack.c.l.b16 %v1852
        %v1901 = vunpack.c.l.b16 %v1853
        %v1902 = vunpack.c.l.b16 %v1854
        %v1903 = vunpack.c.l.b16 %v1855
        %v1904 = vunpack.c.l.b16 %v1856
        %v1905 = vunpack.c.l.b16 %v1857
        %v1906 = vunpack.c.l.b16 %v1858
        %v1907 = vunpack.c.l.b16 %v1859
        %v1908 = vunpack.c.l.b16 %v1860
        %v1909 = vunpack.c.l.b16 %v1861
        %v1910 = vunpack.c.l.b16 %v1862
        %v1911 = vunpack.c.l.b16 %v1863
        %v1912 = vunpack.c.l.b16 %v1864
        %v1913 = vpack.c.b16 %v1898, %v1897
        %v1914 = vpack.c.b16 %v1900, %v1899
        %v1915 = vpack.c.b16 %v1902, %v1901
        %v1916 = vpack.c.b16 %v1904, %v1903
        %v1917 = vpack.c.b16 %v1906, %v1905
        %v1918 = vpack.c.b16 %v1908, %v1907
        %v1919 = vpack.c.b16 %v1910, %v1909
        %v1920 = vpack.c.b16 %v1912, %v1911
        %v1929 = vunpack.c.l.b16 %v1865
        %v1930 = vunpack.c.l.b16 %v1866
        %v1931 = vunpack.c.l.b16 %v1867
        %v1932 = vunpack.c.l.b16 %v1868
        %v1933 = vunpack.c.l.b16 %v1869
        %v1934 = vunpack.c.l.b16 %v1870
        %v1935 = vunpack.c.l.b16 %v1871
        %v1936 = vunpack.c.l.b16 %v1872
        %v1937 = vpack.c.b16 %v1929, %v1929
        %v1938 = vpack.c.b16 %v1930, %v1930
        %v1939 = vpack.c.b16 %v1931, %v1931
        %v1940 = vpack.c.b16 %v1932, %v1932
        %v1941 = vpack.c.b16 %v1933, %v1933
        %v1942 = vpack.c.b16 %v1934, %v1934
        %v1943 = vpack.c.b16 %v1935, %v1935
        %v1944 = vpack.c.b16 %v1936, %v1936
        %vm1945 = vsmask.f32 7424
        %v1947 = vshrl.u32 %v1913, 16
        %v1949 = vshll.u32 %v1913, 16
        %v1951 = vrot.slane %v1949, 1
        %v1952 = vor.u32 %v1947, %v1951
        %v1954 = vshll.u32 %v1937, 16
        %v1956 = vrot.slane %v1954, 1
        %v1957 = vsel %vm1945, %v1952, %v1956
        %v1959 = vshrl.u32 %v1914, 16
        %v1961 = vshll.u32 %v1914, 16
        %v1963 = vrot.slane %v1961, 1
        %v1964 = vor.u32 %v1959, %v1963
        %v1966 = vshll.u32 %v1938, 16
        %v1968 = vrot.slane %v1966, 1
        %v1969 = vsel %vm1945, %v1964, %v1968
        %v1971 = vshrl.u32 %v1915, 16
        %v1973 = vshll.u32 %v1915, 16
        %v1975 = vrot.slane %v1973, 1
        %v1976 = vor.u32 %v1971, %v1975
        %v1978 = vshll.u32 %v1939, 16
        %v1980 = vrot.slane %v1978, 1
        %v1981 = vsel %vm1945, %v1976, %v1980
        %v1983 = vshrl.u32 %v1916, 16
        %v1985 = vshll.u32 %v1916, 16
        %v1987 = vrot.slane %v1985, 1
        %v1988 = vor.u32 %v1983, %v1987
        %v1990 = vshll.u32 %v1940, 16
        %v1992 = vrot.slane %v1990, 1
        %v1993 = vsel %vm1945, %v1988, %v1992
        %v1995 = vshrl.u32 %v1917, 16
        %v1997 = vshll.u32 %v1917, 16
        %v1999 = vrot.slane %v1997, 1
        %v2000 = vor.u32 %v1995, %v1999
        %v2002 = vshll.u32 %v1941, 16
        %v2004 = vrot.slane %v2002, 1
        %v2005 = vsel %vm1945, %v2000, %v2004
        %v2007 = vshrl.u32 %v1918, 16
        %v2009 = vshll.u32 %v1918, 16
        %v2011 = vrot.slane %v2009, 1
        %v2012 = vor.u32 %v2007, %v2011
        %v2014 = vshll.u32 %v1942, 16
        %v2016 = vrot.slane %v2014, 1
        %v2017 = vsel %vm1945, %v2012, %v2016
        %v2019 = vshrl.u32 %v1919, 16
        %v2021 = vshll.u32 %v1919, 16
        %v2023 = vrot.slane %v2021, 1
        %v2024 = vor.u32 %v2019, %v2023
        %v2026 = vshll.u32 %v1943, 16
        %v2028 = vrot.slane %v2026, 1
        %v2029 = vsel %vm1945, %v2024, %v2028
        %v2031 = vshrl.u32 %v1920, 16
        %v2033 = vshll.u32 %v1920, 16
        %v2035 = vrot.slane %v2033, 1
        %v2036 = vor.u32 %v2031, %v2035
        %v2038 = vshll.u32 %v1944, 16
        %v2040 = vrot.slane %v2038, 1
        %v2041 = vsel %vm1945, %v2036, %v2040
        %2042 = vrot.lane.b32.xlu0 %v1957, 8
        %v2043 = vpop.permute.xlu0 %2042
        %2044 = vrot.lane.b32.xlu0 %v1969, 8
        %v2045 = vpop.permute.xlu0 %2044
        %2046 = vrot.lane.b32.xlu0 %v1981, 8
        %v2047 = vpop.permute.xlu0 %2046
        %2048 = vrot.lane.b32.xlu0 %v1993, 8
        %v2049 = vpop.permute.xlu0 %2048
        %2050 = vrot.lane.b32.xlu0 %v2005, 8
        %v2051 = vpop.permute.xlu0 %2050
        %2052 = vrot.lane.b32.xlu0 %v2017, 8
        %v2053 = vpop.permute.xlu0 %2052
        %2054 = vrot.lane.b32.xlu0 %v2029, 8
        %v2055 = vpop.permute.xlu0 %2054
        %2056 = vrot.lane.b32.xlu0 %v2041, 8
        %v2057 = vpop.permute.xlu0 %2056
        %v2066 = vunpack.c.l.b16 %v1873
        %v2067 = vunpack.c.l.b16 %v1874
        %v2068 = vunpack.c.l.b16 %v1875
        %v2069 = vunpack.c.l.b16 %v1876
        %v2070 = vunpack.c.l.b16 %v1877
        %v2071 = vunpack.c.l.b16 %v1878
        %v2072 = vunpack.c.l.b16 %v1879
        %v2073 = vunpack.c.l.b16 %v1880
        %v2074 = vpack.c.b16 %v1898, %v2066
        %v2075 = vpack.c.b16 %v1900, %v2067
        %v2076 = vpack.c.b16 %v1902, %v2068
        %v2077 = vpack.c.b16 %v1904, %v2069
        %v2078 = vpack.c.b16 %v1906, %v2070
        %v2079 = vpack.c.b16 %v1908, %v2071
        %v2080 = vpack.c.b16 %v1910, %v2072
        %v2081 = vpack.c.b16 %v1912, %v2073
        %vm2082 = vcmask 1046528
        %v2083 = vrot.slane %v2074, 1
        %v2084 = vrot.slane %v1937, 1
        %v2085 = vsel %vm2082, %v2083, %v2084
        %v2086 = vrot.slane %v2075, 1
        %v2087 = vrot.slane %v1938, 1
        %v2088 = vsel %vm2082, %v2086, %v2087
        %v2089 = vrot.slane %v2076, 1
        %v2090 = vrot.slane %v1939, 1
        %v2091 = vsel %vm2082, %v2089, %v2090
        %v2092 = vrot.slane %v2077, 1
        %v2093 = vrot.slane %v1940, 1
        %v2094 = vsel %vm2082, %v2092, %v2093
        %v2095 = vrot.slane %v2078, 1
        %v2096 = vrot.slane %v1941, 1
        %v2097 = vsel %vm2082, %v2095, %v2096
        %v2098 = vrot.slane %v2079, 1
        %v2099 = vrot.slane %v1942, 1
        %v2100 = vsel %vm2082, %v2098, %v2099
        %v2101 = vrot.slane %v2080, 1
        %v2102 = vrot.slane %v1943, 1
        %v2103 = vsel %vm2082, %v2101, %v2102
        %v2104 = vrot.slane %v2081, 1
        %v2105 = vrot.slane %v1944, 1
        %v2106 = vsel %vm2082, %v2104, %v2105
        %2107 = vrot.lane.b32.xlu0 %v2085, 16
        %v2108 = vpop.permute.xlu0 %2107
        %2109 = vrot.lane.b32.xlu0 %v2088, 16
        %v2110 = vpop.permute.xlu0 %2109
        %2111 = vrot.lane.b32.xlu0 %v2091, 16
        %v2112 = vpop.permute.xlu0 %2111
        %2113 = vrot.lane.b32.xlu0 %v2094, 16
        %v2114 = vpop.permute.xlu0 %2113
        %2115 = vrot.lane.b32.xlu0 %v2097, 16
        %v2116 = vpop.permute.xlu0 %2115
        %2117 = vrot.lane.b32.xlu0 %v2100, 16
        %v2118 = vpop.permute.xlu0 %2117
        %2119 = vrot.lane.b32.xlu0 %v2103, 16
        %v2120 = vpop.permute.xlu0 %2119
        %2121 = vrot.lane.b32.xlu0 %v2106, 16
        %v2122 = vpop.permute.xlu0 %2121
        %vm2123 = vcmask 64512
        %v2125 = vsel %vm2123, %v1913, %v2043
        %v2127 = vsel %vm2123, %v1914, %v2045
        %v2129 = vsel %vm2123, %v1915, %v2047
        %v2131 = vsel %vm2123, %v1916, %v2049
        %v2133 = vsel %vm2123, %v1917, %v2051
        %v2135 = vsel %vm2123, %v1918, %v2053
        %v2137 = vsel %vm2123, %v1919, %v2055
        %v2139 = vsel %vm2123, %v1920, %v2057
        %vm2140 = vcmask 130048
        %v2142 = vsel %vm2140, %v2125, %v2108
        %v2144 = vsel %vm2140, %v2127, %v2110
        %v2146 = vsel %vm2140, %v2129, %v2112
        %v2148 = vsel %vm2140, %v2131, %v2114
        %v2150 = vsel %vm2140, %v2133, %v2116
        %v2152 = vsel %vm2140, %v2135, %v2118
        %v2154 = vsel %vm2140, %v2137, %v2120
        %v2156 = vsel %vm2140, %v2139, %v2122
        %v2157 = vld [vmem:[%s4] sm:$0xf]
        %v2158 = vld [vmem:[%s4 + $0x4] sm:$0xf]
        %v2159 = vld [vmem:[%s4 + $0x8] sm:$0xf]
        %v2160 = vld [vmem:[%s1155] sm:$0xf]
        %v2161 = vld [vmem:[%s1155 + $0x4] sm:$0xf]
        %v2162 = vld [vmem:[%s1155 + $0xc] sm:$0xf]
        %v2163 = vld [vmem:[%s1155 + $0x10] sm:$0xf]
        %v2164 = vld [vmem:[%s1155 + $0x18] sm:$0xf]
        %v2165 = vld [vmem:[%s1155 + $0x1c] sm:$0xf]
        %v2166 = vld [vmem:[%s1155 + $0x24] sm:$0xf]
        %v2167 = vld [vmem:[%s1155 + $0x28] sm:$0xf]
        %v2168 = vld [vmem:[%s1155 + $0x30] sm:$0xf]
        %v2169 = vld [vmem:[%s1155 + $0x34] sm:$0xf]
        %v2170 = vld [vmem:[%s1155 + $0x3c] sm:$0xf]
        %v2171 = vld [vmem:[%s1155 + $0x40] sm:$0xf]
        %v2172 = vld [vmem:[%s1155 + $0x48] sm:$0xf]
        %v2173 = vld [vmem:[%s1155 + $0x4c] sm:$0xf]
        %v2174 = vld [vmem:[%s1155 + $0x54] sm:$0xf]
        %v2175 = vld [vmem:[%s1155 + $0x58] sm:$0xf]
        %v2176 = vld [vmem:[%s1155 + $0x8] sm:$0x1]
        %v2177 = vld [vmem:[%s1155 + $0x14] sm:$0x1]
        %v2178 = vld [vmem:[%s1155 + $0x20] sm:$0x1]
        %v2179 = vld [vmem:[%s1155 + $0x2c] sm:$0x1]
        %v2180 = vld [vmem:[%s1155 + $0x38] sm:$0x1]
        %v2181 = vld [vmem:[%s1155 + $0x44] sm:$0x1]
        %v2182 = vld [vmem:[%s1155 + $0x50] sm:$0x1]
        %v2183 = vld [vmem:[%s1155 + $0x5c] sm:$0x1]
        %v2184 = vld [vmem:[%s1155] sm:$0xe]
        %v2185 = vld [vmem:[%s1155 + $0xc] sm:$0xe]
        %v2186 = vld [vmem:[%s1155 + $0x18] sm:$0xe]
        %v2187 = vld [vmem:[%s1155 + $0x24] sm:$0xe]
        %v2188 = vld [vmem:[%s1155 + $0x30] sm:$0xe]
        %v2189 = vld [vmem:[%s1155 + $0x3c] sm:$0xe]
        %v2190 = vld [vmem:[%s1155 + $0x48] sm:$0xe]
        %v2191 = vld [vmem:[%s1155 + $0x54] sm:$0xe]
        %v2208 = vunpack.c.l.b16 %v2160
        %v2209 = vunpack.c.l.b16 %v2161
        %v2210 = vunpack.c.l.b16 %v2162
        %v2211 = vunpack.c.l.b16 %v2163
        %v2212 = vunpack.c.l.b16 %v2164
        %v2213 = vunpack.c.l.b16 %v2165
        %v2214 = vunpack.c.l.b16 %v2166
        %v2215 = vunpack.c.l.b16 %v2167
        %v2216 = vunpack.c.l.b16 %v2168
        %v2217 = vunpack.c.l.b16 %v2169
        %v2218 = vunpack.c.l.b16 %v2170
        %v2219 = vunpack.c.l.b16 %v2171
        %v2220 = vunpack.c.l.b16 %v2172
        %v2221 = vunpack.c.l.b16 %v2173
        %v2222 = vunpack.c.l.b16 %v2174
        %v2223 = vunpack.c.l.b16 %v2175
        %v2224 = vpack.c.b16 %v2209, %v2208
        %v2225 = vpack.c.b16 %v2211, %v2210
        %v2226 = vpack.c.b16 %v2213, %v2212
        %v2227 = vpack.c.b16 %v2215, %v2214
        %v2228 = vpack.c.b16 %v2217, %v2216
        %v2229 = vpack.c.b16 %v2219, %v2218
        %v2230 = vpack.c.b16 %v2221, %v2220
        %v2231 = vpack.c.b16 %v2223, %v2222
        %v2240 = vunpack.c.l.b16 %v2176
        %v2241 = vunpack.c.l.b16 %v2177
        %v2242 = vunpack.c.l.b16 %v2178
        %v2243 = vunpack.c.l.b16 %v2179
        %v2244 = vunpack.c.l.b16 %v2180
        %v2245 = vunpack.c.l.b16 %v2181
        %v2246 = vunpack.c.l.b16 %v2182
        %v2247 = vunpack.c.l.b16 %v2183
        %v2248 = vpack.c.b16 %v2240, %v2240
        %v2249 = vpack.c.b16 %v2241, %v2241
        %v2250 = vpack.c.b16 %v2242, %v2242
        %v2251 = vpack.c.b16 %v2243, %v2243
        %v2252 = vpack.c.b16 %v2244, %v2244
        %v2253 = vpack.c.b16 %v2245, %v2245
        %v2254 = vpack.c.b16 %v2246, %v2246
        %v2255 = vpack.c.b16 %v2247, %v2247
        %v2257 = vshrl.u32 %v2224, 16
        %v2259 = vshll.u32 %v2224, 16
        %v2261 = vrot.slane %v2259, 1
        %v2262 = vor.u32 %v2257, %v2261
        %v2264 = vshll.u32 %v2248, 16
        %v2266 = vrot.slane %v2264, 1
        %v2267 = vsel %vm1945, %v2262, %v2266
        %v2269 = vshrl.u32 %v2225, 16
        %v2271 = vshll.u32 %v2225, 16
        %v2273 = vrot.slane %v2271, 1
        %v2274 = vor.u32 %v2269, %v2273
        %v2276 = vshll.u32 %v2249, 16
        %v2278 = vrot.slane %v2276, 1
        %v2279 = vsel %vm1945, %v2274, %v2278
        %v2281 = vshrl.u32 %v2226, 16
        %v2283 = vshll.u32 %v2226, 16
        %v2285 = vrot.slane %v2283, 1
        %v2286 = vor.u32 %v2281, %v2285
        %v2288 = vshll.u32 %v2250, 16
        %v2290 = vrot.slane %v2288, 1
        %v2291 = vsel %vm1945, %v2286, %v2290
        %v2293 = vshrl.u32 %v2227, 16
        %v2295 = vshll.u32 %v2227, 16
        %v2297 = vrot.slane %v2295, 1
        %v2298 = vor.u32 %v2293, %v2297
        %v2300 = vshll.u32 %v2251, 16
        %v2302 = vrot.slane %v2300, 1
        %v2303 = vsel %vm1945, %v2298, %v2302
        %v2305 = vshrl.u32 %v2228, 16
        %v2307 = vshll.u32 %v2228, 16
        %v2309 = vrot.slane %v2307, 1
        %v2310 = vor.u32 %v2305, %v2309
        %v2312 = vshll.u32 %v2252, 16
        %v2314 = vrot.slane %v2312, 1
        %v2315 = vsel %vm1945, %v2310, %v2314
        %v2317 = vshrl.u32 %v2229, 16
        %v2319 = vshll.u32 %v2229, 16
        %v2321 = vrot.slane %v2319, 1
        %v2322 = vor.u32 %v2317, %v2321
        %v2324 = vshll.u32 %v2253, 16
        %v2326 = vrot.slane %v2324, 1
        %v2327 = vsel %vm1945, %v2322, %v2326
        %v2329 = vshrl.u32 %v2230, 16
        %v2331 = vshll.u32 %v2230, 16
        %v2333 = vrot.slane %v2331, 1
        %v2334 = vor.u32 %v2329, %v2333
        %v2336 = vshll.u32 %v2254, 16
        %v2338 = vrot.slane %v2336, 1
        %v2339 = vsel %vm1945, %v2334, %v2338
        %v2341 = vshrl.u32 %v2231, 16
        %v2343 = vshll.u32 %v2231, 16
        %v2345 = vrot.slane %v2343, 1
        %v2346 = vor.u32 %v2341, %v2345
        %v2348 = vshll.u32 %v2255, 16
        %v2350 = vrot.slane %v2348, 1
        %v2351 = vsel %vm1945, %v2346, %v2350
        %2352 = vrot.lane.b32.xlu0 %v2267, 8
        %v2353 = vpop.permute.xlu0 %2352
        %2354 = vrot.lane.b32.xlu0 %v2279, 8
        %v2355 = vpop.permute.xlu0 %2354
        %2356 = vrot.lane.b32.xlu0 %v2291, 8
        %v2357 = vpop.permute.xlu0 %2356
        %2358 = vrot.lane.b32.xlu0 %v2303, 8
        %v2359 = vpop.permute.xlu0 %2358
        %2360 = vrot.lane.b32.xlu0 %v2315, 8
        %v2361 = vpop.permute.xlu0 %2360
        %2362 = vrot.lane.b32.xlu0 %v2327, 8
        %v2363 = vpop.permute.xlu0 %2362
        %2364 = vrot.lane.b32.xlu0 %v2339, 8
        %v2365 = vpop.permute.xlu0 %2364
        %2366 = vrot.lane.b32.xlu0 %v2351, 8
        %v2367 = vpop.permute.xlu0 %2366
        %v2376 = vunpack.c.l.b16 %v2184
        %v2377 = vunpack.c.l.b16 %v2185
        %v2378 = vunpack.c.l.b16 %v2186
        %v2379 = vunpack.c.l.b16 %v2187
        %v2380 = vunpack.c.l.b16 %v2188
        %v2381 = vunpack.c.l.b16 %v2189
        %v2382 = vunpack.c.l.b16 %v2190
        %v2383 = vunpack.c.l.b16 %v2191
        %v2384 = vpack.c.b16 %v2209, %v2376
        %v2385 = vpack.c.b16 %v2211, %v2377
        %v2386 = vpack.c.b16 %v2213, %v2378
        %v2387 = vpack.c.b16 %v2215, %v2379
        %v2388 = vpack.c.b16 %v2217, %v2380
        %v2389 = vpack.c.b16 %v2219, %v2381
        %v2390 = vpack.c.b16 %v2221, %v2382
        %v2391 = vpack.c.b16 %v2223, %v2383
        %v2392 = vrot.slane %v2384, 1
        %v2393 = vrot.slane %v2248, 1
        %v2394 = vsel %vm2082, %v2392, %v2393
        %v2395 = vrot.slane %v2385, 1
        %v2396 = vrot.slane %v2249, 1
        %v2397 = vsel %vm2082, %v2395, %v2396
        %v2398 = vrot.slane %v2386, 1
        %v2399 = vrot.slane %v2250, 1
        %v2400 = vsel %vm2082, %v2398, %v2399
        %v2401 = vrot.slane %v2387, 1
        %v2402 = vrot.slane %v2251, 1
        %v2403 = vsel %vm2082, %v2401, %v2402
        %v2404 = vrot.slane %v2388, 1
        %v2405 = vrot.slane %v2252, 1
        %v2406 = vsel %vm2082, %v2404, %v2405
        %v2407 = vrot.slane %v2389, 1
        %v2408 = vrot.slane %v2253, 1
        %v2409 = vsel %vm2082, %v2407, %v2408
        %v2410 = vrot.slane %v2390, 1
        %v2411 = vrot.slane %v2254, 1
        %v2412 = vsel %vm2082, %v2410, %v2411
        %v2413 = vrot.slane %v2391, 1
        %v2414 = vrot.slane %v2255, 1
        %v2415 = vsel %vm2082, %v2413, %v2414
        %2416 = vrot.lane.b32.xlu0 %v2394, 16
        %v2417 = vpop.permute.xlu0 %2416
        %2418 = vrot.lane.b32.xlu0 %v2397, 16
        %v2419 = vpop.permute.xlu0 %2418
        %2420 = vrot.lane.b32.xlu0 %v2400, 16
        %v2421 = vpop.permute.xlu0 %2420
        %2422 = vrot.lane.b32.xlu0 %v2403, 16
        %v2423 = vpop.permute.xlu0 %2422
        %2424 = vrot.lane.b32.xlu0 %v2406, 16
        %v2425 = vpop.permute.xlu0 %2424
        %2426 = vrot.lane.b32.xlu0 %v2409, 16
        %v2427 = vpop.permute.xlu0 %2426
        %2428 = vrot.lane.b32.xlu0 %v2412, 16
        %v2429 = vpop.permute.xlu0 %2428
        %2430 = vrot.lane.b32.xlu0 %v2415, 16
        %v2431 = vpop.permute.xlu0 %2430
        %v2433 = vsel %vm2123, %v2224, %v2353
        %v2435 = vsel %vm2123, %v2225, %v2355
        %v2437 = vsel %vm2123, %v2226, %v2357
        %v2439 = vsel %vm2123, %v2227, %v2359
        %v2441 = vsel %vm2123, %v2228, %v2361
        %v2443 = vsel %vm2123, %v2229, %v2363
        %v2445 = vsel %vm2123, %v2230, %v2365
        %v2447 = vsel %vm2123, %v2231, %v2367
        %v2449 = vsel %vm2140, %v2433, %v2417
        %v2451 = vsel %vm2140, %v2435, %v2419
        %v2453 = vsel %vm2140, %v2437, %v2421
        %v2455 = vsel %vm2140, %v2439, %v2423
        %v2457 = vsel %vm2140, %v2441, %v2425
        %v2459 = vsel %vm2140, %v2443, %v2427
        %v2461 = vsel %vm2140, %v2445, %v2429
        %v2463 = vsel %vm2140, %v2447, %v2431
        %s2464 = scalar_lea.vmem %s4, 12
        %v2465 = vld [vmem:[%s2464] sm:$0xf]
        %v2466 = vld [vmem:[%s2464 + $0x4] sm:$0xf]
        %v2467 = vld [vmem:[%s2464 + $0x8] sm:$0xf]
        %v2471 = vunpack.c.l.b16 %v2465
        %v2472 = vunpack.c.l.b16 %v2466
        %v2473 = vunpack.c.l.b16 %v2467
        %v2474 = vpack.c.b16 %v2472, %v2471
        %v2475 = vpack.c.b16 %v2473, %v2473
        %vm2477 = vcmask 195584
        %v2478 = vsel %vm2477, %v2449, 0
        %v2480 = vsel %vm2477, %v2451, 0
        %v2482 = vsel %vm2477, %v2453, 0
        %v2484 = vsel %vm2477, %v2455, 0
        %v2486 = vsel %vm2477, %v2457, 0
        %v2488 = vsel %vm2477, %v2459, 0
        %v2490 = vsel %vm2477, %v2461, 0
        %v2492 = vsel %vm2477, %v2463, 0
        %vm2494 = vcmask 1043456
        %v2496 = vsel %vm2494, %v2475, 0
        %2498 = vmatpush.bf16.msra.mxu0 0
        %2499 = vmatpush.bf16.msra.mxu0 0
        %2500 = vmatpush.bf16.msra.mxu0 0
        %2501 = vmatpush.bf16.msra.mxu0 0
        %2502 = vmatpush.bf16.msra.mxu0 0
        %2503 = vmatpush.bf16.msra.mxu0 0
        %2504 = vmatpush.bf16.msra.mxu0 %v2496
        %2505 = vmatpush.bf16.msra.mxu0 %v2474
        %2506 = vmatmul.bf16.gmra.mxu0 %v2478
        %v2507 = vpop.f32.mrf.mxu0
        %v2508 = vadd.f32 0.0, %v2507
        %v2509 = vpop.f32.mrf.mxu0
        %v2510 = vadd.f32 0.0, %v2509
        %2511 = vmatmul.bf16.gmra.mxu0 %v2480
        %v2512 = vpop.f32.mrf.mxu0
        %v2513 = vadd.f32 0.0, %v2512
        %v2514 = vpop.f32.mrf.mxu0
        %v2515 = vadd.f32 0.0, %v2514
        %2516 = vmatmul.bf16.gmra.mxu0 %v2482
        %v2517 = vpop.f32.mrf.mxu0
        %v2518 = vadd.f32 0.0, %v2517
        %v2519 = vpop.f32.mrf.mxu0
        %v2520 = vadd.f32 0.0, %v2519
        %2521 = vmatmul.bf16.gmra.mxu0 %v2484
        %v2522 = vpop.f32.mrf.mxu0
        %v2523 = vadd.f32 0.0, %v2522
        %v2524 = vpop.f32.mrf.mxu0
        %v2525 = vadd.f32 0.0, %v2524
        %2526 = vmatmul.bf16.gmra.mxu0 %v2486
        %v2527 = vpop.f32.mrf.mxu0
        %v2528 = vadd.f32 0.0, %v2527
        %v2529 = vpop.f32.mrf.mxu0
        %v2530 = vadd.f32 0.0, %v2529
        %2531 = vmatmul.bf16.gmra.mxu0 %v2488
        %v2532 = vpop.f32.mrf.mxu0
        %v2533 = vadd.f32 0.0, %v2532
        %v2534 = vpop.f32.mrf.mxu0
        %v2535 = vadd.f32 0.0, %v2534
        %2536 = vmatmul.bf16.gmra.mxu0 %v2490
        %v2537 = vpop.f32.mrf.mxu0
        %v2538 = vadd.f32 0.0, %v2537
        %v2539 = vpop.f32.mrf.mxu0
        %v2540 = vadd.f32 0.0, %v2539
        %2541 = vmatmul.bf16.gmra.mxu0 %v2492
        %v2542 = vpop.f32.mrf.mxu0
        %v2543 = vadd.f32 0.0, %v2542
        %v2544 = vpop.f32.mrf.mxu0
        %v2545 = vadd.f32 0.0, %v2544
        %2546 = vdwg.mxu0
        %v2550 = vunpack.c.l.b16 %v2157
        %v2551 = vunpack.c.l.b16 %v2158
        %v2552 = vunpack.c.l.b16 %v2159
        %v2553 = vpack.c.b16 %v2551, %v2550
        %v2554 = vpack.c.b16 %v2552, %v2552
        %v2556 = vsel %vm2477, %v2142, 0
        %v2558 = vsel %vm2477, %v2144, 0
        %v2560 = vsel %vm2477, %v2146, 0
        %v2562 = vsel %vm2477, %v2148, 0
        %v2564 = vsel %vm2477, %v2150, 0
        %v2566 = vsel %vm2477, %v2152, 0
        %v2568 = vsel %vm2477, %v2154, 0
        %v2570 = vsel %vm2477, %v2156, 0
        %v2573 = vsel %vm2494, %v2554, 0
        %2575 = vmatpush.bf16.msra.mxu0 0
        %2576 = vmatpush.bf16.msra.mxu0 0
        %2577 = vmatpush.bf16.msra.mxu0 0
        %2578 = vmatpush.bf16.msra.mxu0 0
        %2579 = vmatpush.bf16.msra.mxu0 0
        %2580 = vmatpush.bf16.msra.mxu0 0
        %2581 = vmatpush.bf16.msra.mxu0 %v2573
        %2582 = vmatpush.bf16.msra.mxu0 %v2553
        %2583 = vmatmul.bf16.gmra.mxu0 %v2556
        %v2584 = vpop.f32.mrf.mxu0
        %v2585 = vadd.f32 %v2508, %v2584
        %v2586 = vpop.f32.mrf.mxu0
        %v2587 = vadd.f32 %v2510, %v2586
        %2588 = vmatmul.bf16.gmra.mxu0 %v2558
        %v2589 = vpop.f32.mrf.mxu0
        %v2590 = vadd.f32 %v2513, %v2589
        %v2591 = vpop.f32.mrf.mxu0
        %v2592 = vadd.f32 %v2515, %v2591
        %2593 = vmatmul.bf16.gmra.mxu0 %v2560
        %v2594 = vpop.f32.mrf.mxu0
        %v2595 = vadd.f32 %v2518, %v2594
        %v2596 = vpop.f32.mrf.mxu0
        %v2597 = vadd.f32 %v2520, %v2596
        %2598 = vmatmul.bf16.gmra.mxu0 %v2562
        %v2599 = vpop.f32.mrf.mxu0
        %v2600 = vadd.f32 %v2523, %v2599
        %v2601 = vpop.f32.mrf.mxu0
        %v2602 = vadd.f32 %v2525, %v2601
        %2603 = vmatmul.bf16.gmra.mxu0 %v2564
        %v2604 = vpop.f32.mrf.mxu0
        %v2605 = vadd.f32 %v2528, %v2604
        %v2606 = vpop.f32.mrf.mxu0
        %v2607 = vadd.f32 %v2530, %v2606
        %2608 = vmatmul.bf16.gmra.mxu0 %v2566
        %v2609 = vpop.f32.mrf.mxu0
        %v2610 = vadd.f32 %v2533, %v2609
        %v2611 = vpop.f32.mrf.mxu0
        %v2612 = vadd.f32 %v2535, %v2611
        %2613 = vmatmul.bf16.gmra.mxu0 %v2568
        %v2614 = vpop.f32.mrf.mxu0
        %v2615 = vadd.f32 %v2538, %v2614
        %v2616 = vpop.f32.mrf.mxu0
        %v2617 = vadd.f32 %v2540, %v2616
        %2618 = vmatmul.bf16.gmra.mxu0 %v2570
        %v2619 = vpop.f32.mrf.mxu0
        %v2620 = vadd.f32 %v2543, %v2619
        %v2621 = vpop.f32.mrf.mxu0
        %v2622 = vadd.f32 %v2545, %v2621
        %2623 = vdwg.mxu0
        %s2624 = scalar_lea.vmem [#allocation2], 24
        %v2625 = vld [vmem:[%s2624] sm:$0xf]
        %v2626 = vld [vmem:[%s2624 + $0x4] sm:$0xf]
        %v2627 = vld [vmem:[%s2624 + $0xc] sm:$0xf]
        %v2628 = vld [vmem:[%s2624 + $0x10] sm:$0xf]
        %v2629 = vld [vmem:[%s2624 + $0x18] sm:$0xf]
        %v2630 = vld [vmem:[%s2624 + $0x1c] sm:$0xf]
        %v2631 = vld [vmem:[%s2624 + $0x24] sm:$0xf]
        %v2632 = vld [vmem:[%s2624 + $0x28] sm:$0xf]
        %v2633 = vld [vmem:[%s2624 + $0x30] sm:$0xf]
        %v2634 = vld [vmem:[%s2624 + $0x34] sm:$0xf]
        %v2635 = vld [vmem:[%s2624 + $0x3c] sm:$0xf]
        %v2636 = vld [vmem:[%s2624 + $0x40] sm:$0xf]
        %v2637 = vld [vmem:[%s2624 + $0x48] sm:$0xf]
        %v2638 = vld [vmem:[%s2624 + $0x4c] sm:$0xf]
        %v2639 = vld [vmem:[%s2624 + $0x54] sm:$0xf]
        %v2640 = vld [vmem:[%s2624 + $0x58] sm:$0xf]
        %v2641 = vld [vmem:[%s2624 + $0x8] sm:$0x1]
        %v2642 = vld [vmem:[%s2624 + $0x14] sm:$0x1]
        %v2643 = vld [vmem:[%s2624 + $0x20] sm:$0x1]
        %v2644 = vld [vmem:[%s2624 + $0x2c] sm:$0x1]
        %v2645 = vld [vmem:[%s2624 + $0x38] sm:$0x1]
        %v2646 = vld [vmem:[%s2624 + $0x44] sm:$0x1]
        %v2647 = vld [vmem:[%s2624 + $0x50] sm:$0x1]
        %v2648 = vld [vmem:[%s2624 + $0x5c] sm:$0x1]
        %v2649 = vld [vmem:[%s2624] sm:$0xe]
        %v2650 = vld [vmem:[%s2624 + $0xc] sm:$0xe]
        %v2651 = vld [vmem:[%s2624 + $0x18] sm:$0xe]
        %v2652 = vld [vmem:[%s2624 + $0x24] sm:$0xe]
        %v2653 = vld [vmem:[%s2624 + $0x30] sm:$0xe]
        %v2654 = vld [vmem:[%s2624 + $0x3c] sm:$0xe]
        %v2655 = vld [vmem:[%s2624 + $0x48] sm:$0xe]
        %v2656 = vld [vmem:[%s2624 + $0x54] sm:$0xe]
        %v2673 = vunpack.c.l.b16 %v2625
        %v2674 = vunpack.c.l.b16 %v2626
        %v2675 = vunpack.c.l.b16 %v2627
        %v2676 = vunpack.c.l.b16 %v2628
        %v2677 = vunpack.c.l.b16 %v2629
        %v2678 = vunpack.c.l.b16 %v2630
        %v2679 = vunpack.c.l.b16 %v2631
        %v2680 = vunpack.c.l.b16 %v2632
        %v2681 = vunpack.c.l.b16 %v2633
        %v2682 = vunpack.c.l.b16 %v2634
        %v2683 = vunpack.c.l.b16 %v2635
        %v2684 = vunpack.c.l.b16 %v2636
        %v2685 = vunpack.c.l.b16 %v2637
        %v2686 = vunpack.c.l.b16 %v2638
        %v2687 = vunpack.c.l.b16 %v2639
        %v2688 = vunpack.c.l.b16 %v2640
        %v2689 = vpack.c.b16 %v2674, %v2673
        %v2690 = vpack.c.b16 %v2676, %v2675
        %v2691 = vpack.c.b16 %v2678, %v2677
        %v2692 = vpack.c.b16 %v2680, %v2679
        %v2693 = vpack.c.b16 %v2682, %v2681
        %v2694 = vpack.c.b16 %v2684, %v2683
        %v2695 = vpack.c.b16 %v2686, %v2685
        %v2696 = vpack.c.b16 %v2688, %v2687
        %v2705 = vunpack.c.l.b16 %v2641
        %v2706 = vunpack.c.l.b16 %v2642
        %v2707 = vunpack.c.l.b16 %v2643
        %v2708 = vunpack.c.l.b16 %v2644
        %v2709 = vunpack.c.l.b16 %v2645
        %v2710 = vunpack.c.l.b16 %v2646
        %v2711 = vunpack.c.l.b16 %v2647
        %v2712 = vunpack.c.l.b16 %v2648
        %v2713 = vpack.c.b16 %v2705, %v2705
        %v2714 = vpack.c.b16 %v2706, %v2706
        %v2715 = vpack.c.b16 %v2707, %v2707
        %v2716 = vpack.c.b16 %v2708, %v2708
        %v2717 = vpack.c.b16 %v2709, %v2709
        %v2718 = vpack.c.b16 %v2710, %v2710
        %v2719 = vpack.c.b16 %v2711, %v2711
        %v2720 = vpack.c.b16 %v2712, %v2712
        %v2722 = vshrl.u32 %v2689, 16
        %v2724 = vshll.u32 %v2689, 16
        %v2726 = vrot.slane %v2724, 1
        %v2727 = vor.u32 %v2722, %v2726
        %v2729 = vshll.u32 %v2713, 16
        %v2731 = vrot.slane %v2729, 1
        %v2732 = vsel %vm1945, %v2727, %v2731
        %v2734 = vshrl.u32 %v2690, 16
        %v2736 = vshll.u32 %v2690, 16
        %v2738 = vrot.slane %v2736, 1
        %v2739 = vor.u32 %v2734, %v2738
        %v2741 = vshll.u32 %v2714, 16
        %v2743 = vrot.slane %v2741, 1
        %v2744 = vsel %vm1945, %v2739, %v2743
        %v2746 = vshrl.u32 %v2691, 16
        %v2748 = vshll.u32 %v2691, 16
        %v2750 = vrot.slane %v2748, 1
        %v2751 = vor.u32 %v2746, %v2750
        %v2753 = vshll.u32 %v2715, 16
        %v2755 = vrot.slane %v2753, 1
        %v2756 = vsel %vm1945, %v2751, %v2755
        %v2758 = vshrl.u32 %v2692, 16
        %v2760 = vshll.u32 %v2692, 16
        %v2762 = vrot.slane %v2760, 1
        %v2763 = vor.u32 %v2758, %v2762
        %v2765 = vshll.u32 %v2716, 16
        %v2767 = vrot.slane %v2765, 1
        %v2768 = vsel %vm1945, %v2763, %v2767
        %v2770 = vshrl.u32 %v2693, 16
        %v2772 = vshll.u32 %v2693, 16
        %v2774 = vrot.slane %v2772, 1
        %v2775 = vor.u32 %v2770, %v2774
        %v2777 = vshll.u32 %v2717, 16
        %v2779 = vrot.slane %v2777, 1
        %v2780 = vsel %vm1945, %v2775, %v2779
        %v2782 = vshrl.u32 %v2694, 16
        %v2784 = vshll.u32 %v2694, 16
        %v2786 = vrot.slane %v2784, 1
        %v2787 = vor.u32 %v2782, %v2786
        %v2789 = vshll.u32 %v2718, 16
        %v2791 = vrot.slane %v2789, 1
        %v2792 = vsel %vm1945, %v2787, %v2791
        %v2794 = vshrl.u32 %v2695, 16
        %v2796 = vshll.u32 %v2695, 16
        %v2798 = vrot.slane %v2796, 1
        %v2799 = vor.u32 %v2794, %v2798
        %v2801 = vshll.u32 %v2719, 16
        %v2803 = vrot.slane %v2801, 1
        %v2804 = vsel %vm1945, %v2799, %v2803
        %v2806 = vshrl.u32 %v2696, 16
        %v2808 = vshll.u32 %v2696, 16
        %v2810 = vrot.slane %v2808, 1
        %v2811 = vor.u32 %v2806, %v2810
        %v2813 = vshll.u32 %v2720, 16
        %v2815 = vrot.slane %v2813, 1
        %v2816 = vsel %vm1945, %v2811, %v2815
        %2817 = vrot.lane.b32.xlu0 %v2732, 8
        %v2818 = vpop.permute.xlu0 %2817
        %2819 = vrot.lane.b32.xlu0 %v2744, 8
        %v2820 = vpop.permute.xlu0 %2819
        %2821 = vrot.lane.b32.xlu0 %v2756, 8
        %v2822 = vpop.permute.xlu0 %2821
        %2823 = vrot.lane.b32.xlu0 %v2768, 8
        %v2824 = vpop.permute.xlu0 %2823
        %2825 = vrot.lane.b32.xlu0 %v2780, 8
        %v2826 = vpop.permute.xlu0 %2825
        %2827 = vrot.lane.b32.xlu0 %v2792, 8
        %v2828 = vpop.permute.xlu0 %2827
        %2829 = vrot.lane.b32.xlu0 %v2804, 8
        %v2830 = vpop.permute.xlu0 %2829
        %2831 = vrot.lane.b32.xlu0 %v2816, 8
        %v2832 = vpop.permute.xlu0 %2831
        %v2841 = vunpack.c.l.b16 %v2649
        %v2842 = vunpack.c.l.b16 %v2650
        %v2843 = vunpack.c.l.b16 %v2651
        %v2844 = vunpack.c.l.b16 %v2652
        %v2845 = vunpack.c.l.b16 %v2653
        %v2846 = vunpack.c.l.b16 %v2654
        %v2847 = vunpack.c.l.b16 %v2655
        %v2848 = vunpack.c.l.b16 %v2656
        %v2849 = vpack.c.b16 %v2674, %v2841
        %v2850 = vpack.c.b16 %v2676, %v2842
        %v2851 = vpack.c.b16 %v2678, %v2843
        %v2852 = vpack.c.b16 %v2680, %v2844
        %v2853 = vpack.c.b16 %v2682, %v2845
        %v2854 = vpack.c.b16 %v2684, %v2846
        %v2855 = vpack.c.b16 %v2686, %v2847
        %v2856 = vpack.c.b16 %v2688, %v2848
        %v2857 = vrot.slane %v2849, 1
        %v2858 = vrot.slane %v2713, 1
        %v2859 = vsel %vm2082, %v2857, %v2858
        %v2860 = vrot.slane %v2850, 1
        %v2861 = vrot.slane %v2714, 1
        %v2862 = vsel %vm2082, %v2860, %v2861
        %v2863 = vrot.slane %v2851, 1
        %v2864 = vrot.slane %v2715, 1
        %v2865 = vsel %vm2082, %v2863, %v2864
        %v2866 = vrot.slane %v2852, 1
        %v2867 = vrot.slane %v2716, 1
        %v2868 = vsel %vm2082, %v2866, %v2867
        %v2869 = vrot.slane %v2853, 1
        %v2870 = vrot.slane %v2717, 1
        %v2871 = vsel %vm2082, %v2869, %v2870
        %v2872 = vrot.slane %v2854, 1
        %v2873 = vrot.slane %v2718, 1
        %v2874 = vsel %vm2082, %v2872, %v2873
        %v2875 = vrot.slane %v2855, 1
        %v2876 = vrot.slane %v2719, 1
        %v2877 = vsel %vm2082, %v2875, %v2876
        %v2878 = vrot.slane %v2856, 1
        %v2879 = vrot.slane %v2720, 1
        %v2880 = vsel %vm2082, %v2878, %v2879
        %2881 = vrot.lane.b32.xlu0 %v2859, 16
        %v2882 = vpop.permute.xlu0 %2881
        %2883 = vrot.lane.b32.xlu0 %v2862, 16
        %v2884 = vpop.permute.xlu0 %2883
        %2885 = vrot.lane.b32.xlu0 %v2865, 16
        %v2886 = vpop.permute.xlu0 %2885
        %2887 = vrot.lane.b32.xlu0 %v2868, 16
        %v2888 = vpop.permute.xlu0 %2887
        %2889 = vrot.lane.b32.xlu0 %v2871, 16
        %v2890 = vpop.permute.xlu0 %2889
        %2891 = vrot.lane.b32.xlu0 %v2874, 16
        %v2892 = vpop.permute.xlu0 %2891
        %2893 = vrot.lane.b32.xlu0 %v2877, 16
        %v2894 = vpop.permute.xlu0 %2893
        %2895 = vrot.lane.b32.xlu0 %v2880, 16
        %v2896 = vpop.permute.xlu0 %2895
        %v2898 = vsel %vm2123, %v2689, %v2818
        %v2900 = vsel %vm2123, %v2690, %v2820
        %v2902 = vsel %vm2123, %v2691, %v2822
        %v2904 = vsel %vm2123, %v2692, %v2824
        %v2906 = vsel %vm2123, %v2693, %v2826
        %v2908 = vsel %vm2123, %v2694, %v2828
        %v2910 = vsel %vm2123, %v2695, %v2830
        %v2912 = vsel %vm2123, %v2696, %v2832
        %v2914 = vsel %vm2140, %v2898, %v2882
        %v2916 = vsel %vm2140, %v2900, %v2884
        %v2918 = vsel %vm2140, %v2902, %v2886
        %v2920 = vsel %vm2140, %v2904, %v2888
        %v2922 = vsel %vm2140, %v2906, %v2890
        %v2924 = vsel %vm2140, %v2908, %v2892
        %v2926 = vsel %vm2140, %v2910, %v2894
        %v2928 = vsel %vm2140, %v2912, %v2896
        %s2929 = scalar_lea.vmem %s4, 24
        %v2930 = vld [vmem:[%s2929] sm:$0xf]
        %v2931 = vld [vmem:[%s2929 + $0x4] sm:$0xf]
        %v2932 = vld [vmem:[%s2929 + $0x8] sm:$0xf]
        %v2936 = vunpack.c.l.b16 %v2930
        %v2937 = vunpack.c.l.b16 %v2931
        %v2938 = vunpack.c.l.b16 %v2932
        %v2939 = vpack.c.b16 %v2937, %v2936
        %v2940 = vpack.c.b16 %v2938, %v2938
        %v2942 = vsel %vm2477, %v2914, 0
        %v2944 = vsel %vm2477, %v2916, 0
        %v2946 = vsel %vm2477, %v2918, 0
        %v2948 = vsel %vm2477, %v2920, 0
        %v2950 = vsel %vm2477, %v2922, 0
        %v2952 = vsel %vm2477, %v2924, 0
        %v2954 = vsel %vm2477, %v2926, 0
        %v2956 = vsel %vm2477, %v2928, 0
        %v2959 = vsel %vm2494, %v2940, 0
        %2961 = vmatpush.bf16.msra.mxu0 0
        %2962 = vmatpush.bf16.msra.mxu0 0
        %2963 = vmatpush.bf16.msra.mxu0 0
        %2964 = vmatpush.bf16.msra.mxu0 0
        %2965 = vmatpush.bf16.msra.mxu0 0
        %2966 = vmatpush.bf16.msra.mxu0 0
        %2967 = vmatpush.bf16.msra.mxu0 %v2959
        %2968 = vmatpush.bf16.msra.mxu0 %v2939
        %2969 = vmatmul.bf16.gmra.mxu0 %v2942
        %v2970 = vpop.f32.mrf.mxu0
        %v2971 = vadd.f32 0.0, %v2970
        %v2972 = vpop.f32.mrf.mxu0
        %v2973 = vadd.f32 0.0, %v2972
        %2974 = vmatmul.bf16.gmra.mxu0 %v2944
        %v2975 = vpop.f32.mrf.mxu0
        %v2976 = vadd.f32 0.0, %v2975
        %v2977 = vpop.f32.mrf.mxu0
        %v2978 = vadd.f32 0.0, %v2977
        %2979 = vmatmul.bf16.gmra.mxu0 %v2946
        %v2980 = vpop.f32.mrf.mxu0
        %v2981 = vadd.f32 0.0, %v2980
        %v2982 = vpop.f32.mrf.mxu0
        %v2983 = vadd.f32 0.0, %v2982
        %2984 = vmatmul.bf16.gmra.mxu0 %v2948
        %v2985 = vpop.f32.mrf.mxu0
        %v2986 = vadd.f32 0.0, %v2985
        %v2987 = vpop.f32.mrf.mxu0
        %v2988 = vadd.f32 0.0, %v2987
        %2989 = vmatmul.bf16.gmra.mxu0 %v2950
        %v2990 = vpop.f32.mrf.mxu0
        %v2991 = vadd.f32 0.0, %v2990
        %v2992 = vpop.f32.mrf.mxu0
        %v2993 = vadd.f32 0.0, %v2992
        %2994 = vmatmul.bf16.gmra.mxu0 %v2952
        %v2995 = vpop.f32.mrf.mxu0
        %v2996 = vadd.f32 0.0, %v2995
        %v2997 = vpop.f32.mrf.mxu0
        %v2998 = vadd.f32 0.0, %v2997
        %2999 = vmatmul.bf16.gmra.mxu0 %v2954
        %v3000 = vpop.f32.mrf.mxu0
        %v3001 = vadd.f32 0.0, %v3000
        %v3002 = vpop.f32.mrf.mxu0
        %v3003 = vadd.f32 0.0, %v3002
        %3004 = vmatmul.bf16.gmra.mxu0 %v2956
        %v3005 = vpop.f32.mrf.mxu0
        %v3006 = vadd.f32 0.0, %v3005
        %v3007 = vpop.f32.mrf.mxu0
        %v3008 = vadd.f32 0.0, %v3007
        %3009 = vdwg.mxu0
        %v3010 = vadd.f32 %v2585, %v2971
        %v3011 = vadd.f32 %v2587, %v2973
        %v3012 = vadd.f32 %v2590, %v2976
        %v3013 = vadd.f32 %v2592, %v2978
        %v3014 = vadd.f32 %v2595, %v2981
        %v3015 = vadd.f32 %v2597, %v2983
        %v3016 = vadd.f32 %v2600, %v2986
        %v3017 = vadd.f32 %v2602, %v2988
        %v3018 = vadd.f32 %v2605, %v2991
        %v3019 = vadd.f32 %v2607, %v2993
        %v3020 = vadd.f32 %v2610, %v2996
        %v3021 = vadd.f32 %v2612, %v2998
        %v3022 = vadd.f32 %v2615, %v3001
        %v3023 = vadd.f32 %v2617, %v3003
        %v3024 = vadd.f32 %v2620, %v3006
        %v3025 = vadd.f32 %v2622, %v3008
        %v3026 = vld [vmem:[%s8] sm:$0x1]
        %v3027 = vperm.slane %v3026, 0
        %v3028 = vmul.f32 %v3010, %v3027
        %v3029 = vmul.f32 %v3011, %v3027
        %v3030 = vmul.f32 %v3012, %v3027
        %v3031 = vmul.f32 %v3013, %v3027
        %v3032 = vmul.f32 %v3014, %v3027
        %v3033 = vmul.f32 %v3015, %v3027
        %v3034 = vmul.f32 %v3016, %v3027
        %v3035 = vmul.f32 %v3017, %v3027
        %v3036 = vmul.f32 %v3018, %v3027
        %v3037 = vmul.f32 %v3019, %v3027
        %v3038 = vmul.f32 %v3020, %v3027
        %v3039 = vmul.f32 %v3021, %v3027
        %v3040 = vmul.f32 %v3022, %v3027
        %v3041 = vmul.f32 %v3023, %v3027
        %v3042 = vmul.f32 %v3024, %v3027
        %v3043 = vmul.f32 %v3025, %v3027
        %v3044 = vld [vmem:[%s9] sm:$0x1]
        %v3045 = vperm.slane %v3044, 0
        %v3046 = vadd.f32 %v3028, %v3045
        %v3047 = vadd.f32 %v3029, %v3045
        %v3048 = vadd.f32 %v3030, %v3045
        %v3049 = vadd.f32 %v3031, %v3045
        %v3050 = vadd.f32 %v3032, %v3045
        %v3051 = vadd.f32 %v3033, %v3045
        %v3052 = vadd.f32 %v3034, %v3045
        %v3053 = vadd.f32 %v3035, %v3045
        %v3054 = vadd.f32 %v3036, %v3045
        %v3055 = vadd.f32 %v3037, %v3045
        %v3056 = vadd.f32 %v3038, %v3045
        %v3057 = vadd.f32 %v3039, %v3045
        %v3058 = vadd.f32 %v3040, %v3045
        %v3059 = vadd.f32 %v3041, %v3045
        %v3060 = vadd.f32 %v3042, %v3045
        %v3061 = vadd.f32 %v3043, %v3045
        %v3062 = vld [vmem:[%s1778] sm:$0xf]
        %v3063 = vld [vmem:[%s1778 + $0x4] sm:$0xf]
        %v3064 = vld [vmem:[%s1778 + $0xc] sm:$0xf]
        %v3065 = vld [vmem:[%s1778 + $0x10] sm:$0xf]
        %v3066 = vld [vmem:[%s1778 + $0x18] sm:$0xf]
        %v3067 = vld [vmem:[%s1778 + $0x1c] sm:$0xf]
        %v3068 = vld [vmem:[%s1778 + $0x24] sm:$0xf]
        %v3069 = vld [vmem:[%s1778 + $0x28] sm:$0xf]
        %v3070 = vld [vmem:[%s1778 + $0x30] sm:$0xf]
        %v3071 = vld [vmem:[%s1778 + $0x34] sm:$0xf]
        %v3072 = vld [vmem:[%s1778 + $0x3c] sm:$0xf]
        %v3073 = vld [vmem:[%s1778 + $0x40] sm:$0xf]
        %v3074 = vld [vmem:[%s1778 + $0x48] sm:$0xf]
        %v3075 = vld [vmem:[%s1778 + $0x4c] sm:$0xf]
        %v3076 = vld [vmem:[%s1778 + $0x54] sm:$0xf]
        %v3077 = vld [vmem:[%s1778 + $0x58] sm:$0xf]
        %v3078 = vld [vmem:[%s1778 + $0x8] sm:$0x1]
        %v3079 = vld [vmem:[%s1778 + $0x14] sm:$0x1]
        %v3080 = vld [vmem:[%s1778 + $0x20] sm:$0x1]
        %v3081 = vld [vmem:[%s1778 + $0x2c] sm:$0x1]
        %v3082 = vld [vmem:[%s1778 + $0x38] sm:$0x1]
        %v3083 = vld [vmem:[%s1778 + $0x44] sm:$0x1]
        %v3084 = vld [vmem:[%s1778 + $0x50] sm:$0x1]
        %v3085 = vld [vmem:[%s1778 + $0x5c] sm:$0x1]
        %v3086 = vld [vmem:[%s1778] sm:$0xe]
        %v3087 = vld [vmem:[%s1778 + $0xc] sm:$0xe]
        %v3088 = vld [vmem:[%s1778 + $0x18] sm:$0xe]
        %v3089 = vld [vmem:[%s1778 + $0x24] sm:$0xe]
        %v3090 = vld [vmem:[%s1778 + $0x30] sm:$0xe]
        %v3091 = vld [vmem:[%s1778 + $0x3c] sm:$0xe]
        %v3092 = vld [vmem:[%s1778 + $0x48] sm:$0xe]
        %v3093 = vld [vmem:[%s1778 + $0x54] sm:$0xe]
        %v3110 = vunpack.c.l.b16 %v3062
        %v3111 = vunpack.c.l.b16 %v3063
        %v3112 = vunpack.c.l.b16 %v3064
        %v3113 = vunpack.c.l.b16 %v3065
        %v3114 = vunpack.c.l.b16 %v3066
        %v3115 = vunpack.c.l.b16 %v3067
        %v3116 = vunpack.c.l.b16 %v3068
        %v3117 = vunpack.c.l.b16 %v3069
        %v3118 = vunpack.c.l.b16 %v3070
        %v3119 = vunpack.c.l.b16 %v3071
        %v3120 = vunpack.c.l.b16 %v3072
        %v3121 = vunpack.c.l.b16 %v3073
        %v3122 = vunpack.c.l.b16 %v3074
        %v3123 = vunpack.c.l.b16 %v3075
        %v3124 = vunpack.c.l.b16 %v3076
        %v3125 = vunpack.c.l.b16 %v3077
        %v3126 = vpack.c.b16 %v3111, %v3110
        %v3127 = vpack.c.b16 %v3113, %v3112
        %v3128 = vpack.c.b16 %v3115, %v3114
        %v3129 = vpack.c.b16 %v3117, %v3116
        %v3130 = vpack.c.b16 %v3119, %v3118
        %v3131 = vpack.c.b16 %v3121, %v3120
        %v3132 = vpack.c.b16 %v3123, %v3122
        %v3133 = vpack.c.b16 %v3125, %v3124
        %v3142 = vunpack.c.l.b16 %v3078
        %v3143 = vunpack.c.l.b16 %v3079
        %v3144 = vunpack.c.l.b16 %v3080
        %v3145 = vunpack.c.l.b16 %v3081
        %v3146 = vunpack.c.l.b16 %v3082
        %v3147 = vunpack.c.l.b16 %v3083
        %v3148 = vunpack.c.l.b16 %v3084
        %v3149 = vunpack.c.l.b16 %v3085
        %v3150 = vpack.c.b16 %v3142, %v3142
        %v3151 = vpack.c.b16 %v3143, %v3143
        %v3152 = vpack.c.b16 %v3144, %v3144
        %v3153 = vpack.c.b16 %v3145, %v3145
        %v3154 = vpack.c.b16 %v3146, %v3146
        %v3155 = vpack.c.b16 %v3147, %v3147
        %v3156 = vpack.c.b16 %v3148, %v3148
        %v3157 = vpack.c.b16 %v3149, %v3149
        %v3159 = vshrl.u32 %v3126, 16
        %v3161 = vshll.u32 %v3126, 16
        %v3163 = vrot.slane %v3161, 1
        %v3164 = vor.u32 %v3159, %v3163
        %v3166 = vshll.u32 %v3150, 16
        %v3168 = vrot.slane %v3166, 1
        %v3169 = vsel %vm1945, %v3164, %v3168
        %v3171 = vshrl.u32 %v3127, 16
        %v3173 = vshll.u32 %v3127, 16
        %v3175 = vrot.slane %v3173, 1
        %v3176 = vor.u32 %v3171, %v3175
        %v3178 = vshll.u32 %v3151, 16
        %v3180 = vrot.slane %v3178, 1
        %v3181 = vsel %vm1945, %v3176, %v3180
        %v3183 = vshrl.u32 %v3128, 16
        %v3185 = vshll.u32 %v3128, 16
        %v3187 = vrot.slane %v3185, 1
        %v3188 = vor.u32 %v3183, %v3187
        %v3190 = vshll.u32 %v3152, 16
        %v3192 = vrot.slane %v3190, 1
        %v3193 = vsel %vm1945, %v3188, %v3192
        %v3195 = vshrl.u32 %v3129, 16
        %v3197 = vshll.u32 %v3129, 16
        %v3199 = vrot.slane %v3197, 1
        %v3200 = vor.u32 %v3195, %v3199
        %v3202 = vshll.u32 %v3153, 16
        %v3204 = vrot.slane %v3202, 1
        %v3205 = vsel %vm1945, %v3200, %v3204
        %v3207 = vshrl.u32 %v3130, 16
        %v3209 = vshll.u32 %v3130, 16
        %v3211 = vrot.slane %v3209, 1
        %v3212 = vor.u32 %v3207, %v3211
        %v3214 = vshll.u32 %v3154, 16
        %v3216 = vrot.slane %v3214, 1
        %v3217 = vsel %vm1945, %v3212, %v3216
        %v3219 = vshrl.u32 %v3131, 16
        %v3221 = vshll.u32 %v3131, 16
        %v3223 = vrot.slane %v3221, 1
        %v3224 = vor.u32 %v3219, %v3223
        %v3226 = vshll.u32 %v3155, 16
        %v3228 = vrot.slane %v3226, 1
        %v3229 = vsel %vm1945, %v3224, %v3228
        %v3231 = vshrl.u32 %v3132, 16
        %v3233 = vshll.u32 %v3132, 16
        %v3235 = vrot.slane %v3233, 1
        %v3236 = vor.u32 %v3231, %v3235
        %v3238 = vshll.u32 %v3156, 16
        %v3240 = vrot.slane %v3238, 1
        %v3241 = vsel %vm1945, %v3236, %v3240
        %v3243 = vshrl.u32 %v3133, 16
        %v3245 = vshll.u32 %v3133, 16
        %v3247 = vrot.slane %v3245, 1
        %v3248 = vor.u32 %v3243, %v3247
        %v3250 = vshll.u32 %v3157, 16
        %v3252 = vrot.slane %v3250, 1
        %v3253 = vsel %vm1945, %v3248, %v3252
        %3254 = vrot.lane.b32.xlu0 %v3169, 8
        %v3255 = vpop.permute.xlu0 %3254
        %3256 = vrot.lane.b32.xlu0 %v3181, 8
        %v3257 = vpop.permute.xlu0 %3256
        %3258 = vrot.lane.b32.xlu0 %v3193, 8
        %v3259 = vpop.permute.xlu0 %3258
        %3260 = vrot.lane.b32.xlu0 %v3205, 8
        %v3261 = vpop.permute.xlu0 %3260
        %3262 = vrot.lane.b32.xlu0 %v3217, 8
        %v3263 = vpop.permute.xlu0 %3262
        %3264 = vrot.lane.b32.xlu0 %v3229, 8
        %v3265 = vpop.permute.xlu0 %3264
        %3266 = vrot.lane.b32.xlu0 %v3241, 8
        %v3267 = vpop.permute.xlu0 %3266
        %3268 = vrot.lane.b32.xlu0 %v3253, 8
        %v3269 = vpop.permute.xlu0 %3268
        %v3278 = vunpack.c.l.b16 %v3086
        %v3279 = vunpack.c.l.b16 %v3087
        %v3280 = vunpack.c.l.b16 %v3088
        %v3281 = vunpack.c.l.b16 %v3089
        %v3282 = vunpack.c.l.b16 %v3090
        %v3283 = vunpack.c.l.b16 %v3091
        %v3284 = vunpack.c.l.b16 %v3092
        %v3285 = vunpack.c.l.b16 %v3093
        %v3286 = vpack.c.b16 %v3111, %v3278
        %v3287 = vpack.c.b16 %v3113, %v3279
        %v3288 = vpack.c.b16 %v3115, %v3280
        %v3289 = vpack.c.b16 %v3117, %v3281
        %v3290 = vpack.c.b16 %v3119, %v3282
        %v3291 = vpack.c.b16 %v3121, %v3283
        %v3292 = vpack.c.b16 %v3123, %v3284
        %v3293 = vpack.c.b16 %v3125, %v3285
        %v3294 = vrot.slane %v3286, 1
        %v3295 = vrot.slane %v3150, 1
        %v3296 = vsel %vm2082, %v3294, %v3295
        %v3297 = vrot.slane %v3287, 1
        %v3298 = vrot.slane %v3151, 1
        %v3299 = vsel %vm2082, %v3297, %v3298
        %v3300 = vrot.slane %v3288, 1
        %v3301 = vrot.slane %v3152, 1
        %v3302 = vsel %vm2082, %v3300, %v3301
        %v3303 = vrot.slane %v3289, 1
        %v3304 = vrot.slane %v3153, 1
        %v3305 = vsel %vm2082, %v3303, %v3304
        %v3306 = vrot.slane %v3290, 1
        %v3307 = vrot.slane %v3154, 1
        %v3308 = vsel %vm2082, %v3306, %v3307
        %v3309 = vrot.slane %v3291, 1
        %v3310 = vrot.slane %v3155, 1
        %v3311 = vsel %vm2082, %v3309, %v3310
        %v3312 = vrot.slane %v3292, 1
        %v3313 = vrot.slane %v3156, 1
        %v3314 = vsel %vm2082, %v3312, %v3313
        %v3315 = vrot.slane %v3293, 1
        %v3316 = vrot.slane %v3157, 1
        %v3317 = vsel %vm2082, %v3315, %v3316
        %3318 = vrot.lane.b32.xlu0 %v3296, 16
        %v3319 = vpop.permute.xlu0 %3318
        %3320 = vrot.lane.b32.xlu0 %v3299, 16
        %v3321 = vpop.permute.xlu0 %3320
        %3322 = vrot.lane.b32.xlu0 %v3302, 16
        %v3323 = vpop.permute.xlu0 %3322
        %3324 = vrot.lane.b32.xlu0 %v3305, 16
        %v3325 = vpop.permute.xlu0 %3324
        %3326 = vrot.lane.b32.xlu0 %v3308, 16
        %v3327 = vpop.permute.xlu0 %3326
        %3328 = vrot.lane.b32.xlu0 %v3311, 16
        %v3329 = vpop.permute.xlu0 %3328
        %3330 = vrot.lane.b32.xlu0 %v3314, 16
        %v3331 = vpop.permute.xlu0 %3330
        %3332 = vrot.lane.b32.xlu0 %v3317, 16
        %v3333 = vpop.permute.xlu0 %3332
        %v3335 = vsel %vm2123, %v3126, %v3255
        %v3337 = vsel %vm2123, %v3127, %v3257
        %v3339 = vsel %vm2123, %v3128, %v3259
        %v3341 = vsel %vm2123, %v3129, %v3261
        %v3343 = vsel %vm2123, %v3130, %v3263
        %v3345 = vsel %vm2123, %v3131, %v3265
        %v3347 = vsel %vm2123, %v3132, %v3267
        %v3349 = vsel %vm2123, %v3133, %v3269
        %v3351 = vsel %vm2140, %v3335, %v3319
        %v3353 = vsel %vm2140, %v3337, %v3321
        %v3355 = vsel %vm2140, %v3339, %v3323
        %v3357 = vsel %vm2140, %v3341, %v3325
        %v3359 = vsel %vm2140, %v3343, %v3327
        %v3361 = vsel %vm2140, %v3345, %v3329
        %v3363 = vsel %vm2140, %v3347, %v3331
        %v3365 = vsel %vm2140, %v3349, %v3333
        %v3366 = vld [vmem:[%s1666] sm:$0xf]
        %v3367 = vld [vmem:[%s1666 + $0x4] sm:$0xf]
        %v3368 = vld [vmem:[%s1666 + $0xc] sm:$0xf]
        %v3369 = vld [vmem:[%s1666 + $0x10] sm:$0xf]
        %v3370 = vld [vmem:[%s1666 + $0x18] sm:$0xf]
        %v3371 = vld [vmem:[%s1666 + $0x1c] sm:$0xf]
        %v3372 = vld [vmem:[%s1666 + $0x24] sm:$0xf]
        %v3373 = vld [vmem:[%s1666 + $0x28] sm:$0xf]
        %v3374 = vld [vmem:[%s1666 + $0x30] sm:$0xf]
        %v3375 = vld [vmem:[%s1666 + $0x34] sm:$0xf]
        %v3376 = vld [vmem:[%s1666 + $0x3c] sm:$0xf]
        %v3377 = vld [vmem:[%s1666 + $0x40] sm:$0xf]
        %v3378 = vld [vmem:[%s1666 + $0x48] sm:$0xf]
        %v3379 = vld [vmem:[%s1666 + $0x4c] sm:$0xf]
        %v3380 = vld [vmem:[%s1666 + $0x54] sm:$0xf]
        %v3381 = vld [vmem:[%s1666 + $0x58] sm:$0xf]
        %v3382 = vld [vmem:[%s1666 + $0x8] sm:$0x1]
        %v3383 = vld [vmem:[%s1666 + $0x14] sm:$0x1]
        %v3384 = vld [vmem:[%s1666 + $0x20] sm:$0x1]
        %v3385 = vld [vmem:[%s1666 + $0x2c] sm:$0x1]
        %v3386 = vld [vmem:[%s1666 + $0x38] sm:$0x1]
        %v3387 = vld [vmem:[%s1666 + $0x44] sm:$0x1]
        %v3388 = vld [vmem:[%s1666 + $0x50] sm:$0x1]
        %v3389 = vld [vmem:[%s1666 + $0x5c] sm:$0x1]
        %v3390 = vld [vmem:[%s1666] sm:$0xe]
        %v3391 = vld [vmem:[%s1666 + $0xc] sm:$0xe]
        %v3392 = vld [vmem:[%s1666 + $0x18] sm:$0xe]
        %v3393 = vld [vmem:[%s1666 + $0x24] sm:$0xe]
        %v3394 = vld [vmem:[%s1666 + $0x30] sm:$0xe]
        %v3395 = vld [vmem:[%s1666 + $0x3c] sm:$0xe]
        %v3396 = vld [vmem:[%s1666 + $0x48] sm:$0xe]
        %v3397 = vld [vmem:[%s1666 + $0x54] sm:$0xe]
        %v3414 = vunpack.c.l.b16 %v3366
        %v3415 = vunpack.c.l.b16 %v3367
        %v3416 = vunpack.c.l.b16 %v3368
        %v3417 = vunpack.c.l.b16 %v3369
        %v3418 = vunpack.c.l.b16 %v3370
        %v3419 = vunpack.c.l.b16 %v3371
        %v3420 = vunpack.c.l.b16 %v3372
        %v3421 = vunpack.c.l.b16 %v3373
        %v3422 = vunpack.c.l.b16 %v3374
        %v3423 = vunpack.c.l.b16 %v3375
        %v3424 = vunpack.c.l.b16 %v3376
        %v3425 = vunpack.c.l.b16 %v3377
        %v3426 = vunpack.c.l.b16 %v3378
        %v3427 = vunpack.c.l.b16 %v3379
        %v3428 = vunpack.c.l.b16 %v3380
        %v3429 = vunpack.c.l.b16 %v3381
        %v3430 = vpack.c.b16 %v3415, %v3414
        %v3431 = vpack.c.b16 %v3417, %v3416
        %v3432 = vpack.c.b16 %v3419, %v3418
        %v3433 = vpack.c.b16 %v3421, %v3420
        %v3434 = vpack.c.b16 %v3423, %v3422
        %v3435 = vpack.c.b16 %v3425, %v3424
        %v3436 = vpack.c.b16 %v3427, %v3426
        %v3437 = vpack.c.b16 %v3429, %v3428
        %v3446 = vunpack.c.l.b16 %v3382
        %v3447 = vunpack.c.l.b16 %v3383
        %v3448 = vunpack.c.l.b16 %v3384
        %v3449 = vunpack.c.l.b16 %v3385
        %v3450 = vunpack.c.l.b16 %v3386
        %v3451 = vunpack.c.l.b16 %v3387
        %v3452 = vunpack.c.l.b16 %v3388
        %v3453 = vunpack.c.l.b16 %v3389
        %v3454 = vpack.c.b16 %v3446, %v3446
        %v3455 = vpack.c.b16 %v3447, %v3447
        %v3456 = vpack.c.b16 %v3448, %v3448
        %v3457 = vpack.c.b16 %v3449, %v3449
        %v3458 = vpack.c.b16 %v3450, %v3450
        %v3459 = vpack.c.b16 %v3451, %v3451
        %v3460 = vpack.c.b16 %v3452, %v3452
        %v3461 = vpack.c.b16 %v3453, %v3453
        %v3463 = vshrl.u32 %v3430, 16
        %v3465 = vshll.u32 %v3430, 16
        %v3467 = vrot.slane %v3465, 1
        %v3468 = vor.u32 %v3463, %v3467
        %v3470 = vshll.u32 %v3454, 16
        %v3472 = vrot.slane %v3470, 1
        %v3473 = vsel %vm1945, %v3468, %v3472
        %v3475 = vshrl.u32 %v3431, 16
        %v3477 = vshll.u32 %v3431, 16
        %v3479 = vrot.slane %v3477, 1
        %v3480 = vor.u32 %v3475, %v3479
        %v3482 = vshll.u32 %v3455, 16
        %v3484 = vrot.slane %v3482, 1
        %v3485 = vsel %vm1945, %v3480, %v3484
        %v3487 = vshrl.u32 %v3432, 16
        %v3489 = vshll.u32 %v3432, 16
        %v3491 = vrot.slane %v3489, 1
        %v3492 = vor.u32 %v3487, %v3491
        %v3494 = vshll.u32 %v3456, 16
        %v3496 = vrot.slane %v3494, 1
        %v3497 = vsel %vm1945, %v3492, %v3496
        %v3499 = vshrl.u32 %v3433, 16
        %v3501 = vshll.u32 %v3433, 16
        %v3503 = vrot.slane %v3501, 1
        %v3504 = vor.u32 %v3499, %v3503
        %v3506 = vshll.u32 %v3457, 16
        %v3508 = vrot.slane %v3506, 1
        %v3509 = vsel %vm1945, %v3504, %v3508
        %v3511 = vshrl.u32 %v3434, 16
        %v3513 = vshll.u32 %v3434, 16
        %v3515 = vrot.slane %v3513, 1
        %v3516 = vor.u32 %v3511, %v3515
        %v3518 = vshll.u32 %v3458, 16
        %v3520 = vrot.slane %v3518, 1
        %v3521 = vsel %vm1945, %v3516, %v3520
        %v3523 = vshrl.u32 %v3435, 16
        %v3525 = vshll.u32 %v3435, 16
        %v3527 = vrot.slane %v3525, 1
        %v3528 = vor.u32 %v3523, %v3527
        %v3530 = vshll.u32 %v3459, 16
        %v3532 = vrot.slane %v3530, 1
        %v3533 = vsel %vm1945, %v3528, %v3532
        %v3535 = vshrl.u32 %v3436, 16
        %v3537 = vshll.u32 %v3436, 16
        %v3539 = vrot.slane %v3537, 1
        %v3540 = vor.u32 %v3535, %v3539
        %v3542 = vshll.u32 %v3460, 16
        %v3544 = vrot.slane %v3542, 1
        %v3545 = vsel %vm1945, %v3540, %v3544
        %v3547 = vshrl.u32 %v3437, 16
        %v3549 = vshll.u32 %v3437, 16
        %v3551 = vrot.slane %v3549, 1
        %v3552 = vor.u32 %v3547, %v3551
        %v3554 = vshll.u32 %v3461, 16
        %v3556 = vrot.slane %v3554, 1
        %v3557 = vsel %vm1945, %v3552, %v3556
        %3558 = vrot.lane.b32.xlu0 %v3473, 8
        %v3559 = vpop.permute.xlu0 %3558
        %3560 = vrot.lane.b32.xlu0 %v3485, 8
        %v3561 = vpop.permute.xlu0 %3560
        %3562 = vrot.lane.b32.xlu0 %v3497, 8
        %v3563 = vpop.permute.xlu0 %3562
        %3564 = vrot.lane.b32.xlu0 %v3509, 8
        %v3565 = vpop.permute.xlu0 %3564
        %3566 = vrot.lane.b32.xlu0 %v3521, 8
        %v3567 = vpop.permute.xlu0 %3566
        %3568 = vrot.lane.b32.xlu0 %v3533, 8
        %v3569 = vpop.permute.xlu0 %3568
        %3570 = vrot.lane.b32.xlu0 %v3545, 8
        %v3571 = vpop.permute.xlu0 %3570
        %3572 = vrot.lane.b32.xlu0 %v3557, 8
        %v3573 = vpop.permute.xlu0 %3572
        %v3582 = vunpack.c.l.b16 %v3390
        %v3583 = vunpack.c.l.b16 %v3391
        %v3584 = vunpack.c.l.b16 %v3392
        %v3585 = vunpack.c.l.b16 %v3393
        %v3586 = vunpack.c.l.b16 %v3394
        %v3587 = vunpack.c.l.b16 %v3395
        %v3588 = vunpack.c.l.b16 %v3396
        %v3589 = vunpack.c.l.b16 %v3397
        %v3590 = vpack.c.b16 %v3415, %v3582
        %v3591 = vpack.c.b16 %v3417, %v3583
        %v3592 = vpack.c.b16 %v3419, %v3584
        %v3593 = vpack.c.b16 %v3421, %v3585
        %v3594 = vpack.c.b16 %v3423, %v3586
        %v3595 = vpack.c.b16 %v3425, %v3587
        %v3596 = vpack.c.b16 %v3427, %v3588
        %v3597 = vpack.c.b16 %v3429, %v3589
        %v3598 = vrot.slane %v3590, 1
        %v3599 = vrot.slane %v3454, 1
        %v3600 = vsel %vm2082, %v3598, %v3599
        %v3601 = vrot.slane %v3591, 1
        %v3602 = vrot.slane %v3455, 1
        %v3603 = vsel %vm2082, %v3601, %v3602
        %v3604 = vrot.slane %v3592, 1
        %v3605 = vrot.slane %v3456, 1
        %v3606 = vsel %vm2082, %v3604, %v3605
        %v3607 = vrot.slane %v3593, 1
        %v3608 = vrot.slane %v3457, 1
        %v3609 = vsel %vm2082, %v3607, %v3608
        %v3610 = vrot.slane %v3594, 1
        %v3611 = vrot.slane %v3458, 1
        %v3612 = vsel %vm2082, %v3610, %v3611
        %v3613 = vrot.slane %v3595, 1
        %v3614 = vrot.slane %v3459, 1
        %v3615 = vsel %vm2082, %v3613, %v3614
        %v3616 = vrot.slane %v3596, 1
        %v3617 = vrot.slane %v3460, 1
        %v3618 = vsel %vm2082, %v3616, %v3617
        %v3619 = vrot.slane %v3597, 1
        %v3620 = vrot.slane %v3461, 1
        %v3621 = vsel %vm2082, %v3619, %v3620
        %3622 = vrot.lane.b32.xlu0 %v3600, 16
        %v3623 = vpop.permute.xlu0 %3622
        %3624 = vrot.lane.b32.xlu0 %v3603, 16
        %v3625 = vpop.permute.xlu0 %3624
        %3626 = vrot.lane.b32.xlu0 %v3606, 16
        %v3627 = vpop.permute.xlu0 %3626
        %3628 = vrot.lane.b32.xlu0 %v3609, 16
        %v3629 = vpop.permute.xlu0 %3628
        %3630 = vrot.lane.b32.xlu0 %v3612, 16
        %v3631 = vpop.permute.xlu0 %3630
        %3632 = vrot.lane.b32.xlu0 %v3615, 16
        %v3633 = vpop.permute.xlu0 %3632
        %3634 = vrot.lane.b32.xlu0 %v3618, 16
        %v3635 = vpop.permute.xlu0 %3634
        %3636 = vrot.lane.b32.xlu0 %v3621, 16
        %v3637 = vpop.permute.xlu0 %3636
        %v3639 = vsel %vm2123, %v3430, %v3559
        %v3641 = vsel %vm2123, %v3431, %v3561
        %v3643 = vsel %vm2123, %v3432, %v3563
        %v3645 = vsel %vm2123, %v3433, %v3565
        %v3647 = vsel %vm2123, %v3434, %v3567
        %v3649 = vsel %vm2123, %v3435, %v3569
        %v3651 = vsel %vm2123, %v3436, %v3571
        %v3653 = vsel %vm2123, %v3437, %v3573
        %v3655 = vsel %vm2140, %v3639, %v3623
        %v3657 = vsel %vm2140, %v3641, %v3625
        %v3659 = vsel %vm2140, %v3643, %v3627
        %v3661 = vsel %vm2140, %v3645, %v3629
        %v3663 = vsel %vm2140, %v3647, %v3631
        %v3665 = vsel %vm2140, %v3649, %v3633
        %v3667 = vsel %vm2140, %v3651, %v3635
        %v3669 = vsel %vm2140, %v3653, %v3637
        %v3670 = vsel %vm2477, %v3655, 0
        %v3672 = vsel %vm2477, %v3657, 0
        %v3674 = vsel %vm2477, %v3659, 0
        %v3676 = vsel %vm2477, %v3661, 0
        %v3678 = vsel %vm2477, %v3663, 0
        %v3680 = vsel %vm2477, %v3665, 0
        %v3682 = vsel %vm2477, %v3667, 0
        %v3684 = vsel %vm2477, %v3669, 0
        %3686 = vmatpush.bf16.msra.mxu0 0
        %3687 = vmatpush.bf16.msra.mxu0 0
        %3688 = vmatpush.bf16.msra.mxu0 0
        %3689 = vmatpush.bf16.msra.mxu0 0
        %3690 = vmatpush.bf16.msra.mxu0 0
        %3691 = vmatpush.bf16.msra.mxu0 0
        %3692 = vmatpush.bf16.msra.mxu0 %v2496
        %3693 = vmatpush.bf16.msra.mxu0 %v2474
        %3694 = vmatmul.bf16.gmra.mxu0 %v3670
        %v3695 = vpop.f32.mrf.mxu0
        %v3696 = vadd.f32 0.0, %v3695
        %v3697 = vpop.f32.mrf.mxu0
        %v3698 = vadd.f32 0.0, %v3697
        %3699 = vmatmul.bf16.gmra.mxu0 %v3672
        %v3700 = vpop.f32.mrf.mxu0
        %v3701 = vadd.f32 0.0, %v3700
        %v3702 = vpop.f32.mrf.mxu0
        %v3703 = vadd.f32 0.0, %v3702
        %3704 = vmatmul.bf16.gmra.mxu0 %v3674
        %v3705 = vpop.f32.mrf.mxu0
        %v3706 = vadd.f32 0.0, %v3705
        %v3707 = vpop.f32.mrf.mxu0
        %v3708 = vadd.f32 0.0, %v3707
        %3709 = vmatmul.bf16.gmra.mxu0 %v3676
        %v3710 = vpop.f32.mrf.mxu0
        %v3711 = vadd.f32 0.0, %v3710
        %v3712 = vpop.f32.mrf.mxu0
        %v3713 = vadd.f32 0.0, %v3712
        %3714 = vmatmul.bf16.gmra.mxu0 %v3678
        %v3715 = vpop.f32.mrf.mxu0
        %v3716 = vadd.f32 0.0, %v3715
        %v3717 = vpop.f32.mrf.mxu0
        %v3718 = vadd.f32 0.0, %v3717
        %3719 = vmatmul.bf16.gmra.mxu0 %v3680
        %v3720 = vpop.f32.mrf.mxu0
        %v3721 = vadd.f32 0.0, %v3720
        %v3722 = vpop.f32.mrf.mxu0
        %v3723 = vadd.f32 0.0, %v3722
        %3724 = vmatmul.bf16.gmra.mxu0 %v3682
        %v3725 = vpop.f32.mrf.mxu0
        %v3726 = vadd.f32 0.0, %v3725
        %v3727 = vpop.f32.mrf.mxu0
        %v3728 = vadd.f32 0.0, %v3727
        %3729 = vmatmul.bf16.gmra.mxu0 %v3684
        %v3730 = vpop.f32.mrf.mxu0
        %v3731 = vadd.f32 0.0, %v3730
        %v3732 = vpop.f32.mrf.mxu0
        %v3733 = vadd.f32 0.0, %v3732
        %3734 = vdwg.mxu0
        %v3735 = vsel %vm2477, %v3351, 0
        %v3737 = vsel %vm2477, %v3353, 0
        %v3739 = vsel %vm2477, %v3355, 0
        %v3741 = vsel %vm2477, %v3357, 0
        %v3743 = vsel %vm2477, %v3359, 0
        %v3745 = vsel %vm2477, %v3361, 0
        %v3747 = vsel %vm2477, %v3363, 0
        %v3749 = vsel %vm2477, %v3365, 0
        %3751 = vmatpush.bf16.msra.mxu0 0
        %3752 = vmatpush.bf16.msra.mxu0 0
        %3753 = vmatpush.bf16.msra.mxu0 0
        %3754 = vmatpush.bf16.msra.mxu0 0
        %3755 = vmatpush.bf16.msra.mxu0 0
        %3756 = vmatpush.bf16.msra.mxu0 0
        %3757 = vmatpush.bf16.msra.mxu0 %v2573
        %3758 = vmatpush.bf16.msra.mxu0 %v2553
        %3759 = vmatmul.bf16.gmra.mxu0 %v3735
        %v3760 = vpop.f32.mrf.mxu0
        %v3761 = vadd.f32 %v3696, %v3760
        %v3762 = vpop.f32.mrf.mxu0
        %v3763 = vadd.f32 %v3698, %v3762
        %3764 = vmatmul.bf16.gmra.mxu0 %v3737
        %v3765 = vpop.f32.mrf.mxu0
        %v3766 = vadd.f32 %v3701, %v3765
        %v3767 = vpop.f32.mrf.mxu0
        %v3768 = vadd.f32 %v3703, %v3767
        %3769 = vmatmul.bf16.gmra.mxu0 %v3739
        %v3770 = vpop.f32.mrf.mxu0
        %v3771 = vadd.f32 %v3706, %v3770
        %v3772 = vpop.f32.mrf.mxu0
        %v3773 = vadd.f32 %v3708, %v3772
        %3774 = vmatmul.bf16.gmra.mxu0 %v3741
        %v3775 = vpop.f32.mrf.mxu0
        %v3776 = vadd.f32 %v3711, %v3775
        %v3777 = vpop.f32.mrf.mxu0
        %v3778 = vadd.f32 %v3713, %v3777
        %3779 = vmatmul.bf16.gmra.mxu0 %v3743
        %v3780 = vpop.f32.mrf.mxu0
        %v3781 = vadd.f32 %v3716, %v3780
        %v3782 = vpop.f32.mrf.mxu0
        %v3783 = vadd.f32 %v3718, %v3782
        %3784 = vmatmul.bf16.gmra.mxu0 %v3745
        %v3785 = vpop.f32.mrf.mxu0
        %v3786 = vadd.f32 %v3721, %v3785
        %v3787 = vpop.f32.mrf.mxu0
        %v3788 = vadd.f32 %v3723, %v3787
        %3789 = vmatmul.bf16.gmra.mxu0 %v3747
        %v3790 = vpop.f32.mrf.mxu0
        %v3791 = vadd.f32 %v3726, %v3790
        %v3792 = vpop.f32.mrf.mxu0
        %v3793 = vadd.f32 %v3728, %v3792
        %3794 = vmatmul.bf16.gmra.mxu0 %v3749
        %v3795 = vpop.f32.mrf.mxu0
        %v3796 = vadd.f32 %v3731, %v3795
        %v3797 = vpop.f32.mrf.mxu0
        %v3798 = vadd.f32 %v3733, %v3797
        %3799 = vdwg.mxu0
        %s3800 = scalar_lea.vmem [#allocation2], 144
        %v3801 = vld [vmem:[%s3800] sm:$0xf]
        %v3802 = vld [vmem:[%s3800 + $0x4] sm:$0xf]
        %v3803 = vld [vmem:[%s3800 + $0xc] sm:$0xf]
        %v3804 = vld [vmem:[%s3800 + $0x10] sm:$0xf]
        %v3805 = vld [vmem:[%s3800 + $0x18] sm:$0xf]
        %v3806 = vld [vmem:[%s3800 + $0x1c] sm:$0xf]
        %v3807 = vld [vmem:[%s3800 + $0x24] sm:$0xf]
        %v3808 = vld [vmem:[%s3800 + $0x28] sm:$0xf]
        %v3809 = vld [vmem:[%s3800 + $0x30] sm:$0xf]
        %v3810 = vld [vmem:[%s3800 + $0x34] sm:$0xf]
        %v3811 = vld [vmem:[%s3800 + $0x3c] sm:$0xf]
        %v3812 = vld [vmem:[%s3800 + $0x40] sm:$0xf]
        %v3813 = vld [vmem:[%s3800 + $0x48] sm:$0xf]
        %v3814 = vld [vmem:[%s3800 + $0x4c] sm:$0xf]
        %v3815 = vld [vmem:[%s3800 + $0x54] sm:$0xf]
        %v3816 = vld [vmem:[%s3800 + $0x58] sm:$0xf]
        %v3817 = vld [vmem:[%s3800 + $0x8] sm:$0x1]
        %v3818 = vld [vmem:[%s3800 + $0x14] sm:$0x1]
        %v3819 = vld [vmem:[%s3800 + $0x20] sm:$0x1]
        %v3820 = vld [vmem:[%s3800 + $0x2c] sm:$0x1]
        %v3821 = vld [vmem:[%s3800 + $0x38] sm:$0x1]
        %v3822 = vld [vmem:[%s3800 + $0x44] sm:$0x1]
        %v3823 = vld [vmem:[%s3800 + $0x50] sm:$0x1]
        %v3824 = vld [vmem:[%s3800 + $0x5c] sm:$0x1]
        %v3825 = vld [vmem:[%s3800] sm:$0xe]
        %v3826 = vld [vmem:[%s3800 + $0xc] sm:$0xe]
        %v3827 = vld [vmem:[%s3800 + $0x18] sm:$0xe]
        %v3828 = vld [vmem:[%s3800 + $0x24] sm:$0xe]
        %v3829 = vld [vmem:[%s3800 + $0x30] sm:$0xe]
        %v3830 = vld [vmem:[%s3800 + $0x3c] sm:$0xe]
        %v3831 = vld [vmem:[%s3800 + $0x48] sm:$0xe]
        %v3832 = vld [vmem:[%s3800 + $0x54] sm:$0xe]
        %v3849 = vunpack.c.l.b16 %v3801
        %v3850 = vunpack.c.l.b16 %v3802
        %v3851 = vunpack.c.l.b16 %v3803
        %v3852 = vunpack.c.l.b16 %v3804
        %v3853 = vunpack.c.l.b16 %v3805
        %v3854 = vunpack.c.l.b16 %v3806
        %v3855 = vunpack.c.l.b16 %v3807
        %v3856 = vunpack.c.l.b16 %v3808
        %v3857 = vunpack.c.l.b16 %v3809
        %v3858 = vunpack.c.l.b16 %v3810
        %v3859 = vunpack.c.l.b16 %v3811
        %v3860 = vunpack.c.l.b16 %v3812
        %v3861 = vunpack.c.l.b16 %v3813
        %v3862 = vunpack.c.l.b16 %v3814
        %v3863 = vunpack.c.l.b16 %v3815
        %v3864 = vunpack.c.l.b16 %v3816
        %v3865 = vpack.c.b16 %v3850, %v3849
        %v3866 = vpack.c.b16 %v3852, %v3851
        %v3867 = vpack.c.b16 %v3854, %v3853
        %v3868 = vpack.c.b16 %v3856, %v3855
        %v3869 = vpack.c.b16 %v3858, %v3857
        %v3870 = vpack.c.b16 %v3860, %v3859
        %v3871 = vpack.c.b16 %v3862, %v3861
        %v3872 = vpack.c.b16 %v3864, %v3863
        %v3881 = vunpack.c.l.b16 %v3817
        %v3882 = vunpack.c.l.b16 %v3818
        %v3883 = vunpack.c.l.b16 %v3819
        %v3884 = vunpack.c.l.b16 %v3820
        %v3885 = vunpack.c.l.b16 %v3821
        %v3886 = vunpack.c.l.b16 %v3822
        %v3887 = vunpack.c.l.b16 %v3823
        %v3888 = vunpack.c.l.b16 %v3824
        %v3889 = vpack.c.b16 %v3881, %v3881
        %v3890 = vpack.c.b16 %v3882, %v3882
        %v3891 = vpack.c.b16 %v3883, %v3883
        %v3892 = vpack.c.b16 %v3884, %v3884
        %v3893 = vpack.c.b16 %v3885, %v3885
        %v3894 = vpack.c.b16 %v3886, %v3886
        %v3895 = vpack.c.b16 %v3887, %v3887
        %v3896 = vpack.c.b16 %v3888, %v3888
        %v3898 = vshrl.u32 %v3865, 16
        %v3900 = vshll.u32 %v3865, 16
        %v3902 = vrot.slane %v3900, 1
        %v3903 = vor.u32 %v3898, %v3902
        %v3905 = vshll.u32 %v3889, 16
        %v3907 = vrot.slane %v3905, 1
        %v3908 = vsel %vm1945, %v3903, %v3907
        %v3910 = vshrl.u32 %v3866, 16
        %v3912 = vshll.u32 %v3866, 16
        %v3914 = vrot.slane %v3912, 1
        %v3915 = vor.u32 %v3910, %v3914
        %v3917 = vshll.u32 %v3890, 16
        %v3919 = vrot.slane %v3917, 1
        %v3920 = vsel %vm1945, %v3915, %v3919
        %v3922 = vshrl.u32 %v3867, 16
        %v3924 = vshll.u32 %v3867, 16
        %v3926 = vrot.slane %v3924, 1
        %v3927 = vor.u32 %v3922, %v3926
        %v3929 = vshll.u32 %v3891, 16
        %v3931 = vrot.slane %v3929, 1
        %v3932 = vsel %vm1945, %v3927, %v3931
        %v3934 = vshrl.u32 %v3868, 16
        %v3936 = vshll.u32 %v3868, 16
        %v3938 = vrot.slane %v3936, 1
        %v3939 = vor.u32 %v3934, %v3938
        %v3941 = vshll.u32 %v3892, 16
        %v3943 = vrot.slane %v3941, 1
        %v3944 = vsel %vm1945, %v3939, %v3943
        %v3946 = vshrl.u32 %v3869, 16
        %v3948 = vshll.u32 %v3869, 16
        %v3950 = vrot.slane %v3948, 1
        %v3951 = vor.u32 %v3946, %v3950
        %v3953 = vshll.u32 %v3893, 16
        %v3955 = vrot.slane %v3953, 1
        %v3956 = vsel %vm1945, %v3951, %v3955
        %v3958 = vshrl.u32 %v3870, 16
        %v3960 = vshll.u32 %v3870, 16
        %v3962 = vrot.slane %v3960, 1
        %v3963 = vor.u32 %v3958, %v3962
        %v3965 = vshll.u32 %v3894, 16
        %v3967 = vrot.slane %v3965, 1
        %v3968 = vsel %vm1945, %v3963, %v3967
        %v3970 = vshrl.u32 %v3871, 16
        %v3972 = vshll.u32 %v3871, 16
        %v3974 = vrot.slane %v3972, 1
        %v3975 = vor.u32 %v3970, %v3974
        %v3977 = vshll.u32 %v3895, 16
        %v3979 = vrot.slane %v3977, 1
        %v3980 = vsel %vm1945, %v3975, %v3979
        %v3982 = vshrl.u32 %v3872, 16
        %v3984 = vshll.u32 %v3872, 16
        %v3986 = vrot.slane %v3984, 1
        %v3987 = vor.u32 %v3982, %v3986
        %v3989 = vshll.u32 %v3896, 16
        %v3991 = vrot.slane %v3989, 1
        %v3992 = vsel %vm1945, %v3987, %v3991
        %3993 = vrot.lane.b32.xlu0 %v3908, 8
        %v3994 = vpop.permute.xlu0 %3993
        %3995 = vrot.lane.b32.xlu0 %v3920, 8
        %v3996 = vpop.permute.xlu0 %3995
        %3997 = vrot.lane.b32.xlu0 %v3932, 8
        %v3998 = vpop.permute.xlu0 %3997
        %3999 = vrot.lane.b32.xlu0 %v3944, 8
        %v4000 = vpop.permute.xlu0 %3999
        %4001 = vrot.lane.b32.xlu0 %v3956, 8
        %v4002 = vpop.permute.xlu0 %4001
        %4003 = vrot.lane.b32.xlu0 %v3968, 8
        %v4004 = vpop.permute.xlu0 %4003
        %4005 = vrot.lane.b32.xlu0 %v3980, 8
        %v4006 = vpop.permute.xlu0 %4005
        %4007 = vrot.lane.b32.xlu0 %v3992, 8
        %v4008 = vpop.permute.xlu0 %4007
        %v4017 = vunpack.c.l.b16 %v3825
        %v4018 = vunpack.c.l.b16 %v3826
        %v4019 = vunpack.c.l.b16 %v3827
        %v4020 = vunpack.c.l.b16 %v3828
        %v4021 = vunpack.c.l.b16 %v3829
        %v4022 = vunpack.c.l.b16 %v3830
        %v4023 = vunpack.c.l.b16 %v3831
        %v4024 = vunpack.c.l.b16 %v3832
        %v4025 = vpack.c.b16 %v3850, %v4017
        %v4026 = vpack.c.b16 %v3852, %v4018
        %v4027 = vpack.c.b16 %v3854, %v4019
        %v4028 = vpack.c.b16 %v3856, %v4020
        %v4029 = vpack.c.b16 %v3858, %v4021
        %v4030 = vpack.c.b16 %v3860, %v4022
        %v4031 = vpack.c.b16 %v3862, %v4023
        %v4032 = vpack.c.b16 %v3864, %v4024
        %v4033 = vrot.slane %v4025, 1
        %v4034 = vrot.slane %v3889, 1
        %v4035 = vsel %vm2082, %v4033, %v4034
        %v4036 = vrot.slane %v4026, 1
        %v4037 = vrot.slane %v3890, 1
        %v4038 = vsel %vm2082, %v4036, %v4037
        %v4039 = vrot.slane %v4027, 1
        %v4040 = vrot.slane %v3891, 1
        %v4041 = vsel %vm2082, %v4039, %v4040
        %v4042 = vrot.slane %v4028, 1
        %v4043 = vrot.slane %v3892, 1
        %v4044 = vsel %vm2082, %v4042, %v4043
        %v4045 = vrot.slane %v4029, 1
        %v4046 = vrot.slane %v3893, 1
        %v4047 = vsel %vm2082, %v4045, %v4046
        %v4048 = vrot.slane %v4030, 1
        %v4049 = vrot.slane %v3894, 1
        %v4050 = vsel %vm2082, %v4048, %v4049
        %v4051 = vrot.slane %v4031, 1
        %v4052 = vrot.slane %v3895, 1
        %v4053 = vsel %vm2082, %v4051, %v4052
        %v4054 = vrot.slane %v4032, 1
        %v4055 = vrot.slane %v3896, 1
        %v4056 = vsel %vm2082, %v4054, %v4055
        %4057 = vrot.lane.b32.xlu0 %v4035, 16
        %v4058 = vpop.permute.xlu0 %4057
        %4059 = vrot.lane.b32.xlu0 %v4038, 16
        %v4060 = vpop.permute.xlu0 %4059
        %4061 = vrot.lane.b32.xlu0 %v4041, 16
        %v4062 = vpop.permute.xlu0 %4061
        %4063 = vrot.lane.b32.xlu0 %v4044, 16
        %v4064 = vpop.permute.xlu0 %4063
        %4065 = vrot.lane.b32.xlu0 %v4047, 16
        %v4066 = vpop.permute.xlu0 %4065
        %4067 = vrot.lane.b32.xlu0 %v4050, 16
        %v4068 = vpop.permute.xlu0 %4067
        %4069 = vrot.lane.b32.xlu0 %v4053, 16
        %v4070 = vpop.permute.xlu0 %4069
        %4071 = vrot.lane.b32.xlu0 %v4056, 16
        %v4072 = vpop.permute.xlu0 %4071
        %v4074 = vsel %vm2123, %v3865, %v3994
        %v4076 = vsel %vm2123, %v3866, %v3996
        %v4078 = vsel %vm2123, %v3867, %v3998
        %v4080 = vsel %vm2123, %v3868, %v4000
        %v4082 = vsel %vm2123, %v3869, %v4002
        %v4084 = vsel %vm2123, %v3870, %v4004
        %v4086 = vsel %vm2123, %v3871, %v4006
        %v4088 = vsel %vm2123, %v3872, %v4008
        %v4090 = vsel %vm2140, %v4074, %v4058
        %v4092 = vsel %vm2140, %v4076, %v4060
        %v4094 = vsel %vm2140, %v4078, %v4062
        %v4096 = vsel %vm2140, %v4080, %v4064
        %v4098 = vsel %vm2140, %v4082, %v4066
        %v4100 = vsel %vm2140, %v4084, %v4068
        %v4102 = vsel %vm2140, %v4086, %v4070
        %v4104 = vsel %vm2140, %v4088, %v4072
        %v4105 = vsel %vm2477, %v4090, 0
        %v4107 = vsel %vm2477, %v4092, 0
        %v4109 = vsel %vm2477, %v4094, 0
        %v4111 = vsel %vm2477, %v4096, 0
        %v4113 = vsel %vm2477, %v4098, 0
        %v4115 = vsel %vm2477, %v4100, 0
        %v4117 = vsel %vm2477, %v4102, 0
        %v4119 = vsel %vm2477, %v4104, 0
        %4121 = vmatpush.bf16.msra.mxu0 0
        %4122 = vmatpush.bf16.msra.mxu0 0
        %4123 = vmatpush.bf16.msra.mxu0 0
        %4124 = vmatpush.bf16.msra.mxu0 0
        %4125 = vmatpush.bf16.msra.mxu0 0
        %4126 = vmatpush.bf16.msra.mxu0 0
        %4127 = vmatpush.bf16.msra.mxu0 %v2959
        %4128 = vmatpush.bf16.msra.mxu0 %v2939
        %4129 = vmatmul.bf16.gmra.mxu0 %v4105
        %v4130 = vpop.f32.mrf.mxu0
        %v4131 = vadd.f32 0.0, %v4130
        %v4132 = vpop.f32.mrf.mxu0
        %v4133 = vadd.f32 0.0, %v4132
        %4134 = vmatmul.bf16.gmra.mxu0 %v4107
        %v4135 = vpop.f32.mrf.mxu0
        %v4136 = vadd.f32 0.0, %v4135
        %v4137 = vpop.f32.mrf.mxu0
        %v4138 = vadd.f32 0.0, %v4137
        %4139 = vmatmul.bf16.gmra.mxu0 %v4109
        %v4140 = vpop.f32.mrf.mxu0
        %v4141 = vadd.f32 0.0, %v4140
        %v4142 = vpop.f32.mrf.mxu0
        %v4143 = vadd.f32 0.0, %v4142
        %4144 = vmatmul.bf16.gmra.mxu0 %v4111
        %v4145 = vpop.f32.mrf.mxu0
        %v4146 = vadd.f32 0.0, %v4145
        %v4147 = vpop.f32.mrf.mxu0
        %v4148 = vadd.f32 0.0, %v4147
        %4149 = vmatmul.bf16.gmra.mxu0 %v4113
        %v4150 = vpop.f32.mrf.mxu0
        %v4151 = vadd.f32 0.0, %v4150
        %v4152 = vpop.f32.mrf.mxu0
        %v4153 = vadd.f32 0.0, %v4152
        %4154 = vmatmul.bf16.gmra.mxu0 %v4115
        %v4155 = vpop.f32.mrf.mxu0
        %v4156 = vadd.f32 0.0, %v4155
        %v4157 = vpop.f32.mrf.mxu0
        %v4158 = vadd.f32 0.0, %v4157
        %4159 = vmatmul.bf16.gmra.mxu0 %v4117
        %v4160 = vpop.f32.mrf.mxu0
        %v4161 = vadd.f32 0.0, %v4160
        %v4162 = vpop.f32.mrf.mxu0
        %v4163 = vadd.f32 0.0, %v4162
        %4164 = vmatmul.bf16.gmra.mxu0 %v4119
        %v4165 = vpop.f32.mrf.mxu0
        %v4166 = vadd.f32 0.0, %v4165
        %v4167 = vpop.f32.mrf.mxu0
        %v4168 = vadd.f32 0.0, %v4167
        %4169 = vdwg.mxu0
        %v4170 = vadd.f32 %v3761, %v4131
        %v4171 = vadd.f32 %v3763, %v4133
        %v4172 = vadd.f32 %v3766, %v4136
        %v4173 = vadd.f32 %v3768, %v4138
        %v4174 = vadd.f32 %v3771, %v4141
        %v4175 = vadd.f32 %v3773, %v4143
        %v4176 = vadd.f32 %v3776, %v4146
        %v4177 = vadd.f32 %v3778, %v4148
        %v4178 = vadd.f32 %v3781, %v4151
        %v4179 = vadd.f32 %v3783, %v4153
        %v4180 = vadd.f32 %v3786, %v4156
        %v4181 = vadd.f32 %v3788, %v4158
        %v4182 = vadd.f32 %v3791, %v4161
        %v4183 = vadd.f32 %v3793, %v4163
        %v4184 = vadd.f32 %v3796, %v4166
        %v4185 = vadd.f32 %v3798, %v4168
        %v4186 = vld [vmem:[%s8 + $0x1] sm:$0x1]
        %v4187 = vperm.slane %v4186, 0
        %v4188 = vmul.f32 %v4170, %v4187
        %v4189 = vmul.f32 %v4171, %v4187
        %v4190 = vmul.f32 %v4172, %v4187
        %v4191 = vmul.f32 %v4173, %v4187
        %v4192 = vmul.f32 %v4174, %v4187
        %v4193 = vmul.f32 %v4175, %v4187
        %v4194 = vmul.f32 %v4176, %v4187
        %v4195 = vmul.f32 %v4177, %v4187
        %v4196 = vmul.f32 %v4178, %v4187
        %v4197 = vmul.f32 %v4179, %v4187
        %v4198 = vmul.f32 %v4180, %v4187
        %v4199 = vmul.f32 %v4181, %v4187
        %v4200 = vmul.f32 %v4182, %v4187
        %v4201 = vmul.f32 %v4183, %v4187
        %v4202 = vmul.f32 %v4184, %v4187
        %v4203 = vmul.f32 %v4185, %v4187
        %v4204 = vld [vmem:[%s9 + $0x1] sm:$0x1]
        %v4205 = vperm.slane %v4204, 0
        %v4206 = vadd.f32 %v4188, %v4205
        %v4207 = vadd.f32 %v4189, %v4205
        %v4208 = vadd.f32 %v4190, %v4205
        %v4209 = vadd.f32 %v4191, %v4205
        %v4210 = vadd.f32 %v4192, %v4205
        %v4211 = vadd.f32 %v4193, %v4205
        %v4212 = vadd.f32 %v4194, %v4205
        %v4213 = vadd.f32 %v4195, %v4205
        %v4214 = vadd.f32 %v4196, %v4205
        %v4215 = vadd.f32 %v4197, %v4205
        %v4216 = vadd.f32 %v4198, %v4205
        %v4217 = vadd.f32 %v4199, %v4205
        %v4218 = vadd.f32 %v4200, %v4205
        %v4219 = vadd.f32 %v4201, %v4205
        %v4220 = vadd.f32 %v4202, %v4205
        %v4221 = vadd.f32 %v4203, %v4205
        %v4222 = vld [vmem:[%s10] sm:$0x1]
        %v4223 = vand.u32 2147483647, %v4222
        %vm4224 = vcmp.ge.f32.partialorder %v4223, 0.5
        %v4225 = vsel %vm4224, 1, 0
        %vm4226 = vcmp.eq.s32.totalorder %v4225, 1
        %v4243 = vrot.slane %v3046, 1
        %v4244 = vrot.slane %v3046, 2
        %v4245 = vrot.slane %v3046, 3
        %v4246 = vrot.slane %v3046, 4
        %v4247 = vrot.slane %v3046, 5
        %v4248 = vrot.slane %v3046, 6
        %v4249 = vrot.slane %v3046, 7
        %v4250 = vrot.slane %v3047, 1
        %v4251 = vrot.slane %v3047, 2
        %v4252 = vrot.slane %v3047, 3
        %v4253 = vrot.slane %v3047, 4
        %v4254 = vrot.slane %v3047, 5
        %v4255 = vrot.slane %v3047, 6
        %v4256 = vrot.slane %v3047, 7
        %v4257 = vrot.slane %v3048, 1
        %v4258 = vrot.slane %v3048, 2
        %v4259 = vrot.slane %v3048, 3
        %v4260 = vrot.slane %v3048, 4
        %v4261 = vrot.slane %v3048, 5
        %v4262 = vrot.slane %v3048, 6
        %v4263 = vrot.slane %v3048, 7
        %v4264 = vrot.slane %v3049, 1
        %v4265 = vrot.slane %v3049, 2
        %v4266 = vrot.slane %v3049, 3
        %v4267 = vrot.slane %v3049, 4
        %v4268 = vrot.slane %v3049, 5
        %v4269 = vrot.slane %v3049, 6
        %v4270 = vrot.slane %v3049, 7
        %v4271 = vrot.slane %v3050, 1
        %v4272 = vrot.slane %v3050, 2
        %v4273 = vrot.slane %v3050, 3
        %v4274 = vrot.slane %v3050, 4
        %v4275 = vrot.slane %v3050, 5
        %v4276 = vrot.slane %v3050, 6
        %v4277 = vrot.slane %v3050, 7
        %v4278 = vrot.slane %v3051, 1
        %v4279 = vrot.slane %v3051, 2
        %v4280 = vrot.slane %v3051, 3
        %v4281 = vrot.slane %v3051, 4
        %v4282 = vrot.slane %v3051, 5
        %v4283 = vrot.slane %v3051, 6
        %v4284 = vrot.slane %v3051, 7
        %v4285 = vrot.slane %v3052, 1
        %v4286 = vrot.slane %v3052, 2
        %v4287 = vrot.slane %v3052, 3
        %v4288 = vrot.slane %v3052, 4
        %v4289 = vrot.slane %v3052, 5
        %v4290 = vrot.slane %v3052, 6
        %v4291 = vrot.slane %v3052, 7
        %v4292 = vrot.slane %v3053, 1
        %v4293 = vrot.slane %v3053, 2
        %v4294 = vrot.slane %v3053, 3
        %v4295 = vrot.slane %v3053, 4
        %v4296 = vrot.slane %v3053, 5
        %v4297 = vrot.slane %v3053, 6
        %v4298 = vrot.slane %v3053, 7
        %v4299 = vrot.slane %v3054, 1
        %v4300 = vrot.slane %v3054, 2
        %v4301 = vrot.slane %v3054, 3
        %v4302 = vrot.slane %v3054, 4
        %v4303 = vrot.slane %v3054, 5
        %v4304 = vrot.slane %v3054, 6
        %v4305 = vrot.slane %v3054, 7
        %v4306 = vrot.slane %v3055, 1
        %v4307 = vrot.slane %v3055, 2
        %v4308 = vrot.slane %v3055, 3
        %v4309 = vrot.slane %v3055, 4
        %v4310 = vrot.slane %v3055, 5
        %v4311 = vrot.slane %v3055, 6
        %v4312 = vrot.slane %v3055, 7
        %v4313 = vrot.slane %v3056, 1
        %v4314 = vrot.slane %v3056, 2
        %v4315 = vrot.slane %v3056, 3
        %v4316 = vrot.slane %v3056, 4
        %v4317 = vrot.slane %v3056, 5
        %v4318 = vrot.slane %v3056, 6
        %v4319 = vrot.slane %v3056, 7
        %v4320 = vrot.slane %v3057, 1
        %v4321 = vrot.slane %v3057, 2
        %v4322 = vrot.slane %v3057, 3
        %v4323 = vrot.slane %v3057, 4
        %v4324 = vrot.slane %v3057, 5
        %v4325 = vrot.slane %v3057, 6
        %v4326 = vrot.slane %v3057, 7
        %v4327 = vrot.slane %v3058, 1
        %v4328 = vrot.slane %v3058, 2
        %v4329 = vrot.slane %v3058, 3
        %v4330 = vrot.slane %v3058, 4
        %v4331 = vrot.slane %v3058, 5
        %v4332 = vrot.slane %v3058, 6
        %v4333 = vrot.slane %v3058, 7
        %v4334 = vrot.slane %v3059, 1
        %v4335 = vrot.slane %v3059, 2
        %v4336 = vrot.slane %v3059, 3
        %v4337 = vrot.slane %v3059, 4
        %v4338 = vrot.slane %v3059, 5
        %v4339 = vrot.slane %v3059, 6
        %v4340 = vrot.slane %v3059, 7
        %v4341 = vrot.slane %v3060, 1
        %v4342 = vrot.slane %v3060, 2
        %v4343 = vrot.slane %v3060, 3
        %v4344 = vrot.slane %v3060, 4
        %v4345 = vrot.slane %v3060, 5
        %v4346 = vrot.slane %v3060, 6
        %v4347 = vrot.slane %v3060, 7
        %v4348 = vrot.slane %v3061, 1
        %v4349 = vrot.slane %v3061, 2
        %v4350 = vrot.slane %v3061, 3
        %v4351 = vrot.slane %v3061, 4
        %v4352 = vrot.slane %v3061, 5
        %v4353 = vrot.slane %v3061, 6
        %v4354 = vrot.slane %v3061, 7
        %v4499 = vrot.slane %v4206, 1
        %v4500 = vrot.slane %v4206, 2
        %v4501 = vrot.slane %v4206, 3
        %v4502 = vrot.slane %v4206, 4
        %v4503 = vrot.slane %v4206, 5
        %v4504 = vrot.slane %v4206, 6
        %v4505 = vrot.slane %v4206, 7
        %v4506 = vrot.slane %v4207, 1
        %v4507 = vrot.slane %v4207, 2
        %v4508 = vrot.slane %v4207, 3
        %v4509 = vrot.slane %v4207, 4
        %v4510 = vrot.slane %v4207, 5
        %v4511 = vrot.slane %v4207, 6
        %v4512 = vrot.slane %v4207, 7
        %v4513 = vrot.slane %v4208, 1
        %v4514 = vrot.slane %v4208, 2
        %v4515 = vrot.slane %v4208, 3
        %v4516 = vrot.slane %v4208, 4
        %v4517 = vrot.slane %v4208, 5
        %v4518 = vrot.slane %v4208, 6
        %v4519 = vrot.slane %v4208, 7
        %v4520 = vrot.slane %v4209, 1
        %v4521 = vrot.slane %v4209, 2
        %v4522 = vrot.slane %v4209, 3
        %v4523 = vrot.slane %v4209, 4
        %v4524 = vrot.slane %v4209, 5
        %v4525 = vrot.slane %v4209, 6
        %v4526 = vrot.slane %v4209, 7
        %v4527 = vrot.slane %v4210, 1
        %v4528 = vrot.slane %v4210, 2
        %v4529 = vrot.slane %v4210, 3
        %v4530 = vrot.slane %v4210, 4
        %v4531 = vrot.slane %v4210, 5
        %v4532 = vrot.slane %v4210, 6
        %v4533 = vrot.slane %v4210, 7
        %v4534 = vrot.slane %v4211, 1
        %v4535 = vrot.slane %v4211, 2
        %v4536 = vrot.slane %v4211, 3
        %v4537 = vrot.slane %v4211, 4
        %v4538 = vrot.slane %v4211, 5
        %v4539 = vrot.slane %v4211, 6
        %v4540 = vrot.slane %v4211, 7
        %v4541 = vrot.slane %v4212, 1
        %v4542 = vrot.slane %v4212, 2
        %v4543 = vrot.slane %v4212, 3
        %v4544 = vrot.slane %v4212, 4
        %v4545 = vrot.slane %v4212, 5
        %v4546 = vrot.slane %v4212, 6
        %v4547 = vrot.slane %v4212, 7
        %v4548 = vrot.slane %v4213, 1
        %v4549 = vrot.slane %v4213, 2
        %v4550 = vrot.slane %v4213, 3
        %v4551 = vrot.slane %v4213, 4
        %v4552 = vrot.slane %v4213, 5
        %v4553 = vrot.slane %v4213, 6
        %v4554 = vrot.slane %v4213, 7
        %v4555 = vrot.slane %v4214, 1
        %v4556 = vrot.slane %v4214, 2
        %v4557 = vrot.slane %v4214, 3
        %v4558 = vrot.slane %v4214, 4
        %v4559 = vrot.slane %v4214, 5
        %v4560 = vrot.slane %v4214, 6
        %v4561 = vrot.slane %v4214, 7
        %v4562 = vrot.slane %v4215, 1
        %v4563 = vrot.slane %v4215, 2
        %v4564 = vrot.slane %v4215, 3
        %v4565 = vrot.slane %v4215, 4
        %v4566 = vrot.slane %v4215, 5
        %v4567 = vrot.slane %v4215, 6
        %v4568 = vrot.slane %v4215, 7
        %v4569 = vrot.slane %v4216, 1
        %v4570 = vrot.slane %v4216, 2
        %v4571 = vrot.slane %v4216, 3
        %v4572 = vrot.slane %v4216, 4
        %v4573 = vrot.slane %v4216, 5
        %v4574 = vrot.slane %v4216, 6
        %v4575 = vrot.slane %v4216, 7
        %v4576 = vrot.slane %v4217, 1
        %v4577 = vrot.slane %v4217, 2
        %v4578 = vrot.slane %v4217, 3
        %v4579 = vrot.slane %v4217, 4
        %v4580 = vrot.slane %v4217, 5
        %v4581 = vrot.slane %v4217, 6
        %v4582 = vrot.slane %v4217, 7
        %v4583 = vrot.slane %v4218, 1
        %v4584 = vrot.slane %v4218, 2
        %v4585 = vrot.slane %v4218, 3
        %v4586 = vrot.slane %v4218, 4
        %v4587 = vrot.slane %v4218, 5
        %v4588 = vrot.slane %v4218, 6
        %v4589 = vrot.slane %v4218, 7
        %v4590 = vrot.slane %v4219, 1
        %v4591 = vrot.slane %v4219, 2
        %v4592 = vrot.slane %v4219, 3
        %v4593 = vrot.slane %v4219, 4
        %v4594 = vrot.slane %v4219, 5
        %v4595 = vrot.slane %v4219, 6
        %v4596 = vrot.slane %v4219, 7
        %v4597 = vrot.slane %v4220, 1
        %v4598 = vrot.slane %v4220, 2
        %v4599 = vrot.slane %v4220, 3
        %v4600 = vrot.slane %v4220, 4
        %v4601 = vrot.slane %v4220, 5
        %v4602 = vrot.slane %v4220, 6
        %v4603 = vrot.slane %v4220, 7
        %v4604 = vrot.slane %v4221, 1
        %v4605 = vrot.slane %v4221, 2
        %v4606 = vrot.slane %v4221, 3
        %v4607 = vrot.slane %v4221, 4
        %v4608 = vrot.slane %v4221, 5
        %v4609 = vrot.slane %v4221, 6
        %v4610 = vrot.slane %v4221, 7
        %v4739 = vsel %vm4226, %v3046, %v4206
        %v4740 = vsel %vm4226, %v4243, %v4499
        %v4741 = vsel %vm4226, %v4244, %v4500
        %v4742 = vsel %vm4226, %v4245, %v4501
        %v4743 = vsel %vm4226, %v4246, %v4502
        %v4744 = vsel %vm4226, %v4247, %v4503
        %v4745 = vsel %vm4226, %v4248, %v4504
        %v4746 = vsel %vm4226, %v4249, %v4505
        %v4747 = vsel %vm4226, %v3047, %v4207
        %v4748 = vsel %vm4226, %v4250, %v4506
        %v4749 = vsel %vm4226, %v4251, %v4507
        %v4750 = vsel %vm4226, %v4252, %v4508
        %v4751 = vsel %vm4226, %v4253, %v4509
        %v4752 = vsel %vm4226, %v4254, %v4510
        %v4753 = vsel %vm4226, %v4255, %v4511
        %v4754 = vsel %vm4226, %v4256, %v4512
        %v4755 = vsel %vm4226, %v3048, %v4208
        %v4756 = vsel %vm4226, %v4257, %v4513
        %v4757 = vsel %vm4226, %v4258, %v4514
        %v4758 = vsel %vm4226, %v4259, %v4515
        %v4759 = vsel %vm4226, %v4260, %v4516
        %v4760 = vsel %vm4226, %v4261, %v4517
        %v4761 = vsel %vm4226, %v4262, %v4518
        %v4762 = vsel %vm4226, %v4263, %v4519
        %v4763 = vsel %vm4226, %v3049, %v4209
        %v4764 = vsel %vm4226, %v4264, %v4520
        %v4765 = vsel %vm4226, %v4265, %v4521
        %v4766 = vsel %vm4226, %v4266, %v4522
        %v4767 = vsel %vm4226, %v4267, %v4523
        %v4768 = vsel %vm4226, %v4268, %v4524
        %v4769 = vsel %vm4226, %v4269, %v4525
        %v4770 = vsel %vm4226, %v4270, %v4526
        %v4771 = vsel %vm4226, %v3050, %v4210
        %v4772 = vsel %vm4226, %v4271, %v4527
        %v4773 = vsel %vm4226, %v4272, %v4528
        %v4774 = vsel %vm4226, %v4273, %v4529
        %v4775 = vsel %vm4226, %v4274, %v4530
        %v4776 = vsel %vm4226, %v4275, %v4531
        %v4777 = vsel %vm4226, %v4276, %v4532
        %v4778 = vsel %vm4226, %v4277, %v4533
        %v4779 = vsel %vm4226, %v3051, %v4211
        %v4780 = vsel %vm4226, %v4278, %v4534
        %v4781 = vsel %vm4226, %v4279, %v4535
        %v4782 = vsel %vm4226, %v4280, %v4536
        %v4783 = vsel %vm4226, %v4281, %v4537
        %v4784 = vsel %vm4226, %v4282, %v4538
        %v4785 = vsel %vm4226, %v4283, %v4539
        %v4786 = vsel %vm4226, %v4284, %v4540
        %v4787 = vsel %vm4226, %v3052, %v4212
        %v4788 = vsel %vm4226, %v4285, %v4541
        %v4789 = vsel %vm4226, %v4286, %v4542
        %v4790 = vsel %vm4226, %v4287, %v4543
        %v4791 = vsel %vm4226, %v4288, %v4544
        %v4792 = vsel %vm4226, %v4289, %v4545
        %v4793 = vsel %vm4226, %v4290, %v4546
        %v4794 = vsel %vm4226, %v4291, %v4547
        %v4795 = vsel %vm4226, %v3053, %v4213
        %v4796 = vsel %vm4226, %v4292, %v4548
        %v4797 = vsel %vm4226, %v4293, %v4549
        %v4798 = vsel %vm4226, %v4294, %v4550
        %v4799 = vsel %vm4226, %v4295, %v4551
        %v4800 = vsel %vm4226, %v4296, %v4552
        %v4801 = vsel %vm4226, %v4297, %v4553
        %v4802 = vsel %vm4226, %v4298, %v4554
        %v4803 = vsel %vm4226, %v3054, %v4214
        %v4804 = vsel %vm4226, %v4299, %v4555
        %v4805 = vsel %vm4226, %v4300, %v4556
        %v4806 = vsel %vm4226, %v4301, %v4557
        %v4807 = vsel %vm4226, %v4302, %v4558
        %v4808 = vsel %vm4226, %v4303, %v4559
        %v4809 = vsel %vm4226, %v4304, %v4560
        %v4810 = vsel %vm4226, %v4305, %v4561
        %v4811 = vsel %vm4226, %v3055, %v4215
        %v4812 = vsel %vm4226, %v4306, %v4562
        %v4813 = vsel %vm4226, %v4307, %v4563
        %v4814 = vsel %vm4226, %v4308, %v4564
        %v4815 = vsel %vm4226, %v4309, %v4565
        %v4816 = vsel %vm4226, %v4310, %v4566
        %v4817 = vsel %vm4226, %v4311, %v4567
        %v4818 = vsel %vm4226, %v4312, %v4568
        %v4819 = vsel %vm4226, %v3056, %v4216
        %v4820 = vsel %vm4226, %v4313, %v4569
        %v4821 = vsel %vm4226, %v4314, %v4570
        %v4822 = vsel %vm4226, %v4315, %v4571
        %v4823 = vsel %vm4226, %v4316, %v4572
        %v4824 = vsel %vm4226, %v4317, %v4573
        %v4825 = vsel %vm4226, %v4318, %v4574
        %v4826 = vsel %vm4226, %v4319, %v4575
        %v4827 = vsel %vm4226, %v3057, %v4217
        %v4828 = vsel %vm4226, %v4320, %v4576
        %v4829 = vsel %vm4226, %v4321, %v4577
        %v4830 = vsel %vm4226, %v4322, %v4578
        %v4831 = vsel %vm4226, %v4323, %v4579
        %v4832 = vsel %vm4226, %v4324, %v4580
        %v4833 = vsel %vm4226, %v4325, %v4581
        %v4834 = vsel %vm4226, %v4326, %v4582
        %v4835 = vsel %vm4226, %v3058, %v4218
        %v4836 = vsel %vm4226, %v4327, %v4583
        %v4837 = vsel %vm4226, %v4328, %v4584
        %v4838 = vsel %vm4226, %v4329, %v4585
        %v4839 = vsel %vm4226, %v4330, %v4586
        %v4840 = vsel %vm4226, %v4331, %v4587
        %v4841 = vsel %vm4226, %v4332, %v4588
        %v4842 = vsel %vm4226, %v4333, %v4589
        %v4843 = vsel %vm4226, %v3059, %v4219
        %v4844 = vsel %vm4226, %v4334, %v4590
        %v4845 = vsel %vm4226, %v4335, %v4591
        %v4846 = vsel %vm4226, %v4336, %v4592
        %v4847 = vsel %vm4226, %v4337, %v4593
        %v4848 = vsel %vm4226, %v4338, %v4594
        %v4849 = vsel %vm4226, %v4339, %v4595
        %v4850 = vsel %vm4226, %v4340, %v4596
        %v4851 = vsel %vm4226, %v3060, %v4220
        %v4852 = vsel %vm4226, %v4341, %v4597
        %v4853 = vsel %vm4226, %v4342, %v4598
        %v4854 = vsel %vm4226, %v4343, %v4599
        %v4855 = vsel %vm4226, %v4344, %v4600
        %v4856 = vsel %vm4226, %v4345, %v4601
        %v4857 = vsel %vm4226, %v4346, %v4602
        %v4858 = vsel %vm4226, %v4347, %v4603
        %v4859 = vsel %vm4226, %v3061, %v4221
        %v4860 = vsel %vm4226, %v4348, %v4604
        %v4861 = vsel %vm4226, %v4349, %v4605
        %v4862 = vsel %vm4226, %v4350, %v4606
        %v4863 = vsel %vm4226, %v4351, %v4607
        %v4864 = vsel %vm4226, %v4352, %v4608
        %v4865 = vsel %vm4226, %v4353, %v4609
        %v4866 = vsel %vm4226, %v4354, %v4610
        %v4867 = vmax.f32 %v4739, 0.0
        %v4868 = vmax.f32 %v4740, 0.0
        %v4869 = vmax.f32 %v4741, 0.0
        %v4870 = vmax.f32 %v4742, 0.0
        %v4871 = vmax.f32 %v4743, 0.0
        %v4872 = vmax.f32 %v4744, 0.0
        %v4873 = vmax.f32 %v4745, 0.0
        %v4874 = vmax.f32 %v4746, 0.0
        %v4875 = vmax.f32 %v4747, 0.0
        %v4876 = vmax.f32 %v4748, 0.0
        %v4877 = vmax.f32 %v4749, 0.0
        %v4878 = vmax.f32 %v4750, 0.0
        %v4879 = vmax.f32 %v4751, 0.0
        %v4880 = vmax.f32 %v4752, 0.0
        %v4881 = vmax.f32 %v4753, 0.0
        %v4882 = vmax.f32 %v4754, 0.0
        %v4883 = vmax.f32 %v4755, 0.0
        %v4884 = vmax.f32 %v4756, 0.0
        %v4885 = vmax.f32 %v4757, 0.0
        %v4886 = vmax.f32 %v4758, 0.0
        %v4887 = vmax.f32 %v4759, 0.0
        %v4888 = vmax.f32 %v4760, 0.0
        %v4889 = vmax.f32 %v4761, 0.0
        %v4890 = vmax.f32 %v4762, 0.0
        %v4891 = vmax.f32 %v4763, 0.0
        %v4892 = vmax.f32 %v4764, 0.0
        %v4893 = vmax.f32 %v4765, 0.0
        %v4894 = vmax.f32 %v4766, 0.0
        %v4895 = vmax.f32 %v4767, 0.0
        %v4896 = vmax.f32 %v4768, 0.0
        %v4897 = vmax.f32 %v4769, 0.0
        %v4898 = vmax.f32 %v4770, 0.0
        %v4899 = vmax.f32 %v4771, 0.0
        %v4900 = vmax.f32 %v4772, 0.0
        %v4901 = vmax.f32 %v4773, 0.0
        %v4902 = vmax.f32 %v4774, 0.0
        %v4903 = vmax.f32 %v4775, 0.0
        %v4904 = vmax.f32 %v4776, 0.0
        %v4905 = vmax.f32 %v4777, 0.0
        %v4906 = vmax.f32 %v4778, 0.0
        %v4907 = vmax.f32 %v4779, 0.0
        %v4908 = vmax.f32 %v4780, 0.0
        %v4909 = vmax.f32 %v4781, 0.0
        %v4910 = vmax.f32 %v4782, 0.0
        %v4911 = vmax.f32 %v4783, 0.0
        %v4912 = vmax.f32 %v4784, 0.0
        %v4913 = vmax.f32 %v4785, 0.0
        %v4914 = vmax.f32 %v4786, 0.0
        %v4915 = vmax.f32 %v4787, 0.0
        %v4916 = vmax.f32 %v4788, 0.0
        %v4917 = vmax.f32 %v4789, 0.0
        %v4918 = vmax.f32 %v4790, 0.0
        %v4919 = vmax.f32 %v4791, 0.0
        %v4920 = vmax.f32 %v4792, 0.0
        %v4921 = vmax.f32 %v4793, 0.0
        %v4922 = vmax.f32 %v4794, 0.0
        %v4923 = vmax.f32 %v4795, 0.0
        %v4924 = vmax.f32 %v4796, 0.0
        %v4925 = vmax.f32 %v4797, 0.0
        %v4926 = vmax.f32 %v4798, 0.0
        %v4927 = vmax.f32 %v4799, 0.0
        %v4928 = vmax.f32 %v4800, 0.0
        %v4929 = vmax.f32 %v4801, 0.0
        %v4930 = vmax.f32 %v4802, 0.0
        %v4931 = vmax.f32 %v4803, 0.0
        %v4932 = vmax.f32 %v4804, 0.0
        %v4933 = vmax.f32 %v4805, 0.0
        %v4934 = vmax.f32 %v4806, 0.0
        %v4935 = vmax.f32 %v4807, 0.0
        %v4936 = vmax.f32 %v4808, 0.0
        %v4937 = vmax.f32 %v4809, 0.0
        %v4938 = vmax.f32 %v4810, 0.0
        %v4939 = vmax.f32 %v4811, 0.0
        %v4940 = vmax.f32 %v4812, 0.0
        %v4941 = vmax.f32 %v4813, 0.0
        %v4942 = vmax.f32 %v4814, 0.0
        %v4943 = vmax.f32 %v4815, 0.0
        %v4944 = vmax.f32 %v4816, 0.0
        %v4945 = vmax.f32 %v4817, 0.0
        %v4946 = vmax.f32 %v4818, 0.0
        %v4947 = vmax.f32 %v4819, 0.0
        %v4948 = vmax.f32 %v4820, 0.0
        %v4949 = vmax.f32 %v4821, 0.0
        %v4950 = vmax.f32 %v4822, 0.0
        %v4951 = vmax.f32 %v4823, 0.0
        %v4952 = vmax.f32 %v4824, 0.0
        %v4953 = vmax.f32 %v4825, 0.0
        %v4954 = vmax.f32 %v4826, 0.0
        %v4955 = vmax.f32 %v4827, 0.0
        %v4956 = vmax.f32 %v4828, 0.0
        %v4957 = vmax.f32 %v4829, 0.0
        %v4958 = vmax.f32 %v4830, 0.0
        %v4959 = vmax.f32 %v4831, 0.0
        %v4960 = vmax.f32 %v4832, 0.0
        %v4961 = vmax.f32 %v4833, 0.0
        %v4962 = vmax.f32 %v4834, 0.0
        %v4963 = vmax.f32 %v4835, 0.0
        %v4964 = vmax.f32 %v4836, 0.0
        %v4965 = vmax.f32 %v4837, 0.0
        %v4966 = vmax.f32 %v4838, 0.0
        %v4967 = vmax.f32 %v4839, 0.0
        %v4968 = vmax.f32 %v4840, 0.0
        %v4969 = vmax.f32 %v4841, 0.0
        %v4970 = vmax.f32 %v4842, 0.0
        %v4971 = vmax.f32 %v4843, 0.0
        %v4972 = vmax.f32 %v4844, 0.0
        %v4973 = vmax.f32 %v4845, 0.0
        %v4974 = vmax.f32 %v4846, 0.0
        %v4975 = vmax.f32 %v4847, 0.0
        %v4976 = vmax.f32 %v4848, 0.0
        %v4977 = vmax.f32 %v4849, 0.0
        %v4978 = vmax.f32 %v4850, 0.0
        %v4979 = vmax.f32 %v4851, 0.0
        %v4980 = vmax.f32 %v4852, 0.0
        %v4981 = vmax.f32 %v4853, 0.0
        %v4982 = vmax.f32 %v4854, 0.0
        %v4983 = vmax.f32 %v4855, 0.0
        %v4984 = vmax.f32 %v4856, 0.0
        %v4985 = vmax.f32 %v4857, 0.0
        %v4986 = vmax.f32 %v4858, 0.0
        %v4987 = vmax.f32 %v4859, 0.0
        %v4988 = vmax.f32 %v4860, 0.0
        %v4989 = vmax.f32 %v4861, 0.0
        %v4990 = vmax.f32 %v4862, 0.0
        %v4991 = vmax.f32 %v4863, 0.0
        %v4992 = vmax.f32 %v4864, 0.0
        %v4993 = vmax.f32 %v4865, 0.0
        %v4994 = vmax.f32 %v4866, 0.0
        %v4995 = vpack.c.bf16 %v4867, %v4867
        %v4996 = vpack.c.bf16 %v4868, %v4868
        %v4997 = vpack.c.bf16 %v4869, %v4869
        %v4998 = vpack.c.bf16 %v4870, %v4870
        %v4999 = vpack.c.bf16 %v4871, %v4871
        %v5000 = vpack.c.bf16 %v4872, %v4872
        %v5001 = vpack.c.bf16 %v4873, %v4873
        %v5002 = vpack.c.bf16 %v4874, %v4874
        %v5003 = vpack.c.bf16 %v4875, %v4875
        %v5004 = vpack.c.bf16 %v4876, %v4876
        %v5005 = vpack.c.bf16 %v4877, %v4877
        %v5006 = vpack.c.bf16 %v4878, %v4878
        %v5007 = vpack.c.bf16 %v4879, %v4879
        %v5008 = vpack.c.bf16 %v4880, %v4880
        %v5009 = vpack.c.bf16 %v4881, %v4881
        %v5010 = vpack.c.bf16 %v4882, %v4882
        %v5011 = vpack.c.bf16 %v4883, %v4883
        %v5012 = vpack.c.bf16 %v4884, %v4884
        %v5013 = vpack.c.bf16 %v4885, %v4885
        %v5014 = vpack.c.bf16 %v4886, %v4886
        %v5015 = vpack.c.bf16 %v4887, %v4887
        %v5016 = vpack.c.bf16 %v4888, %v4888
        %v5017 = vpack.c.bf16 %v4889, %v4889
        %v5018 = vpack.c.bf16 %v4890, %v4890
        %v5019 = vpack.c.bf16 %v4891, %v4891
        %v5020 = vpack.c.bf16 %v4892, %v4892
        %v5021 = vpack.c.bf16 %v4893, %v4893
        %v5022 = vpack.c.bf16 %v4894, %v4894
        %v5023 = vpack.c.bf16 %v4895, %v4895
        %v5024 = vpack.c.bf16 %v4896, %v4896
        %v5025 = vpack.c.bf16 %v4897, %v4897
        %v5026 = vpack.c.bf16 %v4898, %v4898
        %v5027 = vpack.c.bf16 %v4899, %v4899
        %v5028 = vpack.c.bf16 %v4900, %v4900
        %v5029 = vpack.c.bf16 %v4901, %v4901
        %v5030 = vpack.c.bf16 %v4902, %v4902
        %v5031 = vpack.c.bf16 %v4903, %v4903
        %v5032 = vpack.c.bf16 %v4904, %v4904
        %v5033 = vpack.c.bf16 %v4905, %v4905
        %v5034 = vpack.c.bf16 %v4906, %v4906
        %v5035 = vpack.c.bf16 %v4907, %v4907
        %v5036 = vpack.c.bf16 %v4908, %v4908
        %v5037 = vpack.c.bf16 %v4909, %v4909
        %v5038 = vpack.c.bf16 %v4910, %v4910
        %v5039 = vpack.c.bf16 %v4911, %v4911
        %v5040 = vpack.c.bf16 %v4912, %v4912
        %v5041 = vpack.c.bf16 %v4913, %v4913
        %v5042 = vpack.c.bf16 %v4914, %v4914
        %v5043 = vpack.c.bf16 %v4915, %v4915
        %v5044 = vpack.c.bf16 %v4916, %v4916
        %v5045 = vpack.c.bf16 %v4917, %v4917
        %v5046 = vpack.c.bf16 %v4918, %v4918
        %v5047 = vpack.c.bf16 %v4919, %v4919
        %v5048 = vpack.c.bf16 %v4920, %v4920
        %v5049 = vpack.c.bf16 %v4921, %v4921
        %v5050 = vpack.c.bf16 %v4922, %v4922
        %v5051 = vpack.c.bf16 %v4923, %v4923
        %v5052 = vpack.c.bf16 %v4924, %v4924
        %v5053 = vpack.c.bf16 %v4925, %v4925
        %v5054 = vpack.c.bf16 %v4926, %v4926
        %v5055 = vpack.c.bf16 %v4927, %v4927
        %v5056 = vpack.c.bf16 %v4928, %v4928
        %v5057 = vpack.c.bf16 %v4929, %v4929
        %v5058 = vpack.c.bf16 %v4930, %v4930
        %v5059 = vpack.c.bf16 %v4931, %v4931
        %v5060 = vpack.c.bf16 %v4932, %v4932
        %v5061 = vpack.c.bf16 %v4933, %v4933
        %v5062 = vpack.c.bf16 %v4934, %v4934
        %v5063 = vpack.c.bf16 %v4935, %v4935
        %v5064 = vpack.c.bf16 %v4936, %v4936
        %v5065 = vpack.c.bf16 %v4937, %v4937
        %v5066 = vpack.c.bf16 %v4938, %v4938
        %v5067 = vpack.c.bf16 %v4939, %v4939
        %v5068 = vpack.c.bf16 %v4940, %v4940
        %v5069 = vpack.c.bf16 %v4941, %v4941
        %v5070 = vpack.c.bf16 %v4942, %v4942
        %v5071 = vpack.c.bf16 %v4943, %v4943
        %v5072 = vpack.c.bf16 %v4944, %v4944
        %v5073 = vpack.c.bf16 %v4945, %v4945
        %v5074 = vpack.c.bf16 %v4946, %v4946
        %v5075 = vpack.c.bf16 %v4947, %v4947
        %v5076 = vpack.c.bf16 %v4948, %v4948
        %v5077 = vpack.c.bf16 %v4949, %v4949
        %v5078 = vpack.c.bf16 %v4950, %v4950
        %v5079 = vpack.c.bf16 %v4951, %v4951
        %v5080 = vpack.c.bf16 %v4952, %v4952
        %v5081 = vpack.c.bf16 %v4953, %v4953
        %v5082 = vpack.c.bf16 %v4954, %v4954
        %v5083 = vpack.c.bf16 %v4955, %v4955
        %v5084 = vpack.c.bf16 %v4956, %v4956
        %v5085 = vpack.c.bf16 %v4957, %v4957
        %v5086 = vpack.c.bf16 %v4958, %v4958
        %v5087 = vpack.c.bf16 %v4959, %v4959
        %v5088 = vpack.c.bf16 %v4960, %v4960
        %v5089 = vpack.c.bf16 %v4961, %v4961
        %v5090 = vpack.c.bf16 %v4962, %v4962
        %v5091 = vpack.c.bf16 %v4963, %v4963
        %v5092 = vpack.c.bf16 %v4964, %v4964
        %v5093 = vpack.c.bf16 %v4965, %v4965
        %v5094 = vpack.c.bf16 %v4966, %v4966
        %v5095 = vpack.c.bf16 %v4967, %v4967
        %v5096 = vpack.c.bf16 %v4968, %v4968
        %v5097 = vpack.c.bf16 %v4969, %v4969
        %v5098 = vpack.c.bf16 %v4970, %v4970
        %v5099 = vpack.c.bf16 %v4971, %v4971
        %v5100 = vpack.c.bf16 %v4972, %v4972
        %v5101 = vpack.c.bf16 %v4973, %v4973
        %v5102 = vpack.c.bf16 %v4974, %v4974
        %v5103 = vpack.c.bf16 %v4975, %v4975
        %v5104 = vpack.c.bf16 %v4976, %v4976
        %v5105 = vpack.c.bf16 %v4977, %v4977
        %v5106 = vpack.c.bf16 %v4978, %v4978
        %v5107 = vpack.c.bf16 %v4979, %v4979
        %v5108 = vpack.c.bf16 %v4980, %v4980
        %v5109 = vpack.c.bf16 %v4981, %v4981
        %v5110 = vpack.c.bf16 %v4982, %v4982
        %v5111 = vpack.c.bf16 %v4983, %v4983
        %v5112 = vpack.c.bf16 %v4984, %v4984
        %v5113 = vpack.c.bf16 %v4985, %v4985
        %v5114 = vpack.c.bf16 %v4986, %v4986
        %v5115 = vpack.c.bf16 %v4987, %v4987
        %v5116 = vpack.c.bf16 %v4988, %v4988
        %v5117 = vpack.c.bf16 %v4989, %v4989
        %v5118 = vpack.c.bf16 %v4990, %v4990
        %v5119 = vpack.c.bf16 %v4991, %v4991
        %v5120 = vpack.c.bf16 %v4992, %v4992
        %v5121 = vpack.c.bf16 %v4993, %v4993
        %v5122 = vpack.c.bf16 %v4994, %v4994
        %v5251 = vunpack.c.l.b16 %v4995
        %v5252 = vunpack.c.l.b16 %v4996
        %v5253 = vunpack.c.l.b16 %v4997
        %v5254 = vunpack.c.l.b16 %v4998
        %v5255 = vunpack.c.l.b16 %v4999
        %v5256 = vunpack.c.l.b16 %v5000
        %v5257 = vunpack.c.l.b16 %v5001
        %v5258 = vunpack.c.l.b16 %v5002
        %v5259 = vunpack.c.l.b16 %v5003
        %v5260 = vunpack.c.l.b16 %v5004
        %v5261 = vunpack.c.l.b16 %v5005
        %v5262 = vunpack.c.l.b16 %v5006
        %v5263 = vunpack.c.l.b16 %v5007
        %v5264 = vunpack.c.l.b16 %v5008
        %v5265 = vunpack.c.l.b16 %v5009
        %v5266 = vunpack.c.l.b16 %v5010
        %v5267 = vunpack.c.l.b16 %v5011
        %v5268 = vunpack.c.l.b16 %v5012
        %v5269 = vunpack.c.l.b16 %v5013
        %v5270 = vunpack.c.l.b16 %v5014
        %v5271 = vunpack.c.l.b16 %v5015
        %v5272 = vunpack.c.l.b16 %v5016
        %v5273 = vunpack.c.l.b16 %v5017
        %v5274 = vunpack.c.l.b16 %v5018
        %v5275 = vunpack.c.l.b16 %v5019
        %v5276 = vunpack.c.l.b16 %v5020
        %v5277 = vunpack.c.l.b16 %v5021
        %v5278 = vunpack.c.l.b16 %v5022
        %v5279 = vunpack.c.l.b16 %v5023
        %v5280 = vunpack.c.l.b16 %v5024
        %v5281 = vunpack.c.l.b16 %v5025
        %v5282 = vunpack.c.l.b16 %v5026
        %v5283 = vunpack.c.l.b16 %v5027
        %v5284 = vunpack.c.l.b16 %v5028
        %v5285 = vunpack.c.l.b16 %v5029
        %v5286 = vunpack.c.l.b16 %v5030
        %v5287 = vunpack.c.l.b16 %v5031
        %v5288 = vunpack.c.l.b16 %v5032
        %v5289 = vunpack.c.l.b16 %v5033
        %v5290 = vunpack.c.l.b16 %v5034
        %v5291 = vunpack.c.l.b16 %v5035
        %v5292 = vunpack.c.l.b16 %v5036
        %v5293 = vunpack.c.l.b16 %v5037
        %v5294 = vunpack.c.l.b16 %v5038
        %v5295 = vunpack.c.l.b16 %v5039
        %v5296 = vunpack.c.l.b16 %v5040
        %v5297 = vunpack.c.l.b16 %v5041
        %v5298 = vunpack.c.l.b16 %v5042
        %v5299 = vunpack.c.l.b16 %v5043
        %v5300 = vunpack.c.l.b16 %v5044
        %v5301 = vunpack.c.l.b16 %v5045
        %v5302 = vunpack.c.l.b16 %v5046
        %v5303 = vunpack.c.l.b16 %v5047
        %v5304 = vunpack.c.l.b16 %v5048
        %v5305 = vunpack.c.l.b16 %v5049
        %v5306 = vunpack.c.l.b16 %v5050
        %v5307 = vunpack.c.l.b16 %v5051
        %v5308 = vunpack.c.l.b16 %v5052
        %v5309 = vunpack.c.l.b16 %v5053
        %v5310 = vunpack.c.l.b16 %v5054
        %v5311 = vunpack.c.l.b16 %v5055
        %v5312 = vunpack.c.l.b16 %v5056
        %v5313 = vunpack.c.l.b16 %v5057
        %v5314 = vunpack.c.l.b16 %v5058
        %v5315 = vunpack.c.l.b16 %v5059
        %v5316 = vunpack.c.l.b16 %v5060
        %v5317 = vunpack.c.l.b16 %v5061
        %v5318 = vunpack.c.l.b16 %v5062
        %v5319 = vunpack.c.l.b16 %v5063
        %v5320 = vunpack.c.l.b16 %v5064
        %v5321 = vunpack.c.l.b16 %v5065
        %v5322 = vunpack.c.l.b16 %v5066
        %v5323 = vunpack.c.l.b16 %v5067
        %v5324 = vunpack.c.l.b16 %v5068
        %v5325 = vunpack.c.l.b16 %v5069
        %v5326 = vunpack.c.l.b16 %v5070
        %v5327 = vunpack.c.l.b16 %v5071
        %v5328 = vunpack.c.l.b16 %v5072
        %v5329 = vunpack.c.l.b16 %v5073
        %v5330 = vunpack.c.l.b16 %v5074
        %v5331 = vunpack.c.l.b16 %v5075
        %v5332 = vunpack.c.l.b16 %v5076
        %v5333 = vunpack.c.l.b16 %v5077
        %v5334 = vunpack.c.l.b16 %v5078
        %v5335 = vunpack.c.l.b16 %v5079
        %v5336 = vunpack.c.l.b16 %v5080
        %v5337 = vunpack.c.l.b16 %v5081
        %v5338 = vunpack.c.l.b16 %v5082
        %v5339 = vunpack.c.l.b16 %v5083
        %v5340 = vunpack.c.l.b16 %v5084
        %v5341 = vunpack.c.l.b16 %v5085
        %v5342 = vunpack.c.l.b16 %v5086
        %v5343 = vunpack.c.l.b16 %v5087
        %v5344 = vunpack.c.l.b16 %v5088
        %v5345 = vunpack.c.l.b16 %v5089
        %v5346 = vunpack.c.l.b16 %v5090
        %v5347 = vunpack.c.l.b16 %v5091
        %v5348 = vunpack.c.l.b16 %v5092
        %v5349 = vunpack.c.l.b16 %v5093
        %v5350 = vunpack.c.l.b16 %v5094
        %v5351 = vunpack.c.l.b16 %v5095
        %v5352 = vunpack.c.l.b16 %v5096
        %v5353 = vunpack.c.l.b16 %v5097
        %v5354 = vunpack.c.l.b16 %v5098
        %v5355 = vunpack.c.l.b16 %v5099
        %v5356 = vunpack.c.l.b16 %v5100
        %v5357 = vunpack.c.l.b16 %v5101
        %v5358 = vunpack.c.l.b16 %v5102
        %v5359 = vunpack.c.l.b16 %v5103
        %v5360 = vunpack.c.l.b16 %v5104
        %v5361 = vunpack.c.l.b16 %v5105
        %v5362 = vunpack.c.l.b16 %v5106
        %v5363 = vunpack.c.l.b16 %v5107
        %v5364 = vunpack.c.l.b16 %v5108
        %v5365 = vunpack.c.l.b16 %v5109
        %v5366 = vunpack.c.l.b16 %v5110
        %v5367 = vunpack.c.l.b16 %v5111
        %v5368 = vunpack.c.l.b16 %v5112
        %v5369 = vunpack.c.l.b16 %v5113
        %v5370 = vunpack.c.l.b16 %v5114
        %v5371 = vunpack.c.l.b16 %v5115
        %v5372 = vunpack.c.l.b16 %v5116
        %v5373 = vunpack.c.l.b16 %v5117
        %v5374 = vunpack.c.l.b16 %v5118
        %v5375 = vunpack.c.l.b16 %v5119
        %v5376 = vunpack.c.l.b16 %v5120
        %v5377 = vunpack.c.l.b16 %v5121
        %v5378 = vunpack.c.l.b16 %v5122
        %v5379 = vrot.slane %v5252, 7
        %vm5380 = vcmask 1041409
        %v5381 = vsel %vm5380, %v5379, %v5251
        %v5382 = vrot.slane %v5253, 6
        %vm5383 = vcmask 1042434
        %v5384 = vsel %vm5383, %v5382, %v5381
        %v5385 = vrot.slane %v5254, 5
        %vm5386 = vcmask 1043459
        %v5387 = vsel %vm5386, %v5385, %v5384
        %v5388 = vrot.slane %v5255, 4
        %vm5389 = vcmask 1044484
        %v5390 = vsel %vm5389, %v5388, %v5387
        %v5391 = vrot.slane %v5256, 3
        %vm5392 = vcmask 1045509
        %v5393 = vsel %vm5392, %v5391, %v5390
        %v5394 = vrot.slane %v5257, 2
        %vm5395 = vcmask 1046534
        %v5396 = vsel %vm5395, %v5394, %v5393
        %v5397 = vrot.slane %v5258, 1
        %vm5398 = vcmask 1047559
        %v5399 = vsel %vm5398, %v5397, %v5396
        %v5400 = vrot.slane %v5260, 7
        %v5401 = vsel %vm5380, %v5400, %v5259
        %v5402 = vrot.slane %v5261, 6
        %v5403 = vsel %vm5383, %v5402, %v5401
        %v5404 = vrot.slane %v5262, 5
        %v5405 = vsel %vm5386, %v5404, %v5403
        %v5406 = vrot.slane %v5263, 4
        %v5407 = vsel %vm5389, %v5406, %v5405
        %v5408 = vrot.slane %v5264, 3
        %v5409 = vsel %vm5392, %v5408, %v5407
        %v5410 = vrot.slane %v5265, 2
        %v5411 = vsel %vm5395, %v5410, %v5409
        %v5412 = vrot.slane %v5266, 1
        %v5413 = vsel %vm5398, %v5412, %v5411
        %v5414 = vrot.slane %v5268, 7
        %v5415 = vsel %vm5380, %v5414, %v5267
        %v5416 = vrot.slane %v5269, 6
        %v5417 = vsel %vm5383, %v5416, %v5415
        %v5418 = vrot.slane %v5270, 5
        %v5419 = vsel %vm5386, %v5418, %v5417
        %v5420 = vrot.slane %v5271, 4
        %v5421 = vsel %vm5389, %v5420, %v5419
        %v5422 = vrot.slane %v5272, 3
        %v5423 = vsel %vm5392, %v5422, %v5421
        %v5424 = vrot.slane %v5273, 2
        %v5425 = vsel %vm5395, %v5424, %v5423
        %v5426 = vrot.slane %v5274, 1
        %v5427 = vsel %vm5398, %v5426, %v5425
        %v5428 = vrot.slane %v5276, 7
        %v5429 = vsel %vm5380, %v5428, %v5275
        %v5430 = vrot.slane %v5277, 6
        %v5431 = vsel %vm5383, %v5430, %v5429
        %v5432 = vrot.slane %v5278, 5
        %v5433 = vsel %vm5386, %v5432, %v5431
        %v5434 = vrot.slane %v5279, 4
        %v5435 = vsel %vm5389, %v5434, %v5433
        %v5436 = vrot.slane %v5280, 3
        %v5437 = vsel %vm5392, %v5436, %v5435
        %v5438 = vrot.slane %v5281, 2
        %v5439 = vsel %vm5395, %v5438, %v5437
        %v5440 = vrot.slane %v5282, 1
        %v5441 = vsel %vm5398, %v5440, %v5439
        %v5442 = vrot.slane %v5284, 7
        %v5443 = vsel %vm5380, %v5442, %v5283
        %v5444 = vrot.slane %v5285, 6
        %v5445 = vsel %vm5383, %v5444, %v5443
        %v5446 = vrot.slane %v5286, 5
        %v5447 = vsel %vm5386, %v5446, %v5445
        %v5448 = vrot.slane %v5287, 4
        %v5449 = vsel %vm5389, %v5448, %v5447
        %v5450 = vrot.slane %v5288, 3
        %v5451 = vsel %vm5392, %v5450, %v5449
        %v5452 = vrot.slane %v5289, 2
        %v5453 = vsel %vm5395, %v5452, %v5451
        %v5454 = vrot.slane %v5290, 1
        %v5455 = vsel %vm5398, %v5454, %v5453
        %v5456 = vrot.slane %v5292, 7
        %v5457 = vsel %vm5380, %v5456, %v5291
        %v5458 = vrot.slane %v5293, 6
        %v5459 = vsel %vm5383, %v5458, %v5457
        %v5460 = vrot.slane %v5294, 5
        %v5461 = vsel %vm5386, %v5460, %v5459
        %v5462 = vrot.slane %v5295, 4
        %v5463 = vsel %vm5389, %v5462, %v5461
        %v5464 = vrot.slane %v5296, 3
        %v5465 = vsel %vm5392, %v5464, %v5463
        %v5466 = vrot.slane %v5297, 2
        %v5467 = vsel %vm5395, %v5466, %v5465
        %v5468 = vrot.slane %v5298, 1
        %v5469 = vsel %vm5398, %v5468, %v5467
        %v5470 = vrot.slane %v5300, 7
        %v5471 = vsel %vm5380, %v5470, %v5299
        %v5472 = vrot.slane %v5301, 6
        %v5473 = vsel %vm5383, %v5472, %v5471
        %v5474 = vrot.slane %v5302, 5
        %v5475 = vsel %vm5386, %v5474, %v5473
        %v5476 = vrot.slane %v5303, 4
        %v5477 = vsel %vm5389, %v5476, %v5475
        %v5478 = vrot.slane %v5304, 3
        %v5479 = vsel %vm5392, %v5478, %v5477
        %v5480 = vrot.slane %v5305, 2
        %v5481 = vsel %vm5395, %v5480, %v5479
        %v5482 = vrot.slane %v5306, 1
        %v5483 = vsel %vm5398, %v5482, %v5481
        %v5484 = vrot.slane %v5308, 7
        %v5485 = vsel %vm5380, %v5484, %v5307
        %v5486 = vrot.slane %v5309, 6
        %v5487 = vsel %vm5383, %v5486, %v5485
        %v5488 = vrot.slane %v5310, 5
        %v5489 = vsel %vm5386, %v5488, %v5487
        %v5490 = vrot.slane %v5311, 4
        %v5491 = vsel %vm5389, %v5490, %v5489
        %v5492 = vrot.slane %v5312, 3
        %v5493 = vsel %vm5392, %v5492, %v5491
        %v5494 = vrot.slane %v5313, 2
        %v5495 = vsel %vm5395, %v5494, %v5493
        %v5496 = vrot.slane %v5314, 1
        %v5497 = vsel %vm5398, %v5496, %v5495
        %v5498 = vrot.slane %v5316, 7
        %v5499 = vsel %vm5380, %v5498, %v5315
        %v5500 = vrot.slane %v5317, 6
        %v5501 = vsel %vm5383, %v5500, %v5499
        %v5502 = vrot.slane %v5318, 5
        %v5503 = vsel %vm5386, %v5502, %v5501
        %v5504 = vrot.slane %v5319, 4
        %v5505 = vsel %vm5389, %v5504, %v5503
        %v5506 = vrot.slane %v5320, 3
        %v5507 = vsel %vm5392, %v5506, %v5505
        %v5508 = vrot.slane %v5321, 2
        %v5509 = vsel %vm5395, %v5508, %v5507
        %v5510 = vrot.slane %v5322, 1
        %v5511 = vsel %vm5398, %v5510, %v5509
        %v5512 = vrot.slane %v5324, 7
        %v5513 = vsel %vm5380, %v5512, %v5323
        %v5514 = vrot.slane %v5325, 6
        %v5515 = vsel %vm5383, %v5514, %v5513
        %v5516 = vrot.slane %v5326, 5
        %v5517 = vsel %vm5386, %v5516, %v5515
        %v5518 = vrot.slane %v5327, 4
        %v5519 = vsel %vm5389, %v5518, %v5517
        %v5520 = vrot.slane %v5328, 3
        %v5521 = vsel %vm5392, %v5520, %v5519
        %v5522 = vrot.slane %v5329, 2
        %v5523 = vsel %vm5395, %v5522, %v5521
        %v5524 = vrot.slane %v5330, 1
        %v5525 = vsel %vm5398, %v5524, %v5523
        %v5526 = vrot.slane %v5332, 7
        %v5527 = vsel %vm5380, %v5526, %v5331
        %v5528 = vrot.slane %v5333, 6
        %v5529 = vsel %vm5383, %v5528, %v5527
        %v5530 = vrot.slane %v5334, 5
        %v5531 = vsel %vm5386, %v5530, %v5529
        %v5532 = vrot.slane %v5335, 4
        %v5533 = vsel %vm5389, %v5532, %v5531
        %v5534 = vrot.slane %v5336, 3
        %v5535 = vsel %vm5392, %v5534, %v5533
        %v5536 = vrot.slane %v5337, 2
        %v5537 = vsel %vm5395, %v5536, %v5535
        %v5538 = vrot.slane %v5338, 1
        %v5539 = vsel %vm5398, %v5538, %v5537
        %v5540 = vrot.slane %v5340, 7
        %v5541 = vsel %vm5380, %v5540, %v5339
        %v5542 = vrot.slane %v5341, 6
        %v5543 = vsel %vm5383, %v5542, %v5541
        %v5544 = vrot.slane %v5342, 5
        %v5545 = vsel %vm5386, %v5544, %v5543
        %v5546 = vrot.slane %v5343, 4
        %v5547 = vsel %vm5389, %v5546, %v5545
        %v5548 = vrot.slane %v5344, 3
        %v5549 = vsel %vm5392, %v5548, %v5547
        %v5550 = vrot.slane %v5345, 2
        %v5551 = vsel %vm5395, %v5550, %v5549
        %v5552 = vrot.slane %v5346, 1
        %v5553 = vsel %vm5398, %v5552, %v5551
        %v5554 = vrot.slane %v5348, 7
        %v5555 = vsel %vm5380, %v5554, %v5347
        %v5556 = vrot.slane %v5349, 6
        %v5557 = vsel %vm5383, %v5556, %v5555
        %v5558 = vrot.slane %v5350, 5
        %v5559 = vsel %vm5386, %v5558, %v5557
        %v5560 = vrot.slane %v5351, 4
        %v5561 = vsel %vm5389, %v5560, %v5559
        %v5562 = vrot.slane %v5352, 3
        %v5563 = vsel %vm5392, %v5562, %v5561
        %v5564 = vrot.slane %v5353, 2
        %v5565 = vsel %vm5395, %v5564, %v5563
        %v5566 = vrot.slane %v5354, 1
        %v5567 = vsel %vm5398, %v5566, %v5565
        %v5568 = vrot.slane %v5356, 7
        %v5569 = vsel %vm5380, %v5568, %v5355
        %v5570 = vrot.slane %v5357, 6
        %v5571 = vsel %vm5383, %v5570, %v5569
        %v5572 = vrot.slane %v5358, 5
        %v5573 = vsel %vm5386, %v5572, %v5571
        %v5574 = vrot.slane %v5359, 4
        %v5575 = vsel %vm5389, %v5574, %v5573
        %v5576 = vrot.slane %v5360, 3
        %v5577 = vsel %vm5392, %v5576, %v5575
        %v5578 = vrot.slane %v5361, 2
        %v5579 = vsel %vm5395, %v5578, %v5577
        %v5580 = vrot.slane %v5362, 1
        %v5581 = vsel %vm5398, %v5580, %v5579
        %v5582 = vrot.slane %v5364, 7
        %v5583 = vsel %vm5380, %v5582, %v5363
        %v5584 = vrot.slane %v5365, 6
        %v5585 = vsel %vm5383, %v5584, %v5583
        %v5586 = vrot.slane %v5366, 5
        %v5587 = vsel %vm5386, %v5586, %v5585
        %v5588 = vrot.slane %v5367, 4
        %v5589 = vsel %vm5389, %v5588, %v5587
        %v5590 = vrot.slane %v5368, 3
        %v5591 = vsel %vm5392, %v5590, %v5589
        %v5592 = vrot.slane %v5369, 2
        %v5593 = vsel %vm5395, %v5592, %v5591
        %v5594 = vrot.slane %v5370, 1
        %v5595 = vsel %vm5398, %v5594, %v5593
        %v5596 = vrot.slane %v5372, 7
        %v5597 = vsel %vm5380, %v5596, %v5371
        %v5598 = vrot.slane %v5373, 6
        %v5599 = vsel %vm5383, %v5598, %v5597
        %v5600 = vrot.slane %v5374, 5
        %v5601 = vsel %vm5386, %v5600, %v5599
        %v5602 = vrot.slane %v5375, 4
        %v5603 = vsel %vm5389, %v5602, %v5601
        %v5604 = vrot.slane %v5376, 3
        %v5605 = vsel %vm5392, %v5604, %v5603
        %v5606 = vrot.slane %v5377, 2
        %v5607 = vsel %vm5395, %v5606, %v5605
        %v5608 = vrot.slane %v5378, 1
        %v5609 = vsel %vm5398, %v5608, %v5607
        %v5610 = vpack.c.b16 %v5413, %v5399
        %v5611 = vpack.c.b16 %v5441, %v5427
        %v5612 = vpack.c.b16 %v5469, %v5455
        %v5613 = vpack.c.b16 %v5497, %v5483
        %v5614 = vpack.c.b16 %v5525, %v5511
        %v5615 = vpack.c.b16 %v5553, %v5539
        %v5616 = vpack.c.b16 %v5581, %v5567
        %v5617 = vpack.c.b16 %v5609, %v5595
        %v5619 = vsel %vm2123, %v5610, 0
        %v5622 = vsel %vm2123, %v5611, 0
        %v5625 = vsel %vm2123, %v5612, 0
        %v5628 = vsel %vm2123, %v5613, 0
        %v5631 = vsel %vm2123, %v5614, 0
        %v5634 = vsel %vm2123, %v5615, 0
        %v5637 = vsel %vm2123, %v5616, 0
        %v5640 = vsel %vm2123, %v5617, 0
        %v5643 = vsel %vm2494, %v683, 0
        %5645 = vmatpush.bf16.msra.mxu0 0
        %5646 = vmatpush.bf16.msra.mxu0 0
        %5647 = vmatpush.bf16.msra.mxu0 0
        %5648 = vmatpush.bf16.msra.mxu0 0
        %5649 = vmatpush.bf16.msra.mxu0 0
        %5650 = vmatpush.bf16.msra.mxu0 0
        %5651 = vmatpush.bf16.msra.mxu0 0
        %5652 = vmatpush.bf16.msra.mxu0 %v5643
        %5653 = vmatmul.bf16.gmra.mxu0 %v5619
        %v5654 = vpop.f32.mrf.mxu0
        %v5655 = vadd.f32 0.0, %v5654
        %v5656 = vpop.f32.mrf.mxu0
        %v5657 = vadd.f32 0.0, %v5656
        %5658 = vmatmul.bf16.gmra.mxu0 %v5622
        %v5659 = vpop.f32.mrf.mxu0
        %v5660 = vadd.f32 0.0, %v5659
        %v5661 = vpop.f32.mrf.mxu0
        %v5662 = vadd.f32 0.0, %v5661
        %5663 = vmatmul.bf16.gmra.mxu0 %v5625
        %v5664 = vpop.f32.mrf.mxu0
        %v5665 = vadd.f32 0.0, %v5664
        %v5666 = vpop.f32.mrf.mxu0
        %v5667 = vadd.f32 0.0, %v5666
        %5668 = vmatmul.bf16.gmra.mxu0 %v5628
        %v5669 = vpop.f32.mrf.mxu0
        %v5670 = vadd.f32 0.0, %v5669
        %v5671 = vpop.f32.mrf.mxu0
        %v5672 = vadd.f32 0.0, %v5671
        %5673 = vmatmul.bf16.gmra.mxu0 %v5631
        %v5674 = vpop.f32.mrf.mxu0
        %v5675 = vadd.f32 0.0, %v5674
        %v5676 = vpop.f32.mrf.mxu0
        %v5677 = vadd.f32 0.0, %v5676
        %5678 = vmatmul.bf16.gmra.mxu0 %v5634
        %v5679 = vpop.f32.mrf.mxu0
        %v5680 = vadd.f32 0.0, %v5679
        %v5681 = vpop.f32.mrf.mxu0
        %v5682 = vadd.f32 0.0, %v5681
        %5683 = vmatmul.bf16.gmra.mxu0 %v5637
        %v5684 = vpop.f32.mrf.mxu0
        %v5685 = vadd.f32 0.0, %v5684
        %v5686 = vpop.f32.mrf.mxu0
        %v5687 = vadd.f32 0.0, %v5686
        %5688 = vmatmul.bf16.gmra.mxu0 %v5640
        %v5689 = vpop.f32.mrf.mxu0
        %v5690 = vadd.f32 0.0, %v5689
        %v5691 = vpop.f32.mrf.mxu0
        %v5692 = vadd.f32 0.0, %v5691
        %5693 = vdwg.mxu0
        %v5694 = vld [vmem:[%s11] sm:$0x1]
        %v5695 = vperm.slane %v5694, 0
        %v5696 = vmul.f32 %v5655, %v5695
        %v5697 = vmul.f32 %v5657, %v5695
        %v5698 = vmul.f32 %v5660, %v5695
        %v5699 = vmul.f32 %v5662, %v5695
        %v5700 = vmul.f32 %v5665, %v5695
        %v5701 = vmul.f32 %v5667, %v5695
        %v5702 = vmul.f32 %v5670, %v5695
        %v5703 = vmul.f32 %v5672, %v5695
        %v5704 = vmul.f32 %v5675, %v5695
        %v5705 = vmul.f32 %v5677, %v5695
        %v5706 = vmul.f32 %v5680, %v5695
        %v5707 = vmul.f32 %v5682, %v5695
        %v5708 = vmul.f32 %v5685, %v5695
        %v5709 = vmul.f32 %v5687, %v5695
        %v5710 = vmul.f32 %v5690, %v5695
        %v5711 = vmul.f32 %v5692, %v5695
        %v5712 = vld [vmem:[%s12] sm:$0x1]
        %v5713 = vperm.slane %v5712, 0
        %v5714 = vadd.f32 %v5696, %v5713
        %v5715 = vadd.f32 %v5697, %v5713
        %v5716 = vadd.f32 %v5698, %v5713
        %v5717 = vadd.f32 %v5699, %v5713
        %v5718 = vadd.f32 %v5700, %v5713
        %v5719 = vadd.f32 %v5701, %v5713
        %v5720 = vadd.f32 %v5702, %v5713
        %v5721 = vadd.f32 %v5703, %v5713
        %v5722 = vadd.f32 %v5704, %v5713
        %v5723 = vadd.f32 %v5705, %v5713
        %v5724 = vadd.f32 %v5706, %v5713
        %v5725 = vadd.f32 %v5707, %v5713
        %v5726 = vadd.f32 %v5708, %v5713
        %v5727 = vadd.f32 %v5709, %v5713
        %v5728 = vadd.f32 %v5710, %v5713
        %v5729 = vadd.f32 %v5711, %v5713
        %v5730 = vld [vmem:[%s594] sm:$0xff]
        %v5731 = vld [vmem:[%s594 + $0x8] sm:$0xff]
        %v5732 = vld [vmem:[%s594 + $0x10] sm:$0xff]
        %v5733 = vld [vmem:[%s594 + $0x18] sm:$0xff]
        %v5734 = vld [vmem:[%s594 + $0x20] sm:$0xff]
        %v5735 = vld [vmem:[%s594 + $0x28] sm:$0xff]
        %v5736 = vld [vmem:[%s594 + $0x30] sm:$0xff]
        %v5737 = vld [vmem:[%s594 + $0x38] sm:$0xff]
        %v5738 = vld [vmem:[%s594 + $0x40] sm:$0xff]
        %v5739 = vld [vmem:[%s594 + $0x48] sm:$0xff]
        %v5740 = vld [vmem:[%s594 + $0x50] sm:$0xff]
        %v5741 = vld [vmem:[%s594 + $0x58] sm:$0xff]
        %v5742 = vld [vmem:[%s594 + $0x60] sm:$0xff]
        %v5743 = vld [vmem:[%s594 + $0x68] sm:$0xff]
        %v5744 = vld [vmem:[%s594 + $0x70] sm:$0xff]
        %v5745 = vld [vmem:[%s594 + $0x78] sm:$0xff]
        %v5746 = vadd.f32 %v5714, %v5730
        %v5747 = vadd.f32 %v5715, %v5731
        %v5748 = vadd.f32 %v5716, %v5732
        %v5749 = vadd.f32 %v5717, %v5733
        %v5750 = vadd.f32 %v5718, %v5734
        %v5751 = vadd.f32 %v5719, %v5735
        %v5752 = vadd.f32 %v5720, %v5736
        %v5753 = vadd.f32 %v5721, %v5737
        %v5754 = vadd.f32 %v5722, %v5738
        %v5755 = vadd.f32 %v5723, %v5739
        %v5756 = vadd.f32 %v5724, %v5740
        %v5757 = vadd.f32 %v5725, %v5741
        %v5758 = vadd.f32 %v5726, %v5742
        %v5759 = vadd.f32 %v5727, %v5743
        %v5760 = vadd.f32 %v5728, %v5744
        %v5761 = vadd.f32 %v5729, %v5745
        %v5762 = vmax.f32 %v5746, 0.0
        %v5763 = vmax.f32 %v5747, 0.0
        %v5764 = vmax.f32 %v5748, 0.0
        %v5765 = vmax.f32 %v5749, 0.0
        %v5766 = vmax.f32 %v5750, 0.0
        %v5767 = vmax.f32 %v5751, 0.0
        %v5768 = vmax.f32 %v5752, 0.0
        %v5769 = vmax.f32 %v5753, 0.0
        %v5770 = vmax.f32 %v5754, 0.0
        %v5771 = vmax.f32 %v5755, 0.0
        %v5772 = vmax.f32 %v5756, 0.0
        %v5773 = vmax.f32 %v5757, 0.0
        %v5774 = vmax.f32 %v5758, 0.0
        %v5775 = vmax.f32 %v5759, 0.0
        %v5776 = vmax.f32 %v5760, 0.0
        %v5777 = vmax.f32 %v5761, 0.0
        %5778 = vst.msk [vmem:[%s667] sm:$0xff] %vm851, %v5762
        %5779 = vst.msk [vmem:[%s667 + $0x8] sm:$0xff] %vm851, %v5763
        %5780 = vst.msk [vmem:[%s667 + $0x10] sm:$0xff] %vm851, %v5764
        %5781 = vst.msk [vmem:[%s667 + $0x18] sm:$0xff] %vm851, %v5765
        %5782 = vst.msk [vmem:[%s667 + $0x20] sm:$0xff] %vm851, %v5766
        %5783 = vst.msk [vmem:[%s667 + $0x28] sm:$0xff] %vm851, %v5767
        %5784 = vst.msk [vmem:[%s667 + $0x30] sm:$0xff] %vm851, %v5768
        %5785 = vst.msk [vmem:[%s667 + $0x38] sm:$0xff] %vm851, %v5769
        %5786 = vst.msk [vmem:[%s667 + $0x40] sm:$0xff] %vm851, %v5770
        %5787 = vst.msk [vmem:[%s667 + $0x48] sm:$0xff] %vm851, %v5771
        %5788 = vst.msk [vmem:[%s667 + $0x50] sm:$0xff] %vm851, %v5772
        %5789 = vst.msk [vmem:[%s667 + $0x58] sm:$0xff] %vm851, %v5773
        %5790 = vst.msk [vmem:[%s667 + $0x60] sm:$0xff] %vm851, %v5774
        %5791 = vst.msk [vmem:[%s667 + $0x68] sm:$0xff] %vm851, %v5775
        %5792 = vst.msk [vmem:[%s667 + $0x70] sm:$0xff] %vm851, %v5776
        %5793 = vst.msk [vmem:[%s667 + $0x78] sm:$0xff] %vm851, %v5777
        %v5794 = vld [vmem:[%s10 + $0x1] sm:$0x1]
        %v5795 = vand.u32 2147483647, %v5794
        %vm5796 = vcmp.ge.f32.partialorder %v5795, 0.5
        %v5797 = vsel %vm5796, 1, 0
        %vm5798 = vcmp.eq.s32.totalorder %v5797, 1
        %v5799 = vsel %vm5798, %v4206, %v3046
        %v5800 = vsel %vm5798, %v4499, %v4243
        %v5801 = vsel %vm5798, %v4500, %v4244
        %v5802 = vsel %vm5798, %v4501, %v4245
        %v5803 = vsel %vm5798, %v4502, %v4246
        %v5804 = vsel %vm5798, %v4503, %v4247
        %v5805 = vsel %vm5798, %v4504, %v4248
        %v5806 = vsel %vm5798, %v4505, %v4249
        %v5807 = vsel %vm5798, %v4207, %v3047
        %v5808 = vsel %vm5798, %v4506, %v4250
        %v5809 = vsel %vm5798, %v4507, %v4251
        %v5810 = vsel %vm5798, %v4508, %v4252
        %v5811 = vsel %vm5798, %v4509, %v4253
        %v5812 = vsel %vm5798, %v4510, %v4254
        %v5813 = vsel %vm5798, %v4511, %v4255
        %v5814 = vsel %vm5798, %v4512, %v4256
        %v5815 = vsel %vm5798, %v4208, %v3048
        %v5816 = vsel %vm5798, %v4513, %v4257
        %v5817 = vsel %vm5798, %v4514, %v4258
        %v5818 = vsel %vm5798, %v4515, %v4259
        %v5819 = vsel %vm5798, %v4516, %v4260
        %v5820 = vsel %vm5798, %v4517, %v4261
        %v5821 = vsel %vm5798, %v4518, %v4262
        %v5822 = vsel %vm5798, %v4519, %v4263
        %v5823 = vsel %vm5798, %v4209, %v3049
        %v5824 = vsel %vm5798, %v4520, %v4264
        %v5825 = vsel %vm5798, %v4521, %v4265
        %v5826 = vsel %vm5798, %v4522, %v4266
        %v5827 = vsel %vm5798, %v4523, %v4267
        %v5828 = vsel %vm5798, %v4524, %v4268
        %v5829 = vsel %vm5798, %v4525, %v4269
        %v5830 = vsel %vm5798, %v4526, %v4270
        %v5831 = vsel %vm5798, %v4210, %v3050
        %v5832 = vsel %vm5798, %v4527, %v4271
        %v5833 = vsel %vm5798, %v4528, %v4272
        %v5834 = vsel %vm5798, %v4529, %v4273
        %v5835 = vsel %vm5798, %v4530, %v4274
        %v5836 = vsel %vm5798, %v4531, %v4275
        %v5837 = vsel %vm5798, %v4532, %v4276
        %v5838 = vsel %vm5798, %v4533, %v4277
        %v5839 = vsel %vm5798, %v4211, %v3051
        %v5840 = vsel %vm5798, %v4534, %v4278
        %v5841 = vsel %vm5798, %v4535, %v4279
        %v5842 = vsel %vm5798, %v4536, %v4280
        %v5843 = vsel %vm5798, %v4537, %v4281
        %v5844 = vsel %vm5798, %v4538, %v4282
        %v5845 = vsel %vm5798, %v4539, %v4283
        %v5846 = vsel %vm5798, %v4540, %v4284
        %v5847 = vsel %vm5798, %v4212, %v3052
        %v5848 = vsel %vm5798, %v4541, %v4285
        %v5849 = vsel %vm5798, %v4542, %v4286
        %v5850 = vsel %vm5798, %v4543, %v4287
        %v5851 = vsel %vm5798, %v4544, %v4288
        %v5852 = vsel %vm5798, %v4545, %v4289
        %v5853 = vsel %vm5798, %v4546, %v4290
        %v5854 = vsel %vm5798, %v4547, %v4291
        %v5855 = vsel %vm5798, %v4213, %v3053
        %v5856 = vsel %vm5798, %v4548, %v4292
        %v5857 = vsel %vm5798, %v4549, %v4293
        %v5858 = vsel %vm5798, %v4550, %v4294
        %v5859 = vsel %vm5798, %v4551, %v4295
        %v5860 = vsel %vm5798, %v4552, %v4296
        %v5861 = vsel %vm5798, %v4553, %v4297
        %v5862 = vsel %vm5798, %v4554, %v4298
        %v5863 = vsel %vm5798, %v4214, %v3054
        %v5864 = vsel %vm5798, %v4555, %v4299
        %v5865 = vsel %vm5798, %v4556, %v4300
        %v5866 = vsel %vm5798, %v4557, %v4301
        %v5867 = vsel %vm5798, %v4558, %v4302
        %v5868 = vsel %vm5798, %v4559, %v4303
        %v5869 = vsel %vm5798, %v4560, %v4304
        %v5870 = vsel %vm5798, %v4561, %v4305
        %v5871 = vsel %vm5798, %v4215, %v3055
        %v5872 = vsel %vm5798, %v4562, %v4306
        %v5873 = vsel %vm5798, %v4563, %v4307
        %v5874 = vsel %vm5798, %v4564, %v4308
        %v5875 = vsel %vm5798, %v4565, %v4309
        %v5876 = vsel %vm5798, %v4566, %v4310
        %v5877 = vsel %vm5798, %v4567, %v4311
        %v5878 = vsel %vm5798, %v4568, %v4312
        %v5879 = vsel %vm5798, %v4216, %v3056
        %v5880 = vsel %vm5798, %v4569, %v4313
        %v5881 = vsel %vm5798, %v4570, %v4314
        %v5882 = vsel %vm5798, %v4571, %v4315
        %v5883 = vsel %vm5798, %v4572, %v4316
        %v5884 = vsel %vm5798, %v4573, %v4317
        %v5885 = vsel %vm5798, %v4574, %v4318
        %v5886 = vsel %vm5798, %v4575, %v4319
        %v5887 = vsel %vm5798, %v4217, %v3057
        %v5888 = vsel %vm5798, %v4576, %v4320
        %v5889 = vsel %vm5798, %v4577, %v4321
        %v5890 = vsel %vm5798, %v4578, %v4322
        %v5891 = vsel %vm5798, %v4579, %v4323
        %v5892 = vsel %vm5798, %v4580, %v4324
        %v5893 = vsel %vm5798, %v4581, %v4325
        %v5894 = vsel %vm5798, %v4582, %v4326
        %v5895 = vsel %vm5798, %v4218, %v3058
        %v5896 = vsel %vm5798, %v4583, %v4327
        %v5897 = vsel %vm5798, %v4584, %v4328
        %v5898 = vsel %vm5798, %v4585, %v4329
        %v5899 = vsel %vm5798, %v4586, %v4330
        %v5900 = vsel %vm5798, %v4587, %v4331
        %v5901 = vsel %vm5798, %v4588, %v4332
        %v5902 = vsel %vm5798, %v4589, %v4333
        %v5903 = vsel %vm5798, %v4219, %v3059
        %v5904 = vsel %vm5798, %v4590, %v4334
        %v5905 = vsel %vm5798, %v4591, %v4335
        %v5906 = vsel %vm5798, %v4592, %v4336
        %v5907 = vsel %vm5798, %v4593, %v4337
        %v5908 = vsel %vm5798, %v4594, %v4338
        %v5909 = vsel %vm5798, %v4595, %v4339
        %v5910 = vsel %vm5798, %v4596, %v4340
        %v5911 = vsel %vm5798, %v4220, %v3060
        %v5912 = vsel %vm5798, %v4597, %v4341
        %v5913 = vsel %vm5798, %v4598, %v4342
        %v5914 = vsel %vm5798, %v4599, %v4343
        %v5915 = vsel %vm5798, %v4600, %v4344
        %v5916 = vsel %vm5798, %v4601, %v4345
        %v5917 = vsel %vm5798, %v4602, %v4346
        %v5918 = vsel %vm5798, %v4603, %v4347
        %v5919 = vsel %vm5798, %v4221, %v3061
        %v5920 = vsel %vm5798, %v4604, %v4348
        %v5921 = vsel %vm5798, %v4605, %v4349
        %v5922 = vsel %vm5798, %v4606, %v4350
        %v5923 = vsel %vm5798, %v4607, %v4351
        %v5924 = vsel %vm5798, %v4608, %v4352
        %v5925 = vsel %vm5798, %v4609, %v4353
        %v5926 = vsel %vm5798, %v4610, %v4354
        %v5927 = vmax.f32 %v5799, 0.0
        %v5928 = vmax.f32 %v5800, 0.0
        %v5929 = vmax.f32 %v5801, 0.0
        %v5930 = vmax.f32 %v5802, 0.0
        %v5931 = vmax.f32 %v5803, 0.0
        %v5932 = vmax.f32 %v5804, 0.0
        %v5933 = vmax.f32 %v5805, 0.0
        %v5934 = vmax.f32 %v5806, 0.0
        %v5935 = vmax.f32 %v5807, 0.0
        %v5936 = vmax.f32 %v5808, 0.0
        %v5937 = vmax.f32 %v5809, 0.0
        %v5938 = vmax.f32 %v5810, 0.0
        %v5939 = vmax.f32 %v5811, 0.0
        %v5940 = vmax.f32 %v5812, 0.0
        %v5941 = vmax.f32 %v5813, 0.0
        %v5942 = vmax.f32 %v5814, 0.0
        %v5943 = vmax.f32 %v5815, 0.0
        %v5944 = vmax.f32 %v5816, 0.0
        %v5945 = vmax.f32 %v5817, 0.0
        %v5946 = vmax.f32 %v5818, 0.0
        %v5947 = vmax.f32 %v5819, 0.0
        %v5948 = vmax.f32 %v5820, 0.0
        %v5949 = vmax.f32 %v5821, 0.0
        %v5950 = vmax.f32 %v5822, 0.0
        %v5951 = vmax.f32 %v5823, 0.0
        %v5952 = vmax.f32 %v5824, 0.0
        %v5953 = vmax.f32 %v5825, 0.0
        %v5954 = vmax.f32 %v5826, 0.0
        %v5955 = vmax.f32 %v5827, 0.0
        %v5956 = vmax.f32 %v5828, 0.0
        %v5957 = vmax.f32 %v5829, 0.0
        %v5958 = vmax.f32 %v5830, 0.0
        %v5959 = vmax.f32 %v5831, 0.0
        %v5960 = vmax.f32 %v5832, 0.0
        %v5961 = vmax.f32 %v5833, 0.0
        %v5962 = vmax.f32 %v5834, 0.0
        %v5963 = vmax.f32 %v5835, 0.0
        %v5964 = vmax.f32 %v5836, 0.0
        %v5965 = vmax.f32 %v5837, 0.0
        %v5966 = vmax.f32 %v5838, 0.0
        %v5967 = vmax.f32 %v5839, 0.0
        %v5968 = vmax.f32 %v5840, 0.0
        %v5969 = vmax.f32 %v5841, 0.0
        %v5970 = vmax.f32 %v5842, 0.0
        %v5971 = vmax.f32 %v5843, 0.0
        %v5972 = vmax.f32 %v5844, 0.0
        %v5973 = vmax.f32 %v5845, 0.0
        %v5974 = vmax.f32 %v5846, 0.0
        %v5975 = vmax.f32 %v5847, 0.0
        %v5976 = vmax.f32 %v5848, 0.0
        %v5977 = vmax.f32 %v5849, 0.0
        %v5978 = vmax.f32 %v5850, 0.0
        %v5979 = vmax.f32 %v5851, 0.0
        %v5980 = vmax.f32 %v5852, 0.0
        %v5981 = vmax.f32 %v5853, 0.0
        %v5982 = vmax.f32 %v5854, 0.0
        %v5983 = vmax.f32 %v5855, 0.0
        %v5984 = vmax.f32 %v5856, 0.0
        %v5985 = vmax.f32 %v5857, 0.0
        %v5986 = vmax.f32 %v5858, 0.0
        %v5987 = vmax.f32 %v5859, 0.0
        %v5988 = vmax.f32 %v5860, 0.0
        %v5989 = vmax.f32 %v5861, 0.0
        %v5990 = vmax.f32 %v5862, 0.0
        %v5991 = vmax.f32 %v5863, 0.0
        %v5992 = vmax.f32 %v5864, 0.0
        %v5993 = vmax.f32 %v5865, 0.0
        %v5994 = vmax.f32 %v5866, 0.0
        %v5995 = vmax.f32 %v5867, 0.0
        %v5996 = vmax.f32 %v5868, 0.0
        %v5997 = vmax.f32 %v5869, 0.0
        %v5998 = vmax.f32 %v5870, 0.0
        %v5999 = vmax.f32 %v5871, 0.0
        %v6000 = vmax.f32 %v5872, 0.0
        %v6001 = vmax.f32 %v5873, 0.0
        %v6002 = vmax.f32 %v5874, 0.0
        %v6003 = vmax.f32 %v5875, 0.0
        %v6004 = vmax.f32 %v5876, 0.0
        %v6005 = vmax.f32 %v5877, 0.0
        %v6006 = vmax.f32 %v5878, 0.0
        %v6007 = vmax.f32 %v5879, 0.0
        %v6008 = vmax.f32 %v5880, 0.0
        %v6009 = vmax.f32 %v5881, 0.0
        %v6010 = vmax.f32 %v5882, 0.0
        %v6011 = vmax.f32 %v5883, 0.0
        %v6012 = vmax.f32 %v5884, 0.0
        %v6013 = vmax.f32 %v5885, 0.0
        %v6014 = vmax.f32 %v5886, 0.0
        %v6015 = vmax.f32 %v5887, 0.0
        %v6016 = vmax.f32 %v5888, 0.0
        %v6017 = vmax.f32 %v5889, 0.0
        %v6018 = vmax.f32 %v5890, 0.0
        %v6019 = vmax.f32 %v5891, 0.0
        %v6020 = vmax.f32 %v5892, 0.0
        %v6021 = vmax.f32 %v5893, 0.0
        %v6022 = vmax.f32 %v5894, 0.0
        %v6023 = vmax.f32 %v5895, 0.0
        %v6024 = vmax.f32 %v5896, 0.0
        %v6025 = vmax.f32 %v5897, 0.0
        %v6026 = vmax.f32 %v5898, 0.0
        %v6027 = vmax.f32 %v5899, 0.0
        %v6028 = vmax.f32 %v5900, 0.0
        %v6029 = vmax.f32 %v5901, 0.0
        %v6030 = vmax.f32 %v5902, 0.0
        %v6031 = vmax.f32 %v5903, 0.0
        %v6032 = vmax.f32 %v5904, 0.0
        %v6033 = vmax.f32 %v5905, 0.0
        %v6034 = vmax.f32 %v5906, 0.0
        %v6035 = vmax.f32 %v5907, 0.0
        %v6036 = vmax.f32 %v5908, 0.0
        %v6037 = vmax.f32 %v5909, 0.0
        %v6038 = vmax.f32 %v5910, 0.0
        %v6039 = vmax.f32 %v5911, 0.0
        %v6040 = vmax.f32 %v5912, 0.0
        %v6041 = vmax.f32 %v5913, 0.0
        %v6042 = vmax.f32 %v5914, 0.0
        %v6043 = vmax.f32 %v5915, 0.0
        %v6044 = vmax.f32 %v5916, 0.0
        %v6045 = vmax.f32 %v5917, 0.0
        %v6046 = vmax.f32 %v5918, 0.0
        %v6047 = vmax.f32 %v5919, 0.0
        %v6048 = vmax.f32 %v5920, 0.0
        %v6049 = vmax.f32 %v5921, 0.0
        %v6050 = vmax.f32 %v5922, 0.0
        %v6051 = vmax.f32 %v5923, 0.0
        %v6052 = vmax.f32 %v5924, 0.0
        %v6053 = vmax.f32 %v5925, 0.0
        %v6054 = vmax.f32 %v5926, 0.0
        %v6055 = vpack.c.bf16 %v5927, %v5927
        %v6056 = vpack.c.bf16 %v5928, %v5928
        %v6057 = vpack.c.bf16 %v5929, %v5929
        %v6058 = vpack.c.bf16 %v5930, %v5930
        %v6059 = vpack.c.bf16 %v5931, %v5931
        %v6060 = vpack.c.bf16 %v5932, %v5932
        %v6061 = vpack.c.bf16 %v5933, %v5933
        %v6062 = vpack.c.bf16 %v5934, %v5934
        %v6063 = vpack.c.bf16 %v5935, %v5935
        %v6064 = vpack.c.bf16 %v5936, %v5936
        %v6065 = vpack.c.bf16 %v5937, %v5937
        %v6066 = vpack.c.bf16 %v5938, %v5938
        %v6067 = vpack.c.bf16 %v5939, %v5939
        %v6068 = vpack.c.bf16 %v5940, %v5940
        %v6069 = vpack.c.bf16 %v5941, %v5941
        %v6070 = vpack.c.bf16 %v5942, %v5942
        %v6071 = vpack.c.bf16 %v5943, %v5943
        %v6072 = vpack.c.bf16 %v5944, %v5944
        %v6073 = vpack.c.bf16 %v5945, %v5945
        %v6074 = vpack.c.bf16 %v5946, %v5946
        %v6075 = vpack.c.bf16 %v5947, %v5947
        %v6076 = vpack.c.bf16 %v5948, %v5948
        %v6077 = vpack.c.bf16 %v5949, %v5949
        %v6078 = vpack.c.bf16 %v5950, %v5950
        %v6079 = vpack.c.bf16 %v5951, %v5951
        %v6080 = vpack.c.bf16 %v5952, %v5952
        %v6081 = vpack.c.bf16 %v5953, %v5953
        %v6082 = vpack.c.bf16 %v5954, %v5954
        %v6083 = vpack.c.bf16 %v5955, %v5955
        %v6084 = vpack.c.bf16 %v5956, %v5956
        %v6085 = vpack.c.bf16 %v5957, %v5957
        %v6086 = vpack.c.bf16 %v5958, %v5958
        %v6087 = vpack.c.bf16 %v5959, %v5959
        %v6088 = vpack.c.bf16 %v5960, %v5960
        %v6089 = vpack.c.bf16 %v5961, %v5961
        %v6090 = vpack.c.bf16 %v5962, %v5962
        %v6091 = vpack.c.bf16 %v5963, %v5963
        %v6092 = vpack.c.bf16 %v5964, %v5964
        %v6093 = vpack.c.bf16 %v5965, %v5965
        %v6094 = vpack.c.bf16 %v5966, %v5966
        %v6095 = vpack.c.bf16 %v5967, %v5967
        %v6096 = vpack.c.bf16 %v5968, %v5968
        %v6097 = vpack.c.bf16 %v5969, %v5969
        %v6098 = vpack.c.bf16 %v5970, %v5970
        %v6099 = vpack.c.bf16 %v5971, %v5971
        %v6100 = vpack.c.bf16 %v5972, %v5972
        %v6101 = vpack.c.bf16 %v5973, %v5973
        %v6102 = vpack.c.bf16 %v5974, %v5974
        %v6103 = vpack.c.bf16 %v5975, %v5975
        %v6104 = vpack.c.bf16 %v5976, %v5976
        %v6105 = vpack.c.bf16 %v5977, %v5977
        %v6106 = vpack.c.bf16 %v5978, %v5978
        %v6107 = vpack.c.bf16 %v5979, %v5979
        %v6108 = vpack.c.bf16 %v5980, %v5980
        %v6109 = vpack.c.bf16 %v5981, %v5981
        %v6110 = vpack.c.bf16 %v5982, %v5982
        %v6111 = vpack.c.bf16 %v5983, %v5983
        %v6112 = vpack.c.bf16 %v5984, %v5984
        %v6113 = vpack.c.bf16 %v5985, %v5985
        %v6114 = vpack.c.bf16 %v5986, %v5986
        %v6115 = vpack.c.bf16 %v5987, %v5987
        %v6116 = vpack.c.bf16 %v5988, %v5988
        %v6117 = vpack.c.bf16 %v5989, %v5989
        %v6118 = vpack.c.bf16 %v5990, %v5990
        %v6119 = vpack.c.bf16 %v5991, %v5991
        %v6120 = vpack.c.bf16 %v5992, %v5992
        %v6121 = vpack.c.bf16 %v5993, %v5993
        %v6122 = vpack.c.bf16 %v5994, %v5994
        %v6123 = vpack.c.bf16 %v5995, %v5995
        %v6124 = vpack.c.bf16 %v5996, %v5996
        %v6125 = vpack.c.bf16 %v5997, %v5997
        %v6126 = vpack.c.bf16 %v5998, %v5998
        %v6127 = vpack.c.bf16 %v5999, %v5999
        %v6128 = vpack.c.bf16 %v6000, %v6000
        %v6129 = vpack.c.bf16 %v6001, %v6001
        %v6130 = vpack.c.bf16 %v6002, %v6002
        %v6131 = vpack.c.bf16 %v6003, %v6003
        %v6132 = vpack.c.bf16 %v6004, %v6004
        %v6133 = vpack.c.bf16 %v6005, %v6005
        %v6134 = vpack.c.bf16 %v6006, %v6006
        %v6135 = vpack.c.bf16 %v6007, %v6007
        %v6136 = vpack.c.bf16 %v6008, %v6008
        %v6137 = vpack.c.bf16 %v6009, %v6009
        %v6138 = vpack.c.bf16 %v6010, %v6010
        %v6139 = vpack.c.bf16 %v6011, %v6011
        %v6140 = vpack.c.bf16 %v6012, %v6012
        %v6141 = vpack.c.bf16 %v6013, %v6013
        %v6142 = vpack.c.bf16 %v6014, %v6014
        %v6143 = vpack.c.bf16 %v6015, %v6015
        %v6144 = vpack.c.bf16 %v6016, %v6016
        %v6145 = vpack.c.bf16 %v6017, %v6017
        %v6146 = vpack.c.bf16 %v6018, %v6018
        %v6147 = vpack.c.bf16 %v6019, %v6019
        %v6148 = vpack.c.bf16 %v6020, %v6020
        %v6149 = vpack.c.bf16 %v6021, %v6021
        %v6150 = vpack.c.bf16 %v6022, %v6022
        %v6151 = vpack.c.bf16 %v6023, %v6023
        %v6152 = vpack.c.bf16 %v6024, %v6024
        %v6153 = vpack.c.bf16 %v6025, %v6025
        %v6154 = vpack.c.bf16 %v6026, %v6026
        %v6155 = vpack.c.bf16 %v6027, %v6027
        %v6156 = vpack.c.bf16 %v6028, %v6028
        %v6157 = vpack.c.bf16 %v6029, %v6029
        %v6158 = vpack.c.bf16 %v6030, %v6030
        %v6159 = vpack.c.bf16 %v6031, %v6031
        %v6160 = vpack.c.bf16 %v6032, %v6032
        %v6161 = vpack.c.bf16 %v6033, %v6033
        %v6162 = vpack.c.bf16 %v6034, %v6034
        %v6163 = vpack.c.bf16 %v6035, %v6035
        %v6164 = vpack.c.bf16 %v6036, %v6036
        %v6165 = vpack.c.bf16 %v6037, %v6037
        %v6166 = vpack.c.bf16 %v6038, %v6038
        %v6167 = vpack.c.bf16 %v6039, %v6039
        %v6168 = vpack.c.bf16 %v6040, %v6040
        %v6169 = vpack.c.bf16 %v6041, %v6041
        %v6170 = vpack.c.bf16 %v6042, %v6042
        %v6171 = vpack.c.bf16 %v6043, %v6043
        %v6172 = vpack.c.bf16 %v6044, %v6044
        %v6173 = vpack.c.bf16 %v6045, %v6045
        %v6174 = vpack.c.bf16 %v6046, %v6046
        %v6175 = vpack.c.bf16 %v6047, %v6047
        %v6176 = vpack.c.bf16 %v6048, %v6048
        %v6177 = vpack.c.bf16 %v6049, %v6049
        %v6178 = vpack.c.bf16 %v6050, %v6050
        %v6179 = vpack.c.bf16 %v6051, %v6051
        %v6180 = vpack.c.bf16 %v6052, %v6052
        %v6181 = vpack.c.bf16 %v6053, %v6053
        %v6182 = vpack.c.bf16 %v6054, %v6054
        %v6311 = vunpack.c.l.b16 %v6055
        %v6312 = vunpack.c.l.b16 %v6056
        %v6313 = vunpack.c.l.b16 %v6057
        %v6314 = vunpack.c.l.b16 %v6058
        %v6315 = vunpack.c.l.b16 %v6059
        %v6316 = vunpack.c.l.b16 %v6060
        %v6317 = vunpack.c.l.b16 %v6061
        %v6318 = vunpack.c.l.b16 %v6062
        %v6319 = vunpack.c.l.b16 %v6063
        %v6320 = vunpack.c.l.b16 %v6064
        %v6321 = vunpack.c.l.b16 %v6065
        %v6322 = vunpack.c.l.b16 %v6066
        %v6323 = vunpack.c.l.b16 %v6067
        %v6324 = vunpack.c.l.b16 %v6068
        %v6325 = vunpack.c.l.b16 %v6069
        %v6326 = vunpack.c.l.b16 %v6070
        %v6327 = vunpack.c.l.b16 %v6071
        %v6328 = vunpack.c.l.b16 %v6072
        %v6329 = vunpack.c.l.b16 %v6073
        %v6330 = vunpack.c.l.b16 %v6074
        %v6331 = vunpack.c.l.b16 %v6075
        %v6332 = vunpack.c.l.b16 %v6076
        %v6333 = vunpack.c.l.b16 %v6077
        %v6334 = vunpack.c.l.b16 %v6078
        %v6335 = vunpack.c.l.b16 %v6079
        %v6336 = vunpack.c.l.b16 %v6080
        %v6337 = vunpack.c.l.b16 %v6081
        %v6338 = vunpack.c.l.b16 %v6082
        %v6339 = vunpack.c.l.b16 %v6083
        %v6340 = vunpack.c.l.b16 %v6084
        %v6341 = vunpack.c.l.b16 %v6085
        %v6342 = vunpack.c.l.b16 %v6086
        %v6343 = vunpack.c.l.b16 %v6087
        %v6344 = vunpack.c.l.b16 %v6088
        %v6345 = vunpack.c.l.b16 %v6089
        %v6346 = vunpack.c.l.b16 %v6090
        %v6347 = vunpack.c.l.b16 %v6091
        %v6348 = vunpack.c.l.b16 %v6092
        %v6349 = vunpack.c.l.b16 %v6093
        %v6350 = vunpack.c.l.b16 %v6094
        %v6351 = vunpack.c.l.b16 %v6095
        %v6352 = vunpack.c.l.b16 %v6096
        %v6353 = vunpack.c.l.b16 %v6097
        %v6354 = vunpack.c.l.b16 %v6098
        %v6355 = vunpack.c.l.b16 %v6099
        %v6356 = vunpack.c.l.b16 %v6100
        %v6357 = vunpack.c.l.b16 %v6101
        %v6358 = vunpack.c.l.b16 %v6102
        %v6359 = vunpack.c.l.b16 %v6103
        %v6360 = vunpack.c.l.b16 %v6104
        %v6361 = vunpack.c.l.b16 %v6105
        %v6362 = vunpack.c.l.b16 %v6106
        %v6363 = vunpack.c.l.b16 %v6107
        %v6364 = vunpack.c.l.b16 %v6108
        %v6365 = vunpack.c.l.b16 %v6109
        %v6366 = vunpack.c.l.b16 %v6110
        %v6367 = vunpack.c.l.b16 %v6111
        %v6368 = vunpack.c.l.b16 %v6112
        %v6369 = vunpack.c.l.b16 %v6113
        %v6370 = vunpack.c.l.b16 %v6114
        %v6371 = vunpack.c.l.b16 %v6115
        %v6372 = vunpack.c.l.b16 %v6116
        %v6373 = vunpack.c.l.b16 %v6117
        %v6374 = vunpack.c.l.b16 %v6118
        %v6375 = vunpack.c.l.b16 %v6119
        %v6376 = vunpack.c.l.b16 %v6120
        %v6377 = vunpack.c.l.b16 %v6121
        %v6378 = vunpack.c.l.b16 %v6122
        %v6379 = vunpack.c.l.b16 %v6123
        %v6380 = vunpack.c.l.b16 %v6124
        %v6381 = vunpack.c.l.b16 %v6125
        %v6382 = vunpack.c.l.b16 %v6126
        %v6383 = vunpack.c.l.b16 %v6127
        %v6384 = vunpack.c.l.b16 %v6128
        %v6385 = vunpack.c.l.b16 %v6129
        %v6386 = vunpack.c.l.b16 %v6130
        %v6387 = vunpack.c.l.b16 %v6131
        %v6388 = vunpack.c.l.b16 %v6132
        %v6389 = vunpack.c.l.b16 %v6133
        %v6390 = vunpack.c.l.b16 %v6134
        %v6391 = vunpack.c.l.b16 %v6135
        %v6392 = vunpack.c.l.b16 %v6136
        %v6393 = vunpack.c.l.b16 %v6137
        %v6394 = vunpack.c.l.b16 %v6138
        %v6395 = vunpack.c.l.b16 %v6139
        %v6396 = vunpack.c.l.b16 %v6140
        %v6397 = vunpack.c.l.b16 %v6141
        %v6398 = vunpack.c.l.b16 %v6142
        %v6399 = vunpack.c.l.b16 %v6143
        %v6400 = vunpack.c.l.b16 %v6144
        %v6401 = vunpack.c.l.b16 %v6145
        %v6402 = vunpack.c.l.b16 %v6146
        %v6403 = vunpack.c.l.b16 %v6147
        %v6404 = vunpack.c.l.b16 %v6148
        %v6405 = vunpack.c.l.b16 %v6149
        %v6406 = vunpack.c.l.b16 %v6150
        %v6407 = vunpack.c.l.b16 %v6151
        %v6408 = vunpack.c.l.b16 %v6152
        %v6409 = vunpack.c.l.b16 %v6153
        %v6410 = vunpack.c.l.b16 %v6154
        %v6411 = vunpack.c.l.b16 %v6155
        %v6412 = vunpack.c.l.b16 %v6156
        %v6413 = vunpack.c.l.b16 %v6157
        %v6414 = vunpack.c.l.b16 %v6158
        %v6415 = vunpack.c.l.b16 %v6159
        %v6416 = vunpack.c.l.b16 %v6160
        %v6417 = vunpack.c.l.b16 %v6161
        %v6418 = vunpack.c.l.b16 %v6162
        %v6419 = vunpack.c.l.b16 %v6163
        %v6420 = vunpack.c.l.b16 %v6164
        %v6421 = vunpack.c.l.b16 %v6165
        %v6422 = vunpack.c.l.b16 %v6166
        %v6423 = vunpack.c.l.b16 %v6167
        %v6424 = vunpack.c.l.b16 %v6168
        %v6425 = vunpack.c.l.b16 %v6169
        %v6426 = vunpack.c.l.b16 %v6170
        %v6427 = vunpack.c.l.b16 %v6171
        %v6428 = vunpack.c.l.b16 %v6172
        %v6429 = vunpack.c.l.b16 %v6173
        %v6430 = vunpack.c.l.b16 %v6174
        %v6431 = vunpack.c.l.b16 %v6175
        %v6432 = vunpack.c.l.b16 %v6176
        %v6433 = vunpack.c.l.b16 %v6177
        %v6434 = vunpack.c.l.b16 %v6178
        %v6435 = vunpack.c.l.b16 %v6179
        %v6436 = vunpack.c.l.b16 %v6180
        %v6437 = vunpack.c.l.b16 %v6181
        %v6438 = vunpack.c.l.b16 %v6182
        %v6439 = vrot.slane %v6312, 7
        %v6440 = vsel %vm5380, %v6439, %v6311
        %v6441 = vrot.slane %v6313, 6
        %v6442 = vsel %vm5383, %v6441, %v6440
        %v6443 = vrot.slane %v6314, 5
        %v6444 = vsel %vm5386, %v6443, %v6442
        %v6445 = vrot.slane %v6315, 4
        %v6446 = vsel %vm5389, %v6445, %v6444
        %v6447 = vrot.slane %v6316, 3
        %v6448 = vsel %vm5392, %v6447, %v6446
        %v6449 = vrot.slane %v6317, 2
        %v6450 = vsel %vm5395, %v6449, %v6448
        %v6451 = vrot.slane %v6318, 1
        %v6452 = vsel %vm5398, %v6451, %v6450
        %v6453 = vrot.slane %v6320, 7
        %v6454 = vsel %vm5380, %v6453, %v6319
        %v6455 = vrot.slane %v6321, 6
        %v6456 = vsel %vm5383, %v6455, %v6454
        %v6457 = vrot.slane %v6322, 5
        %v6458 = vsel %vm5386, %v6457, %v6456
        %v6459 = vrot.slane %v6323, 4
        %v6460 = vsel %vm5389, %v6459, %v6458
        %v6461 = vrot.slane %v6324, 3
        %v6462 = vsel %vm5392, %v6461, %v6460
        %v6463 = vrot.slane %v6325, 2
        %v6464 = vsel %vm5395, %v6463, %v6462
        %v6465 = vrot.slane %v6326, 1
        %v6466 = vsel %vm5398, %v6465, %v6464
        %v6467 = vrot.slane %v6328, 7
        %v6468 = vsel %vm5380, %v6467, %v6327
        %v6469 = vrot.slane %v6329, 6
        %v6470 = vsel %vm5383, %v6469, %v6468
        %v6471 = vrot.slane %v6330, 5
        %v6472 = vsel %vm5386, %v6471, %v6470
        %v6473 = vrot.slane %v6331, 4
        %v6474 = vsel %vm5389, %v6473, %v6472
        %v6475 = vrot.slane %v6332, 3
        %v6476 = vsel %vm5392, %v6475, %v6474
        %v6477 = vrot.slane %v6333, 2
        %v6478 = vsel %vm5395, %v6477, %v6476
        %v6479 = vrot.slane %v6334, 1
        %v6480 = vsel %vm5398, %v6479, %v6478
        %v6481 = vrot.slane %v6336, 7
        %v6482 = vsel %vm5380, %v6481, %v6335
        %v6483 = vrot.slane %v6337, 6
        %v6484 = vsel %vm5383, %v6483, %v6482
        %v6485 = vrot.slane %v6338, 5
        %v6486 = vsel %vm5386, %v6485, %v6484
        %v6487 = vrot.slane %v6339, 4
        %v6488 = vsel %vm5389, %v6487, %v6486
        %v6489 = vrot.slane %v6340, 3
        %v6490 = vsel %vm5392, %v6489, %v6488
        %v6491 = vrot.slane %v6341, 2
        %v6492 = vsel %vm5395, %v6491, %v6490
        %v6493 = vrot.slane %v6342, 1
        %v6494 = vsel %vm5398, %v6493, %v6492
        %v6495 = vrot.slane %v6344, 7
        %v6496 = vsel %vm5380, %v6495, %v6343
        %v6497 = vrot.slane %v6345, 6
        %v6498 = vsel %vm5383, %v6497, %v6496
        %v6499 = vrot.slane %v6346, 5
        %v6500 = vsel %vm5386, %v6499, %v6498
        %v6501 = vrot.slane %v6347, 4
        %v6502 = vsel %vm5389, %v6501, %v6500
        %v6503 = vrot.slane %v6348, 3
        %v6504 = vsel %vm5392, %v6503, %v6502
        %v6505 = vrot.slane %v6349, 2
        %v6506 = vsel %vm5395, %v6505, %v6504
        %v6507 = vrot.slane %v6350, 1
        %v6508 = vsel %vm5398, %v6507, %v6506
        %v6509 = vrot.slane %v6352, 7
        %v6510 = vsel %vm5380, %v6509, %v6351
        %v6511 = vrot.slane %v6353, 6
        %v6512 = vsel %vm5383, %v6511, %v6510
        %v6513 = vrot.slane %v6354, 5
        %v6514 = vsel %vm5386, %v6513, %v6512
        %v6515 = vrot.slane %v6355, 4
        %v6516 = vsel %vm5389, %v6515, %v6514
        %v6517 = vrot.slane %v6356, 3
        %v6518 = vsel %vm5392, %v6517, %v6516
        %v6519 = vrot.slane %v6357, 2
        %v6520 = vsel %vm5395, %v6519, %v6518
        %v6521 = vrot.slane %v6358, 1
        %v6522 = vsel %vm5398, %v6521, %v6520
        %v6523 = vrot.slane %v6360, 7
        %v6524 = vsel %vm5380, %v6523, %v6359
        %v6525 = vrot.slane %v6361, 6
        %v6526 = vsel %vm5383, %v6525, %v6524
        %v6527 = vrot.slane %v6362, 5
        %v6528 = vsel %vm5386, %v6527, %v6526
        %v6529 = vrot.slane %v6363, 4
        %v6530 = vsel %vm5389, %v6529, %v6528
        %v6531 = vrot.slane %v6364, 3
        %v6532 = vsel %vm5392, %v6531, %v6530
        %v6533 = vrot.slane %v6365, 2
        %v6534 = vsel %vm5395, %v6533, %v6532
        %v6535 = vrot.slane %v6366, 1
        %v6536 = vsel %vm5398, %v6535, %v6534
        %v6537 = vrot.slane %v6368, 7
        %v6538 = vsel %vm5380, %v6537, %v6367
        %v6539 = vrot.slane %v6369, 6
        %v6540 = vsel %vm5383, %v6539, %v6538
        %v6541 = vrot.slane %v6370, 5
        %v6542 = vsel %vm5386, %v6541, %v6540
        %v6543 = vrot.slane %v6371, 4
        %v6544 = vsel %vm5389, %v6543, %v6542
        %v6545 = vrot.slane %v6372, 3
        %v6546 = vsel %vm5392, %v6545, %v6544
        %v6547 = vrot.slane %v6373, 2
        %v6548 = vsel %vm5395, %v6547, %v6546
        %v6549 = vrot.slane %v6374, 1
        %v6550 = vsel %vm5398, %v6549, %v6548
        %v6551 = vrot.slane %v6376, 7
        %v6552 = vsel %vm5380, %v6551, %v6375
        %v6553 = vrot.slane %v6377, 6
        %v6554 = vsel %vm5383, %v6553, %v6552
        %v6555 = vrot.slane %v6378, 5
        %v6556 = vsel %vm5386, %v6555, %v6554
        %v6557 = vrot.slane %v6379, 4
        %v6558 = vsel %vm5389, %v6557, %v6556
        %v6559 = vrot.slane %v6380, 3
        %v6560 = vsel %vm5392, %v6559, %v6558
        %v6561 = vrot.slane %v6381, 2
        %v6562 = vsel %vm5395, %v6561, %v6560
        %v6563 = vrot.slane %v6382, 1
        %v6564 = vsel %vm5398, %v6563, %v6562
        %v6565 = vrot.slane %v6384, 7
        %v6566 = vsel %vm5380, %v6565, %v6383
        %v6567 = vrot.slane %v6385, 6
        %v6568 = vsel %vm5383, %v6567, %v6566
        %v6569 = vrot.slane %v6386, 5
        %v6570 = vsel %vm5386, %v6569, %v6568
        %v6571 = vrot.slane %v6387, 4
        %v6572 = vsel %vm5389, %v6571, %v6570
        %v6573 = vrot.slane %v6388, 3
        %v6574 = vsel %vm5392, %v6573, %v6572
        %v6575 = vrot.slane %v6389, 2
        %v6576 = vsel %vm5395, %v6575, %v6574
        %v6577 = vrot.slane %v6390, 1
        %v6578 = vsel %vm5398, %v6577, %v6576
        %v6579 = vrot.slane %v6392, 7
        %v6580 = vsel %vm5380, %v6579, %v6391
        %v6581 = vrot.slane %v6393, 6
        %v6582 = vsel %vm5383, %v6581, %v6580
        %v6583 = vrot.slane %v6394, 5
        %v6584 = vsel %vm5386, %v6583, %v6582
        %v6585 = vrot.slane %v6395, 4
        %v6586 = vsel %vm5389, %v6585, %v6584
        %v6587 = vrot.slane %v6396, 3
        %v6588 = vsel %vm5392, %v6587, %v6586
        %v6589 = vrot.slane %v6397, 2
        %v6590 = vsel %vm5395, %v6589, %v6588
        %v6591 = vrot.slane %v6398, 1
        %v6592 = vsel %vm5398, %v6591, %v6590
        %v6593 = vrot.slane %v6400, 7
        %v6594 = vsel %vm5380, %v6593, %v6399
        %v6595 = vrot.slane %v6401, 6
        %v6596 = vsel %vm5383, %v6595, %v6594
        %v6597 = vrot.slane %v6402, 5
        %v6598 = vsel %vm5386, %v6597, %v6596
        %v6599 = vrot.slane %v6403, 4
        %v6600 = vsel %vm5389, %v6599, %v6598
        %v6601 = vrot.slane %v6404, 3
        %v6602 = vsel %vm5392, %v6601, %v6600
        %v6603 = vrot.slane %v6405, 2
        %v6604 = vsel %vm5395, %v6603, %v6602
        %v6605 = vrot.slane %v6406, 1
        %v6606 = vsel %vm5398, %v6605, %v6604
        %v6607 = vrot.slane %v6408, 7
        %v6608 = vsel %vm5380, %v6607, %v6407
        %v6609 = vrot.slane %v6409, 6
        %v6610 = vsel %vm5383, %v6609, %v6608
        %v6611 = vrot.slane %v6410, 5
        %v6612 = vsel %vm5386, %v6611, %v6610
        %v6613 = vrot.slane %v6411, 4
        %v6614 = vsel %vm5389, %v6613, %v6612
        %v6615 = vrot.slane %v6412, 3
        %v6616 = vsel %vm5392, %v6615, %v6614
        %v6617 = vrot.slane %v6413, 2
        %v6618 = vsel %vm5395, %v6617, %v6616
        %v6619 = vrot.slane %v6414, 1
        %v6620 = vsel %vm5398, %v6619, %v6618
        %v6621 = vrot.slane %v6416, 7
        %v6622 = vsel %vm5380, %v6621, %v6415
        %v6623 = vrot.slane %v6417, 6
        %v6624 = vsel %vm5383, %v6623, %v6622
        %v6625 = vrot.slane %v6418, 5
        %v6626 = vsel %vm5386, %v6625, %v6624
        %v6627 = vrot.slane %v6419, 4
        %v6628 = vsel %vm5389, %v6627, %v6626
        %v6629 = vrot.slane %v6420, 3
        %v6630 = vsel %vm5392, %v6629, %v6628
        %v6631 = vrot.slane %v6421, 2
        %v6632 = vsel %vm5395, %v6631, %v6630
        %v6633 = vrot.slane %v6422, 1
        %v6634 = vsel %vm5398, %v6633, %v6632
        %v6635 = vrot.slane %v6424, 7
        %v6636 = vsel %vm5380, %v6635, %v6423
        %v6637 = vrot.slane %v6425, 6
        %v6638 = vsel %vm5383, %v6637, %v6636
        %v6639 = vrot.slane %v6426, 5
        %v6640 = vsel %vm5386, %v6639, %v6638
        %v6641 = vrot.slane %v6427, 4
        %v6642 = vsel %vm5389, %v6641, %v6640
        %v6643 = vrot.slane %v6428, 3
        %v6644 = vsel %vm5392, %v6643, %v6642
        %v6645 = vrot.slane %v6429, 2
        %v6646 = vsel %vm5395, %v6645, %v6644
        %v6647 = vrot.slane %v6430, 1
        %v6648 = vsel %vm5398, %v6647, %v6646
        %v6649 = vrot.slane %v6432, 7
        %v6650 = vsel %vm5380, %v6649, %v6431
        %v6651 = vrot.slane %v6433, 6
        %v6652 = vsel %vm5383, %v6651, %v6650
        %v6653 = vrot.slane %v6434, 5
        %v6654 = vsel %vm5386, %v6653, %v6652
        %v6655 = vrot.slane %v6435, 4
        %v6656 = vsel %vm5389, %v6655, %v6654
        %v6657 = vrot.slane %v6436, 3
        %v6658 = vsel %vm5392, %v6657, %v6656
        %v6659 = vrot.slane %v6437, 2
        %v6660 = vsel %vm5395, %v6659, %v6658
        %v6661 = vrot.slane %v6438, 1
        %v6662 = vsel %vm5398, %v6661, %v6660
        %v6663 = vpack.c.b16 %v6466, %v6452
        %v6664 = vpack.c.b16 %v6494, %v6480
        %v6665 = vpack.c.b16 %v6522, %v6508
        %v6666 = vpack.c.b16 %v6550, %v6536
        %v6667 = vpack.c.b16 %v6578, %v6564
        %v6668 = vpack.c.b16 %v6606, %v6592
        %v6669 = vpack.c.b16 %v6634, %v6620
        %v6670 = vpack.c.b16 %v6662, %v6648
        %v6672 = vsel %vm2123, %v6663, 0
        %v6675 = vsel %vm2123, %v6664, 0
        %v6678 = vsel %vm2123, %v6665, 0
        %v6681 = vsel %vm2123, %v6666, 0
        %v6684 = vsel %vm2123, %v6667, 0
        %v6687 = vsel %vm2123, %v6668, 0
        %v6690 = vsel %vm2123, %v6669, 0
        %v6693 = vsel %vm2123, %v6670, 0
        %6695 = vmatpush.bf16.msra.mxu0 0
        %6696 = vmatpush.bf16.msra.mxu0 0
        %6697 = vmatpush.bf16.msra.mxu0 0
        %6698 = vmatpush.bf16.msra.mxu0 0
        %6699 = vmatpush.bf16.msra.mxu0 0
        %6700 = vmatpush.bf16.msra.mxu0 0
        %6701 = vmatpush.bf16.msra.mxu0 0
        %6702 = vmatpush.bf16.msra.mxu0 %v5643
        %6703 = vmatmul.bf16.gmra.mxu0 %v6672
        %v6704 = vpop.f32.mrf.mxu0
        %v6705 = vadd.f32 0.0, %v6704
        %v6706 = vpop.f32.mrf.mxu0
        %v6707 = vadd.f32 0.0, %v6706
        %6708 = vmatmul.bf16.gmra.mxu0 %v6675
        %v6709 = vpop.f32.mrf.mxu0
        %v6710 = vadd.f32 0.0, %v6709
        %v6711 = vpop.f32.mrf.mxu0
        %v6712 = vadd.f32 0.0, %v6711
        %6713 = vmatmul.bf16.gmra.mxu0 %v6678
        %v6714 = vpop.f32.mrf.mxu0
        %v6715 = vadd.f32 0.0, %v6714
        %v6716 = vpop.f32.mrf.mxu0
        %v6717 = vadd.f32 0.0, %v6716
        %6718 = vmatmul.bf16.gmra.mxu0 %v6681
        %v6719 = vpop.f32.mrf.mxu0
        %v6720 = vadd.f32 0.0, %v6719
        %v6721 = vpop.f32.mrf.mxu0
        %v6722 = vadd.f32 0.0, %v6721
        %6723 = vmatmul.bf16.gmra.mxu0 %v6684
        %v6724 = vpop.f32.mrf.mxu0
        %v6725 = vadd.f32 0.0, %v6724
        %v6726 = vpop.f32.mrf.mxu0
        %v6727 = vadd.f32 0.0, %v6726
        %6728 = vmatmul.bf16.gmra.mxu0 %v6687
        %v6729 = vpop.f32.mrf.mxu0
        %v6730 = vadd.f32 0.0, %v6729
        %v6731 = vpop.f32.mrf.mxu0
        %v6732 = vadd.f32 0.0, %v6731
        %6733 = vmatmul.bf16.gmra.mxu0 %v6690
        %v6734 = vpop.f32.mrf.mxu0
        %v6735 = vadd.f32 0.0, %v6734
        %v6736 = vpop.f32.mrf.mxu0
        %v6737 = vadd.f32 0.0, %v6736
        %6738 = vmatmul.bf16.gmra.mxu0 %v6693
        %v6739 = vpop.f32.mrf.mxu0
        %v6740 = vadd.f32 0.0, %v6739
        %v6741 = vpop.f32.mrf.mxu0
        %v6742 = vadd.f32 0.0, %v6741
        %6743 = vdwg.mxu0
        %v6744 = vld [vmem:[%s11 + $0x1] sm:$0x1]
        %v6745 = vperm.slane %v6744, 0
        %v6746 = vmul.f32 %v6705, %v6745
        %v6747 = vmul.f32 %v6707, %v6745
        %v6748 = vmul.f32 %v6710, %v6745
        %v6749 = vmul.f32 %v6712, %v6745
        %v6750 = vmul.f32 %v6715, %v6745
        %v6751 = vmul.f32 %v6717, %v6745
        %v6752 = vmul.f32 %v6720, %v6745
        %v6753 = vmul.f32 %v6722, %v6745
        %v6754 = vmul.f32 %v6725, %v6745
        %v6755 = vmul.f32 %v6727, %v6745
        %v6756 = vmul.f32 %v6730, %v6745
        %v6757 = vmul.f32 %v6732, %v6745
        %v6758 = vmul.f32 %v6735, %v6745
        %v6759 = vmul.f32 %v6737, %v6745
        %v6760 = vmul.f32 %v6740, %v6745
        %v6761 = vmul.f32 %v6742, %v6745
        %v6762 = vld [vmem:[%s12 + $0x1] sm:$0x1]
        %v6763 = vperm.slane %v6762, 0
        %v6764 = vadd.f32 %v6746, %v6763
        %v6765 = vadd.f32 %v6747, %v6763
        %v6766 = vadd.f32 %v6748, %v6763
        %v6767 = vadd.f32 %v6749, %v6763
        %v6768 = vadd.f32 %v6750, %v6763
        %v6769 = vadd.f32 %v6751, %v6763
        %v6770 = vadd.f32 %v6752, %v6763
        %v6771 = vadd.f32 %v6753, %v6763
        %v6772 = vadd.f32 %v6754, %v6763
        %v6773 = vadd.f32 %v6755, %v6763
        %v6774 = vadd.f32 %v6756, %v6763
        %v6775 = vadd.f32 %v6757, %v6763
        %v6776 = vadd.f32 %v6758, %v6763
        %v6777 = vadd.f32 %v6759, %v6763
        %v6778 = vadd.f32 %v6760, %v6763
        %v6779 = vadd.f32 %v6761, %v6763
        %v6780 = vld [vmem:[%s1340] sm:$0xff]
        %v6781 = vld [vmem:[%s1340 + $0x8] sm:$0xff]
        %v6782 = vld [vmem:[%s1340 + $0x10] sm:$0xff]
        %v6783 = vld [vmem:[%s1340 + $0x18] sm:$0xff]
        %v6784 = vld [vmem:[%s1340 + $0x20] sm:$0xff]
        %v6785 = vld [vmem:[%s1340 + $0x28] sm:$0xff]
        %v6786 = vld [vmem:[%s1340 + $0x30] sm:$0xff]
        %v6787 = vld [vmem:[%s1340 + $0x38] sm:$0xff]
        %v6788 = vld [vmem:[%s1340 + $0x40] sm:$0xff]
        %v6789 = vld [vmem:[%s1340 + $0x48] sm:$0xff]
        %v6790 = vld [vmem:[%s1340 + $0x50] sm:$0xff]
        %v6791 = vld [vmem:[%s1340 + $0x58] sm:$0xff]
        %v6792 = vld [vmem:[%s1340 + $0x60] sm:$0xff]
        %v6793 = vld [vmem:[%s1340 + $0x68] sm:$0xff]
        %v6794 = vld [vmem:[%s1340 + $0x70] sm:$0xff]
        %v6795 = vld [vmem:[%s1340 + $0x78] sm:$0xff]
        %v6796 = vadd.f32 %v6764, %v6780
        %v6797 = vadd.f32 %v6765, %v6781
        %v6798 = vadd.f32 %v6766, %v6782
        %v6799 = vadd.f32 %v6767, %v6783
        %v6800 = vadd.f32 %v6768, %v6784
        %v6801 = vadd.f32 %v6769, %v6785
        %v6802 = vadd.f32 %v6770, %v6786
        %v6803 = vadd.f32 %v6771, %v6787
        %v6804 = vadd.f32 %v6772, %v6788
        %v6805 = vadd.f32 %v6773, %v6789
        %v6806 = vadd.f32 %v6774, %v6790
        %v6807 = vadd.f32 %v6775, %v6791
        %v6808 = vadd.f32 %v6776, %v6792
        %v6809 = vadd.f32 %v6777, %v6793
        %v6810 = vadd.f32 %v6778, %v6794
        %v6811 = vadd.f32 %v6779, %v6795
        %v6812 = vmax.f32 %v6796, 0.0
        %v6813 = vmax.f32 %v6797, 0.0
        %v6814 = vmax.f32 %v6798, 0.0
        %v6815 = vmax.f32 %v6799, 0.0
        %v6816 = vmax.f32 %v6800, 0.0
        %v6817 = vmax.f32 %v6801, 0.0
        %v6818 = vmax.f32 %v6802, 0.0
        %v6819 = vmax.f32 %v6803, 0.0
        %v6820 = vmax.f32 %v6804, 0.0
        %v6821 = vmax.f32 %v6805, 0.0
        %v6822 = vmax.f32 %v6806, 0.0
        %v6823 = vmax.f32 %v6807, 0.0
        %v6824 = vmax.f32 %v6808, 0.0
        %v6825 = vmax.f32 %v6809, 0.0
        %v6826 = vmax.f32 %v6810, 0.0
        %v6827 = vmax.f32 %v6811, 0.0
        %s6828 = scalar_lea.vmem %s667, 128 [#allocation9]
        %6829 = vst.msk [vmem:[%s6828] sm:$0xff] %vm851, %v6812
        %6830 = vst.msk [vmem:[%s6828 + $0x8] sm:$0xff] %vm851, %v6813
        %6831 = vst.msk [vmem:[%s6828 + $0x10] sm:$0xff] %vm851, %v6814
        %6832 = vst.msk [vmem:[%s6828 + $0x18] sm:$0xff] %vm851, %v6815
        %6833 = vst.msk [vmem:[%s6828 + $0x20] sm:$0xff] %vm851, %v6816
        %6834 = vst.msk [vmem:[%s6828 + $0x28] sm:$0xff] %vm851, %v6817
        %6835 = vst.msk [vmem:[%s6828 + $0x30] sm:$0xff] %vm851, %v6818
        %6836 = vst.msk [vmem:[%s6828 + $0x38] sm:$0xff] %vm851, %v6819
        %6837 = vst.msk [vmem:[%s6828 + $0x40] sm:$0xff] %vm851, %v6820
        %6838 = vst.msk [vmem:[%s6828 + $0x48] sm:$0xff] %vm851, %v6821
        %6839 = vst.msk [vmem:[%s6828 + $0x50] sm:$0xff] %vm851, %v6822
        %6840 = vst.msk [vmem:[%s6828 + $0x58] sm:$0xff] %vm851, %v6823
        %6841 = vst.msk [vmem:[%s6828 + $0x60] sm:$0xff] %vm851, %v6824
        %6842 = vst.msk [vmem:[%s6828 + $0x68] sm:$0xff] %vm851, %v6825
        %6843 = vst.msk [vmem:[%s6828 + $0x70] sm:$0xff] %vm851, %v6826
        %6844 = vst.msk [vmem:[%s6828 + $0x78] sm:$0xff] %vm851, %v6827
        %s6845 = sand.u32 %s365, 1
        %s6846 = scalar_lea.sflag [#allocation5], %s6845
        %s6847 = sand.u32 %s365, 1
        %s6848 = smul.addr %s6847, 256
        %s6849 = scalar_lea.vmem [#allocation9], %s6848
        // Predicated region
        $region85: #{tpu_custom_call.1} parent=71 // pred_check
          %p6850 = pneg %p375
        $region86: #{tpu_custom_call.1} parent=71 // pred_check_branch
          %6852 = sbr.rel (%p6850) target = $region88
        $region87: #{tpu_custom_call.1} parent=71 // pred_region
          #allocation17 [shape = 'u32[6]{0}', space=smem, size = 0x18, scoped, tag = 'DMA stride descriptor']
          %s6853 = smul.u32 8, %s38
          %6855 = vsyncadd %s6846, 0
          %s6856 = smul.addr %s6853, 2
          %s6857 = smul.addr %s37, 64
          %s6858 = sadd.s32 %s6856, %s6857
          %s6859 = smul.addr %s6858, 8
          %s6860 = scalar_lea.hbm %s13, %s6859
          %s6862 = sshll.u32 1, 14
          %s6863 = sxor.u32 4294967295, %s6862
          %s6866 = sshll.u32 7, 18
          %s6867 = sxor.u32 4294967295, %s6866
          %s6868 = sand.u32 0, %s6867
          %s6870 = sor.u32 %s6868, 0
          %s6871 = sshll.u32 %s6849, 4
          %s6872 = int_to_ptr.vmem [resolvable:$true] %s6871
          %s6873 = sshll.u32 %s6860, 4
          %s6874 = int_to_ptr.hbm [resolvable:$true] %s6873
          %6880 = sst [smem:[#allocation17]] 2048
          %s6881 = scalar_lea.smem [#allocation17], 1
          %6882 = sst [smem:[%s6881]] 4096
          %s6883 = scalar_lea.smem [#allocation17], 2
          %6884 = sst [smem:[%s6883]] 16
          %s6885 = scalar_lea.smem [#allocation17], 3
          %6886 = sst [smem:[%s6885]] 128
          %s6887 = scalar_lea.smem [#allocation17], 4
          %6888 = sst [smem:[%s6887]] 128
          %s6889 = scalar_lea.smem [#allocation17], 5
          %6890 = sst [smem:[%s6889]] 8
          %6892 = dma.general %s6872, 4096, %s6874, %s6846, [#allocation16], [#allocation17], %s6870, 0
        $region88: #{tpu_custom_call.1} parent=71 // pred_fallthru
          _
      $region72: #{tpu_custom_call.1} parent=5 // pred_fallthru
        _
      %p6893 = scmp.le.s32.totalorder 2, %s28
      // Predicated region
      $region89: #{tpu_custom_call.1} parent=5 // pred_check
        %p6894 = pneg %p6893
      $region90: #{tpu_custom_call.1} parent=5 // pred_check_branch
        %6896 = sbr.rel (%p6894) target = $region92
      $region91: #{tpu_custom_call.1} parent=5 // pred_region
        %s6897 = ssub.s32 %s28, 2
        // Predicated region
        $region93: #{tpu_custom_call.1} parent=91 // pred_check
          %p6898 = pneg %p381
        $region94: #{tpu_custom_call.1} parent=91 // pred_check_branch
          %6900 = sbr.rel (%p6898) target = $region96
        $region95: #{tpu_custom_call.1} parent=91 // pred_region
          %s6901 = sand.u32 %s366, 1
          %s6902 = scalar_lea.sflag [#allocation5], %s6901
          %s6903 = sand.u32 %s366, 1
          %s6904 = smul.addr %s6903, 256
          %s6905 = scalar_lea.vmem [#allocation9], %s6904
          %6907 = dma.done %s6902, 4096
        $region96: #{tpu_custom_call.1} parent=91 // pred_fallthru
          _
      $region92: #{tpu_custom_call.1} parent=5 // pred_fallthru
        _
    $region6: #{tpu_custom_call.1} parent=1 // loop_footer
      %s32 = sadd.s32 1, %s28
    $region7: #{tpu_custom_call.1} parent=1 // loop_footer_branch
      %27 = sbr.rel target = $region3
    $region8: #{tpu_custom_call.1} parent=1 // loop_exit
      _
    %6908 = vsyncpa [#allocation4], 1
    %s6909 = scalar_lea.sflag [#allocation4], 1
    %6910 = vsyncpa %s6909, 1
    %6911 = vsyncpa [#allocation7], 1
    %s6912 = scalar_lea.sflag [#allocation7], 1
    %6913 = vsyncpa %s6912, 1
    %6914 = vsyncpa [#allocation5], 1
    %s6915 = scalar_lea.sflag [#allocation5], 1
    %6916 = vsyncpa %s6915, 1

</llo_original>
